<compile_context>
chip_gen: v5e
topology: v5e:2x2
jax: 0.10.0
libtpu: 0.0.40
codegen_flags: <defaults>
</compile_context>

<pallas_src>
import functools

import jax
import jax.numpy as jnp
import numpy as np
from jax.experimental import pallas as pl
from jax.experimental.pallas import tpu as pltpu

SMEM_SPEC = pl.BlockSpec(memory_space=pltpu.MemorySpace.SMEM)
VMEM_LIMIT = 32 * 1024 * 1024


def _round_up(x, m):
    return ((x + m - 1) // m) * m


def _pick_tile(n, cap=1024):
    for t in (1024, 512, 256, 128, 64, 32, 16, 8):
        if t <= cap and n % t == 0:
            return t
    return n


# ---------------------------------------------------------------------------
# Kernel 1: 3x3 conv + folded BN (+ optional ReLU), 9 accumulated tap matmuls
# ---------------------------------------------------------------------------

def _conv3x3_kernel(x_ref, w_ref, scale_ref, bias_ref, o_ref, *, stride, ho, wo, relu):
    # x_ref  : (1, s*s, hs, ws, cin) f32 -- parity-split, spatially padded input
    # w_ref  : (9, cin, coutp) bf16      -- per-tap weight matrices
    # scale/bias: (1, coutp) f32         -- folded BatchNorm affine
    # o_ref  : (1, ho*wo, coutp) f32
    s = stride
    acc = None
    for di in range(3):
        for dj in range(3):
            pi = (di % s) * s + (dj % s)          # parity slab index
            r0, c0 = di // s, dj // s             # offset inside the slab
            win = x_ref[0, pi, r0:r0 + ho, c0:c0 + wo, :]          # (ho, wo, cin)
            patch = win.reshape(ho * wo, win.shape[-1]).astype(jnp.bfloat16)
            y = jnp.dot(patch, w_ref[di * 3 + dj],
                        preferred_element_type=jnp.float32)
            acc = y if acc is None else acc + y
    y = acc * scale_ref[...] + bias_ref[...]
    if relu:
        y = jnp.maximum(y, 0.0)
    o_ref[0] = y


def conv3x3_bn(x, w9, scale, bias, *, stride, relu):
    """x: (n, h, w, cin) f32; w9: (9, cin, coutp) bf16; returns ((n, ho*wo, coutp), (ho, wo))."""
    n, h, w_, cin = x.shape
    s = stride
    ho = (h + 2 - 3) // s + 1
    wo = (w_ + 2 - 3) // s + 1
    coutp = w9.shape[-1]

    xp = jnp.pad(x, ((0, 0), (1, 1), (1, 1), (0, 0)))
    hp, wp = h + 2, w_ + 2
    hs = -(-hp // s)
    ws = -(-wp // s)
    slabs = []
    for p in range(s):
        for q in range(s):
            sl = xp[:, p::s, q::s, :]
            sl = jnp.pad(sl, ((0, 0), (0, hs - sl.shape[1]), (0, ws - sl.shape[2]), (0, 0)))
            slabs.append(sl)
    xs = jnp.stack(slabs, axis=1)                 # (n, s*s, hs, ws, cin)

    kernel = functools.partial(_conv3x3_kernel, stride=s, ho=ho, wo=wo, relu=relu)
    out = pl.pallas_call(
        kernel,
        out_shape=jax.ShapeDtypeStruct((n, ho * wo, coutp), jnp.float32),
        grid=(n,),
        in_specs=[
            pl.BlockSpec((1, s * s, hs, ws, cin), lambda i: (i, 0, 0, 0, 0)),
            pl.BlockSpec((9, cin, coutp), lambda i: (0, 0, 0)),
            pl.BlockSpec((1, coutp), lambda i: (0, 0)),
            pl.BlockSpec((1, coutp), lambda i: (0, 0)),
        ],
        out_specs=pl.BlockSpec((1, ho * wo, coutp), lambda i: (i, 0, 0)),
        compiler_params=pltpu.CompilerParams(
            dimension_semantics=("parallel",),
            vmem_limit_bytes=VMEM_LIMIT),
    )(xs, w9, scale, bias)
    return out, (ho, wo)


# ---------------------------------------------------------------------------
# Kernel 2: CBAM ChannelGate attention (tiled two-phase reduction + tiny MLP)
# ---------------------------------------------------------------------------

def _channel_att_kernel(x_ref, w1_ref, b1_ref, w2_ref, b2_ref, o_ref,
                        sum_ref, max_ref, *, inv_hw):
    t = pl.program_id(1)

    @pl.when(t == 0)
    def _():
        sum_ref[...] = jnp.zeros_like(sum_ref)
        max_ref[...] = jnp.full_like(max_ref, -jnp.inf)

    x = x_ref[0]                                              # (thw, coutp)
    sum_ref[...] += jnp.sum(x, axis=0, keepdims=True)
    max_ref[...] = jnp.maximum(max_ref[...], jnp.max(x, axis=0, keepdims=True))

    @pl.when(t == pl.num_programs(1) - 1)
    def _():
        avg = sum_ref[...] * inv_hw                           # (1, coutp)
        mx = max_ref[...]

        def mlp(v):
            h = jnp.maximum(
                jnp.dot(v, w1_ref[...], preferred_element_type=jnp.float32)
                + b1_ref[...], 0.0)
            return (jnp.dot(h, w2_ref[...], preferred_element_type=jnp.float32)
                    + b2_ref[...])

        o_ref[0] = jax.nn.sigmoid(mlp(avg) + mlp(mx))


def channel_attention(y2, w1, b1, w2, b2):
    """y2: (n, hw, coutp) -> per-channel sigmoid scale (n, 1, coutp)."""
    n, hw, coutp = y2.shape
    crp = w1.shape[-1]
    thw = _pick_tile(hw)
    return pl.pallas_call(
        functools.partial(_channel_att_kernel, inv_hw=1.0 / hw),
        out_shape=jax.ShapeDtypeStruct((n, 1, coutp), jnp.float32),
        grid=(n, hw // thw),
        in_specs=[
            pl.BlockSpec((1, thw, coutp), lambda i, t: (i, t, 0)),
            pl.BlockSpec((coutp, crp), lambda i, t: (0, 0)),
            pl.BlockSpec((1, crp), lambda i, t: (0, 0)),
            pl.BlockSpec((crp, coutp), lambda i, t: (0, 0)),
            pl.BlockSpec((1, coutp), lambda i, t: (0, 0)),
        ],
        out_specs=pl.BlockSpec((1, 1, coutp), lambda i, t: (i, 0, 0)),
        scratch_shapes=[pltpu.VMEM((1, coutp), jnp.float32),
                        pltpu.VMEM((1, coutp), jnp.float32)],
        compiler_params=pltpu.CompilerParams(
            dimension_semantics=("parallel", "arbitrary"),
            vmem_limit_bytes=VMEM_LIMIT),
    )(y2, w1, b1, w2, b2)


# ---------------------------------------------------------------------------
# Kernel 3: ChannelPool planes (max / mean over channels of channel-gated x)
# ---------------------------------------------------------------------------

def _channel_pool_kernel(x_ref, cs_ref, o_ref, *, cout):
    x = x_ref[0] * cs_ref[0, 0, :]                            # (h2, w2, coutp)
    coutp = x.shape[-1]
    cmask = jax.lax.broadcasted_iota(jnp.int32, (1, 1, coutp), 2) < cout
    o_ref[0, 0] = jnp.max(jnp.where(cmask, x, -jnp.inf), axis=-1)
    # padded channels are exactly zero, so a plain sum * (1/cout) is the true mean
    o_ref[0, 1] = jnp.sum(x, axis=-1) * (1.0 / cout)


def channel_pool_planes(y2s, cscale, *, cout):
    n, h2, w2, coutp = y2s.shape
    return pl.pallas_call(
        functools.partial(_channel_pool_kernel, cout=cout),
        out_shape=jax.ShapeDtypeStruct((n, 2, h2, w2), jnp.float32),
        grid=(n,),
        in_specs=[pl.BlockSpec((1, h2, w2, coutp), lambda i: (i, 0, 0, 0)),
                  pl.BlockSpec((1, 1, coutp), lambda i: (i, 0, 0))],
        out_specs=pl.BlockSpec((1, 2, h2, w2), lambda i: (i, 0, 0, 0)),
        compiler_params=pltpu.CompilerParams(
            dimension_semantics=("parallel",),
            vmem_limit_bytes=VMEM_LIMIT),
    )(y2s, cscale)


# ---------------------------------------------------------------------------
# Kernel 4: fused epilogue
#   spatial 7x7 direct conv (VPU) + BN -> sigmoid gate; channel scale;
#   residual (fused 1x1 stride-2 DownSample matmul + BN, or identity); ReLU.
# ---------------------------------------------------------------------------

def _spatial_gate(pool_ref, spw_ref, spab_ref, h2, w2):
    logit = jnp.zeros((h2, w2), jnp.float32)
    for c in range(2):
        plane = pool_ref[0, c]                                # (h2+6, w2+6)
        for di in range(7):
            for dj in range(7):
                logit = logit + spw_ref[c * 49 + di * 7 + dj] * plane[di:di + h2, dj:dj + w2]
    return jax.nn.sigmoid(logit * spab_ref[0] + spab_ref[1])


def _epilogue_ds_kernel(y_ref, cs_ref, pool_ref, spw_ref, spab_ref,
                        xs_ref, wds_ref, sds_ref, bds_ref, o_ref, *, h2, w2):
    gate = _spatial_gate(pool_ref, spw_ref, spab_ref, h2, w2)
    xg = y_ref[0] * cs_ref[0, 0, :]                           # (h2, w2, coutp)
    r = jnp.dot(xs_ref[0].astype(jnp.bfloat16), wds_ref[...],
                preferred_element_type=jnp.float32)
    r = r * sds_ref[...] + bds_ref[...]                       # (h2*w2, coutp)
    res = r.reshape(h2, w2, r.shape[-1])
    o_ref[0] = jnp.maximum(xg * gate[:, :, None] + res, 0.0)


def _epilogue_id_kernel(y_ref, cs_ref, pool_ref, spw_ref, spab_ref,
                        res_ref, o_ref, *, h2, w2):
    gate = _spatial_gate(pool_ref, spw_ref, spab_ref, h2, w2)
    xg = y_ref[0] * cs_ref[0, 0, :]
    o_ref[0] = jnp.maximum(xg * gate[:, :, None] + res_ref[0], 0.0)


def epilogue_ds(y2s, cscale, pooled_pad, sp_w, sp_ab, xs, wds, sds, bds):
    n, h2, w2, coutp = y2s.shape
    hp, wp = h2 + 6, w2 + 6
    hw = h2 * w2
    cin = xs.shape[-1]
    return pl.pallas_call(
        functools.partial(_epilogue_ds_kernel, h2=h2, w2=w2),
        out_shape=jax.ShapeDtypeStruct((n, h2, w2, coutp), jnp.float32),
        grid=(n,),
        in_specs=[
            pl.BlockSpec((1, h2, w2, coutp), lambda i: (i, 0, 0, 0)),
            pl.BlockSpec((1, 1, coutp), lambda i: (i, 0, 0)),
            pl.BlockSpec((1, 2, hp, wp), lambda i: (i, 0, 0, 0)),
            SMEM_SPEC, SMEM_SPEC,
            pl.BlockSpec((1, hw, cin), lambda i: (i, 0, 0)),
            pl.BlockSpec((cin, coutp), lambda i: (0, 0)),
            pl.BlockSpec((1, coutp), lambda i: (0, 0)),
            pl.BlockSpec((1, coutp), lambda i: (0, 0)),
        ],
        out_specs=pl.BlockSpec((1, h2, w2, coutp), lambda i: (i, 0, 0, 0)),
        compiler_params=pltpu.CompilerParams(
            dimension_semantics=("parallel",),
            vmem_limit_bytes=VMEM_LIMIT),
    )(y2s, cscale, pooled_pad, sp_w, sp_ab, xs, wds, sds, bds)


def epilogue_identity(y2s, cscale, pooled_pad, sp_w, sp_ab, resid):
    n, h2, w2, coutp = y2s.shape
    hp, wp = h2 + 6, w2 + 6
    return pl.pallas_call(
        functools.partial(_epilogue_id_kernel, h2=h2, w2=w2),
        out_shape=jax.ShapeDtypeStruct((n, h2, w2, coutp), jnp.float32),
        grid=(n,),
        in_specs=[
            pl.BlockSpec((1, h2, w2, coutp), lambda i: (i, 0, 0, 0)),
            pl.BlockSpec((1, 1, coutp), lambda i: (i, 0, 0)),
            pl.BlockSpec((1, 2, hp, wp), lambda i: (i, 0, 0, 0)),
            SMEM_SPEC, SMEM_SPEC,
            pl.BlockSpec((1, h2, w2, coutp), lambda i: (i, 0, 0, 0)),
        ],
        out_specs=pl.BlockSpec((1, h2, w2, coutp), lambda i: (i, 0, 0, 0)),
        compiler_params=pltpu.CompilerParams(
            dimension_semantics=("parallel",),
            vmem_limit_bytes=VMEM_LIMIT),
    )(y2s, cscale, pooled_pad, sp_w, sp_ab, resid)


PALLAS_OPS = dict(conv3x3=conv3x3_bn, channel_att=channel_attention,
                  channel_pool=channel_pool_planes,
                  epilogue_ds=epilogue_ds, epilogue=epilogue_identity)


# ---------------------------------------------------------------------------
# Pure-jnp reference versions of the same math (validation only)
# ---------------------------------------------------------------------------

def _ref_conv3x3(x, w9, scale, bias, *, stride, relu):
    n, h, w_, cin = x.shape
    coutp = w9.shape[-1]
    xp = jnp.pad(x, ((0, 0), (1, 1), (1, 1), (0, 0)))
    ho = (h + 2 - 3) // stride + 1
    wo = (w_ + 2 - 3) // stride + 1
    acc = jnp.zeros((n, ho, wo, coutp), jnp.float32)
    for di in range(3):
        for dj in range(3):
            win = xp[:, di:di + stride * (ho - 1) + 1:stride,
                     dj:dj + stride * (wo - 1) + 1:stride, :]
            acc = acc + jnp.einsum('nhwc,co->nhwo', win.astype(jnp.bfloat16),
                                   w9[di * 3 + dj],
                                   preferred_element_type=jnp.float32)
    y = acc * scale[0] + bias[0]
    if relu:
        y = jnp.maximum(y, 0.0)
    return y.reshape(n, ho * wo, coutp), (ho, wo)


def _ref_channel_att(y2, w1, b1, w2, b2):
    hw = y2.shape[1]
    avg = jnp.sum(y2, axis=1) / hw
    mx = jnp.max(y2, axis=1)

    def mlp(v):
        return jnp.maximum(v @ w1 + b1, 0.0) @ w2 + b2

    return jax.nn.sigmoid(mlp(avg) + mlp(mx))[:, None, :]


def _ref_channel_pool(y2s, cscale, *, cout):
    xg = y2s * cscale[:, :, None, :]
    cmask = jnp.arange(xg.shape[-1]) < cout
    xmax = jnp.max(jnp.where(cmask, xg, -jnp.inf), axis=-1)
    xmean = jnp.sum(xg, axis=-1) / cout
    return jnp.stack([xmax, xmean], axis=1)


def _ref_spatial_gate(pooled_pad, sp_w, sp_ab):
    n, _, hp, wp = pooled_pad.shape
    h2, w2 = hp - 6, wp - 6
    logit = jnp.zeros((n, h2, w2), jnp.float32)
    for c in range(2):
        for di in range(7):
            for dj in range(7):
                logit = logit + sp_w[c * 49 + di * 7 + dj] * \
                    pooled_pad[:, c, di:di + h2, dj:dj + w2]
    return jax.nn.sigmoid(logit * sp_ab[0] + sp_ab[1])


def _ref_epilogue_ds(y2s, cscale, pooled_pad, sp_w, sp_ab, xs, wds, sds, bds):
    gate = _ref_spatial_gate(pooled_pad, sp_w, sp_ab)
    xg = y2s * cscale[:, :, None, :]
    r = jnp.dot(xs.astype(jnp.bfloat16), wds, preferred_element_type=jnp.float32)
    r = r * sds + bds
    n, h2, w2, coutp = y2s.shape
    res = r.reshape(n, h2, w2, coutp)
    return jnp.maximum(xg * gate[..., None] + res, 0.0)


def _ref_epilogue_identity(y2s, cscale, pooled_pad, sp_w, sp_ab, resid):
    gate = _ref_spatial_gate(pooled_pad, sp_w, sp_ab)
    xg = y2s * cscale[:, :, None, :]
    return jnp.maximum(xg * gate[..., None] + resid, 0.0)


REF_OPS = dict(conv3x3=_ref_conv3x3, channel_att=_ref_channel_att,
               channel_pool=_ref_channel_pool,
               epilogue_ds=_ref_epilogue_ds, epilogue=_ref_epilogue_identity)


# ---------------------------------------------------------------------------
# Parameter init, BN folding / channel padding, full forward
# ---------------------------------------------------------------------------

def bn_init(key, c):
    k1, k2, k3, k4 = jax.random.split(key, 4)
    return dict(
        gamma=jax.random.uniform(k1, (c,), jnp.float32, 0.5, 1.5),
        beta=0.1 * jax.random.normal(k2, (c,), jnp.float32),
        mean=0.1 * jax.random.normal(k3, (c,), jnp.float32),
        var=jax.random.uniform(k4, (c,), jnp.float32, 0.5, 1.5),
    )


def init_params(key, cin, cout):
    keys = jax.random.split(key, 16)
    cr = max(cout // 16, 1)  # ChannelGate reduction_ratio = 16
    return {
        'conv1_w': 0.1 * jax.random.normal(keys[0], (3, 3, cin, cout), jnp.float32),
        'conv1_b': 0.1 * jax.random.normal(keys[1], (cout,), jnp.float32),
        'bn1': bn_init(keys[2], cout),
        'conv2_w': 0.1 * jax.random.normal(keys[3], (3, 3, cout, cout), jnp.float32),
        'conv2_b': 0.1 * jax.random.normal(keys[4], (cout,), jnp.float32),
        'bn2': bn_init(keys[5], cout),
        'mlp_w1': 0.2 * jax.random.normal(keys[6], (cout, cr), jnp.float32),
        'mlp_b1': 0.1 * jax.random.normal(keys[7], (cr,), jnp.float32),
        'mlp_w2': 0.2 * jax.random.normal(keys[8], (cr, cout), jnp.float32),
        'mlp_b2': 0.1 * jax.random.normal(keys[9], (cout,), jnp.float32),
        'sp_w': 0.1 * jax.random.normal(keys[10], (7, 7, 2, 1), jnp.float32),
        'sp_bn': bn_init(keys[11], 1),
        'ds_w': 0.1 * jax.random.normal(keys[12], (1, 1, cin, cout), jnp.float32),
        'ds_b': 0.1 * jax.random.normal(keys[13], (cout,), jnp.float32),
        'ds_bn': bn_init(keys[14], cout),
    }


def fold_bn(bn, conv_bias=None, eps=1e-5):
    scale = bn['gamma'] / jnp.sqrt(bn['var'] + eps)
    bias = bn['beta'] - bn['mean'] * scale
    if conv_bias is not None:
        bias = bias + conv_bias * scale
    return scale, bias


def _pad_last(a, size):
    return jnp.pad(a, [(0, 0)] * (a.ndim - 1) + [(0, size - a.shape[-1])])


def prep_params(raw, cin, cout):
    """Fold BN, pad channels to 128 lanes, pre-cast MXU weights to bf16."""
    coutp = max(128, _round_up(cout, 128))
    cr = max(cout // 16, 1)
    crp = 128
    p = {}
    s1, b1 = fold_bn(raw['bn1'], raw['conv1_b'])
    p['conv1_w9'] = _pad_last(raw['conv1_w'].reshape(9, cin, cout), coutp).astype(jnp.bfloat16)
    p['conv1_s'] = _pad_last(s1[None, :], coutp)
    p['conv1_b'] = _pad_last(b1[None, :], coutp)

    w2 = raw['conv2_w'].reshape(9, cout, cout)
    w2 = jnp.pad(w2, ((0, 0), (0, coutp - cout), (0, coutp - cout)))
    s2, b2 = fold_bn(raw['bn2'], raw['conv2_b'])
    p['conv2_w9'] = w2.astype(jnp.bfloat16)
    p['conv2_s'] = _pad_last(s2[None, :], coutp)
    p['conv2_b'] = _pad_last(b2[None, :], coutp)

    p['mlp_w1'] = jnp.pad(raw['mlp_w1'], ((0, coutp - cout), (0, crp - cr)))
    p['mlp_b1'] = _pad_last(raw['mlp_b1'][None, :], crp)
    p['mlp_w2'] = jnp.pad(raw['mlp_w2'], ((0, crp - cr), (0, coutp - cout)))
    p['mlp_b2'] = _pad_last(raw['mlp_b2'][None, :], coutp)

    ssp, bsp = fold_bn(raw['sp_bn'])
    p['sp_w'] = jnp.transpose(raw['sp_w'][:, :, :, 0], (2, 0, 1)).reshape(98)
    p['sp_ab'] = jnp.stack([ssp[0], bsp[0]])

    sds, bds = fold_bn(raw['ds_bn'], raw['ds_b'])
    p['ds_w'] = _pad_last(raw['ds_w'].reshape(cin, cout), coutp).astype(jnp.bfloat16)
    p['ds_s'] = _pad_last(sds[None, :], coutp)
    p['ds_b'] = _pad_last(bds[None, :], coutp)
    return p


def basic_block_forward(x_nchw, params, *, stride, down_sample, cout, ops=PALLAS_OPS):
    x = jnp.transpose(x_nchw, (0, 2, 3, 1)).astype(jnp.float32)   # NCHW -> NHWC
    n, h, w, cin = x.shape
    coutp = params['conv1_w9'].shape[-1]

    if down_sample:
        assert stride == 2, "DownSample residual implies a stride-2 block"
    else:
        assert stride == 1 and cin == cout, "identity residual needs matching shapes"

    # conv1 (3x3, s=1, p=1) + bn1 + relu1
    y1, (h1, w1) = ops['conv3x3'](x, params['conv1_w9'], params['conv1_s'],
                                  params['conv1_b'], stride=1, relu=True)
    y1 = y1.reshape(n, h1, w1, coutp)

    # conv2 (3x3, s=stride, p=1) + bn2
    y2, (h2, w2) = ops['conv3x3'](y1, params['conv2_w9'], params['conv2_s'],
                                  params['conv2_b'], stride=stride, relu=False)

    # CBAM ChannelGate: tiled avg/max reduction + shared MLP + sigmoid
    cscale = ops['channel_att'](y2, params['mlp_w1'], params['mlp_b1'],
                                params['mlp_w2'], params['mlp_b2'])
    y2s = y2.reshape(n, h2, w2, coutp)

    # CBAM SpatialGate channel-pool planes (max / mean over true channels of xg)
    pooled = ops['channel_pool'](y2s, cscale, cout=cout)
    pooled_pad = jnp.pad(pooled, ((0, 0), (0, 0), (3, 3), (3, 3)))

    if down_sample:
        xs = x[:, ::2, ::2, :][:, :h2, :w2, :].reshape(n, h2 * w2, cin)
        out = ops['epilogue_ds'](y2s, cscale, pooled_pad, params['sp_w'], params['sp_ab'],
                                 xs, params['ds_w'], params['ds_s'], params['ds_b'])
    else:
        resid = jnp.pad(x, ((0, 0), (0, 0), (0, 0), (0, coutp - cin)))
        out = ops['epilogue'](y2s, cscale, pooled_pad, params['sp_w'], params['sp_ab'],
                              resid)

    out = out[..., :cout]
    return jnp.transpose(out, (0, 3, 1, 2))                      # -> NCHW


if __name__ == "__main__":
    key = jax.random.PRNGKey(0)
    kx, kp, kx2, kp2 = jax.random.split(key, 4)

    # Config 1: down-sampling block (stride=2, DownSample residual).
    N, CIN, H, W, COUT = 2, 16, 16, 16, 32
    x = jax.random.normal(kx, (N, CIN, H, W), jnp.float32)
    params = prep_params(init_params(kp, CIN, COUT), CIN, COUT)

    fwd = jax.jit(functools.partial(basic_block_forward, stride=2,
                                    down_sample=True, cout=COUT))
    out = jax.block_until_ready(fwd(x, params))
    assert out.shape == (N, COUT, H // 2, W // 2)

    ref_fwd = jax.jit(functools.partial(basic_block_forward, stride=2,
                                        down_sample=True, cout=COUT, ops=REF_OPS))
    ref = jax.block_until_ready(ref_fwd(x, params))
    np.testing.assert_allclose(np.asarray(out), np.asarray(ref), rtol=2e-2, atol=2e-2)

    # Config 2: identity-residual block (stride=1, cin == cout).
    N2, C2, H2, W2 = 2, 32, 8, 8
    x2 = jax.random.normal(kx2, (N2, C2, H2, W2), jnp.float32)
    params2 = prep_params(init_params(kp2, C2, C2), C2, C2)

    fwd2 = jax.jit(functools.partial(basic_block_forward, stride=1,
                                     down_sample=False, cout=C2))
    out2 = jax.block_until_ready(fwd2(x2, params2))
    assert out2.shape == (N2, C2, H2, W2)

    ref_fwd2 = jax.jit(functools.partial(basic_block_forward, stride=1,
                                         down_sample=False, cout=C2, ops=REF_OPS))
    ref2 = jax.block_until_ready(ref_fwd2(x2, params2))
    np.testing.assert_allclose(np.asarray(out2), np.asarray(ref2), rtol=2e-2, atol=2e-2)

    print("KERNEL_OK")
</pallas_src>

<mosaic_0001>
module attributes {stable_mosaic.version = 11 : i64} {
  func.func @_conv3x3_kernel(%arg0: i32, %arg1: memref<1x1x18x18x16xf32, #tpu.memory_space<vmem>>, %arg2: memref<9x16x128xbf16, #tpu.memory_space<vmem>>, %arg3: memref<1x128xf32, #tpu.memory_space<vmem>>, %arg4: memref<1x128xf32, #tpu.memory_space<vmem>>, %arg5: memref<1x256x128xf32, #tpu.memory_space<vmem>>) attributes {dimension_semantics = [#tpu.dimension_semantics<parallel>], iteration_bounds = array<i64: 2>, scalar_prefetch = 0 : i64, scratch_operands = 0 : i64, tpu.core_type = #tpu.core_type<tc>, window_params = [{transform_indices = @transform_0, window_bounds = array<i64: 1, 1, 18, 18, 16>}, {pipeline_mode = #tpu.pipeline_mode<synchronous>, transform_indices = @transform_1, window_bounds = array<i64: 9, 16, 128>}, {pipeline_mode = #tpu.pipeline_mode<synchronous>, transform_indices = @transform_2, window_bounds = array<i64: 1, 128>}, {pipeline_mode = #tpu.pipeline_mode<synchronous>, transform_indices = @transform_3, window_bounds = array<i64: 1, 128>}, {transform_indices = @transform_4, window_bounds = array<i64: 1, 256, 128>}]} {
    %c0 = arith.constant 0 : index
    %c0_0 = arith.constant 0 : index
    %c0_1 = arith.constant 0 : index
    %c0_2 = arith.constant 0 : index
    %c0_3 = arith.constant 0 : index
    %0 = vector.load %arg1[%c0, %c0_0, %c0_1, %c0_2, %c0_3] : memref<1x1x18x18x16xf32, #tpu.memory_space<vmem>>, vector<1x1x16x16x16xf32>
    %1 = vector.shape_cast %0 : vector<1x1x16x16x16xf32> to vector<16x16x16xf32>
    %2 = vector.shape_cast %1 : vector<16x16x16xf32> to vector<256x16xf32>
    %3 = arith.truncf %2 : vector<256x16xf32> to vector<256x16xbf16>
    %c0_4 = arith.constant 0 : index
    %c0_5 = arith.constant 0 : index
    %c0_6 = arith.constant 0 : index
    %4 = vector.load %arg2[%c0_4, %c0_5, %c0_6] : memref<9x16x128xbf16, #tpu.memory_space<vmem>>, vector<1x16x128xbf16>
    %5 = vector.shape_cast %4 : vector<1x16x128xbf16> to vector<16x128xbf16>
    %cst = arith.constant dense<0.000000e+00> : vector<256x128xf32>
    %6 = tpu.matmul %3, %5, %cst {dimension_numbers = #tpu.dot_dimension_numbers<[1], [0], [0], [1], [0, 0, 1, 1], [], []>} : vector<256x16xbf16>, vector<16x128xbf16>, vector<256x128xf32> -> vector<256x128xf32>
    %c0_7 = arith.constant 0 : index
    %c0_8 = arith.constant 0 : index
    %c0_9 = arith.constant 0 : index
    %c1 = arith.constant 1 : index
    %c0_10 = arith.constant 0 : index
    %7 = vector.load %arg1[%c0_7, %c0_8, %c0_9, %c1, %c0_10] : memref<1x1x18x18x16xf32, #tpu.memory_space<vmem>>, vector<1x1x16x16x16xf32>
    %8 = vector.shape_cast %7 : vector<1x1x16x16x16xf32> to vector<16x16x16xf32>
    %9 = vector.shape_cast %8 : vector<16x16x16xf32> to vector<256x16xf32>
    %10 = arith.truncf %9 : vector<256x16xf32> to vector<256x16xbf16>
    %c1_11 = arith.constant 1 : index
    %c0_12 = arith.constant 0 : index
    %c0_13 = arith.constant 0 : index
    %11 = vector.load %arg2[%c1_11, %c0_12, %c0_13] : memref<9x16x128xbf16, #tpu.memory_space<vmem>>, vector<1x16x128xbf16>
    %12 = vector.shape_cast %11 : vector<1x16x128xbf16> to vector<16x128xbf16>
    %cst_14 = arith.constant dense<0.000000e+00> : vector<256x128xf32>
    %13 = tpu.matmul %10, %12, %cst_14 {dimension_numbers = #tpu.dot_dimension_numbers<[1], [0], [0], [1], [0, 0, 1, 1], [], []>} : vector<256x16xbf16>, vector<16x128xbf16>, vector<256x128xf32> -> vector<256x128xf32>
    %14 = arith.addf %6, %13 : vector<256x128xf32>
    %c0_15 = arith.constant 0 : index
    %c0_16 = arith.constant 0 : index
    %c0_17 = arith.constant 0 : index
    %c2 = arith.constant 2 : index
    %c0_18 = arith.constant 0 : index
    %15 = vector.load %arg1[%c0_15, %c0_16, %c0_17, %c2, %c0_18] : memref<1x1x18x18x16xf32, #tpu.memory_space<vmem>>, vector<1x1x16x16x16xf32>
    %16 = vector.shape_cast %15 : vector<1x1x16x16x16xf32> to vector<16x16x16xf32>
    %17 = vector.shape_cast %16 : vector<16x16x16xf32> to vector<256x16xf32>
    %18 = arith.truncf %17 : vector<256x16xf32> to vector<256x16xbf16>
    %c2_19 = arith.constant 2 : index
    %c0_20 = arith.constant 0 : index
    %c0_21 = arith.constant 0 : index
    %19 = vector.load %arg2[%c2_19, %c0_20, %c0_21] : memref<9x16x128xbf16, #tpu.memory_space<vmem>>, vector<1x16x128xbf16>
    %20 = vector.shape_cast %19 : vector<1x16x128xbf16> to vector<16x128xbf16>
    %cst_22 = arith.constant dense<0.000000e+00> : vector<256x128xf32>
    %21 = tpu.matmul %18, %20, %cst_22 {dimension_numbers = #tpu.dot_dimension_numbers<[1], [0], [0], [1], [0, 0, 1, 1], [], []>} : vector<256x16xbf16>, vector<16x128xbf16>, vector<256x128xf32> -> vector<256x128xf32>
    %22 = arith.addf %14, %21 : vector<256x128xf32>
    %c0_23 = arith.constant 0 : index
    %c0_24 = arith.constant 0 : index
    %c1_25 = arith.constant 1 : index
    %c0_26 = arith.constant 0 : index
    %c0_27 = arith.constant 0 : index
    %23 = vector.load %arg1[%c0_23, %c0_24, %c1_25, %c0_26, %c0_27] : memref<1x1x18x18x16xf32, #tpu.memory_space<vmem>>, vector<1x1x16x16x16xf32>
    %24 = vector.shape_cast %23 : vector<1x1x16x16x16xf32> to vector<16x16x16xf32>
    %25 = vector.shape_cast %24 : vector<16x16x16xf32> to vector<256x16xf32>
    %26 = arith.truncf %25 : vector<256x16xf32> to vector<256x16xbf16>
    %c3 = arith.constant 3 : index
    %c0_28 = arith.constant 0 : index
    %c0_29 = arith.constant 0 : index
    %27 = vector.load %arg2[%c3, %c0_28, %c0_29] : memref<9x16x128xbf16, #tpu.memory_space<vmem>>, vector<1x16x128xbf16>
    %28 = vector.shape_cast %27 : vector<1x16x128xbf16> to vector<16x128xbf16>
    %cst_30 = arith.constant dense<0.000000e+00> : vector<256x128xf32>
    %29 = tpu.matmul %26, %28, %cst_30 {dimension_numbers = #tpu.dot_dimension_numbers<[1], [0], [0], [1], [0, 0, 1, 1], [], []>} : vector<256x16xbf16>, vector<16x128xbf16>, vector<256x128xf32> -> vector<256x128xf32>
    %30 = arith.addf %22, %29 : vector<256x128xf32>
    %c0_31 = arith.constant 0 : index
    %c0_32 = arith.constant 0 : index
    %c1_33 = arith.constant 1 : index
    %c1_34 = arith.constant 1 : index
    %c0_35 = arith.constant 0 : index
    %31 = vector.load %arg1[%c0_31, %c0_32, %c1_33, %c1_34, %c0_35] : memref<1x1x18x18x16xf32, #tpu.memory_space<vmem>>, vector<1x1x16x16x16xf32>
    %32 = vector.shape_cast %31 : vector<1x1x16x16x16xf32> to vector<16x16x16xf32>
    %33 = vector.shape_cast %32 : vector<16x16x16xf32> to vector<256x16xf32>
    %34 = arith.truncf %33 : vector<256x16xf32> to vector<256x16xbf16>
    %c4 = arith.constant 4 : index
    %c0_36 = arith.constant 0 : index
    %c0_37 = arith.constant 0 : index
    %35 = vector.load %arg2[%c4, %c0_36, %c0_37] : memref<9x16x128xbf16, #tpu.memory_space<vmem>>, vector<1x16x128xbf16>
    %36 = vector.shape_cast %35 : vector<1x16x128xbf16> to vector<16x128xbf16>
    %cst_38 = arith.constant dense<0.000000e+00> : vector<256x128xf32>
    %37 = tpu.matmul %34, %36, %cst_38 {dimension_numbers = #tpu.dot_dimension_numbers<[1], [0], [0], [1], [0, 0, 1, 1], [], []>} : vector<256x16xbf16>, vector<16x128xbf16>, vector<256x128xf32> -> vector<256x128xf32>
    %38 = arith.addf %30, %37 : vector<256x128xf32>
    %c0_39 = arith.constant 0 : index
    %c0_40 = arith.constant 0 : index
    %c1_41 = arith.constant 1 : index
    %c2_42 = arith.constant 2 : index
    %c0_43 = arith.constant 0 : index
    %39 = vector.load %arg1[%c0_39, %c0_40, %c1_41, %c2_42, %c0_43] : memref<1x1x18x18x16xf32, #tpu.memory_space<vmem>>, vector<1x1x16x16x16xf32>
    %40 = vector.shape_cast %39 : vector<1x1x16x16x16xf32> to vector<16x16x16xf32>
    %41 = vector.shape_cast %40 : vector<16x16x16xf32> to vector<256x16xf32>
    %42 = arith.truncf %41 : vector<256x16xf32> to vector<256x16xbf16>
    %c5 = arith.constant 5 : index
    %c0_44 = arith.constant 0 : index
    %c0_45 = arith.constant 0 : index
    %43 = vector.load %arg2[%c5, %c0_44, %c0_45] : memref<9x16x128xbf16, #tpu.memory_space<vmem>>, vector<1x16x128xbf16>
    %44 = vector.shape_cast %43 : vector<1x16x128xbf16> to vector<16x128xbf16>
    %cst_46 = arith.constant dense<0.000000e+00> : vector<256x128xf32>
    %45 = tpu.matmul %42, %44, %cst_46 {dimension_numbers = #tpu.dot_dimension_numbers<[1], [0], [0], [1], [0, 0, 1, 1], [], []>} : vector<256x16xbf16>, vector<16x128xbf16>, vector<256x128xf32> -> vector<256x128xf32>
    %46 = arith.addf %38, %45 : vector<256x128xf32>
    %c0_47 = arith.constant 0 : index
    %c0_48 = arith.constant 0 : index
    %c2_49 = arith.constant 2 : index
    %c0_50 = arith.constant 0 : index
    %c0_51 = arith.constant 0 : index
    %47 = vector.load %arg1[%c0_47, %c0_48, %c2_49, %c0_50, %c0_51] : memref<1x1x18x18x16xf32, #tpu.memory_space<vmem>>, vector<1x1x16x16x16xf32>
    %48 = vector.shape_cast %47 : vector<1x1x16x16x16xf32> to vector<16x16x16xf32>
    %49 = vector.shape_cast %48 : vector<16x16x16xf32> to vector<256x16xf32>
    %50 = arith.truncf %49 : vector<256x16xf32> to vector<256x16xbf16>
    %c6 = arith.constant 6 : index
    %c0_52 = arith.constant 0 : index
    %c0_53 = arith.constant 0 : index
    %51 = vector.load %arg2[%c6, %c0_52, %c0_53] : memref<9x16x128xbf16, #tpu.memory_space<vmem>>, vector<1x16x128xbf16>
    %52 = vector.shape_cast %51 : vector<1x16x128xbf16> to vector<16x128xbf16>
    %cst_54 = arith.constant dense<0.000000e+00> : vector<256x128xf32>
    %53 = tpu.matmul %50, %52, %cst_54 {dimension_numbers = #tpu.dot_dimension_numbers<[1], [0], [0], [1], [0, 0, 1, 1], [], []>} : vector<256x16xbf16>, vector<16x128xbf16>, vector<256x128xf32> -> vector<256x128xf32>
    %54 = arith.addf %46, %53 : vector<256x128xf32>
    %c0_55 = arith.constant 0 : index
    %c0_56 = arith.constant 0 : index
    %c2_57 = arith.constant 2 : index
    %c1_58 = arith.constant 1 : index
    %c0_59 = arith.constant 0 : index
    %55 = vector.load %arg1[%c0_55, %c0_56, %c2_57, %c1_58, %c0_59] : memref<1x1x18x18x16xf32, #tpu.memory_space<vmem>>, vector<1x1x16x16x16xf32>
    %56 = vector.shape_cast %55 : vector<1x1x16x16x16xf32> to vector<16x16x16xf32>
    %57 = vector.shape_cast %56 : vector<16x16x16xf32> to vector<256x16xf32>
    %58 = arith.truncf %57 : vector<256x16xf32> to vector<256x16xbf16>
    %c7 = arith.constant 7 : index
    %c0_60 = arith.constant 0 : index
    %c0_61 = arith.constant 0 : index
    %59 = vector.load %arg2[%c7, %c0_60, %c0_61] : memref<9x16x128xbf16, #tpu.memory_space<vmem>>, vector<1x16x128xbf16>
    %60 = vector.shape_cast %59 : vector<1x16x128xbf16> to vector<16x128xbf16>
    %cst_62 = arith.constant dense<0.000000e+00> : vector<256x128xf32>
    %61 = tpu.matmul %58, %60, %cst_62 {dimension_numbers = #tpu.dot_dimension_numbers<[1], [0], [0], [1], [0, 0, 1, 1], [], []>} : vector<256x16xbf16>, vector<16x128xbf16>, vector<256x128xf32> -> vector<256x128xf32>
    %62 = arith.addf %54, %61 : vector<256x128xf32>
    %c0_63 = arith.constant 0 : index
    %c0_64 = arith.constant 0 : index
    %c2_65 = arith.constant 2 : index
    %c2_66 = arith.constant 2 : index
    %c0_67 = arith.constant 0 : index
    %63 = vector.load %arg1[%c0_63, %c0_64, %c2_65, %c2_66, %c0_67] : memref<1x1x18x18x16xf32, #tpu.memory_space<vmem>>, vector<1x1x16x16x16xf32>
    %64 = vector.shape_cast %63 : vector<1x1x16x16x16xf32> to vector<16x16x16xf32>
    %65 = vector.shape_cast %64 : vector<16x16x16xf32> to vector<256x16xf32>
    %66 = arith.truncf %65 : vector<256x16xf32> to vector<256x16xbf16>
    %c8 = arith.constant 8 : index
    %c0_68 = arith.constant 0 : index
    %c0_69 = arith.constant 0 : index
    %67 = vector.load %arg2[%c8, %c0_68, %c0_69] : memref<9x16x128xbf16, #tpu.memory_space<vmem>>, vector<1x16x128xbf16>
    %68 = vector.shape_cast %67 : vector<1x16x128xbf16> to vector<16x128xbf16>
    %cst_70 = arith.constant dense<0.000000e+00> : vector<256x128xf32>
    %69 = tpu.matmul %66, %68, %cst_70 {dimension_numbers = #tpu.dot_dimension_numbers<[1], [0], [0], [1], [0, 0, 1, 1], [], []>} : vector<256x16xbf16>, vector<16x128xbf16>, vector<256x128xf32> -> vector<256x128xf32>
    %70 = arith.addf %62, %69 : vector<256x128xf32>
    %c0_71 = arith.constant 0 : index
    %c0_72 = arith.constant 0 : index
    %71 = vector.load %arg3[%c0_71, %c0_72] : memref<1x128xf32, #tpu.memory_space<vmem>>, vector<1x128xf32>
    %72 = vector.broadcast %71 : vector<1x128xf32> to vector<256x128xf32>
    %73 = arith.mulf %70, %72 : vector<256x128xf32>
    %c0_73 = arith.constant 0 : index
    %c0_74 = arith.constant 0 : index
    %74 = vector.load %arg4[%c0_73, %c0_74] : memref<1x128xf32, #tpu.memory_space<vmem>>, vector<1x128xf32>
    %75 = vector.broadcast %74 : vector<1x128xf32> to vector<256x128xf32>
    %76 = arith.addf %73, %75 : vector<256x128xf32>
    %cst_75 = arith.constant 0.000000e+00 : f32
    %77 = vector.broadcast %cst_75 : f32 to vector<256x128xf32>
    %78 = arith.maximumf %76, %77 : vector<256x128xf32>
    %c0_76 = arith.constant 0 : index
    %c0_77 = arith.constant 0 : index
    %c0_78 = arith.constant 0 : index
    %79 = vector.load %arg5[%c0_76, %c0_77, %c0_78] : memref<1x256x128xf32, #tpu.memory_space<vmem>>, vector<1x256x128xf32>
    %80 = vector.shape_cast %79 : vector<1x256x128xf32> to vector<256x128xf32>
    %81 = vector.shape_cast %78 : vector<256x128xf32> to vector<1x256x128xf32>
    tpu.vector_store %arg5[%c0_76, %c0_77, %c0_78], %81 {strides = array<i32>} : memref<1x256x128xf32, #tpu.memory_space<vmem>>, vector<1x256x128xf32>,
    return
  }
  func.func @transform_0(%arg0: i32) -> (i32, i32, i32, i32, i32) {
    %c0_i32 = arith.constant 0 : i32
    %c0_i32_0 = arith.constant 0 : i32
    %c0_i32_1 = arith.constant 0 : i32
    %c0_i32_2 = arith.constant 0 : i32
    %c0_i32_3 = arith.constant 0 : i32
    return %arg0, %c0_i32, %c0_i32_0, %c0_i32_1, %c0_i32_2 : i32, i32, i32, i32, i32
  }
  func.func @transform_1(%arg0: i32) -> (i32, i32, i32) {
    %c0_i32 = arith.constant 0 : i32
    %c0_i32_0 = arith.constant 0 : i32
    %c0_i32_1 = arith.constant 0 : i32
    %c0_i32_2 = arith.constant 0 : i32
    return %c0_i32, %c0_i32_0, %c0_i32_1 : i32, i32, i32
  }
  func.func @transform_2(%arg0: i32) -> (i32, i32) {
    %c0_i32 = arith.constant 0 : i32
    %c0_i32_0 = arith.constant 0 : i32
    %c0_i32_1 = arith.constant 0 : i32
    return %c0_i32, %c0_i32_0 : i32, i32
  }
  func.func @transform_3(%arg0: i32) -> (i32, i32) {
    %c0_i32 = arith.constant 0 : i32
    %c0_i32_0 = arith.constant 0 : i32
    %c0_i32_1 = arith.constant 0 : i32
    return %c0_i32, %c0_i32_0 : i32, i32
  }
  func.func @transform_4(%arg0: i32) -> (i32, i32, i32) {
    %c0_i32 = arith.constant 0 : i32
    %c0_i32_0 = arith.constant 0 : i32
    %c0_i32_1 = arith.constant 0 : i32
    return %arg0, %c0_i32, %c0_i32_0 : i32, i32, i32
  }
}

module attributes {stable_mosaic.version = 11 : i64} {
  func.func @_channel_att_kernel(%arg0: i32, %arg1: i32, %arg2: memref<1x64x128xf32, #tpu.memory_space<vmem>>, %arg3: memref<128x128xf32, #tpu.memory_space<vmem>>, %arg4: memref<1x128xf32, #tpu.memory_space<vmem>>, %arg5: memref<128x128xf32, #tpu.memory_space<vmem>>, %arg6: memref<1x128xf32, #tpu.memory_space<vmem>>, %arg7: memref<1x1x128xf32, #tpu.memory_space<vmem>>, %arg8: memref<1x128xf32, #tpu.memory_space<vmem>>, %arg9: memref<1x128xf32, #tpu.memory_space<vmem>>) attributes {dimension_semantics = [#tpu.dimension_semantics<parallel>, #tpu.dimension_semantics<arbitrary>], iteration_bounds = array<i64: 2, 1>, scalar_prefetch = 0 : i64, scratch_operands = 2 : i64, tpu.core_type = #tpu.core_type<tc>, window_params = [{transform_indices = @transform_0, window_bounds = array<i64: 1, 64, 128>}, {pipeline_mode = #tpu.pipeline_mode<synchronous>, transform_indices = @transform_1, window_bounds = array<i64: 128, 128>}, {pipeline_mode = #tpu.pipeline_mode<synchronous>, transform_indices = @transform_2, window_bounds = array<i64: 1, 128>}, {pipeline_mode = #tpu.pipeline_mode<synchronous>, transform_indices = @transform_3, window_bounds = array<i64: 128, 128>}, {pipeline_mode = #tpu.pipeline_mode<synchronous>, transform_indices = @transform_4, window_bounds = array<i64: 1, 128>}, {transform_indices = @transform_5, window_bounds = array<i64: 1, 1, 128>}]} {
    %c0_i32 = arith.constant 0 : i32
    %0 = arith.cmpi eq, %arg1, %c0_i32 : i32
    %1 = arith.extui %0 : i1 to i32
    %c0_i32_0 = arith.constant 0 : i32
    %2 = arith.cmpi ne, %1, %c0_i32_0 : i32
    scf.if %2 {
      %cst_14 = arith.constant 0.000000e+00 : f32
      %18 = vector.broadcast %cst_14 : f32 to vector<1x128xf32>
      %c0_15 = arith.constant 0 : index
      %c0_16 = arith.constant 0 : index
      %19 = vector.load %arg8[%c0_15, %c0_16] : memref<1x128xf32, #tpu.memory_space<vmem>>, vector<1x128xf32>
      tpu.vector_store %arg8[%c0_15, %c0_16], %18 {strides = array<i32>} : memref<1x128xf32, #tpu.memory_space<vmem>>, vector<1x128xf32>,
      %cst_17 = arith.constant 0xFF800000 : f32
      %20 = vector.broadcast %cst_17 : f32 to vector<1x128xf32>
      %c0_18 = arith.constant 0 : index
      %c0_19 = arith.constant 0 : index
      %21 = vector.load %arg9[%c0_18, %c0_19] : memref<1x128xf32, #tpu.memory_space<vmem>>, vector<1x128xf32>
      tpu.vector_store %arg9[%c0_18, %c0_19], %20 {strides = array<i32>} : memref<1x128xf32, #tpu.memory_space<vmem>>, vector<1x128xf32>,
    } else {
    }
    %c0 = arith.constant 0 : index
    %c0_1 = arith.constant 0 : index
    %c0_2 = arith.constant 0 : index
    %3 = vector.load %arg2[%c0, %c0_1, %c0_2] : memref<1x64x128xf32, #tpu.memory_space<vmem>>, vector<1x64x128xf32>
    %4 = vector.shape_cast %3 : vector<1x64x128xf32> to vector<64x128xf32>
    %c0_3 = arith.constant 0 : index
    %c0_4 = arith.constant 0 : index
    %5 = vector.load %arg8[%c0_3, %c0_4] : memref<1x128xf32, #tpu.memory_space<vmem>>, vector<1x128xf32>
    %cst = arith.constant dense<0.000000e+00> : vector<128xf32>
    %6 = vector.multi_reduction <add>, %4, %cst [0] : vector<64x128xf32> to vector<128xf32>
    %7 = vector.shape_cast %6 : vector<128xf32> to vector<1x128xf32>
    %8 = arith.addf %5, %7 : vector<1x128xf32>
    %c0_5 = arith.constant 0 : index
    %c0_6 = arith.constant 0 : index
    %9 = vector.load %arg8[%c0_5, %c0_6] : memref<1x128xf32, #tpu.memory_space<vmem>>, vector<1x128xf32>
    tpu.vector_store %arg8[%c0_5, %c0_6], %8 {strides = array<i32>} : memref<1x128xf32, #tpu.memory_space<vmem>>, vector<1x128xf32>,
    %c0_7 = arith.constant 0 : index
    %c0_8 = arith.constant 0 : index
    %10 = vector.load %arg9[%c0_7, %c0_8] : memref<1x128xf32, #tpu.memory_space<vmem>>, vector<1x128xf32>
    %cst_9 = arith.constant dense<0xFF800000> : vector<128xf32>
    %11 = vector.multi_reduction <maximumf>, %4, %cst_9 [0] : vector<64x128xf32> to vector<128xf32>
    %12 = vector.shape_cast %11 : vector<128xf32> to vector<1x128xf32>
    %13 = arith.maximumf %10, %12 : vector<1x128xf32>
    %c0_10 = arith.constant 0 : index
    %c0_11 = arith.constant 0 : index
    %14 = vector.load %arg9[%c0_10, %c0_11] : memref<1x128xf32, #tpu.memory_space<vmem>>, vector<1x128xf32>
    tpu.vector_store %arg9[%c0_10, %c0_11], %13 {strides = array<i32>} : memref<1x128xf32, #tpu.memory_space<vmem>>, vector<1x128xf32>,
    %c0_i32_12 = arith.constant 0 : i32
    %15 = arith.cmpi eq, %arg1, %c0_i32_12 : i32
    %16 = arith.extui %15 : i1 to i32
    %c0_i32_13 = arith.constant 0 : i32
    %17 = arith.cmpi ne, %16, %c0_i32_13 : i32
    scf.if %17 {
      %c0_14 = arith.constant 0 : index
      %c0_15 = arith.constant 0 : index
      %18 = vector.load %arg8[%c0_14, %c0_15] : memref<1x128xf32, #tpu.memory_space<vmem>>, vector<1x128xf32>
      %cst_16 = arith.constant 1.562500e-02 : f32
      %19 = vector.broadcast %cst_16 : f32 to vector<1x128xf32>
      %20 = arith.mulf %18, %19 : vector<1x128xf32>
      %c0_17 = arith.constant 0 : index
      %c0_18 = arith.constant 0 : index
      %21 = vector.load %arg9[%c0_17, %c0_18] : memref<1x128xf32, #tpu.memory_space<vmem>>, vector<1x128xf32>
      %c0_19 = arith.constant 0 : index
      %c0_20 = arith.constant 0 : index
      %22 = vector.load %arg3[%c0_19, %c0_20] : memref<128x128xf32, #tpu.memory_space<vmem>>, vector<128x128xf32>
      %cst_21 = arith.constant dense<0.000000e+00> : vector<1x128xf32>
      %23 = tpu.matmul %20, %22, %cst_21 {dimension_numbers = #tpu.dot_dimension_numbers<[1], [0], [0], [1], [0, 0, 1, 1], [], []>} : vector<1x128xf32>, vector<128x128xf32>, vector<1x128xf32> -> vector<1x128xf32>
      %c0_22 = arith.constant 0 : index
      %c0_23 = arith.constant 0 : index
      %24 = vector.load %arg4[%c0_22, %c0_23] : memref<1x128xf32, #tpu.memory_space<vmem>>, vector<1x128xf32>
      %25 = arith.addf %23, %24 : vector<1x128xf32>
      %cst_24 = arith.constant 0.000000e+00 : f32
      %26 = vector.broadcast %cst_24 : f32 to vector<1x128xf32>
      %27 = arith.maximumf %25, %26 : vector<1x128xf32>
      %c0_25 = arith.constant 0 : index
      %c0_26 = arith.constant 0 : index
      %28 = vector.load %arg5[%c0_25, %c0_26] : memref<128x128xf32, #tpu.memory_space<vmem>>, vector<128x128xf32>
      %cst_27 = arith.constant dense<0.000000e+00> : vector<1x128xf32>
      %29 = tpu.matmul %27, %28, %cst_27 {dimension_numbers = #tpu.dot_dimension_numbers<[1], [0], [0], [1], [0, 0, 1, 1], [], []>} : vector<1x128xf32>, vector<128x128xf32>, vector<1x128xf32> -> vector<1x128xf32>
      %c0_28 = arith.constant 0 : index
      %c0_29 = arith.constant 0 : index
      %30 = vector.load %arg6[%c0_28, %c0_29] : memref<1x128xf32, #tpu.memory_space<vmem>>, vector<1x128xf32>
      %31 = arith.addf %29, %30 : vector<1x128xf32>
      %c0_30 = arith.constant 0 : index
      %c0_31 = arith.constant 0 : index
      %32 = vector.load %arg3[%c0_30, %c0_31] : memref<128x128xf32, #tpu.memory_space<vmem>>, vector<128x128xf32>
      %cst_32 = arith.constant dense<0.000000e+00> : vector<1x128xf32>
      %33 = tpu.matmul %21, %32, %cst_32 {dimension_numbers = #tpu.dot_dimension_numbers<[1], [0], [0], [1], [0, 0, 1, 1], [], []>} : vector<1x128xf32>, vector<128x128xf32>, vector<1x128xf32> -> vector<1x128xf32>
      %c0_33 = arith.constant 0 : index
      %c0_34 = arith.constant 0 : index
      %34 = vector.load %arg4[%c0_33, %c0_34] : memref<1x128xf32, #tpu.memory_space<vmem>>, vector<1x128xf32>
      %35 = arith.addf %33, %34 : vector<1x128xf32>
      %cst_35 = arith.constant 0.000000e+00 : f32
      %36 = vector.broadcast %cst_35 : f32 to vector<1x128xf32>
      %37 = arith.maximumf %35, %36 : vector<1x128xf32>
      %c0_36 = arith.constant 0 : index
      %c0_37 = arith.constant 0 : index
      %38 = vector.load %arg5[%c0_36, %c0_37] : memref<128x128xf32, #tpu.memory_space<vmem>>, vector<128x128xf32>
      %cst_38 = arith.constant dense<0.000000e+00> : vector<1x128xf32>
      %39 = tpu.matmul %37, %38, %cst_38 {dimension_numbers = #tpu.dot_dimension_numbers<[1], [0], [0], [1], [0, 0, 1, 1], [], []>} : vector<1x128xf32>, vector<128x128xf32>, vector<1x128xf32> -> vector<1x128xf32>
      %c0_39 = arith.constant 0 : index
      %c0_40 = arith.constant 0 : index
      %40 = vector.load %arg6[%c0_39, %c0_40] : memref<1x128xf32, #tpu.memory_space<vmem>>, vector<1x128xf32>
      %41 = arith.addf %39, %40 : vector<1x128xf32>
      %42 = arith.addf %31, %41 : vector<1x128xf32>
      %43 = arith.negf %42 : vector<1x128xf32>
      %44 = math.exp %43 : vector<1x128xf32>
      %cst_41 = arith.constant 1.000000e+00 : f32
      %45 = vector.broadcast %cst_41 : f32 to vector<1x128xf32>
      %46 = arith.addf %45, %44 : vector<1x128xf32>
      %47 = arith.divf %45, %46 : vector<1x128xf32>
      %c0_42 = arith.constant 0 : index
      %c0_43 = arith.constant 0 : index
      %c0_44 = arith.constant 0 : index
      %48 = vector.load %arg7[%c0_42, %c0_43, %c0_44] : memref<1x1x128xf32, #tpu.memory_space<vmem>>, vector<1x1x128xf32>
      %49 = vector.shape_cast %48 : vector<1x1x128xf32> to vector<1x128xf32>
      %50 = vector.shape_cast %47 : vector<1x128xf32> to vector<1x1x128xf32>
      tpu.vector_store %arg7[%c0_42, %c0_43, %c0_44], %50 {strides = array<i32>} : memref<1x1x128xf32, #tpu.memory_space<vmem>>, vector<1x1x128xf32>,
    } else {
    }
    return
  }
  func.func @transform_0(%arg0: i32, %arg1: i32) -> (i32, i32, i32) {
    %c0_i32 = arith.constant 0 : i32
    %c0_i32_0 = arith.constant 0 : i32
    return %arg0, %arg1, %c0_i32 : i32, i32, i32
  }
  func.func @transform_1(%arg0: i32, %arg1: i32) -> (i32, i32) {
    %c0_i32 = arith.constant 0 : i32
    %c0_i32_0 = arith.constant 0 : i32
    %c0_i32_1 = arith.constant 0 : i32
    return %c0_i32, %c0_i32_0 : i32, i32
  }
  func.func @transform_2(%arg0: i32, %arg1: i32) -> (i32, i32) {
    %c0_i32 = arith.constant 0 : i32
    %c0_i32_0 = arith.constant 0 : i32
    %c0_i32_1 = arith.constant 0 : i32
    return %c0_i32, %c0_i32_0 : i32, i32
  }
  func.func @transform_3(%arg0: i32, %arg1: i32) -> (i32, i32) {
    %c0_i32 = arith.constant 0 : i32
    %c0_i32_0 = arith.constant 0 : i32
    %c0_i32_1 = arith.constant 0 : i32
    return %c0_i32, %c0_i32_0 : i32, i32
  }
  func.func @transform_4(%arg0: i32, %arg1: i32) -> (i32, i32) {
    %c0_i32 = arith.constant 0 : i32
    %c0_i32_0 = arith.constant 0 : i32
    %c0_i32_1 = arith.constant 0 : i32
    return %c0_i32, %c0_i32_0 : i32, i32
  }
  func.func @transform_5(%arg0: i32, %arg1: i32) -> (i32, i32, i32) {
    %c0_i32 = arith.constant 0 : i32
    %c0_i32_0 = arith.constant 0 : i32
    %c0_i32_1 = arith.constant 0 : i32
    return %arg0, %c0_i32, %c0_i32_0 : i32, i32, i32
  }
}

module attributes {stable_mosaic.version = 11 : i64} {
  func.func @_conv3x3_kernel(%arg0: i32, %arg1: memref<1x4x9x9x128xf32, #tpu.memory_space<vmem>>, %arg2: memref<9x128x128xbf16, #tpu.memory_space<vmem>>, %arg3: memref<1x128xf32, #tpu.memory_space<vmem>>, %arg4: memref<1x128xf32, #tpu.memory_space<vmem>>, %arg5: memref<1x64x128xf32, #tpu.memory_space<vmem>>) attributes {dimension_semantics = [#tpu.dimension_semantics<parallel>], iteration_bounds = array<i64: 2>, scalar_prefetch = 0 : i64, scratch_operands = 0 : i64, tpu.core_type = #tpu.core_type<tc>, window_params = [{transform_indices = @transform_0, window_bounds = array<i64: 1, 4, 9, 9, 128>}, {pipeline_mode = #tpu.pipeline_mode<synchronous>, transform_indices = @transform_1, window_bounds = array<i64: 9, 128, 128>}, {pipeline_mode = #tpu.pipeline_mode<synchronous>, transform_indices = @transform_2, window_bounds = array<i64: 1, 128>}, {pipeline_mode = #tpu.pipeline_mode<synchronous>, transform_indices = @transform_3, window_bounds = array<i64: 1, 128>}, {transform_indices = @transform_4, window_bounds = array<i64: 1, 64, 128>}]} {
    %c0 = arith.constant 0 : index
    %c0_0 = arith.constant 0 : index
    %c0_1 = arith.constant 0 : index
    %c0_2 = arith.constant 0 : index
    %c0_3 = arith.constant 0 : index
    %0 = vector.load %arg1[%c0, %c0_0, %c0_1, %c0_2, %c0_3] : memref<1x4x9x9x128xf32, #tpu.memory_space<vmem>>, vector<1x1x8x8x128xf32>
    %1 = vector.shape_cast %0 : vector<1x1x8x8x128xf32> to vector<8x8x128xf32>
    %2 = vector.shape_cast %1 : vector<8x8x128xf32> to vector<64x128xf32>
    %3 = arith.truncf %2 : vector<64x128xf32> to vector<64x128xbf16>
    %c0_4 = arith.constant 0 : index
    %c0_5 = arith.constant 0 : index
    %c0_6 = arith.constant 0 : index
    %4 = vector.load %arg2[%c0_4, %c0_5, %c0_6] : memref<9x128x128xbf16, #tpu.memory_space<vmem>>, vector<1x128x128xbf16>
    %5 = vector.shape_cast %4 : vector<1x128x128xbf16> to vector<128x128xbf16>
    %cst = arith.constant dense<0.000000e+00> : vector<64x128xf32>
    %6 = tpu.matmul %3, %5, %cst {dimension_numbers = #tpu.dot_dimension_numbers<[1], [0], [0], [1], [0, 0, 1, 1], [], []>} : vector<64x128xbf16>, vector<128x128xbf16>, vector<64x128xf32> -> vector<64x128xf32>
    %c0_7 = arith.constant 0 : index
    %c1 = arith.constant 1 : index
    %c0_8 = arith.constant 0 : index
    %c0_9 = arith.constant 0 : index
    %c0_10 = arith.constant 0 : index
    %7 = vector.load %arg1[%c0_7, %c1, %c0_8, %c0_9, %c0_10] : memref<1x4x9x9x128xf32, #tpu.memory_space<vmem>>, vector<1x1x8x8x128xf32>
    %8 = vector.shape_cast %7 : vector<1x1x8x8x128xf32> to vector<8x8x128xf32>
    %9 = vector.shape_cast %8 : vector<8x8x128xf32> to vector<64x128xf32>
    %10 = arith.truncf %9 : vector<64x128xf32> to vector<64x128xbf16>
    %c1_11 = arith.constant 1 : index
    %c0_12 = arith.constant 0 : index
    %c0_13 = arith.constant 0 : index
    %11 = vector.load %arg2[%c1_11, %c0_12, %c0_13] : memref<9x128x128xbf16, #tpu.memory_space<vmem>>, vector<1x128x128xbf16>
    %12 = vector.shape_cast %11 : vector<1x128x128xbf16> to vector<128x128xbf16>
    %cst_14 = arith.constant dense<0.000000e+00> : vector<64x128xf32>
    %13 = tpu.matmul %10, %12, %cst_14 {dimension_numbers = #tpu.dot_dimension_numbers<[1], [0], [0], [1], [0, 0, 1, 1], [], []>} : vector<64x128xbf16>, vector<128x128xbf16>, vector<64x128xf32> -> vector<64x128xf32>
    %14 = arith.addf %6, %13 : vector<64x128xf32>
    %c0_15 = arith.constant 0 : index
    %c0_16 = arith.constant 0 : index
    %c0_17 = arith.constant 0 : index
    %c1_18 = arith.constant 1 : index
    %c0_19 = arith.constant 0 : index
    %15 = vector.load %arg1[%c0_15, %c0_16, %c0_17, %c1_18, %c0_19] : memref<1x4x9x9x128xf32, #tpu.memory_space<vmem>>, vector<1x1x8x8x128xf32>
    %16 = vector.shape_cast %15 : vector<1x1x8x8x128xf32> to vector<8x8x128xf32>
    %17 = vector.shape_cast %16 : vector<8x8x128xf32> to vector<64x128xf32>
    %18 = arith.truncf %17 : vector<64x128xf32> to vector<64x128xbf16>
    %c2 = arith.constant 2 : index
    %c0_20 = arith.constant 0 : index
    %c0_21 = arith.constant 0 : index
    %19 = vector.load %arg2[%c2, %c0_20, %c0_21] : memref<9x128x128xbf16, #tpu.memory_space<vmem>>, vector<1x128x128xbf16>
    %20 = vector.shape_cast %19 : vector<1x128x128xbf16> to vector<128x128xbf16>
    %cst_22 = arith.constant dense<0.000000e+00> : vector<64x128xf32>
    %21 = tpu.matmul %18, %20, %cst_22 {dimension_numbers = #tpu.dot_dimension_numbers<[1], [0], [0], [1], [0, 0, 1, 1], [], []>} : vector<64x128xbf16>, vector<128x128xbf16>, vector<64x128xf32> -> vector<64x128xf32>
    %22 = arith.addf %14, %21 : vector<64x128xf32>
    %c0_23 = arith.constant 0 : index
    %c2_24 = arith.constant 2 : index
    %c0_25 = arith.constant 0 : index
    %c0_26 = arith.constant 0 : index
    %c0_27 = arith.constant 0 : index
    %23 = vector.load %arg1[%c0_23, %c2_24, %c0_25, %c0_26, %c0_27] : memref<1x4x9x9x128xf32, #tpu.memory_space<vmem>>, vector<1x1x8x8x128xf32>
    %24 = vector.shape_cast %23 : vector<1x1x8x8x128xf32> to vector<8x8x128xf32>
    %25 = vector.shape_cast %24 : vector<8x8x128xf32> to vector<64x128xf32>
    %26 = arith.truncf %25 : vector<64x128xf32> to vector<64x128xbf16>
    %c3 = arith.constant 3 : index
    %c0_28 = arith.constant 0 : index
    %c0_29 = arith.constant 0 : index
    %27 = vector.load %arg2[%c3, %c0_28, %c0_29] : memref<9x128x128xbf16, #tpu.memory_space<vmem>>, vector<1x128x128xbf16>
    %28 = vector.shape_cast %27 : vector<1x128x128xbf16> to vector<128x128xbf16>
    %cst_30 = arith.constant dense<0.000000e+00> : vector<64x128xf32>
    %29 = tpu.matmul %26, %28, %cst_30 {dimension_numbers = #tpu.dot_dimension_numbers<[1], [0], [0], [1], [0, 0, 1, 1], [], []>} : vector<64x128xbf16>, vector<128x128xbf16>, vector<64x128xf32> -> vector<64x128xf32>
    %30 = arith.addf %22, %29 : vector<64x128xf32>
    %c0_31 = arith.constant 0 : index
    %c3_32 = arith.constant 3 : index
    %c0_33 = arith.constant 0 : index
    %c0_34 = arith.constant 0 : index
    %c0_35 = arith.constant 0 : index
    %31 = vector.load %arg1[%c0_31, %c3_32, %c0_33, %c0_34, %c0_35] : memref<1x4x9x9x128xf32, #tpu.memory_space<vmem>>, vector<1x1x8x8x128xf32>
    %32 = vector.shape_cast %31 : vector<1x1x8x8x128xf32> to vector<8x8x128xf32>
    %33 = vector.shape_cast %32 : vector<8x8x128xf32> to vector<64x128xf32>
    %34 = arith.truncf %33 : vector<64x128xf32> to vector<64x128xbf16>
    %c4 = arith.constant 4 : index
    %c0_36 = arith.constant 0 : index
    %c0_37 = arith.constant 0 : index
    %35 = vector.load %arg2[%c4, %c0_36, %c0_37] : memref<9x128x128xbf16, #tpu.memory_space<vmem>>, vector<1x128x128xbf16>
    %36 = vector.shape_cast %35 : vector<1x128x128xbf16> to vector<128x128xbf16>
    %cst_38 = arith.constant dense<0.000000e+00> : vector<64x128xf32>
    %37 = tpu.matmul %34, %36, %cst_38 {dimension_numbers = #tpu.dot_dimension_numbers<[1], [0], [0], [1], [0, 0, 1, 1], [], []>} : vector<64x128xbf16>, vector<128x128xbf16>, vector<64x128xf32> -> vector<64x128xf32>
    %38 = arith.addf %30, %37 : vector<64x128xf32>
    %c0_39 = arith.constant 0 : index
    %c2_40 = arith.constant 2 : index
    %c0_41 = arith.constant 0 : index
    %c1_42 = arith.constant 1 : index
    %c0_43 = arith.constant 0 : index
    %39 = vector.load %arg1[%c0_39, %c2_40, %c0_41, %c1_42, %c0_43] : memref<1x4x9x9x128xf32, #tpu.memory_space<vmem>>, vector<1x1x8x8x128xf32>
    %40 = vector.shape_cast %39 : vector<1x1x8x8x128xf32> to vector<8x8x128xf32>
    %41 = vector.shape_cast %40 : vector<8x8x128xf32> to vector<64x128xf32>
    %42 = arith.truncf %41 : vector<64x128xf32> to vector<64x128xbf16>
    %c5 = arith.constant 5 : index
    %c0_44 = arith.constant 0 : index
    %c0_45 = arith.constant 0 : index
    %43 = vector.load %arg2[%c5, %c0_44, %c0_45] : memref<9x128x128xbf16, #tpu.memory_space<vmem>>, vector<1x128x128xbf16>
    %44 = vector.shape_cast %43 : vector<1x128x128xbf16> to vector<128x128xbf16>
    %cst_46 = arith.constant dense<0.000000e+00> : vector<64x128xf32>
    %45 = tpu.matmul %42, %44, %cst_46 {dimension_numbers = #tpu.dot_dimension_numbers<[1], [0], [0], [1], [0, 0, 1, 1], [], []>} : vector<64x128xbf16>, vector<128x128xbf16>, vector<64x128xf32> -> vector<64x128xf32>
    %46 = arith.addf %38, %45 : vector<64x128xf32>
    %c0_47 = arith.constant 0 : index
    %c0_48 = arith.constant 0 : index
    %c1_49 = arith.constant 1 : index
    %c0_50 = arith.constant 0 : index
    %c0_51 = arith.constant 0 : index
    %47 = vector.load %arg1[%c0_47, %c0_48, %c1_49, %c0_50, %c0_51] : memref<1x4x9x9x128xf32, #tpu.memory_space<vmem>>, vector<1x1x8x8x128xf32>
    %48 = vector.shape_cast %47 : vector<1x1x8x8x128xf32> to vector<8x8x128xf32>
    %49 = vector.shape_cast %48 : vector<8x8x128xf32> to vector<64x128xf32>
    %50 = arith.truncf %49 : vector<64x128xf32> to vector<64x128xbf16>
    %c6 = arith.constant 6 : index
    %c0_52 = arith.constant 0 : index
    %c0_53 = arith.constant 0 : index
    %51 = vector.load %arg2[%c6, %c0_52, %c0_53] : memref<9x128x128xbf16, #tpu.memory_space<vmem>>, vector<1x128x128xbf16>
    %52 = vector.shape_cast %51 : vector<1x128x128xbf16> to vector<128x128xbf16>
    %cst_54 = arith.constant dense<0.000000e+00> : vector<64x128xf32>
    %53 = tpu.matmul %50, %52, %cst_54 {dimension_numbers = #tpu.dot_dimension_numbers<[1], [0], [0], [1], [0, 0, 1, 1], [], []>} : vector<64x128xbf16>, vector<128x128xbf16>, vector<64x128xf32> -> vector<64x128xf32>
    %54 = arith.addf %46, %53 : vector<64x128xf32>
    %c0_55 = arith.constant 0 : index
    %c1_56 = arith.constant 1 : index
    %c1_57 = arith.constant 1 : index
    %c0_58 = arith.constant 0 : index
    %c0_59 = arith.constant 0 : index
    %55 = vector.load %arg1[%c0_55, %c1_56, %c1_57, %c0_58, %c0_59] : memref<1x4x9x9x128xf32, #tpu.memory_space<vmem>>, vector<1x1x8x8x128xf32>
    %56 = vector.shape_cast %55 : vector<1x1x8x8x128xf32> to vector<8x8x128xf32>
    %57 = vector.shape_cast %56 : vector<8x8x128xf32> to vector<64x128xf32>
    %58 = arith.truncf %57 : vector<64x128xf32> to vector<64x128xbf16>
    %c7 = arith.constant 7 : index
    %c0_60 = arith.constant 0 : index
    %c0_61 = arith.constant 0 : index
    %59 = vector.load %arg2[%c7, %c0_60, %c0_61] : memref<9x128x128xbf16, #tpu.memory_space<vmem>>, vector<1x128x128xbf16>
    %60 = vector.shape_cast %59 : vector<1x128x128xbf16> to vector<128x128xbf16>
    %cst_62 = arith.constant dense<0.000000e+00> : vector<64x128xf32>
    %61 = tpu.matmul %58, %60, %cst_62 {dimension_numbers = #tpu.dot_dimension_numbers<[1], [0], [0], [1], [0, 0, 1, 1], [], []>} : vector<64x128xbf16>, vector<128x128xbf16>, vector<64x128xf32> -> vector<64x128xf32>
    %62 = arith.addf %54, %61 : vector<64x128xf32>
    %c0_63 = arith.constant 0 : index
    %c0_64 = arith.constant 0 : index
    %c1_65 = arith.constant 1 : index
    %c1_66 = arith.constant 1 : index
    %c0_67 = arith.constant 0 : index
    %63 = vector.load %arg1[%c0_63, %c0_64, %c1_65, %c1_66, %c0_67] : memref<1x4x9x9x128xf32, #tpu.memory_space<vmem>>, vector<1x1x8x8x128xf32>
    %64 = vector.shape_cast %63 : vector<1x1x8x8x128xf32> to vector<8x8x128xf32>
    %65 = vector.shape_cast %64 : vector<8x8x128xf32> to vector<64x128xf32>
    %66 = arith.truncf %65 : vector<64x128xf32> to vector<64x128xbf16>
    %c8 = arith.constant 8 : index
    %c0_68 = arith.constant 0 : index
    %c0_69 = arith.constant 0 : index
    %67 = vector.load %arg2[%c8, %c0_68, %c0_69] : memref<9x128x128xbf16, #tpu.memory_space<vmem>>, vector<1x128x128xbf16>
    %68 = vector.shape_cast %67 : vector<1x128x128xbf16> to vector<128x128xbf16>
    %cst_70 = arith.constant dense<0.000000e+00> : vector<64x128xf32>
    %69 = tpu.matmul %66, %68, %cst_70 {dimension_numbers = #tpu.dot_dimension_numbers<[1], [0], [0], [1], [0, 0, 1, 1], [], []>} : vector<64x128xbf16>, vector<128x128xbf16>, vector<64x128xf32> -> vector<64x128xf32>
    %70 = arith.addf %62, %69 : vector<64x128xf32>
    %c0_71 = arith.constant 0 : index
    %c0_72 = arith.constant 0 : index
    %71 = vector.load %arg3[%c0_71, %c0_72] : memref<1x128xf32, #tpu.memory_space<vmem>>, vector<1x128xf32>
    %72 = vector.broadcast %71 : vector<1x128xf32> to vector<64x128xf32>
    %73 = arith.mulf %70, %72 : vector<64x128xf32>
    %c0_73 = arith.constant 0 : index
    %c0_74 = arith.constant 0 : index
    %74 = vector.load %arg4[%c0_73, %c0_74] : memref<1x128xf32, #tpu.memory_space<vmem>>, vector<1x128xf32>
    %75 = vector.broadcast %74 : vector<1x128xf32> to vector<64x128xf32>
    %76 = arith.addf %73, %75 : vector<64x128xf32>
    %c0_75 = arith.constant 0 : index
    %c0_76 = arith.constant 0 : index
    %c0_77 = arith.constant 0 : index
    %77 = vector.load %arg5[%c0_75, %c0_76, %c0_77] : memref<1x64x128xf32, #tpu.memory_space<vmem>>, vector<1x64x128xf32>
    %78 = vector.shape_cast %77 : vector<1x64x128xf32> to vector<64x128xf32>
    %79 = vector.shape_cast %76 : vector<64x128xf32> to vector<1x64x128xf32>
    tpu.vector_store %arg5[%c0_75, %c0_76, %c0_77], %79 {strides = array<i32>} : memref<1x64x128xf32, #tpu.memory_space<vmem>>, vector<1x64x128xf32>,
    return
  }
  func.func @transform_0(%arg0: i32) -> (i32, i32, i32, i32, i32) {
    %c0_i32 = arith.constant 0 : i32
    %c0_i32_0 = arith.constant 0 : i32
    %c0_i32_1 = arith.constant 0 : i32
    %c0_i32_2 = arith.constant 0 : i32
    %c0_i32_3 = arith.constant 0 : i32
    return %arg0, %c0_i32, %c0_i32_0, %c0_i32_1, %c0_i32_2 : i32, i32, i32, i32, i32
  }
  func.func @transform_1(%arg0: i32) -> (i32, i32, i32) {
    %c0_i32 = arith.constant 0 : i32
    %c0_i32_0 = arith.constant 0 : i32
    %c0_i32_1 = arith.constant 0 : i32
    %c0_i32_2 = arith.constant 0 : i32
    return %c0_i32, %c0_i32_0, %c0_i32_1 : i32, i32, i32
  }
  func.func @transform_2(%arg0: i32) -> (i32, i32) {
    %c0_i32 = arith.constant 0 : i32
    %c0_i32_0 = arith.constant 0 : i32
    %c0_i32_1 = arith.constant 0 : i32
    return %c0_i32, %c0_i32_0 : i32, i32
  }
  func.func @transform_3(%arg0: i32) -> (i32, i32) {
    %c0_i32 = arith.constant 0 : i32
    %c0_i32_0 = arith.constant 0 : i32
    %c0_i32_1 = arith.constant 0 : i32
    return %c0_i32, %c0_i32_0 : i32, i32
  }
  func.func @transform_4(%arg0: i32) -> (i32, i32, i32) {
    %c0_i32 = arith.constant 0 : i32
    %c0_i32_0 = arith.constant 0 : i32
    %c0_i32_1 = arith.constant 0 : i32
    return %arg0, %c0_i32, %c0_i32_0 : i32, i32, i32
  }
}

module attributes {stable_mosaic.version = 11 : i64} {
  func.func @_channel_pool_kernel(%arg0: i32, %arg1: memref<1x8x8x128xf32, #tpu.memory_space<vmem>>, %arg2: memref<1x1x128xf32, #tpu.memory_space<vmem>>, %arg3: memref<1x2x8x8xf32, #tpu.memory_space<vmem>>) attributes {dimension_semantics = [#tpu.dimension_semantics<parallel>], iteration_bounds = array<i64: 2>, scalar_prefetch = 0 : i64, scratch_operands = 0 : i64, tpu.core_type = #tpu.core_type<tc>, window_params = [{transform_indices = @transform_0, window_bounds = array<i64: 1, 8, 8, 128>}, {transform_indices = @transform_1, window_bounds = array<i64: 1, 1, 128>}, {transform_indices = @transform_2, window_bounds = array<i64: 1, 2, 8, 8>}]} {
    %c0 = arith.constant 0 : index
    %c0_0 = arith.constant 0 : index
    %c0_1 = arith.constant 0 : index
    %c0_2 = arith.constant 0 : index
    %0 = vector.load %arg1[%c0, %c0_0, %c0_1, %c0_2] : memref<1x8x8x128xf32, #tpu.memory_space<vmem>>, vector<1x8x8x128xf32>
    %1 = vector.shape_cast %0 : vector<1x8x8x128xf32> to vector<8x8x128xf32>
    %c0_3 = arith.constant 0 : index
    %c0_4 = arith.constant 0 : index
    %c0_5 = arith.constant 0 : index
    %2 = vector.load %arg2[%c0_3, %c0_4, %c0_5] : memref<1x1x128xf32, #tpu.memory_space<vmem>>, vector<1x1x128xf32>
    %3 = vector.shape_cast %2 : vector<1x1x128xf32> to vector<128xf32>
    %4 = vector.shape_cast %3 : vector<128xf32> to vector<1x1x128xf32>
    %5 = vector.broadcast %4 : vector<1x1x128xf32> to vector<8x8x128xf32>
    %6 = arith.mulf %1, %5 : vector<8x8x128xf32>
    %7 = tpu.iota {dimensions = array<i32: 2>} : vector<1x1x128xi32>
    %c32_i32 = arith.constant 32 : i32
    %8 = vector.broadcast %c32_i32 : i32 to vector<1x1x128xi32>
    %9 = arith.cmpi slt, %7, %8 : vector<1x1x128xi32>
    %cst = arith.constant 0xFF800000 : f32
    %10 = vector.shape_cast %9 : vector<1x1x128xi1> to vector<1x1x128xi1>
    %11 = vector.broadcast %10 : vector<1x1x128xi1> to vector<8x8x128xi1>
    %12 = vector.broadcast %cst : f32 to vector<8x8x128xf32>
    %13 = arith.select %11, %6, %12 : vector<8x8x128xi1>, vector<8x8x128xf32>
    %cst_6 = arith.constant dense<0xFF800000> : vector<8x8xf32>
    %14 = vector.multi_reduction <maximumf>, %13, %cst_6 [2] : vector<8x8x128xf32> to vector<8x8xf32>
    %c0_7 = arith.constant 0 : index
    %c0_8 = arith.constant 0 : index
    %c0_9 = arith.constant 0 : index
    %c0_10 = arith.constant 0 : index
    %15 = vector.load %arg3[%c0_7, %c0_8, %c0_9, %c0_10] : memref<1x2x8x8xf32, #tpu.memory_space<vmem>>, vector<1x1x8x8xf32>
    %16 = vector.shape_cast %15 : vector<1x1x8x8xf32> to vector<8x8xf32>
    %17 = vector.shape_cast %14 : vector<8x8xf32> to vector<1x1x8x8xf32>
    tpu.vector_store %arg3[%c0_7, %c0_8, %c0_9, %c0_10], %17 {strides = array<i32>} : memref<1x2x8x8xf32, #tpu.memory_space<vmem>>, vector<1x1x8x8xf32>,
    %cst_11 = arith.constant dense<0.000000e+00> : vector<8x8xf32>
    %18 = vector.multi_reduction <add>, %6, %cst_11 [2] : vector<8x8x128xf32> to vector<8x8xf32>
    %cst_12 = arith.constant 3.125000e-02 : f32
    %19 = vector.broadcast %cst_12 : f32 to vector<8x8xf32>
    %20 = arith.mulf %18, %19 : vector<8x8xf32>
    %c0_13 = arith.constant 0 : index
    %c1 = arith.constant 1 : index
    %c0_14 = arith.constant 0 : index
    %c0_15 = arith.constant 0 : index
    %21 = vector.load %arg3[%c0_13, %c1, %c0_14, %c0_15] : memref<1x2x8x8xf32, #tpu.memory_space<vmem>>, vector<1x1x8x8xf32>
    %22 = vector.shape_cast %21 : vector<1x1x8x8xf32> to vector<8x8xf32>
    %23 = vector.shape_cast %20 : vector<8x8xf32> to vector<1x1x8x8xf32>
    tpu.vector_store %arg3[%c0_13, %c1, %c0_14, %c0_15], %23 {strides = array<i32>} : memref<1x2x8x8xf32, #tpu.memory_space<vmem>>, vector<1x1x8x8xf32>,
    return
  }
  func.func @transform_0(%arg0: i32) -> (i32, i32, i32, i32) {
    %c0_i32 = arith.constant 0 : i32
    %c0_i32_0 = arith.constant 0 : i32
    %c0_i32_1 = arith.constant 0 : i32
    %c0_i32_2 = arith.constant 0 : i32
    return %arg0, %c0_i32, %c0_i32_0, %c0_i32_1 : i32, i32, i32, i32
  }
  func.func @transform_1(%arg0: i32) -> (i32, i32, i32) {
    %c0_i32 = arith.constant 0 : i32
    %c0_i32_0 = arith.constant 0 : i32
    %c0_i32_1 = arith.constant 0 : i32
    return %arg0, %c0_i32, %c0_i32_0 : i32, i32, i32
  }
  func.func @transform_2(%arg0: i32) -> (i32, i32, i32, i32) {
    %c0_i32 = arith.constant 0 : i32
    %c0_i32_0 = arith.constant 0 : i32
    %c0_i32_1 = arith.constant 0 : i32
    %c0_i32_2 = arith.constant 0 : i32
    return %arg0, %c0_i32, %c0_i32_0, %c0_i32_1 : i32, i32, i32, i32
  }
}

module attributes {stable_mosaic.version = 11 : i64} {
  func.func @_epilogue_ds_kernel(%arg0: i32, %arg1: memref<1x8x8x128xf32, #tpu.memory_space<vmem>>, %arg2: memref<1x1x128xf32, #tpu.memory_space<vmem>>, %arg3: memref<1x2x14x14xf32, #tpu.memory_space<vmem>>, %arg4: memref<98xf32, #tpu.memory_space<smem>>, %arg5: memref<2xf32, #tpu.memory_space<smem>>, %arg6: memref<1x64x16xf32, #tpu.memory_space<vmem>>, %arg7: memref<16x128xbf16, #tpu.memory_space<vmem>>, %arg8: memref<1x128xf32, #tpu.memory_space<vmem>>, %arg9: memref<1x128xf32, #tpu.memory_space<vmem>>, %arg10: memref<1x8x8x128xf32, #tpu.memory_space<vmem>>) attributes {dimension_semantics = [#tpu.dimension_semantics<parallel>], iteration_bounds = array<i64: 2>, scalar_prefetch = 0 : i64, scratch_operands = 0 : i64, tpu.core_type = #tpu.core_type<tc>, window_params = [{transform_indices = @transform_0, window_bounds = array<i64: 1, 8, 8, 128>}, {transform_indices = @transform_1, window_bounds = array<i64: 1, 1, 128>}, {transform_indices = @transform_2, window_bounds = array<i64: 1, 2, 14, 14>}, {transform_indices = @transform_3, window_bounds = array<i64: 98>}, {transform_indices = @transform_4, window_bounds = array<i64: 2>}, {transform_indices = @transform_5, window_bounds = array<i64: 1, 64, 16>}, {pipeline_mode = #tpu.pipeline_mode<synchronous>, transform_indices = @transform_6, window_bounds = array<i64: 16, 128>}, {pipeline_mode = #tpu.pipeline_mode<synchronous>, transform_indices = @transform_7, window_bounds = array<i64: 1, 128>}, {pipeline_mode = #tpu.pipeline_mode<synchronous>, transform_indices = @transform_8, window_bounds = array<i64: 1, 128>}, {transform_indices = @transform_9, window_bounds = array<i64: 1, 8, 8, 128>}]} {
    %cst = arith.constant 0.000000e+00 : f32
    %0 = vector.broadcast %cst : f32 to vector<8x8xf32>
    %c0 = arith.constant 0 : index
    %c0_0 = arith.constant 0 : index
    %c0_1 = arith.constant 0 : index
    %c0_2 = arith.constant 0 : index
    %1 = vector.load %arg3[%c0, %c0_0, %c0_1, %c0_2] : memref<1x2x14x14xf32, #tpu.memory_space<vmem>>, vector<1x1x14x14xf32>
    %2 = vector.shape_cast %1 : vector<1x1x14x14xf32> to vector<14x14xf32>
    %c0_3 = arith.constant 0 : index
    %3 = memref.load %arg4[%c0_3] : memref<98xf32, #tpu.memory_space<smem>>
    %4 = vector.extract_strided_slice %2 {offsets = [0, 0], sizes = [8, 8], strides = [1, 1]} : vector<14x14xf32> to vector<8x8xf32>
    %5 = vector.broadcast %3 : f32 to vector<8x8xf32>
    %6 = arith.mulf %5, %4 : vector<8x8xf32>
    %7 = arith.addf %0, %6 : vector<8x8xf32>
    %c1 = arith.constant 1 : index
    %8 = memref.load %arg4[%c1] : memref<98xf32, #tpu.memory_space<smem>>
    %9 = vector.extract_strided_slice %2 {offsets = [0, 1], sizes = [8, 8], strides = [1, 1]} : vector<14x14xf32> to vector<8x8xf32>
    %10 = vector.broadcast %8 : f32 to vector<8x8xf32>
    %11 = arith.mulf %10, %9 : vector<8x8xf32>
    %12 = arith.addf %7, %11 : vector<8x8xf32>
    %c2 = arith.constant 2 : index
    %13 = memref.load %arg4[%c2] : memref<98xf32, #tpu.memory_space<smem>>
    %14 = vector.extract_strided_slice %2 {offsets = [0, 2], sizes = [8, 8], strides = [1, 1]} : vector<14x14xf32> to vector<8x8xf32>
    %15 = vector.broadcast %13 : f32 to vector<8x8xf32>
    %16 = arith.mulf %15, %14 : vector<8x8xf32>
    %17 = arith.addf %12, %16 : vector<8x8xf32>
    %c3 = arith.constant 3 : index
    %18 = memref.load %arg4[%c3] : memref<98xf32, #tpu.memory_space<smem>>
    %19 = vector.extract_strided_slice %2 {offsets = [0, 3], sizes = [8, 8], strides = [1, 1]} : vector<14x14xf32> to vector<8x8xf32>
    %20 = vector.broadcast %18 : f32 to vector<8x8xf32>
    %21 = arith.mulf %20, %19 : vector<8x8xf32>
    %22 = arith.addf %17, %21 : vector<8x8xf32>
    %c4 = arith.constant 4 : index
    %23 = memref.load %arg4[%c4] : memref<98xf32, #tpu.memory_space<smem>>
    %24 = vector.extract_strided_slice %2 {offsets = [0, 4], sizes = [8, 8], strides = [1, 1]} : vector<14x14xf32> to vector<8x8xf32>
    %25 = vector.broadcast %23 : f32 to vector<8x8xf32>
    %26 = arith.mulf %25, %24 : vector<8x8xf32>
    %27 = arith.addf %22, %26 : vector<8x8xf32>
    %c5 = arith.constant 5 : index
    %28 = memref.load %arg4[%c5] : memref<98xf32, #tpu.memory_space<smem>>
    %29 = vector.extract_strided_slice %2 {offsets = [0, 5], sizes = [8, 8], strides = [1, 1]} : vector<14x14xf32> to vector<8x8xf32>
    %30 = vector.broadcast %28 : f32 to vector<8x8xf32>
    %31 = arith.mulf %30, %29 : vector<8x8xf32>
    %32 = arith.addf %27, %31 : vector<8x8xf32>
    %c6 = arith.constant 6 : index
    %33 = memref.load %arg4[%c6] : memref<98xf32, #tpu.memory_space<smem>>
    %34 = vector.extract_strided_slice %2 {offsets = [0, 6], sizes = [8, 8], strides = [1, 1]} : vector<14x14xf32> to vector<8x8xf32>
    %35 = vector.broadcast %33 : f32 to vector<8x8xf32>
    %36 = arith.mulf %35, %34 : vector<8x8xf32>
    %37 = arith.addf %32, %36 : vector<8x8xf32>
    %c7 = arith.constant 7 : index
    %38 = memref.load %arg4[%c7] : memref<98xf32, #tpu.memory_space<smem>>
    %39 = vector.extract_strided_slice %2 {offsets = [1, 0], sizes = [8, 8], strides = [1, 1]} : vector<14x14xf32> to vector<8x8xf32>
    %40 = vector.broadcast %38 : f32 to vector<8x8xf32>
    %41 = arith.mulf %40, %39 : vector<8x8xf32>
    %42 = arith.addf %37, %41 : vector<8x8xf32>
    %c8 = arith.constant 8 : index
    %43 = memref.load %arg4[%c8] : memref<98xf32, #tpu.memory_space<smem>>
    %44 = vector.extract_strided_slice %2 {offsets = [1, 1], sizes = [8, 8], strides = [1, 1]} : vector<14x14xf32> to vector<8x8xf32>
    %45 = vector.broadcast %43 : f32 to vector<8x8xf32>
    %46 = arith.mulf %45, %44 : vector<8x8xf32>
    %47 = arith.addf %42, %46 : vector<8x8xf32>
    %c9 = arith.constant 9 : index
    %48 = memref.load %arg4[%c9] : memref<98xf32, #tpu.memory_space<smem>>
    %49 = vector.extract_strided_slice %2 {offsets = [1, 2], sizes = [8, 8], strides = [1, 1]} : vector<14x14xf32> to vector<8x8xf32>
    %50 = vector.broadcast %48 : f32 to vector<8x8xf32>
    %51 = arith.mulf %50, %49 : vector<8x8xf32>
    %52 = arith.addf %47, %51 : vector<8x8xf32>
    %c10 = arith.constant 10 : index
    %53 = memref.load %arg4[%c10] : memref<98xf32, #tpu.memory_space<smem>>
    %54 = vector.extract_strided_slice %2 {offsets = [1, 3], sizes = [8, 8], strides = [1, 1]} : vector<14x14xf32> to vector<8x8xf32>
    %55 = vector.broadcast %53 : f32 to vector<8x8xf32>
    %56 = arith.mulf %55, %54 : vector<8x8xf32>
    %57 = arith.addf %52, %56 : vector<8x8xf32>
    %c11 = arith.constant 11 : index
    %58 = memref.load %arg4[%c11] : memref<98xf32, #tpu.memory_space<smem>>
    %59 = vector.extract_strided_slice %2 {offsets = [1, 4], sizes = [8, 8], strides = [1, 1]} : vector<14x14xf32> to vector<8x8xf32>
    %60 = vector.broadcast %58 : f32 to vector<8x8xf32>
    %61 = arith.mulf %60, %59 : vector<8x8xf32>
    %62 = arith.addf %57, %61 : vector<8x8xf32>
    %c12 = arith.constant 12 : index
    %63 = memref.load %arg4[%c12] : memref<98xf32, #tpu.memory_space<smem>>
    %64 = vector.extract_strided_slice %2 {offsets = [1, 5], sizes = [8, 8], strides = [1, 1]} : vector<14x14xf32> to vector<8x8xf32>
    %65 = vector.broadcast %63 : f32 to vector<8x8xf32>
    %66 = arith.mulf %65, %64 : vector<8x8xf32>
    %67 = arith.addf %62, %66 : vector<8x8xf32>
    %c13 = arith.constant 13 : index
    %68 = memref.load %arg4[%c13] : memref<98xf32, #tpu.memory_space<smem>>
    %69 = vector.extract_strided_slice %2 {offsets = [1, 6], sizes = [8, 8], strides = [1, 1]} : vector<14x14xf32> to vector<8x8xf32>
    %70 = vector.broadcast %68 : f32 to vector<8x8xf32>
    %71 = arith.mulf %70, %69 : vector<8x8xf32>
    %72 = arith.addf %67, %71 : vector<8x8xf32>
    %c14 = arith.constant 14 : index
    %73 = memref.load %arg4[%c14] : memref<98xf32, #tpu.memory_space<smem>>
    %74 = vector.extract_strided_slice %2 {offsets = [2, 0], sizes = [8, 8], strides = [1, 1]} : vector<14x14xf32> to vector<8x8xf32>
    %75 = vector.broadcast %73 : f32 to vector<8x8xf32>
    %76 = arith.mulf %75, %74 : vector<8x8xf32>
    %77 = arith.addf %72, %76 : vector<8x8xf32>
    %c15 = arith.constant 15 : index
    %78 = memref.load %arg4[%c15] : memref<98xf32, #tpu.memory_space<smem>>
    %79 = vector.extract_strided_slice %2 {offsets = [2, 1], sizes = [8, 8], strides = [1, 1]} : vector<14x14xf32> to vector<8x8xf32>
    %80 = vector.broadcast %78 : f32 to vector<8x8xf32>
    %81 = arith.mulf %80, %79 : vector<8x8xf32>
    %82 = arith.addf %77, %81 : vector<8x8xf32>
    %c16 = arith.constant 16 : index
    %83 = memref.load %arg4[%c16] : memref<98xf32, #tpu.memory_space<smem>>
    %84 = vector.extract_strided_slice %2 {offsets = [2, 2], sizes = [8, 8], strides = [1, 1]} : vector<14x14xf32> to vector<8x8xf32>
    %85 = vector.broadcast %83 : f32 to vector<8x8xf32>
    %86 = arith.mulf %85, %84 : vector<8x8xf32>
    %87 = arith.addf %82, %86 : vector<8x8xf32>
    %c17 = arith.constant 17 : index
    %88 = memref.load %arg4[%c17] : memref<98xf32, #tpu.memory_space<smem>>
    %89 = vector.extract_strided_slice %2 {offsets = [2, 3], sizes = [8, 8], strides = [1, 1]} : vector<14x14xf32> to vector<8x8xf32>
    %90 = vector.broadcast %88 : f32 to vector<8x8xf32>
    %91 = arith.mulf %90, %89 : vector<8x8xf32>
    %92 = arith.addf %87, %91 : vector<8x8xf32>
    %c18 = arith.constant 18 : index
    %93 = memref.load %arg4[%c18] : memref<98xf32, #tpu.memory_space<smem>>
    %94 = vector.extract_strided_slice %2 {offsets = [2, 4], sizes = [8, 8], strides = [1, 1]} : vector<14x14xf32> to vector<8x8xf32>
    %95 = vector.broadcast %93 : f32 to vector<8x8xf32>
    %96 = arith.mulf %95, %94 : vector<8x8xf32>
    %97 = arith.addf %92, %96 : vector<8x8xf32>
    %c19 = arith.constant 19 : index
    %98 = memref.load %arg4[%c19] : memref<98xf32, #tpu.memory_space<smem>>
    %99 = vector.extract_strided_slice %2 {offsets = [2, 5], sizes = [8, 8], strides = [1, 1]} : vector<14x14xf32> to vector<8x8xf32>
    %100 = vector.broadcast %98 : f32 to vector<8x8xf32>
    %101 = arith.mulf %100, %99 : vector<8x8xf32>
    %102 = arith.addf %97, %101 : vector<8x8xf32>
    %c20 = arith.constant 20 : index
    %103 = memref.load %arg4[%c20] : memref<98xf32, #tpu.memory_space<smem>>
    %104 = vector.extract_strided_slice %2 {offsets = [2, 6], sizes = [8, 8], strides = [1, 1]} : vector<14x14xf32> to vector<8x8xf32>
    %105 = vector.broadcast %103 : f32 to vector<8x8xf32>
    %106 = arith.mulf %105, %104 : vector<8x8xf32>
    %107 = arith.addf %102, %106 : vector<8x8xf32>
    %c21 = arith.constant 21 : index
    %108 = memref.load %arg4[%c21] : memref<98xf32, #tpu.memory_space<smem>>
    %109 = vector.extract_strided_slice %2 {offsets = [3, 0], sizes = [8, 8], strides = [1, 1]} : vector<14x14xf32> to vector<8x8xf32>
    %110 = vector.broadcast %108 : f32 to vector<8x8xf32>
    %111 = arith.mulf %110, %109 : vector<8x8xf32>
    %112 = arith.addf %107, %111 : vector<8x8xf32>
    %c22 = arith.constant 22 : index
    %113 = memref.load %arg4[%c22] : memref<98xf32, #tpu.memory_space<smem>>
    %114 = vector.extract_strided_slice %2 {offsets = [3, 1], sizes = [8, 8], strides = [1, 1]} : vector<14x14xf32> to vector<8x8xf32>
    %115 = vector.broadcast %113 : f32 to vector<8x8xf32>
    %116 = arith.mulf %115, %114 : vector<8x8xf32>
    %117 = arith.addf %112, %116 : vector<8x8xf32>
    %c23 = arith.constant 23 : index
    %118 = memref.load %arg4[%c23] : memref<98xf32, #tpu.memory_space<smem>>
    %119 = vector.extract_strided_slice %2 {offsets = [3, 2], sizes = [8, 8], strides = [1, 1]} : vector<14x14xf32> to vector<8x8xf32>
    %120 = vector.broadcast %118 : f32 to vector<8x8xf32>
    %121 = arith.mulf %120, %119 : vector<8x8xf32>
    %122 = arith.addf %117, %121 : vector<8x8xf32>
    %c24 = arith.constant 24 : index
    %123 = memref.load %arg4[%c24] : memref<98xf32, #tpu.memory_space<smem>>
    %124 = vector.extract_strided_slice %2 {offsets = [3, 3], sizes = [8, 8], strides = [1, 1]} : vector<14x14xf32> to vector<8x8xf32>
    %125 = vector.broadcast %123 : f32 to vector<8x8xf32>
    %126 = arith.mulf %125, %124 : vector<8x8xf32>
    %127 = arith.addf %122, %126 : vector<8x8xf32>
    %c25 = arith.constant 25 : index
    %128 = memref.load %arg4[%c25] : memref<98xf32, #tpu.memory_space<smem>>
    %129 = vector.extract_strided_slice %2 {offsets = [3, 4], sizes = [8, 8], strides = [1, 1]} : vector<14x14xf32> to vector<8x8xf32>
    %130 = vector.broadcast %128 : f32 to vector<8x8xf32>
    %131 = arith.mulf %130, %129 : vector<8x8xf32>
    %132 = arith.addf %127, %131 : vector<8x8xf32>
    %c26 = arith.constant 26 : index
    %133 = memref.load %arg4[%c26] : memref<98xf32, #tpu.memory_space<smem>>
    %134 = vector.extract_strided_slice %2 {offsets = [3, 5], sizes = [8, 8], strides = [1, 1]} : vector<14x14xf32> to vector<8x8xf32>
    %135 = vector.broadcast %133 : f32 to vector<8x8xf32>
    %136 = arith.mulf %135, %134 : vector<8x8xf32>
    %137 = arith.addf %132, %136 : vector<8x8xf32>
    %c27 = arith.constant 27 : index
    %138 = memref.load %arg4[%c27] : memref<98xf32, #tpu.memory_space<smem>>
    %139 = vector.extract_strided_slice %2 {offsets = [3, 6], sizes = [8, 8], strides = [1, 1]} : vector<14x14xf32> to vector<8x8xf32>
    %140 = vector.broadcast %138 : f32 to vector<8x8xf32>
    %141 = arith.mulf %140, %139 : vector<8x8xf32>
    %142 = arith.addf %137, %141 : vector<8x8xf32>
    %c28 = arith.constant 28 : index
    %143 = memref.load %arg4[%c28] : memref<98xf32, #tpu.memory_space<smem>>
    %144 = vector.extract_strided_slice %2 {offsets = [4, 0], sizes = [8, 8], strides = [1, 1]} : vector<14x14xf32> to vector<8x8xf32>
    %145 = vector.broadcast %143 : f32 to vector<8x8xf32>
    %146 = arith.mulf %145, %144 : vector<8x8xf32>
    %147 = arith.addf %142, %146 : vector<8x8xf32>
    %c29 = arith.constant 29 : index
    %148 = memref.load %arg4[%c29] : memref<98xf32, #tpu.memory_space<smem>>
    %149 = vector.extract_strided_slice %2 {offsets = [4, 1], sizes = [8, 8], strides = [1, 1]} : vector<14x14xf32> to vector<8x8xf32>
    %150 = vector.broadcast %148 : f32 to vector<8x8xf32>
    %151 = arith.mulf %150, %149 : vector<8x8xf32>
    %152 = arith.addf %147, %151 : vector<8x8xf32>
    %c30 = arith.constant 30 : index
    %153 = memref.load %arg4[%c30] : memref<98xf32, #tpu.memory_space<smem>>
    %154 = vector.extract_strided_slice %2 {offsets = [4, 2], sizes = [8, 8], strides = [1, 1]} : vector<14x14xf32> to vector<8x8xf32>
    %155 = vector.broadcast %153 : f32 to vector<8x8xf32>
    %156 = arith.mulf %155, %154 : vector<8x8xf32>
    %157 = arith.addf %152, %156 : vector<8x8xf32>
    %c31 = arith.constant 31 : index
    %158 = memref.load %arg4[%c31] : memref<98xf32, #tpu.memory_space<smem>>
    %159 = vector.extract_strided_slice %2 {offsets = [4, 3], sizes = [8, 8], strides = [1, 1]} : vector<14x14xf32> to vector<8x8xf32>
    %160 = vector.broadcast %158 : f32 to vector<8x8xf32>
    %161 = arith.mulf %160, %159 : vector<8x8xf32>
    %162 = arith.addf %157, %161 : vector<8x8xf32>
    %c32 = arith.constant 32 : index
    %163 = memref.load %arg4[%c32] : memref<98xf32, #tpu.memory_space<smem>>
    %164 = vector.extract_strided_slice %2 {offsets = [4, 4], sizes = [8, 8], strides = [1, 1]} : vector<14x14xf32> to vector<8x8xf32>
    %165 = vector.broadcast %163 : f32 to vector<8x8xf32>
    %166 = arith.mulf %165, %164 : vector<8x8xf32>
    %167 = arith.addf %162, %166 : vector<8x8xf32>
    %c33 = arith.constant 33 : index
    %168 = memref.load %arg4[%c33] : memref<98xf32, #tpu.memory_space<smem>>
    %169 = vector.extract_strided_slice %2 {offsets = [4, 5], sizes = [8, 8], strides = [1, 1]} : vector<14x14xf32> to vector<8x8xf32>
    %170 = vector.broadcast %168 : f32 to vector<8x8xf32>
    %171 = arith.mulf %170, %169 : vector<8x8xf32>
    %172 = arith.addf %167, %171 : vector<8x8xf32>
    %c34 = arith.constant 34 : index
    %173 = memref.load %arg4[%c34] : memref<98xf32, #tpu.memory_space<smem>>
    %174 = vector.extract_strided_slice %2 {offsets = [4, 6], sizes = [8, 8], strides = [1, 1]} : vector<14x14xf32> to vector<8x8xf32>
    %175 = vector.broadcast %173 : f32 to vector<8x8xf32>
    %176 = arith.mulf %175, %174 : vector<8x8xf32>
    %177 = arith.addf %172, %176 : vector<8x8xf32>
    %c35 = arith.constant 35 : index
    %178 = memref.load %arg4[%c35] : memref<98xf32, #tpu.memory_space<smem>>
    %179 = vector.extract_strided_slice %2 {offsets = [5, 0], sizes = [8, 8], strides = [1, 1]} : vector<14x14xf32> to vector<8x8xf32>
    %180 = vector.broadcast %178 : f32 to vector<8x8xf32>
    %181 = arith.mulf %180, %179 : vector<8x8xf32>
    %182 = arith.addf %177, %181 : vector<8x8xf32>
    %c36 = arith.constant 36 : index
    %183 = memref.load %arg4[%c36] : memref<98xf32, #tpu.memory_space<smem>>
    %184 = vector.extract_strided_slice %2 {offsets = [5, 1], sizes = [8, 8], strides = [1, 1]} : vector<14x14xf32> to vector<8x8xf32>
    %185 = vector.broadcast %183 : f32 to vector<8x8xf32>
    %186 = arith.mulf %185, %184 : vector<8x8xf32>
    %187 = arith.addf %182, %186 : vector<8x8xf32>
    %c37 = arith.constant 37 : index
    %188 = memref.load %arg4[%c37] : memref<98xf32, #tpu.memory_space<smem>>
    %189 = vector.extract_strided_slice %2 {offsets = [5, 2], sizes = [8, 8], strides = [1, 1]} : vector<14x14xf32> to vector<8x8xf32>
    %190 = vector.broadcast %188 : f32 to vector<8x8xf32>
    %191 = arith.mulf %190, %189 : vector<8x8xf32>
    %192 = arith.addf %187, %191 : vector<8x8xf32>
    %c38 = arith.constant 38 : index
    %193 = memref.load %arg4[%c38] : memref<98xf32, #tpu.memory_space<smem>>
    %194 = vector.extract_strided_slice %2 {offsets = [5, 3], sizes = [8, 8], strides = [1, 1]} : vector<14x14xf32> to vector<8x8xf32>
    %195 = vector.broadcast %193 : f32 to vector<8x8xf32>
    %196 = arith.mulf %195, %194 : vector<8x8xf32>
    %197 = arith.addf %192, %196 : vector<8x8xf32>
    %c39 = arith.constant 39 : index
    %198 = memref.load %arg4[%c39] : memref<98xf32, #tpu.memory_space<smem>>
    %199 = vector.extract_strided_slice %2 {offsets = [5, 4], sizes = [8, 8], strides = [1, 1]} : vector<14x14xf32> to vector<8x8xf32>
    %200 = vector.broadcast %198 : f32 to vector<8x8xf32>
    %201 = arith.mulf %200, %199 : vector<8x8xf32>
    %202 = arith.addf %197, %201 : vector<8x8xf32>
    %c40 = arith.constant 40 : index
    %203 = memref.load %arg4[%c40] : memref<98xf32, #tpu.memory_space<smem>>
    %204 = vector.extract_strided_slice %2 {offsets = [5, 5], sizes = [8, 8], strides = [1, 1]} : vector<14x14xf32> to vector<8x8xf32>
    %205 = vector.broadcast %203 : f32 to vector<8x8xf32>
    %206 = arith.mulf %205, %204 : vector<8x8xf32>
    %207 = arith.addf %202, %206 : vector<8x8xf32>
    %c41 = arith.constant 41 : index
    %208 = memref.load %arg4[%c41] : memref<98xf32, #tpu.memory_space<smem>>
    %209 = vector.extract_strided_slice %2 {offsets = [5, 6], sizes = [8, 8], strides = [1, 1]} : vector<14x14xf32> to vector<8x8xf32>
    %210 = vector.broadcast %208 : f32 to vector<8x8xf32>
    %211 = arith.mulf %210, %209 : vector<8x8xf32>
    %212 = arith.addf %207, %211 : vector<8x8xf32>
    %c42 = arith.constant 42 : index
    %213 = memref.load %arg4[%c42] : memref<98xf32, #tpu.memory_space<smem>>
    %214 = vector.extract_strided_slice %2 {offsets = [6, 0], sizes = [8, 8], strides = [1, 1]} : vector<14x14xf32> to vector<8x8xf32>
    %215 = vector.broadcast %213 : f32 to vector<8x8xf32>
    %216 = arith.mulf %215, %214 : vector<8x8xf32>
    %217 = arith.addf %212, %216 : vector<8x8xf32>
    %c43 = arith.constant 43 : index
    %218 = memref.load %arg4[%c43] : memref<98xf32, #tpu.memory_space<smem>>
    %219 = vector.extract_strided_slice %2 {offsets = [6, 1], sizes = [8, 8], strides = [1, 1]} : vector<14x14xf32> to vector<8x8xf32>
    %220 = vector.broadcast %218 : f32 to vector<8x8xf32>
    %221 = arith.mulf %220, %219 : vector<8x8xf32>
    %222 = arith.addf %217, %221 : vector<8x8xf32>
    %c44 = arith.constant 44 : index
    %223 = memref.load %arg4[%c44] : memref<98xf32, #tpu.memory_space<smem>>
    %224 = vector.extract_strided_slice %2 {offsets = [6, 2], sizes = [8, 8], strides = [1, 1]} : vector<14x14xf32> to vector<8x8xf32>
    %225 = vector.broadcast %223 : f32 to vector<8x8xf32>
    %226 = arith.mulf %225, %224 : vector<8x8xf32>
    %227 = arith.addf %222, %226 : vector<8x8xf32>
    %c45 = arith.constant 45 : index
    %228 = memref.load %arg4[%c45] : memref<98xf32, #tpu.memory_space<smem>>
    %229 = vector.extract_strided_slice %2 {offsets = [6, 3], sizes = [8, 8], strides = [1, 1]} : vector<14x14xf32> to vector<8x8xf32>
    %230 = vector.broadcast %228 : f32 to vector<8x8xf32>
    %231 = arith.mulf %230, %229 : vector<8x8xf32>
    %232 = arith.addf %227, %231 : vector<8x8xf32>
    %c46 = arith.constant 46 : index
    %233 = memref.load %arg4[%c46] : memref<98xf32, #tpu.memory_space<smem>>
    %234 = vector.extract_strided_slice %2 {offsets = [6, 4], sizes = [8, 8], strides = [1, 1]} : vector<14x14xf32> to vector<8x8xf32>
    %235 = vector.broadcast %233 : f32 to vector<8x8xf32>
    %236 = arith.mulf %235, %234 : vector<8x8xf32>
    %237 = arith.addf %232, %236 : vector<8x8xf32>
    %c47 = arith.constant 47 : index
    %238 = memref.load %arg4[%c47] : memref<98xf32, #tpu.memory_space<smem>>
    %239 = vector.extract_strided_slice %2 {offsets = [6, 5], sizes = [8, 8], strides = [1, 1]} : vector<14x14xf32> to vector<8x8xf32>
    %240 = vector.broadcast %238 : f32 to vector<8x8xf32>
    %241 = arith.mulf %240, %239 : vector<8x8xf32>
    %242 = arith.addf %237, %241 : vector<8x8xf32>
    %c48 = arith.constant 48 : index
    %243 = memref.load %arg4[%c48] : memref<98xf32, #tpu.memory_space<smem>>
    %244 = vector.extract_strided_slice %2 {offsets = [6, 6], sizes = [8, 8], strides = [1, 1]} : vector<14x14xf32> to vector<8x8xf32>
    %245 = vector.broadcast %243 : f32 to vector<8x8xf32>
    %246 = arith.mulf %245, %244 : vector<8x8xf32>
    %247 = arith.addf %242, %246 : vector<8x8xf32>
    %c0_4 = arith.constant 0 : index
    %c1_5 = arith.constant 1 : index
    %c0_6 = arith.constant 0 : index
    %c0_7 = arith.constant 0 : index
    %248 = vector.load %arg3[%c0_4, %c1_5, %c0_6, %c0_7] : memref<1x2x14x14xf32, #tpu.memory_space<vmem>>, vector<1x1x14x14xf32>
    %249 = vector.shape_cast %248 : vector<1x1x14x14xf32> to vector<14x14xf32>
    %c49 = arith.constant 49 : index
    %250 = memref.load %arg4[%c49] : memref<98xf32, #tpu.memory_space<smem>>
    %251 = vector.extract_strided_slice %249 {offsets = [0, 0], sizes = [8, 8], strides = [1, 1]} : vector<14x14xf32> to vector<8x8xf32>
    %252 = vector.broadcast %250 : f32 to vector<8x8xf32>
    %253 = arith.mulf %252, %251 : vector<8x8xf32>
    %254 = arith.addf %247, %253 : vector<8x8xf32>
    %c50 = arith.constant 50 : index
    %255 = memref.load %arg4[%c50] : memref<98xf32, #tpu.memory_space<smem>>
    %256 = vector.extract_strided_slice %249 {offsets = [0, 1], sizes = [8, 8], strides = [1, 1]} : vector<14x14xf32> to vector<8x8xf32>
    %257 = vector.broadcast %255 : f32 to vector<8x8xf32>
    %258 = arith.mulf %257, %256 : vector<8x8xf32>
    %259 = arith.addf %254, %258 : vector<8x8xf32>
    %c51 = arith.constant 51 : index
    %260 = memref.load %arg4[%c51] : memref<98xf32, #tpu.memory_space<smem>>
    %261 = vector.extract_strided_slice %249 {offsets = [0, 2], sizes = [8, 8], strides = [1, 1]} : vector<14x14xf32> to vector<8x8xf32>
    %262 = vector.broadcast %260 : f32 to vector<8x8xf32>
    %263 = arith.mulf %262, %261 : vector<8x8xf32>
    %264 = arith.addf %259, %263 : vector<8x8xf32>
    %c52 = arith.constant 52 : index
    %265 = memref.load %arg4[%c52] : memref<98xf32, #tpu.memory_space<smem>>
    %266 = vector.extract_strided_slice %249 {offsets = [0, 3], sizes = [8, 8], strides = [1, 1]} : vector<14x14xf32> to vector<8x8xf32>
    %267 = vector.broadcast %265 : f32 to vector<8x8xf32>
    %268 = arith.mulf %267, %266 : vector<8x8xf32>
    %269 = arith.addf %264, %268 : vector<8x8xf32>
    %c53 = arith.constant 53 : index
    %270 = memref.load %arg4[%c53] : memref<98xf32, #tpu.memory_space<smem>>
    %271 = vector.extract_strided_slice %249 {offsets = [0, 4], sizes = [8, 8], strides = [1, 1]} : vector<14x14xf32> to vector<8x8xf32>
    %272 = vector.broadcast %270 : f32 to vector<8x8xf32>
    %273 = arith.mulf %272, %271 : vector<8x8xf32>
    %274 = arith.addf %269, %273 : vector<8x8xf32>
    %c54 = arith.constant 54 : index
    %275 = memref.load %arg4[%c54] : memref<98xf32, #tpu.memory_space<smem>>
    %276 = vector.extract_strided_slice %249 {offsets = [0, 5], sizes = [8, 8], strides = [1, 1]} : vector<14x14xf32> to vector<8x8xf32>
    %277 = vector.broadcast %275 : f32 to vector<8x8xf32>
    %278 = arith.mulf %277, %276 : vector<8x8xf32>
    %279 = arith.addf %274, %278 : vector<8x8xf32>
    %c55 = arith.constant 55 : index
    %280 = memref.load %arg4[%c55] : memref<98xf32, #tpu.memory_space<smem>>
    %281 = vector.extract_strided_slice %249 {offsets = [0, 6], sizes = [8, 8], strides = [1, 1]} : vector<14x14xf32> to vector<8x8xf32>
    %282 = vector.broadcast %280 : f32 to vector<8x8xf32>
    %283 = arith.mulf %282, %281 : vector<8x8xf32>
    %284 = arith.addf %279, %283 : vector<8x8xf32>
    %c56 = arith.constant 56 : index
    %285 = memref.load %arg4[%c56] : memref<98xf32, #tpu.memory_space<smem>>
    %286 = vector.extract_strided_slice %249 {offsets = [1, 0], sizes = [8, 8], strides = [1, 1]} : vector<14x14xf32> to vector<8x8xf32>
    %287 = vector.broadcast %285 : f32 to vector<8x8xf32>
    %288 = arith.mulf %287, %286 : vector<8x8xf32>
    %289 = arith.addf %284, %288 : vector<8x8xf32>
    %c57 = arith.constant 57 : index
    %290 = memref.load %arg4[%c57] : memref<98xf32, #tpu.memory_space<smem>>
    %291 = vector.extract_strided_slice %249 {offsets = [1, 1], sizes = [8, 8], strides = [1, 1]} : vector<14x14xf32> to vector<8x8xf32>
    %292 = vector.broadcast %290 : f32 to vector<8x8xf32>
    %293 = arith.mulf %292, %291 : vector<8x8xf32>
    %294 = arith.addf %289, %293 : vector<8x8xf32>
    %c58 = arith.constant 58 : index
    %295 = memref.load %arg4[%c58] : memref<98xf32, #tpu.memory_space<smem>>
    %296 = vector.extract_strided_slice %249 {offsets = [1, 2], sizes = [8, 8], strides = [1, 1]} : vector<14x14xf32> to vector<8x8xf32>
    %297 = vector.broadcast %295 : f32 to vector<8x8xf32>
    %298 = arith.mulf %297, %296 : vector<8x8xf32>
    %299 = arith.addf %294, %298 : vector<8x8xf32>
    %c59 = arith.constant 59 : index
    %300 = memref.load %arg4[%c59] : memref<98xf32, #tpu.memory_space<smem>>
    %301 = vector.extract_strided_slice %249 {offsets = [1, 3], sizes = [8, 8], strides = [1, 1]} : vector<14x14xf32> to vector<8x8xf32>
    %302 = vector.broadcast %300 : f32 to vector<8x8xf32>
    %303 = arith.mulf %302, %301 : vector<8x8xf32>
    %304 = arith.addf %299, %303 : vector<8x8xf32>
    %c60 = arith.constant 60 : index
    %305 = memref.load %arg4[%c60] : memref<98xf32, #tpu.memory_space<smem>>
    %306 = vector.extract_strided_slice %249 {offsets = [1, 4], sizes = [8, 8], strides = [1, 1]} : vector<14x14xf32> to vector<8x8xf32>
    %307 = vector.broadcast %305 : f32 to vector<8x8xf32>
    %308 = arith.mulf %307, %306 : vector<8x8xf32>
    %309 = arith.addf %304, %308 : vector<8x8xf32>
    %c61 = arith.constant 61 : index
    %310 = memref.load %arg4[%c61] : memref<98xf32, #tpu.memory_space<smem>>
    %311 = vector.extract_strided_slice %249 {offsets = [1, 5], sizes = [8, 8], strides = [1, 1]} : vector<14x14xf32> to vector<8x8xf32>
    %312 = vector.broadcast %310 : f32 to vector<8x8xf32>
    %313 = arith.mulf %312, %311 : vector<8x8xf32>
    %314 = arith.addf %309, %313 : vector<8x8xf32>
    %c62 = arith.constant 62 : index
    %315 = memref.load %arg4[%c62] : memref<98xf32, #tpu.memory_space<smem>>
    %316 = vector.extract_strided_slice %249 {offsets = [1, 6], sizes = [8, 8], strides = [1, 1]} : vector<14x14xf32> to vector<8x8xf32>
    %317 = vector.broadcast %315 : f32 to vector<8x8xf32>
    %318 = arith.mulf %317, %316 : vector<8x8xf32>
    %319 = arith.addf %314, %318 : vector<8x8xf32>
    %c63 = arith.constant 63 : index
    %320 = memref.load %arg4[%c63] : memref<98xf32, #tpu.memory_space<smem>>
    %321 = vector.extract_strided_slice %249 {offsets = [2, 0], sizes = [8, 8], strides = [1, 1]} : vector<14x14xf32> to vector<8x8xf32>
    %322 = vector.broadcast %320 : f32 to vector<8x8xf32>
    %323 = arith.mulf %322, %321 : vector<8x8xf32>
    %324 = arith.addf %319, %323 : vector<8x8xf32>
    %c64 = arith.constant 64 : index
    %325 = memref.load %arg4[%c64] : memref<98xf32, #tpu.memory_space<smem>>
    %326 = vector.extract_strided_slice %249 {offsets = [2, 1], sizes = [8, 8], strides = [1, 1]} : vector<14x14xf32> to vector<8x8xf32>
    %327 = vector.broadcast %325 : f32 to vector<8x8xf32>
    %328 = arith.mulf %327, %326 : vector<8x8xf32>
    %329 = arith.addf %324, %328 : vector<8x8xf32>
    %c65 = arith.constant 65 : index
    %330 = memref.load %arg4[%c65] : memref<98xf32, #tpu.memory_space<smem>>
    %331 = vector.extract_strided_slice %249 {offsets = [2, 2], sizes = [8, 8], strides = [1, 1]} : vector<14x14xf32> to vector<8x8xf32>
    %332 = vector.broadcast %330 : f32 to vector<8x8xf32>
    %333 = arith.mulf %332, %331 : vector<8x8xf32>
    %334 = arith.addf %329, %333 : vector<8x8xf32>
    %c66 = arith.constant 66 : index
    %335 = memref.load %arg4[%c66] : memref<98xf32, #tpu.memory_space<smem>>
    %336 = vector.extract_strided_slice %249 {offsets = [2, 3], sizes = [8, 8], strides = [1, 1]} : vector<14x14xf32> to vector<8x8xf32>
    %337 = vector.broadcast %335 : f32 to vector<8x8xf32>
    %338 = arith.mulf %337, %336 : vector<8x8xf32>
    %339 = arith.addf %334, %338 : vector<8x8xf32>
    %c67 = arith.constant 67 : index
    %340 = memref.load %arg4[%c67] : memref<98xf32, #tpu.memory_space<smem>>
    %341 = vector.extract_strided_slice %249 {offsets = [2, 4], sizes = [8, 8], strides = [1, 1]} : vector<14x14xf32> to vector<8x8xf32>
    %342 = vector.broadcast %340 : f32 to vector<8x8xf32>
    %343 = arith.mulf %342, %341 : vector<8x8xf32>
    %344 = arith.addf %339, %343 : vector<8x8xf32>
    %c68 = arith.constant 68 : index
    %345 = memref.load %arg4[%c68] : memref<98xf32, #tpu.memory_space<smem>>
    %346 = vector.extract_strided_slice %249 {offsets = [2, 5], sizes = [8, 8], strides = [1, 1]} : vector<14x14xf32> to vector<8x8xf32>
    %347 = vector.broadcast %345 : f32 to vector<8x8xf32>
    %348 = arith.mulf %347, %346 : vector<8x8xf32>
    %349 = arith.addf %344, %348 : vector<8x8xf32>
    %c69 = arith.constant 69 : index
    %350 = memref.load %arg4[%c69] : memref<98xf32, #tpu.memory_space<smem>>
    %351 = vector.extract_strided_slice %249 {offsets = [2, 6], sizes = [8, 8], strides = [1, 1]} : vector<14x14xf32> to vector<8x8xf32>
    %352 = vector.broadcast %350 : f32 to vector<8x8xf32>
    %353 = arith.mulf %352, %351 : vector<8x8xf32>
    %354 = arith.addf %349, %353 : vector<8x8xf32>
    %c70 = arith.constant 70 : index
    %355 = memref.load %arg4[%c70] : memref<98xf32, #tpu.memory_space<smem>>
    %356 = vector.extract_strided_slice %249 {offsets = [3, 0], sizes = [8, 8], strides = [1, 1]} : vector<14x14xf32> to vector<8x8xf32>
    %357 = vector.broadcast %355 : f32 to vector<8x8xf32>
    %358 = arith.mulf %357, %356 : vector<8x8xf32>
    %359 = arith.addf %354, %358 : vector<8x8xf32>
    %c71 = arith.constant 71 : index
    %360 = memref.load %arg4[%c71] : memref<98xf32, #tpu.memory_space<smem>>
    %361 = vector.extract_strided_slice %249 {offsets = [3, 1], sizes = [8, 8], strides = [1, 1]} : vector<14x14xf32> to vector<8x8xf32>
    %362 = vector.broadcast %360 : f32 to vector<8x8xf32>
    %363 = arith.mulf %362, %361 : vector<8x8xf32>
    %364 = arith.addf %359, %363 : vector<8x8xf32>
    %c72 = arith.constant 72 : index
    %365 = memref.load %arg4[%c72] : memref<98xf32, #tpu.memory_space<smem>>
    %366 = vector.extract_strided_slice %249 {offsets = [3, 2], sizes = [8, 8], strides = [1, 1]} : vector<14x14xf32> to vector<8x8xf32>
    %367 = vector.broadcast %365 : f32 to vector<8x8xf32>
    %368 = arith.mulf %367, %366 : vector<8x8xf32>
    %369 = arith.addf %364, %368 : vector<8x8xf32>
    %c73 = arith.constant 73 : index
    %370 = memref.load %arg4[%c73] : memref<98xf32, #tpu.memory_space<smem>>
    %371 = vector.extract_strided_slice %249 {offsets = [3, 3], sizes = [8, 8], strides = [1, 1]} : vector<14x14xf32> to vector<8x8xf32>
    %372 = vector.broadcast %370 : f32 to vector<8x8xf32>
    %373 = arith.mulf %372, %371 : vector<8x8xf32>
    %374 = arith.addf %369, %373 : vector<8x8xf32>
    %c74 = arith.constant 74 : index
    %375 = memref.load %arg4[%c74] : memref<98xf32, #tpu.memory_space<smem>>
    %376 = vector.extract_strided_slice %249 {offsets = [3, 4], sizes = [8, 8], strides = [1, 1]} : vector<14x14xf32> to vector<8x8xf32>
    %377 = vector.broadcast %375 : f32 to vector<8x8xf32>
    %378 = arith.mulf %377, %376 : vector<8x8xf32>
    %379 = arith.addf %374, %378 : vector<8x8xf32>
    %c75 = arith.constant 75 : index
    %380 = memref.load %arg4[%c75] : memref<98xf32, #tpu.memory_space<smem>>
    %381 = vector.extract_strided_slice %249 {offsets = [3, 5], sizes = [8, 8], strides = [1, 1]} : vector<14x14xf32> to vector<8x8xf32>
    %382 = vector.broadcast %380 : f32 to vector<8x8xf32>
    %383 = arith.mulf %382, %381 : vector<8x8xf32>
    %384 = arith.addf %379, %383 : vector<8x8xf32>
    %c76 = arith.constant 76 : index
    %385 = memref.load %arg4[%c76] : memref<98xf32, #tpu.memory_space<smem>>
    %386 = vector.extract_strided_slice %249 {offsets = [3, 6], sizes = [8, 8], strides = [1, 1]} : vector<14x14xf32> to vector<8x8xf32>
    %387 = vector.broadcast %385 : f32 to vector<8x8xf32>
    %388 = arith.mulf %387, %386 : vector<8x8xf32>
    %389 = arith.addf %384, %388 : vector<8x8xf32>
    %c77 = arith.constant 77 : index
    %390 = memref.load %arg4[%c77] : memref<98xf32, #tpu.memory_space<smem>>
    %391 = vector.extract_strided_slice %249 {offsets = [4, 0], sizes = [8, 8], strides = [1, 1]} : vector<14x14xf32> to vector<8x8xf32>
    %392 = vector.broadcast %390 : f32 to vector<8x8xf32>
    %393 = arith.mulf %392, %391 : vector<8x8xf32>
    %394 = arith.addf %389, %393 : vector<8x8xf32>
    %c78 = arith.constant 78 : index
    %395 = memref.load %arg4[%c78] : memref<98xf32, #tpu.memory_space<smem>>
    %396 = vector.extract_strided_slice %249 {offsets = [4, 1], sizes = [8, 8], strides = [1, 1]} : vector<14x14xf32> to vector<8x8xf32>
    %397 = vector.broadcast %395 : f32 to vector<8x8xf32>
    %398 = arith.mulf %397, %396 : vector<8x8xf32>
    %399 = arith.addf %394, %398 : vector<8x8xf32>
    %c79 = arith.constant 79 : index
    %400 = memref.load %arg4[%c79] : memref<98xf32, #tpu.memory_space<smem>>
    %401 = vector.extract_strided_slice %249 {offsets = [4, 2], sizes = [8, 8], strides = [1, 1]} : vector<14x14xf32> to vector<8x8xf32>
    %402 = vector.broadcast %400 : f32 to vector<8x8xf32>
    %403 = arith.mulf %402, %401 : vector<8x8xf32>
    %404 = arith.addf %399, %403 : vector<8x8xf32>
    %c80 = arith.constant 80 : index
    %405 = memref.load %arg4[%c80] : memref<98xf32, #tpu.memory_space<smem>>
    %406 = vector.extract_strided_slice %249 {offsets = [4, 3], sizes = [8, 8], strides = [1, 1]} : vector<14x14xf32> to vector<8x8xf32>
    %407 = vector.broadcast %405 : f32 to vector<8x8xf32>
    %408 = arith.mulf %407, %406 : vector<8x8xf32>
    %409 = arith.addf %404, %408 : vector<8x8xf32>
    %c81 = arith.constant 81 : index
    %410 = memref.load %arg4[%c81] : memref<98xf32, #tpu.memory_space<smem>>
    %411 = vector.extract_strided_slice %249 {offsets = [4, 4], sizes = [8, 8], strides = [1, 1]} : vector<14x14xf32> to vector<8x8xf32>
    %412 = vector.broadcast %410 : f32 to vector<8x8xf32>
    %413 = arith.mulf %412, %411 : vector<8x8xf32>
    %414 = arith.addf %409, %413 : vector<8x8xf32>
    %c82 = arith.constant 82 : index
    %415 = memref.load %arg4[%c82] : memref<98xf32, #tpu.memory_space<smem>>
    %416 = vector.extract_strided_slice %249 {offsets = [4, 5], sizes = [8, 8], strides = [1, 1]} : vector<14x14xf32> to vector<8x8xf32>
    %417 = vector.broadcast %415 : f32 to vector<8x8xf32>
    %418 = arith.mulf %417, %416 : vector<8x8xf32>
    %419 = arith.addf %414, %418 : vector<8x8xf32>
    %c83 = arith.constant 83 : index
    %420 = memref.load %arg4[%c83] : memref<98xf32, #tpu.memory_space<smem>>
    %421 = vector.extract_strided_slice %249 {offsets = [4, 6], sizes = [8, 8], strides = [1, 1]} : vector<14x14xf32> to vector<8x8xf32>
    %422 = vector.broadcast %420 : f32 to vector<8x8xf32>
    %423 = arith.mulf %422, %421 : vector<8x8xf32>
    %424 = arith.addf %419, %423 : vector<8x8xf32>
    %c84 = arith.constant 84 : index
    %425 = memref.load %arg4[%c84] : memref<98xf32, #tpu.memory_space<smem>>
    %426 = vector.extract_strided_slice %249 {offsets = [5, 0], sizes = [8, 8], strides = [1, 1]} : vector<14x14xf32> to vector<8x8xf32>
    %427 = vector.broadcast %425 : f32 to vector<8x8xf32>
    %428 = arith.mulf %427, %426 : vector<8x8xf32>
    %429 = arith.addf %424, %428 : vector<8x8xf32>
    %c85 = arith.constant 85 : index
    %430 = memref.load %arg4[%c85] : memref<98xf32, #tpu.memory_space<smem>>
    %431 = vector.extract_strided_slice %249 {offsets = [5, 1], sizes = [8, 8], strides = [1, 1]} : vector<14x14xf32> to vector<8x8xf32>
    %432 = vector.broadcast %430 : f32 to vector<8x8xf32>
    %433 = arith.mulf %432, %431 : vector<8x8xf32>
    %434 = arith.addf %429, %433 : vector<8x8xf32>
    %c86 = arith.constant 86 : index
    %435 = memref.load %arg4[%c86] : memref<98xf32, #tpu.memory_space<smem>>
    %436 = vector.extract_strided_slice %249 {offsets = [5, 2], sizes = [8, 8], strides = [1, 1]} : vector<14x14xf32> to vector<8x8xf32>
    %437 = vector.broadcast %435 : f32 to vector<8x8xf32>
    %438 = arith.mulf %437, %436 : vector<8x8xf32>
    %439 = arith.addf %434, %438 : vector<8x8xf32>
    %c87 = arith.constant 87 : index
    %440 = memref.load %arg4[%c87] : memref<98xf32, #tpu.memory_space<smem>>
    %441 = vector.extract_strided_slice %249 {offsets = [5, 3], sizes = [8, 8], strides = [1, 1]} : vector<14x14xf32> to vector<8x8xf32>
    %442 = vector.broadcast %440 : f32 to vector<8x8xf32>
    %443 = arith.mulf %442, %441 : vector<8x8xf32>
    %444 = arith.addf %439, %443 : vector<8x8xf32>
    %c88 = arith.constant 88 : index
    %445 = memref.load %arg4[%c88] : memref<98xf32, #tpu.memory_space<smem>>
    %446 = vector.extract_strided_slice %249 {offsets = [5, 4], sizes = [8, 8], strides = [1, 1]} : vector<14x14xf32> to vector<8x8xf32>
    %447 = vector.broadcast %445 : f32 to vector<8x8xf32>
    %448 = arith.mulf %447, %446 : vector<8x8xf32>
    %449 = arith.addf %444, %448 : vector<8x8xf32>
    %c89 = arith.constant 89 : index
    %450 = memref.load %arg4[%c89] : memref<98xf32, #tpu.memory_space<smem>>
    %451 = vector.extract_strided_slice %249 {offsets = [5, 5], sizes = [8, 8], strides = [1, 1]} : vector<14x14xf32> to vector<8x8xf32>
    %452 = vector.broadcast %450 : f32 to vector<8x8xf32>
    %453 = arith.mulf %452, %451 : vector<8x8xf32>
    %454 = arith.addf %449, %453 : vector<8x8xf32>
    %c90 = arith.constant 90 : index
    %455 = memref.load %arg4[%c90] : memref<98xf32, #tpu.memory_space<smem>>
    %456 = vector.extract_strided_slice %249 {offsets = [5, 6], sizes = [8, 8], strides = [1, 1]} : vector<14x14xf32> to vector<8x8xf32>
    %457 = vector.broadcast %455 : f32 to vector<8x8xf32>
    %458 = arith.mulf %457, %456 : vector<8x8xf32>
    %459 = arith.addf %454, %458 : vector<8x8xf32>
    %c91 = arith.constant 91 : index
    %460 = memref.load %arg4[%c91] : memref<98xf32, #tpu.memory_space<smem>>
    %461 = vector.extract_strided_slice %249 {offsets = [6, 0], sizes = [8, 8], strides = [1, 1]} : vector<14x14xf32> to vector<8x8xf32>
    %462 = vector.broadcast %460 : f32 to vector<8x8xf32>
    %463 = arith.mulf %462, %461 : vector<8x8xf32>
    %464 = arith.addf %459, %463 : vector<8x8xf32>
    %c92 = arith.constant 92 : index
    %465 = memref.load %arg4[%c92] : memref<98xf32, #tpu.memory_space<smem>>
    %466 = vector.extract_strided_slice %249 {offsets = [6, 1], sizes = [8, 8], strides = [1, 1]} : vector<14x14xf32> to vector<8x8xf32>
    %467 = vector.broadcast %465 : f32 to vector<8x8xf32>
    %468 = arith.mulf %467, %466 : vector<8x8xf32>
    %469 = arith.addf %464, %468 : vector<8x8xf32>
    %c93 = arith.constant 93 : index
    %470 = memref.load %arg4[%c93] : memref<98xf32, #tpu.memory_space<smem>>
    %471 = vector.extract_strided_slice %249 {offsets = [6, 2], sizes = [8, 8], strides = [1, 1]} : vector<14x14xf32> to vector<8x8xf32>
    %472 = vector.broadcast %470 : f32 to vector<8x8xf32>
    %473 = arith.mulf %472, %471 : vector<8x8xf32>
    %474 = arith.addf %469, %473 : vector<8x8xf32>
    %c94 = arith.constant 94 : index
    %475 = memref.load %arg4[%c94] : memref<98xf32, #tpu.memory_space<smem>>
    %476 = vector.extract_strided_slice %249 {offsets = [6, 3], sizes = [8, 8], strides = [1, 1]} : vector<14x14xf32> to vector<8x8xf32>
    %477 = vector.broadcast %475 : f32 to vector<8x8xf32>
    %478 = arith.mulf %477, %476 : vector<8x8xf32>
    %479 = arith.addf %474, %478 : vector<8x8xf32>
    %c95 = arith.constant 95 : index
    %480 = memref.load %arg4[%c95] : memref<98xf32, #tpu.memory_space<smem>>
    %481 = vector.extract_strided_slice %249 {offsets = [6, 4], sizes = [8, 8], strides = [1, 1]} : vector<14x14xf32> to vector<8x8xf32>
    %482 = vector.broadcast %480 : f32 to vector<8x8xf32>
    %483 = arith.mulf %482, %481 : vector<8x8xf32>
    %484 = arith.addf %479, %483 : vector<8x8xf32>
    %c96 = arith.constant 96 : index
    %485 = memref.load %arg4[%c96] : memref<98xf32, #tpu.memory_space<smem>>
    %486 = vector.extract_strided_slice %249 {offsets = [6, 5], sizes = [8, 8], strides = [1, 1]} : vector<14x14xf32> to vector<8x8xf32>
    %487 = vector.broadcast %485 : f32 to vector<8x8xf32>
    %488 = arith.mulf %487, %486 : vector<8x8xf32>
    %489 = arith.addf %484, %488 : vector<8x8xf32>
    %c97 = arith.constant 97 : index
    %490 = memref.load %arg4[%c97] : memref<98xf32, #tpu.memory_space<smem>>
    %491 = vector.extract_strided_slice %249 {offsets = [6, 6], sizes = [8, 8], strides = [1, 1]} : vector<14x14xf32> to vector<8x8xf32>
    %492 = vector.broadcast %490 : f32 to vector<8x8xf32>
    %493 = arith.mulf %492, %491 : vector<8x8xf32>
    %494 = arith.addf %489, %493 : vector<8x8xf32>
    %c0_8 = arith.constant 0 : index
    %495 = memref.load %arg5[%c0_8] : memref<2xf32, #tpu.memory_space<smem>>
    %496 = vector.broadcast %495 : f32 to vector<8x8xf32>
    %497 = arith.mulf %494, %496 : vector<8x8xf32>
    %c1_9 = arith.constant 1 : index
    %498 = memref.load %arg5[%c1_9] : memref<2xf32, #tpu.memory_space<smem>>
    %499 = vector.broadcast %498 : f32 to vector<8x8xf32>
    %500 = arith.addf %497, %499 : vector<8x8xf32>
    %501 = arith.negf %500 : vector<8x8xf32>
    %502 = math.exp %501 : vector<8x8xf32>
    %cst_10 = arith.constant 1.000000e+00 : f32
    %503 = vector.broadcast %cst_10 : f32 to vector<8x8xf32>
    %504 = arith.addf %503, %502 : vector<8x8xf32>
    %505 = arith.divf %503, %504 : vector<8x8xf32>
    %c0_11 = arith.constant 0 : index
    %c0_12 = arith.constant 0 : index
    %c0_13 = arith.constant 0 : index
    %c0_14 = arith.constant 0 : index
    %506 = vector.load %arg1[%c0_11, %c0_12, %c0_13, %c0_14] : memref<1x8x8x128xf32, #tpu.memory_space<vmem>>, vector<1x8x8x128xf32>
    %507 = vector.shape_cast %506 : vector<1x8x8x128xf32> to vector<8x8x128xf32>
    %c0_15 = arith.constant 0 : index
    %c0_16 = arith.constant 0 : index
    %c0_17 = arith.constant 0 : index
    %508 = vector.load %arg2[%c0_15, %c0_16, %c0_17] : memref<1x1x128xf32, #tpu.memory_space<vmem>>, vector<1x1x128xf32>
    %509 = vector.shape_cast %508 : vector<1x1x128xf32> to vector<128xf32>
    %510 = vector.shape_cast %509 : vector<128xf32> to vector<1x1x128xf32>
    %511 = vector.broadcast %510 : vector<1x1x128xf32> to vector<8x8x128xf32>
    %512 = arith.mulf %507, %511 : vector<8x8x128xf32>
    %c0_18 = arith.constant 0 : index
    %c0_19 = arith.constant 0 : index
    %c0_20 = arith.constant 0 : index
    %513 = vector.load %arg6[%c0_18, %c0_19, %c0_20] : memref<1x64x16xf32, #tpu.memory_space<vmem>>, vector<1x64x16xf32>
    %514 = vector.shape_cast %513 : vector<1x64x16xf32> to vector<64x16xf32>
    %515 = arith.truncf %514 : vector<64x16xf32> to vector<64x16xbf16>
    %c0_21 = arith.constant 0 : index
    %c0_22 = arith.constant 0 : index
    %516 = vector.load %arg7[%c0_21, %c0_22] : memref<16x128xbf16, #tpu.memory_space<vmem>>, vector<16x128xbf16>
    %cst_23 = arith.constant dense<0.000000e+00> : vector<64x128xf32>
    %517 = tpu.matmul %515, %516, %cst_23 {dimension_numbers = #tpu.dot_dimension_numbers<[1], [0], [0], [1], [0, 0, 1, 1], [], []>} : vector<64x16xbf16>, vector<16x128xbf16>, vector<64x128xf32> -> vector<64x128xf32>
    %c0_24 = arith.constant 0 : index
    %c0_25 = arith.constant 0 : index
    %518 = vector.load %arg8[%c0_24, %c0_25] : memref<1x128xf32, #tpu.memory_space<vmem>>, vector<1x128xf32>
    %519 = vector.broadcast %518 : vector<1x128xf32> to vector<64x128xf32>
    %520 = arith.mulf %517, %519 : vector<64x128xf32>
    %c0_26 = arith.constant 0 : index
    %c0_27 = arith.constant 0 : index
    %521 = vector.load %arg9[%c0_26, %c0_27] : memref<1x128xf32, #tpu.memory_space<vmem>>, vector<1x128xf32>
    %522 = vector.broadcast %521 : vector<1x128xf32> to vector<64x128xf32>
    %523 = arith.addf %520, %522 : vector<64x128xf32>
    %524 = vector.shape_cast %523 : vector<64x128xf32> to vector<8x8x128xf32>
    %525 = vector.shape_cast %505 : vector<8x8xf32> to vector<8x8x1xf32>
    %526 = vector.broadcast %525 : vector<8x8x1xf32> to vector<8x8x128xf32>
    %527 = arith.mulf %512, %526 : vector<8x8x128xf32>
    %528 = arith.addf %527, %524 : vector<8x8x128xf32>
    %cst_28 = arith.constant 0.000000e+00 : f32
    %529 = vector.broadcast %cst_28 : f32 to vector<8x8x128xf32>
    %530 = arith.maximumf %528, %529 : vector<8x8x128xf32>
    %c0_29 = arith.constant 0 : index
    %c0_30 = arith.constant 0 : index
    %c0_31 = arith.constant 0 : index
    %c0_32 = arith.constant 0 : index
    %531 = vector.load %arg10[%c0_29, %c0_30, %c0_31, %c0_32] : memref<1x8x8x128xf32, #tpu.memory_space<vmem>>, vector<1x8x8x128xf32>
    %532 = vector.shape_cast %531 : vector<1x8x8x128xf32> to vector<8x8x128xf32>
    %533 = vector.shape_cast %530 : vector<8x8x128xf32> to vector<1x8x8x128xf32>
    tpu.vector_store %arg10[%c0_29, %c0_30, %c0_31, %c0_32], %533 {strides = array<i32>} : memref<1x8x8x128xf32, #tpu.memory_space<vmem>>, vector<1x8x8x128xf32>,
    return
  }
  func.func @transform_0(%arg0: i32) -> (i32, i32, i32, i32) {
    %c0_i32 = arith.constant 0 : i32
    %c0_i32_0 = arith.constant 0 : i32
    %c0_i32_1 = arith.constant 0 : i32
    %c0_i32_2 = arith.constant 0 : i32
    return %arg0, %c0_i32, %c0_i32_0, %c0_i32_1 : i32, i32, i32, i32
  }
  func.func @transform_1(%arg0: i32) -> (i32, i32, i32) {
    %c0_i32 = arith.constant 0 : i32
    %c0_i32_0 = arith.constant 0 : i32
    %c0_i32_1 = arith.constant 0 : i32
    return %arg0, %c0_i32, %c0_i32_0 : i32, i32, i32
  }
  func.func @transform_2(%arg0: i32) -> (i32, i32, i32, i32) {
    %c0_i32 = arith.constant 0 : i32
    %c0_i32_0 = arith.constant 0 : i32
    %c0_i32_1 = arith.constant 0 : i32
    %c0_i32_2 = arith.constant 0 : i32
    return %arg0, %c0_i32, %c0_i32_0, %c0_i32_1 : i32, i32, i32, i32
  }
  func.func @transform_3(%arg0: i32) -> i32 {
    %c0_i32 = arith.constant 0 : i32
    %c0_i32_0 = arith.constant 0 : i32
    return %c0_i32 : i32
  }
  func.func @transform_4(%arg0: i32) -> i32 {
    %c0_i32 = arith.constant 0 : i32
    %c0_i32_0 = arith.constant 0 : i32
    return %c0_i32 : i32
  }
  func.func @transform_5(%arg0: i32) -> (i32, i32, i32) {
    %c0_i32 = arith.constant 0 : i32
    %c0_i32_0 = arith.constant 0 : i32
    %c0_i32_1 = arith.constant 0 : i32
    return %arg0, %c0_i32, %c0_i32_0 : i32, i32, i32
  }
  func.func @transform_6(%arg0: i32) -> (i32, i32) {
    %c0_i32 = arith.constant 0 : i32
    %c0_i32_0 = arith.constant 0 : i32
    %c0_i32_1 = arith.constant 0 : i32
    return %c0_i32, %c0_i32_0 : i32, i32
  }
  func.func @transform_7(%arg0: i32) -> (i32, i32) {
    %c0_i32 = arith.constant 0 : i32
    %c0_i32_0 = arith.constant 0 : i32
    %c0_i32_1 = arith.constant 0 : i32
    return %c0_i32, %c0_i32_0 : i32, i32
  }
  func.func @transform_8(%arg0: i32) -> (i32, i32) {
    %c0_i32 = arith.constant 0 : i32
    %c0_i32_0 = arith.constant 0 : i32
    %c0_i32_1 = arith.constant 0 : i32
    return %c0_i32, %c0_i32_0 : i32, i32
  }
  func.func @transform_9(%arg0: i32) -> (i32, i32, i32, i32) {
    %c0_i32 = arith.constant 0 : i32
    %c0_i32_0 = arith.constant 0 : i32
    %c0_i32_1 = arith.constant 0 : i32
    %c0_i32_2 = arith.constant 0 : i32
    return %arg0, %c0_i32, %c0_i32_0, %c0_i32_1 : i32, i32, i32, i32
  }
}

</mosaic_0001>

<llo_original>
// kernel: basic_block_forward.7
$region0: #{basic_block_forward.7}
  #allocation0 [shape = 'u32[]', space=smem, size = 0x4, offset = 0x4, fixed_abs, tag = 'smem constant byte address 0x4 - core index']
  #allocation1 [shape = 'u32[72,128]{1,0:T(1,128)}', space=vmem, size = 0x9000, scoped, tag = 'internal scratch']
  #allocation2 [shape = 'f32[1,128]{1,0:T(1,128)}', space=vmem, size = 0x200, scoped, tag = 'scratch operand']
  #allocation3 [shape = 'f32[1,128]{1,0:T(1,128)}', space=vmem, size = 0x200, scoped, tag = 'scratch operand']
  %s0 = inlined_call_operand.vmem [shape: f32[2,64,128], index: 0, kind: input, shape index: {}]
  %s1 = inlined_call_operand.vmem [shape: f32[128,128], index: 1, kind: input, shape index: {}]
  %s2 = inlined_call_operand.vmem [shape: f32[1,128], index: 2, kind: input, shape index: {}]
  %s3 = inlined_call_operand.vmem [shape: f32[128,128], index: 3, kind: input, shape index: {}]
  %s4 = inlined_call_operand.vmem [shape: f32[1,128], index: 4, kind: input, shape index: {}]
  %s5 = inlined_call_operand.vmem [shape: f32[2,1,128], index: 5, kind: output, shape index: {}]
  %s6 = sld [smem:[#allocation0]]
  $region61: #{basic_block_forward.7} parent=0
    _
  %s8 = ssub.s32 1, %s6
  %s9 = scalar_select 0, %s8, %s6
  loop: start=0, step=1, limit=4
  $region2: #{basic_block_forward.7} parent=0 // loop_pre_header
    _
  $region3: #{basic_block_forward.7} parent=0 // loop_header
    %s11 = sphi 0, %s15
    %p12 = scmp.ge.s32.totalorder %s11, 4
    %s18 = sphi 0, %s30
    %s19 = sphi 0, %s26
    %s20 = sphi 0, %s18
    %s21 = sphi 0, %s19
    %s22 = sphi 0, %s20
    %s23 = sphi 0, %s21
    %s35 = sphi 0, %s37
    %s38 = sphi 0, %s35
    %s39 = sphi 0, %s38
    %s55 = sphi 0, %s39
    %s59 = sphi 0, %s59
    %s61 = sphi 0, %s59
    %s62 = sphi 0, %s61
    %s76 = sphi 0, %s62
    %s80 = sphi 0, %s80
    %s82 = sphi 0, %s80
    %s83 = sphi 0, %s82
    %s97 = sphi 0, %s83
    %s101 = sphi 0, %s101
    %s103 = sphi 0, %s101
    %s104 = sphi 0, %s103
    %s118 = sphi 0, %s104
    %s122 = sphi 0, %s122
    %s124 = sphi 0, %s122
    %s125 = sphi 0, %s124
    %s139 = sphi 0, %s125
    %s145 = sphi 0, %s147
    %s148 = sphi 0, %s145
    %s149 = sphi 0, %s148
    %s165 = sphi 0, %s149
  $region4: #{basic_block_forward.7} parent=0 // loop_header_branch
    %14 = sbr.rel (%p12) target = $region8
  $region5: #{basic_block_forward.7} parent=0 // loop_body
    %s16 = ssub.s32 %s11, 1
    %s17 = ssub.s32 %s11, 2
    %s24 = sadd.s32 1, %s19
    %p25 = scmp.ge.s32.totalorder %s24, 1
    %s26 = scalar_select %p25, 0, %s24
    %s27 = sadd.s32 1, %s18
    %s28 = scalar_select %p25, %s27, %s18
    %p29 = scmp.ge.s32.totalorder %s28, 2
    %s30 = scalar_select %p29, 0, %s28
    %s31 = ssub.s32 %s18, %s30
    %s32 = ssub.s32 %s19, %s26
    %s33 = sor.u32 %s31, %s32
    %p34 = scmp.eq.s32.totalorder %s33, 0
    %s36 = sadd.s32 %s35, 1
    %s37 = scalar_select %p34, %s35, %s36
    %p40 = pneg %p34
    %p41 = scmp.eq.s32.totalorder %s11, 1
    %p42 = por %p40, %p41
    %p43 = scmp.ne.s32.totalorder %s35, %s38
    %p44 = scmp.eq.s32.totalorder %s11, 0
    %p45 = por %p43, %p44
    %p46 = scmp.ne.s32.totalorder %s35, %s38
    %p47 = scmp.eq.s32.totalorder %s16, 1
    %p48 = por %p46, %p47
    %p49 = scmp.ne.s32.totalorder %s38, %s39
    %p50 = scmp.eq.s32.totalorder %s16, 0
    %p51 = por %p49, %p50
    %p52 = scmp.ne.s32.totalorder %s38, %s39
    %p53 = scmp.eq.s32.totalorder %s17, 1
    %p54 = por %p52, %p53
    %p56 = scmp.ne.s32.totalorder %s39, %s55
    %p57 = scmp.eq.s32.totalorder %s17, 0
    %p58 = por %p56, %p57
    %s60 = sadd.s32 %s59, 1
    %p63 = scmp.eq.s32.totalorder %s11, 1
    %p64 = scmp.ne.s32.totalorder %s59, %s61
    %p65 = scmp.eq.s32.totalorder %s11, 0
    %p66 = por %p64, %p65
    %p67 = scmp.ne.s32.totalorder %s59, %s61
    %p68 = scmp.eq.s32.totalorder %s16, 1
    %p69 = por %p67, %p68
    %p70 = scmp.ne.s32.totalorder %s61, %s62
    %p71 = scmp.eq.s32.totalorder %s16, 0
    %p72 = por %p70, %p71
    %p73 = scmp.ne.s32.totalorder %s61, %s62
    %p74 = scmp.eq.s32.totalorder %s17, 1
    %p75 = por %p73, %p74
    %p77 = scmp.ne.s32.totalorder %s62, %s76
    %p78 = scmp.eq.s32.totalorder %s17, 0
    %p79 = por %p77, %p78
    %s81 = sadd.s32 %s80, 1
    %p84 = scmp.eq.s32.totalorder %s11, 1
    %p85 = scmp.ne.s32.totalorder %s80, %s82
    %p86 = scmp.eq.s32.totalorder %s11, 0
    %p87 = por %p85, %p86
    %p88 = scmp.ne.s32.totalorder %s80, %s82
    %p89 = scmp.eq.s32.totalorder %s16, 1
    %p90 = por %p88, %p89
    %p91 = scmp.ne.s32.totalorder %s82, %s83
    %p92 = scmp.eq.s32.totalorder %s16, 0
    %p93 = por %p91, %p92
    %p94 = scmp.ne.s32.totalorder %s82, %s83
    %p95 = scmp.eq.s32.totalorder %s17, 1
    %p96 = por %p94, %p95
    %p98 = scmp.ne.s32.totalorder %s83, %s97
    %p99 = scmp.eq.s32.totalorder %s17, 0
    %p100 = por %p98, %p99
    %s102 = sadd.s32 %s101, 1
    %p105 = scmp.eq.s32.totalorder %s11, 1
    %p106 = scmp.ne.s32.totalorder %s101, %s103
    %p107 = scmp.eq.s32.totalorder %s11, 0
    %p108 = por %p106, %p107
    %p109 = scmp.ne.s32.totalorder %s101, %s103
    %p110 = scmp.eq.s32.totalorder %s16, 1
    %p111 = por %p109, %p110
    %p112 = scmp.ne.s32.totalorder %s103, %s104
    %p113 = scmp.eq.s32.totalorder %s16, 0
    %p114 = por %p112, %p113
    %p115 = scmp.ne.s32.totalorder %s103, %s104
    %p116 = scmp.eq.s32.totalorder %s17, 1
    %p117 = por %p115, %p116
    %p119 = scmp.ne.s32.totalorder %s104, %s118
    %p120 = scmp.eq.s32.totalorder %s17, 0
    %p121 = por %p119, %p120
    %s123 = sadd.s32 %s122, 1
    %p126 = scmp.eq.s32.totalorder %s11, 1
    %p127 = scmp.ne.s32.totalorder %s122, %s124
    %p128 = scmp.eq.s32.totalorder %s11, 0
    %p129 = por %p127, %p128
    %p130 = scmp.ne.s32.totalorder %s122, %s124
    %p131 = scmp.eq.s32.totalorder %s16, 1
    %p132 = por %p130, %p131
    %p133 = scmp.ne.s32.totalorder %s124, %s125
    %p134 = scmp.eq.s32.totalorder %s16, 0
    %p135 = por %p133, %p134
    %p136 = scmp.ne.s32.totalorder %s124, %s125
    %p137 = scmp.eq.s32.totalorder %s17, 1
    %p138 = por %p136, %p137
    %p140 = scmp.ne.s32.totalorder %s125, %s139
    %p141 = scmp.eq.s32.totalorder %s17, 0
    %p142 = por %p140, %p141
    %s143 = ssub.s32 %s18, %s30
    %p144 = scmp.eq.s32.totalorder %s143, 0
    %s146 = sadd.s32 %s145, 1
    %s147 = scalar_select %p144, %s145, %s146
    %p150 = pneg %p144
    %p151 = scmp.eq.s32.totalorder %s11, 1
    %p152 = por %p150, %p151
    %p153 = scmp.ne.s32.totalorder %s145, %s148
    %p154 = scmp.eq.s32.totalorder %s11, 0
    %p155 = por %p153, %p154
    %p156 = scmp.ne.s32.totalorder %s145, %s148
    %p157 = scmp.eq.s32.totalorder %s16, 1
    %p158 = por %p156, %p157
    %p159 = scmp.ne.s32.totalorder %s148, %s149
    %p160 = scmp.eq.s32.totalorder %s16, 0
    %p161 = por %p159, %p160
    %p162 = scmp.ne.s32.totalorder %s148, %s149
    %p163 = scmp.eq.s32.totalorder %s17, 1
    %p164 = por %p162, %p163
    %p166 = scmp.ne.s32.totalorder %s149, %s165
    %p167 = scmp.eq.s32.totalorder %s17, 0
    %p168 = por %p166, %p167
    %p169 = scmp.le.s32.totalorder 1, %s11
    %p170 = scmp.lt.s32.totalorder %s11, 3
    %p171 = pnand %p169, %p170
    %p172 = pneg %p171
    // Predicated region
    $region9: #{basic_block_forward.7} parent=5 // pred_check
      _
    $region10: #{basic_block_forward.7} parent=5 // pred_check_branch
      %174 = sbr.rel (%p171) target = $region12
    $region11: #{basic_block_forward.7} parent=5 // pred_region
      %s175 = ssub.s32 %s11, 1
      // Predicated region
      $region13: #{basic_block_forward.7} parent=11 // pred_check
        %p176 = pneg %p72
      $region14: #{basic_block_forward.7} parent=11 // pred_check_branch
        %178 = sbr.rel (%p176) target = $region16
      $region15: #{basic_block_forward.7} parent=11 // pred_region
        _
      $region16: #{basic_block_forward.7} parent=11 // pred_fallthru
        _
      // Predicated region
      $region17: #{basic_block_forward.7} parent=11 // pred_check
        %p179 = pneg %p93
      $region18: #{basic_block_forward.7} parent=11 // pred_check_branch
        %181 = sbr.rel (%p179) target = $region20
      $region19: #{basic_block_forward.7} parent=11 // pred_region
        _
      $region20: #{basic_block_forward.7} parent=11 // pred_fallthru
        _
      // Predicated region
      $region21: #{basic_block_forward.7} parent=11 // pred_check
        %p182 = pneg %p114
      $region22: #{basic_block_forward.7} parent=11 // pred_check_branch
        %184 = sbr.rel (%p182) target = $region24
      $region23: #{basic_block_forward.7} parent=11 // pred_region
        _
      $region24: #{basic_block_forward.7} parent=11 // pred_fallthru
        _
      // Predicated region
      $region25: #{basic_block_forward.7} parent=11 // pred_check
        %p185 = pneg %p135
      $region26: #{basic_block_forward.7} parent=11 // pred_check_branch
        %187 = sbr.rel (%p185) target = $region28
      $region27: #{basic_block_forward.7} parent=11 // pred_region
        _
      $region28: #{basic_block_forward.7} parent=11 // pred_fallthru
        _
    $region12: #{basic_block_forward.7} parent=5 // pred_fallthru
      _
    %p188 = scmp.lt.s32.totalorder %s11, 2
    // Predicated region
    $region29: #{basic_block_forward.7} parent=5 // pred_check
      %p189 = pneg %p188
    $region30: #{basic_block_forward.7} parent=5 // pred_check_branch
      %191 = sbr.rel (%p189) target = $region32
    $region31: #{basic_block_forward.7} parent=5 // pred_region
      // Predicated region
      $region33: #{basic_block_forward.7} parent=31 // pred_check
        %p192 = pneg %p45
      $region34: #{basic_block_forward.7} parent=31 // pred_check_branch
        %194 = sbr.rel (%p192) target = $region36
      $region35: #{basic_block_forward.7} parent=31 // pred_region
        %s195 = smul.u32 8, %s19
        %p196 = scmp.lt.s32.totalorder %s18, 1
        %s197 = scalar_select %p196, %s18, 1
        %p198 = scmp.lt.s32.totalorder %s195, 7
        %s199 = scalar_select %p198, %s195, 7
        %s200 = smul.addr %s197, 8
        %s201 = sadd.s32 %s199, %s200
        %s202 = smul.addr %s201, 8
        %s203 = scalar_lea.vmem %s0, %s202
        %s204 = smul.u32 8, %s19
      $region36: #{basic_block_forward.7} parent=31 // pred_fallthru
        _
    $region32: #{basic_block_forward.7} parent=5 // pred_fallthru
      _
    %p205 = scmp.le.s32.totalorder 1, %s11
    %p206 = scmp.lt.s32.totalorder %s11, 3
    %p207 = pnand %p205, %p206
    %p208 = pneg %p207
    // Predicated region
    $region37: #{basic_block_forward.7} parent=5 // pred_check
      _
    $region38: #{basic_block_forward.7} parent=5 // pred_check_branch
      %210 = sbr.rel (%p207) target = $region40
    $region39: #{basic_block_forward.7} parent=5 // pred_region
      %s211 = ssub.s32 %s11, 1
      %s212 = smul.u32 8, %s21
      %p213 = scmp.lt.s32.totalorder %s20, 1
      %s214 = scalar_select %p213, %s20, 1
      %p215 = scmp.lt.s32.totalorder %s212, 7
      %s216 = scalar_select %p215, %s212, 7
      %s217 = smul.addr %s214, 8
      %s218 = sadd.s32 %s216, %s217
      %s219 = smul.addr %s218, 8
      %s220 = scalar_lea.vmem %s0, %s219
      %p221 = pneg %p51
      %p222 = pneg %p48
      %p223 = pneg %p72
      %p224 = pneg %p69
      %p225 = pneg %p93
      %p226 = pneg %p90
      %p227 = pneg %p114
      %p228 = pneg %p111
      %p229 = pneg %p135
      %p230 = pneg %p132
      %p231 = pneg %p161
      %p232 = pneg %p158
      %p233 = scmp.lt.s32.totalorder %s20, 1
      %s234 = scalar_select %p233, %s20, 1
      %s235 = scalar_lea.vmem %s5, %s234
      %s236 = smul.u32 8, %s21
      %p237 = scmp.lt.s32.totalorder %s20, 1
      %s238 = scalar_select %p237, %s20, 1
      %p239 = scmp.lt.s32.totalorder %s236, 7
      %s240 = scalar_select %p239, %s236, 7
      %s241 = smul.addr %s238, 8
      %s242 = sadd.s32 %s240, %s241
      %s243 = smul.addr %s242, 8
      %s244 = scalar_lea.vmem %s0, %s243
      %s245 = smul.u32 8, %s21
      %p246 = scmp.lt.s32.totalorder %s20, 1
      %s247 = scalar_select %p246, %s20, 1
      %s248 = scalar_lea.vmem %s5, %s247
      %p249 = scmp.eq.s32.totalorder %s21, 0
      // Predicated region
      $region41: #{basic_block_forward.7} parent=39 // pred_check
        %p250 = pneg %p249
      $region42: #{basic_block_forward.7} parent=39 // pred_check_branch
        %252 = sbr.rel (%p250) target = $region44
      $region43: #{basic_block_forward.7} parent=39 // pred_region
        %253 = vst [vmem:[#allocation2] sm:$0x1] 0.0
        %254 = vst [vmem:[#allocation3] sm:$0x1] -inf
      $region44: #{basic_block_forward.7} parent=39 // pred_fallthru
        _
      %v255 = vld [vmem:[%s244] sm:$0xff]
      %v256 = vld [vmem:[%s244 + $0x8] sm:$0xff]
      %v257 = vld [vmem:[%s244 + $0x10] sm:$0xff]
      %v258 = vld [vmem:[%s244 + $0x18] sm:$0xff]
      %v259 = vld [vmem:[%s244 + $0x20] sm:$0xff]
      %v260 = vld [vmem:[%s244 + $0x28] sm:$0xff]
      %v261 = vld [vmem:[%s244 + $0x30] sm:$0xff]
      %v262 = vld [vmem:[%s244 + $0x38] sm:$0xff]
      %v263 = vld [vmem:[#allocation2] sm:$0x1]
      %v264 = vadd.f32 %v255, %v256
      %v265 = vadd.f32 %v264, %v257
      %v266 = vadd.f32 %v265, %v258
      %v267 = vadd.f32 %v266, %v259
      %v268 = vadd.f32 %v267, %v260
      %v269 = vadd.f32 %v268, %v261
      %v270 = vadd.f32 %v269, %v262
      %v271 = vrot.slane %v270, 4
      %v272 = vadd.f32 %v270, %v271
      %v273 = vrot.slane %v272, 2
      %v274 = vadd.f32 %v272, %v273
      %v275 = vrot.slane %v274, 1
      %v276 = vadd.f32 %v274, %v275
      %v277 = vadd.f32 %v263, %v276
      %278 = vst [vmem:[#allocation2] sm:$0x1] %v277
      %v279 = vld [vmem:[#allocation3] sm:$0x1]
      %v280 = vmax.f32 %v255, %v259
      %v281 = vmax.f32 %v256, %v260
      %v282 = vmax.f32 %v257, %v261
      %v283 = vmax.f32 %v258, %v262
      %v284 = vmax.f32 %v280, %v281
      %v285 = vmax.f32 %v282, %v283
      %v286 = vmax.f32 %v284, %v285
      %v287 = vrot.slane %v286, 4
      %v288 = vmax.f32 %v286, %v287
      %v289 = vrot.slane %v288, 2
      %v290 = vmax.f32 %v288, %v289
      %v291 = vrot.slane %v290, 1
      %v292 = vmax.f32 %v290, %v291
      %v293 = vmax.f32 %v279, %v292
      %294 = vst [vmem:[#allocation3] sm:$0x1] %v293
      // Predicated region
      $region45: #{basic_block_forward.7} parent=39 // pred_check
        %p295 = pneg %p249
      $region46: #{basic_block_forward.7} parent=39 // pred_check_branch
        %297 = sbr.rel (%p295) target = $region48
      $region47: #{basic_block_forward.7} parent=39 // pred_region
        %v298 = vld [vmem:[#allocation2] sm:$0x1]
        %v299 = vmul.f32 %v298, 0.015625
        %v300 = vld [vmem:[#allocation3] sm:$0x1]
        %v301 = vld [vmem:[%s1] sm:$0xff]
        %v302 = vld [vmem:[%s1 + $0x8] sm:$0xff]
        %v303 = vld [vmem:[%s1 + $0x10] sm:$0xff]
        %v304 = vld [vmem:[%s1 + $0x18] sm:$0xff]
        %v305 = vld [vmem:[%s1 + $0x20] sm:$0xff]
        %v306 = vld [vmem:[%s1 + $0x28] sm:$0xff]
        %v307 = vld [vmem:[%s1 + $0x30] sm:$0xff]
        %v308 = vld [vmem:[%s1 + $0x38] sm:$0xff]
        %v309 = vld [vmem:[%s1 + $0x40] sm:$0xff]
        %v310 = vld [vmem:[%s1 + $0x48] sm:$0xff]
        %v311 = vld [vmem:[%s1 + $0x50] sm:$0xff]
        %v312 = vld [vmem:[%s1 + $0x58] sm:$0xff]
        %v313 = vld [vmem:[%s1 + $0x60] sm:$0xff]
        %v314 = vld [vmem:[%s1 + $0x68] sm:$0xff]
        %v315 = vld [vmem:[%s1 + $0x70] sm:$0xff]
        %v316 = vld [vmem:[%s1 + $0x78] sm:$0xff]
        %v317 = vld [vmem:[%s2] sm:$0x1]
        %318 = vmatpush.msra.mxu0 %v316
        %319 = vmatpush.msra.mxu0 %v315
        %320 = vmatpush.msra.mxu0 %v314
        %321 = vmatpush.msra.mxu0 %v313
        %322 = vmatpush.msra.mxu0 %v312
        %323 = vmatpush.msra.mxu0 %v311
        %324 = vmatpush.msra.mxu0 %v310
        %325 = vmatpush.msra.mxu0 %v309
        %326 = vmatpush.msra.mxu0 %v308
        %327 = vmatpush.msra.mxu0 %v307
        %328 = vmatpush.msra.mxu0 %v306
        %329 = vmatpush.msra.mxu0 %v305
        %330 = vmatpush.msra.mxu0 %v304
        %331 = vmatpush.msra.mxu0 %v303
        %332 = vmatpush.msra.mxu0 %v302
        %333 = vmatpush.msra.mxu0 %v301
        %334 = vmatmul.f32.gmra.mxu0 %v299
        %v335 = vpop.f32.mrf.mxu0
        %v336 = vadd.f32 %v317, %v335
        %337 = vdwg.mxu0
        %v338 = vmax.f32 %v336, 0.0
        %v339 = vld [vmem:[%s3] sm:$0xff]
        %v340 = vld [vmem:[%s3 + $0x8] sm:$0xff]
        %v341 = vld [vmem:[%s3 + $0x10] sm:$0xff]
        %v342 = vld [vmem:[%s3 + $0x18] sm:$0xff]
        %v343 = vld [vmem:[%s3 + $0x20] sm:$0xff]
        %v344 = vld [vmem:[%s3 + $0x28] sm:$0xff]
        %v345 = vld [vmem:[%s3 + $0x30] sm:$0xff]
        %v346 = vld [vmem:[%s3 + $0x38] sm:$0xff]
        %v347 = vld [vmem:[%s3 + $0x40] sm:$0xff]
        %v348 = vld [vmem:[%s3 + $0x48] sm:$0xff]
        %v349 = vld [vmem:[%s3 + $0x50] sm:$0xff]
        %v350 = vld [vmem:[%s3 + $0x58] sm:$0xff]
        %v351 = vld [vmem:[%s3 + $0x60] sm:$0xff]
        %v352 = vld [vmem:[%s3 + $0x68] sm:$0xff]
        %v353 = vld [vmem:[%s3 + $0x70] sm:$0xff]
        %v354 = vld [vmem:[%s3 + $0x78] sm:$0xff]
        %v355 = vld [vmem:[%s4] sm:$0x1]
        %356 = vmatpush.msra.mxu0 %v354
        %357 = vmatpush.msra.mxu0 %v353
        %358 = vmatpush.msra.mxu0 %v352
        %359 = vmatpush.msra.mxu0 %v351
        %360 = vmatpush.msra.mxu0 %v350
        %361 = vmatpush.msra.mxu0 %v349
        %362 = vmatpush.msra.mxu0 %v348
        %363 = vmatpush.msra.mxu0 %v347
        %364 = vmatpush.msra.mxu0 %v346
        %365 = vmatpush.msra.mxu0 %v345
        %366 = vmatpush.msra.mxu0 %v344
        %367 = vmatpush.msra.mxu0 %v343
        %368 = vmatpush.msra.mxu0 %v342
        %369 = vmatpush.msra.mxu0 %v341
        %370 = vmatpush.msra.mxu0 %v340
        %371 = vmatpush.msra.mxu0 %v339
        %372 = vmatmul.f32.gmra.mxu0 %v338
        %v373 = vpop.f32.mrf.mxu0
        %v374 = vadd.f32 %v355, %v373
        %375 = vdwg.mxu0
        %376 = vmatpush.msra.mxu0 %v316
        %377 = vmatpush.msra.mxu0 %v315
        %378 = vmatpush.msra.mxu0 %v314
        %379 = vmatpush.msra.mxu0 %v313
        %380 = vmatpush.msra.mxu0 %v312
        %381 = vmatpush.msra.mxu0 %v311
        %382 = vmatpush.msra.mxu0 %v310
        %383 = vmatpush.msra.mxu0 %v309
        %384 = vmatpush.msra.mxu0 %v308
        %385 = vmatpush.msra.mxu0 %v307
        %386 = vmatpush.msra.mxu0 %v306
        %387 = vmatpush.msra.mxu0 %v305
        %388 = vmatpush.msra.mxu0 %v304
        %389 = vmatpush.msra.mxu0 %v303
        %390 = vmatpush.msra.mxu0 %v302
        %391 = vmatpush.msra.mxu0 %v301
        %392 = vmatmul.f32.gmra.mxu0 %v300
        %v393 = vpop.f32.mrf.mxu0
        %v394 = vadd.f32 %v317, %v393
        %395 = vdwg.mxu0
        %v396 = vmax.f32 %v394, 0.0
        %397 = vmatpush.msra.mxu0 %v354
        %398 = vmatpush.msra.mxu0 %v353
        %399 = vmatpush.msra.mxu0 %v352
        %400 = vmatpush.msra.mxu0 %v351
        %401 = vmatpush.msra.mxu0 %v350
        %402 = vmatpush.msra.mxu0 %v349
        %403 = vmatpush.msra.mxu0 %v348
        %404 = vmatpush.msra.mxu0 %v347
        %405 = vmatpush.msra.mxu0 %v346
        %406 = vmatpush.msra.mxu0 %v345
        %407 = vmatpush.msra.mxu0 %v344
        %408 = vmatpush.msra.mxu0 %v343
        %409 = vmatpush.msra.mxu0 %v342
        %410 = vmatpush.msra.mxu0 %v341
        %411 = vmatpush.msra.mxu0 %v340
        %412 = vmatpush.msra.mxu0 %v339
        %413 = vmatmul.f32.gmra.mxu0 %v396
        %v414 = vpop.f32.mrf.mxu0
        %v415 = vadd.f32 %v355, %v414
        %416 = vdwg.mxu0
        %v417 = vadd.f32 %v374, %v415
        %v418 = vxor.u32 %v417, 2147483648
        %v419 = vmul.f32 %v418, 1.442695
        %v420 = vpow.pop %v419
        %v421 = vadd.f32 %v420, 1.0
        %v422 = vrcp.pop %v421
        %v423 = vmul.f32 %v421, %v422
        %v424 = vsub.f32 1.0, %v423
        %v425 = vmul.f32 %v422, %v424
        %v426 = vadd.f32 %v422, %v425
        %vm427 = vweird.f32 %v421
        %vm428 = vweird.f32 %v422
        %vm429 = vmor %vm427, %vm428
        %v430 = vsel %vm429, %v422, %v426
        %v431 = vand.u32 2147483647, %v421
        %vm432 = vcmp.eq.f32.partialorder %v431, 8.507059e+37
        %v433 = vand.u32 %v421, 2147483648
        %v434 = vor.u32 1.1754944e-38, %v433
        %v435 = vsel %vm432, %v434, %v430
        %v436 = vmul.f32 1.0, %v435
        %437 = vst [vmem:[%s248] sm:$0x1] %v436
      $region48: #{basic_block_forward.7} parent=39 // pred_fallthru
        _
      %p438 = scmp.lt.s32.totalorder %s20, 1
      %s439 = scalar_select %p438, %s20, 1
      %s440 = scalar_lea.vmem %s5, %s439
      // Predicated region
      $region49: #{basic_block_forward.7} parent=39 // pred_check
        %p441 = pneg %p158
      $region50: #{basic_block_forward.7} parent=39 // pred_check_branch
        %443 = sbr.rel (%p441) target = $region52
      $region51: #{basic_block_forward.7} parent=39 // pred_region
        _
      $region52: #{basic_block_forward.7} parent=39 // pred_fallthru
        _
    $region40: #{basic_block_forward.7} parent=5 // pred_fallthru
      _
    %p444 = scmp.le.s32.totalorder 2, %s11
    // Predicated region
    $region53: #{basic_block_forward.7} parent=5 // pred_check
      %p445 = pneg %p444
    $region54: #{basic_block_forward.7} parent=5 // pred_check_branch
      %447 = sbr.rel (%p445) target = $region56
    $region55: #{basic_block_forward.7} parent=5 // pred_region
      %s448 = ssub.s32 %s11, 2
      // Predicated region
      $region57: #{basic_block_forward.7} parent=55 // pred_check
        %p449 = pneg %p164
      $region58: #{basic_block_forward.7} parent=55 // pred_check_branch
        %451 = sbr.rel (%p449) target = $region60
      $region59: #{basic_block_forward.7} parent=55 // pred_region
        %p452 = scmp.lt.s32.totalorder %s22, 1
        %s453 = scalar_select %p452, %s22, 1
        %s454 = scalar_lea.vmem %s5, %s453
      $region60: #{basic_block_forward.7} parent=55 // pred_fallthru
        _
    $region56: #{basic_block_forward.7} parent=5 // pred_fallthru
      _
  $region6: #{basic_block_forward.7} parent=0 // loop_footer
    %s15 = sadd.s32 1, %s11
  $region7: #{basic_block_forward.7} parent=0 // loop_footer_branch
    %10 = sbr.rel target = $region3
  $region8: #{basic_block_forward.7} parent=0 // loop_exit
    _

// kernel: basic_block_forward.8
$region0: #{basic_block_forward.8}
  #allocation0 [shape = 'u32[]', space=smem, size = 0x4, offset = 0x4, fixed_abs, tag = 'smem constant byte address 0x4 - core index']
  #allocation1 [shape = 'u32[72,128]{1,0:T(1,128)}', space=vmem, size = 0x9000, scoped, tag = 'internal scratch']
  %s0 = inlined_call_operand.vmem [shape: f32[2,8,8,128], index: 0, kind: input, shape index: {}]
  %s1 = inlined_call_operand.vmem [shape: f32[2,1,128], index: 1, kind: input, shape index: {}]
  %s2 = inlined_call_operand.vmem [shape: f32[2,2,8,8], index: 2, kind: output, shape index: {}]
  %s3 = sld [smem:[#allocation0]]
  $region41: #{basic_block_forward.8} parent=0
    _
  %s5 = ssub.s32 1, %s3
  %s6 = scalar_select 0, %s5, %s3
  loop: start=0, step=1, limit=4
  $region2: #{basic_block_forward.8} parent=0 // loop_pre_header
    _
  $region3: #{basic_block_forward.8} parent=0 // loop_header
    %s8 = sphi 0, %s12
    %p9 = scmp.ge.s32.totalorder %s8, 4
    %s18 = sphi 0, %s20
    %s21 = sphi 0, %s18
    %s22 = sphi 0, %s21
    %s38 = sphi 0, %s22
    %s44 = sphi 0, %s46
    %s47 = sphi 0, %s44
    %s48 = sphi 0, %s47
    %s64 = sphi 0, %s48
    %s70 = sphi 0, %s72
    %s73 = sphi 0, %s70
    %s74 = sphi 0, %s73
    %s90 = sphi 0, %s74
  $region4: #{basic_block_forward.8} parent=0 // loop_header_branch
    %11 = sbr.rel (%p9) target = $region8
  $region5: #{basic_block_forward.8} parent=0 // loop_body
    %s13 = ssub.s32 %s8, 1
    %s14 = ssub.s32 %s8, 2
    %s15 = sadd.s32 %s8, 1
    %s16 = ssub.s32 %s8, %s15
    %p17 = scmp.eq.s32.totalorder %s16, 0
    %s19 = sadd.s32 %s18, 1
    %s20 = scalar_select %p17, %s18, %s19
    %p23 = pneg %p17
    %p24 = scmp.eq.s32.totalorder %s8, 1
    %p25 = por %p23, %p24
    %p26 = scmp.ne.s32.totalorder %s18, %s21
    %p27 = scmp.eq.s32.totalorder %s8, 0
    %p28 = por %p26, %p27
    %p29 = scmp.ne.s32.totalorder %s18, %s21
    %p30 = scmp.eq.s32.totalorder %s13, 1
    %p31 = por %p29, %p30
    %p32 = scmp.ne.s32.totalorder %s21, %s22
    %p33 = scmp.eq.s32.totalorder %s13, 0
    %p34 = por %p32, %p33
    %p35 = scmp.ne.s32.totalorder %s21, %s22
    %p36 = scmp.eq.s32.totalorder %s14, 1
    %p37 = por %p35, %p36
    %p39 = scmp.ne.s32.totalorder %s22, %s38
    %p40 = scmp.eq.s32.totalorder %s14, 0
    %p41 = por %p39, %p40
    %s42 = ssub.s32 %s8, %s15
    %p43 = scmp.eq.s32.totalorder %s42, 0
    %s45 = sadd.s32 %s44, 1
    %s46 = scalar_select %p43, %s44, %s45
    %p49 = pneg %p43
    %p50 = scmp.eq.s32.totalorder %s8, 1
    %p51 = por %p49, %p50
    %p52 = scmp.ne.s32.totalorder %s44, %s47
    %p53 = scmp.eq.s32.totalorder %s8, 0
    %p54 = por %p52, %p53
    %p55 = scmp.ne.s32.totalorder %s44, %s47
    %p56 = scmp.eq.s32.totalorder %s13, 1
    %p57 = por %p55, %p56
    %p58 = scmp.ne.s32.totalorder %s47, %s48
    %p59 = scmp.eq.s32.totalorder %s13, 0
    %p60 = por %p58, %p59
    %p61 = scmp.ne.s32.totalorder %s47, %s48
    %p62 = scmp.eq.s32.totalorder %s14, 1
    %p63 = por %p61, %p62
    %p65 = scmp.ne.s32.totalorder %s48, %s64
    %p66 = scmp.eq.s32.totalorder %s14, 0
    %p67 = por %p65, %p66
    %s68 = ssub.s32 %s8, %s15
    %p69 = scmp.eq.s32.totalorder %s68, 0
    %s71 = sadd.s32 %s70, 1
    %s72 = scalar_select %p69, %s70, %s71
    %p75 = pneg %p69
    %p76 = scmp.eq.s32.totalorder %s8, 1
    %p77 = por %p75, %p76
    %p78 = scmp.ne.s32.totalorder %s70, %s73
    %p79 = scmp.eq.s32.totalorder %s8, 0
    %p80 = por %p78, %p79
    %p81 = scmp.ne.s32.totalorder %s70, %s73
    %p82 = scmp.eq.s32.totalorder %s13, 1
    %p83 = por %p81, %p82
    %p84 = scmp.ne.s32.totalorder %s73, %s74
    %p85 = scmp.eq.s32.totalorder %s13, 0
    %p86 = por %p84, %p85
    %p87 = scmp.ne.s32.totalorder %s73, %s74
    %p88 = scmp.eq.s32.totalorder %s14, 1
    %p89 = por %p87, %p88
    %p91 = scmp.ne.s32.totalorder %s74, %s90
    %p92 = scmp.eq.s32.totalorder %s14, 0
    %p93 = por %p91, %p92
    %p94 = scmp.le.s32.totalorder 1, %s8
    %p95 = scmp.lt.s32.totalorder %s8, 3
    %p96 = pnand %p94, %p95
    %p97 = pneg %p96
    // Predicated region
    $region9: #{basic_block_forward.8} parent=5 // pred_check
      _
    $region10: #{basic_block_forward.8} parent=5 // pred_check_branch
      %99 = sbr.rel (%p96) target = $region12
    $region11: #{basic_block_forward.8} parent=5 // pred_region
      %s100 = ssub.s32 %s8, 1
    $region12: #{basic_block_forward.8} parent=5 // pred_fallthru
      _
    %p101 = scmp.lt.s32.totalorder %s8, 2
    // Predicated region
    $region13: #{basic_block_forward.8} parent=5 // pred_check
      %p102 = pneg %p101
    $region14: #{basic_block_forward.8} parent=5 // pred_check_branch
      %104 = sbr.rel (%p102) target = $region16
    $region15: #{basic_block_forward.8} parent=5 // pred_region
      // Predicated region
      $region17: #{basic_block_forward.8} parent=15 // pred_check
        %p105 = pneg %p28
      $region18: #{basic_block_forward.8} parent=15 // pred_check_branch
        %107 = sbr.rel (%p105) target = $region20
      $region19: #{basic_block_forward.8} parent=15 // pred_region
        %p108 = scmp.lt.s32.totalorder %s8, 1
        %s109 = scalar_select %p108, %s8, 1
        %s110 = smul.addr %s109, 8
        %s111 = smul.addr %s110, 8
        %s112 = scalar_lea.vmem %s0, %s111
      $region20: #{basic_block_forward.8} parent=15 // pred_fallthru
        _
      // Predicated region
      $region21: #{basic_block_forward.8} parent=15 // pred_check
        %p113 = pneg %p54
      $region22: #{basic_block_forward.8} parent=15 // pred_check_branch
        %115 = sbr.rel (%p113) target = $region24
      $region23: #{basic_block_forward.8} parent=15 // pred_region
        %p116 = scmp.lt.s32.totalorder %s8, 1
        %s117 = scalar_select %p116, %s8, 1
        %s118 = scalar_lea.vmem %s1, %s117
      $region24: #{basic_block_forward.8} parent=15 // pred_fallthru
        _
    $region16: #{basic_block_forward.8} parent=5 // pred_fallthru
      _
    %p119 = scmp.le.s32.totalorder 1, %s8
    %p120 = scmp.lt.s32.totalorder %s8, 3
    %p121 = pnand %p119, %p120
    %p122 = pneg %p121
    // Predicated region
    $region25: #{basic_block_forward.8} parent=5 // pred_check
      _
    $region26: #{basic_block_forward.8} parent=5 // pred_check_branch
      %124 = sbr.rel (%p121) target = $region28
    $region27: #{basic_block_forward.8} parent=5 // pred_region
      %s125 = ssub.s32 %s8, 1
      %p126 = scmp.lt.s32.totalorder %s13, 1
      %s127 = scalar_select %p126, %s13, 1
      %s128 = smul.addr %s127, 8
      %s129 = smul.addr %s128, 8
      %s130 = scalar_lea.vmem %s0, %s129
      %p131 = pneg %p34
      %p132 = pneg %p31
      %p133 = scmp.lt.s32.totalorder %s13, 1
      %s134 = scalar_select %p133, %s13, 1
      %s135 = scalar_lea.vmem %s1, %s134
      %p136 = pneg %p60
      %p137 = pneg %p57
      %p138 = pneg %p86
      %p139 = pneg %p83
      %p140 = scmp.lt.s32.totalorder %s13, 1
      %s141 = scalar_select %p140, %s13, 1
      %s142 = smul.addr %s141, 2
      %s143 = smul.addr %s142, 8
      %s144 = scalar_lea.vmem %s2, %s143
      %p145 = scmp.lt.s32.totalorder %s13, 1
      %s146 = scalar_select %p145, %s13, 1
      %s147 = smul.addr %s146, 8
      %s148 = smul.addr %s147, 8
      %s149 = scalar_lea.vmem %s0, %s148
      %p150 = scmp.lt.s32.totalorder %s13, 1
      %s151 = scalar_select %p150, %s13, 1
      %s152 = scalar_lea.vmem %s1, %s151
      %p153 = scmp.lt.s32.totalorder %s13, 1
      %s154 = scalar_select %p153, %s13, 1
      %s155 = smul.addr %s154, 2
      %s156 = smul.addr %s155, 8
      %s157 = scalar_lea.vmem %s2, %s156
      %v158 = vld [vmem:[%s149] sm:$0xff]
      %v159 = vld [vmem:[%s149 + $0x8] sm:$0xff]
      %v160 = vld [vmem:[%s149 + $0x10] sm:$0xff]
      %v161 = vld [vmem:[%s149 + $0x18] sm:$0xff]
      %v162 = vld [vmem:[%s149 + $0x20] sm:$0xff]
      %v163 = vld [vmem:[%s149 + $0x28] sm:$0xff]
      %v164 = vld [vmem:[%s149 + $0x30] sm:$0xff]
      %v165 = vld [vmem:[%s149 + $0x38] sm:$0xff]
      %v166 = vld [vmem:[%s152] sm:$0x1]
      %v168 = vperm.slane %v166, 0
      %v170 = vmul.f32 %v158, %v168
      %v171 = vmul.f32 %v159, %v168
      %v172 = vmul.f32 %v160, %v168
      %v173 = vmul.f32 %v161, %v168
      %v174 = vmul.f32 %v162, %v168
      %v175 = vmul.f32 %v163, %v168
      %v176 = vmul.f32 %v164, %v168
      %v177 = vmul.f32 %v165, %v168
      %v178 = vlaneseq
      %v179 = vand.u32 %v178, 127
      %vm180 = vcmp.lt.s32.totalorder %v179, 32
      %v181 = vsel %vm180, 1, 0
      %vm182 = vcmp.eq.s32.totalorder %v181, 1
      %v183 = vsel %vm182, %v170, -inf
      %v184 = vsel %vm182, %v171, -inf
      %v185 = vsel %vm182, %v172, -inf
      %v186 = vsel %vm182, %v173, -inf
      %v187 = vsel %vm182, %v174, -inf
      %v188 = vsel %vm182, %v175, -inf
      %v189 = vsel %vm182, %v176, -inf
      %v190 = vsel %vm182, %v177, -inf
      %191 = vmax.xlane.f32.xlu0 %v183
      %v192 = vpop.xlane.xlu0 %191
      %193 = vmax.xlane.f32.xlu0 %v184
      %v194 = vpop.xlane.xlu0 %193
      %195 = vmax.xlane.f32.xlu0 %v185
      %v196 = vpop.xlane.xlu0 %195
      %197 = vmax.xlane.f32.xlu0 %v186
      %v198 = vpop.xlane.xlu0 %197
      %199 = vmax.xlane.f32.xlu0 %v187
      %v200 = vpop.xlane.xlu0 %199
      %201 = vmax.xlane.f32.xlu0 %v188
      %v202 = vpop.xlane.xlu0 %201
      %203 = vmax.xlane.f32.xlu0 %v189
      %v204 = vpop.xlane.xlu0 %203
      %205 = vmax.xlane.f32.xlu0 %v190
      %v206 = vpop.xlane.xlu0 %205
      %v215 = vperm.slane %v192, %v179
      %v216 = vperm.slane %v194, %v179
      %v217 = vperm.slane %v196, %v179
      %v218 = vperm.slane %v198, %v179
      %v219 = vperm.slane %v200, %v179
      %v220 = vperm.slane %v202, %v179
      %v221 = vperm.slane %v204, %v179
      %v222 = vperm.slane %v206, %v179
      %vm223 = vcmask 1041409
      %v224 = vsel %vm223, %v216, %v215
      %vm225 = vcmask 1042434
      %v226 = vsel %vm225, %v217, %v224
      %vm227 = vcmask 1043459
      %v228 = vsel %vm227, %v218, %v226
      %vm229 = vcmask 1044484
      %v230 = vsel %vm229, %v219, %v228
      %vm231 = vcmask 1045509
      %v232 = vsel %vm231, %v220, %v230
      %vm233 = vcmask 1046534
      %v234 = vsel %vm233, %v221, %v232
      %vm235 = vcmask 1047559
      %v236 = vsel %vm235, %v222, %v234
      %vm238 = vcmask 64512
      %239 = vst.msk [vmem:[%s157] sm:$0xff] %vm238, %v236
      %240 = vadd.xlane.f32.xlu0 %v170
      %v241 = vpop.xlane.xlu0 %240
      %242 = vadd.xlane.f32.xlu0 %v171
      %v243 = vpop.xlane.xlu0 %242
      %244 = vadd.xlane.f32.xlu0 %v172
      %v245 = vpop.xlane.xlu0 %244
      %246 = vadd.xlane.f32.xlu0 %v173
      %v247 = vpop.xlane.xlu0 %246
      %248 = vadd.xlane.f32.xlu0 %v174
      %v249 = vpop.xlane.xlu0 %248
      %250 = vadd.xlane.f32.xlu0 %v175
      %v251 = vpop.xlane.xlu0 %250
      %252 = vadd.xlane.f32.xlu0 %v176
      %v253 = vpop.xlane.xlu0 %252
      %254 = vadd.xlane.f32.xlu0 %v177
      %v255 = vpop.xlane.xlu0 %254
      %v256 = vmul.f32 %v241, 0.03125
      %v257 = vmul.f32 %v243, 0.03125
      %v258 = vmul.f32 %v245, 0.03125
      %v259 = vmul.f32 %v247, 0.03125
      %v260 = vmul.f32 %v249, 0.03125
      %v261 = vmul.f32 %v251, 0.03125
      %v262 = vmul.f32 %v253, 0.03125
      %v263 = vmul.f32 %v255, 0.03125
      %v272 = vperm.slane %v256, %v179
      %v273 = vperm.slane %v257, %v179
      %v274 = vperm.slane %v258, %v179
      %v275 = vperm.slane %v259, %v179
      %v276 = vperm.slane %v260, %v179
      %v277 = vperm.slane %v261, %v179
      %v278 = vperm.slane %v262, %v179
      %v279 = vperm.slane %v263, %v179
      %v280 = vsel %vm223, %v273, %v272
      %v281 = vsel %vm225, %v274, %v280
      %v282 = vsel %vm227, %v275, %v281
      %v283 = vsel %vm229, %v276, %v282
      %v284 = vsel %vm231, %v277, %v283
      %v285 = vsel %vm233, %v278, %v284
      %v286 = vsel %vm235, %v279, %v285
      %s288 = scalar_lea.vmem %s157, 8
      %289 = vst.msk [vmem:[%s288] sm:$0xff] %vm238, %v286
      %p290 = scmp.lt.s32.totalorder %s13, 1
      %s291 = scalar_select %p290, %s13, 1
      %s292 = smul.addr %s291, 2
      %s293 = smul.addr %s292, 8
      %s294 = scalar_lea.vmem %s2, %s293
      // Predicated region
      $region29: #{basic_block_forward.8} parent=27 // pred_check
        %p295 = pneg %p83
      $region30: #{basic_block_forward.8} parent=27 // pred_check_branch
        %297 = sbr.rel (%p295) target = $region32
      $region31: #{basic_block_forward.8} parent=27 // pred_region
        _
      $region32: #{basic_block_forward.8} parent=27 // pred_fallthru
        _
    $region28: #{basic_block_forward.8} parent=5 // pred_fallthru
      _
    %p298 = scmp.le.s32.totalorder 2, %s8
    // Predicated region
    $region33: #{basic_block_forward.8} parent=5 // pred_check
      %p299 = pneg %p298
    $region34: #{basic_block_forward.8} parent=5 // pred_check_branch
      %301 = sbr.rel (%p299) target = $region36
    $region35: #{basic_block_forward.8} parent=5 // pred_region
      %s302 = ssub.s32 %s8, 2
      // Predicated region
      $region37: #{basic_block_forward.8} parent=35 // pred_check
        %p303 = pneg %p89
      $region38: #{basic_block_forward.8} parent=35 // pred_check_branch
        %305 = sbr.rel (%p303) target = $region40
      $region39: #{basic_block_forward.8} parent=35 // pred_region
        %p306 = scmp.lt.s32.totalorder %s14, 1
        %s307 = scalar_select %p306, %s14, 1
        %s308 = smul.addr %s307, 2
        %s309 = smul.addr %s308, 8
        %s310 = scalar_lea.vmem %s2, %s309
      $region40: #{basic_block_forward.8} parent=35 // pred_fallthru
        _
    $region36: #{basic_block_forward.8} parent=5 // pred_fallthru
      _
  $region6: #{basic_block_forward.8} parent=0 // loop_footer
    %s12 = sadd.s32 1, %s8
  $region7: #{basic_block_forward.8} parent=0 // loop_footer_branch
    %7 = sbr.rel target = $region3
  $region8: #{basic_block_forward.8} parent=0 // loop_exit
    _

// kernel: basic_block_forward.5
$region0: #{basic_block_forward.5}
  #allocation0 [shape = 'u32[]', space=smem, size = 0x4, offset = 0x4, fixed_abs, tag = 'smem constant byte address 0x4 - core index']
  #allocation1 [shape = 'u32[72,128]{1,0:T(1,128)}', space=vmem, size = 0x9000, scoped, tag = 'internal scratch']
  %s0 = inlined_call_operand.vmem [shape: f32[2,1,18,18,16], index: 0, kind: input, shape index: {}]
  %s1 = inlined_call_operand.vmem [shape: bf16[9,16,128], index: 1, kind: input, shape index: {}]
  %s2 = inlined_call_operand.vmem [shape: f32[1,128], index: 2, kind: input, shape index: {}]
  %s3 = inlined_call_operand.vmem [shape: f32[1,128], index: 3, kind: input, shape index: {}]
  %s4 = inlined_call_operand.vmem [shape: f32[2,256,128], index: 4, kind: output, shape index: {}]
  %s5 = sld [smem:[#allocation0]]
  $region49: #{basic_block_forward.5} parent=0
    _
  %s7 = ssub.s32 1, %s5
  %s8 = scalar_select 0, %s7, %s5
  loop: start=0, step=1, limit=4
  $region2: #{basic_block_forward.5} parent=0 // loop_pre_header
    _
  $region3: #{basic_block_forward.5} parent=0 // loop_header
    %s10 = sphi 0, %s14
    %p11 = scmp.ge.s32.totalorder %s10, 4
    %s20 = sphi 0, %s22
    %s23 = sphi 0, %s20
    %s24 = sphi 0, %s23
    %s40 = sphi 0, %s24
    %s44 = sphi 0, %s44
    %s46 = sphi 0, %s44
    %s47 = sphi 0, %s46
    %s61 = sphi 0, %s47
    %s65 = sphi 0, %s65
    %s67 = sphi 0, %s65
    %s68 = sphi 0, %s67
    %s82 = sphi 0, %s68
    %s86 = sphi 0, %s86
    %s88 = sphi 0, %s86
    %s89 = sphi 0, %s88
    %s103 = sphi 0, %s89
    %s109 = sphi 0, %s111
    %s112 = sphi 0, %s109
    %s113 = sphi 0, %s112
    %s129 = sphi 0, %s113
  $region4: #{basic_block_forward.5} parent=0 // loop_header_branch
    %13 = sbr.rel (%p11) target = $region8
  $region5: #{basic_block_forward.5} parent=0 // loop_body
    %s15 = ssub.s32 %s10, 1
    %s16 = ssub.s32 %s10, 2
    %s17 = sadd.s32 %s10, 1
    %s18 = ssub.s32 %s10, %s17
    %p19 = scmp.eq.s32.totalorder %s18, 0
    %s21 = sadd.s32 %s20, 1
    %s22 = scalar_select %p19, %s20, %s21
    %p25 = pneg %p19
    %p26 = scmp.eq.s32.totalorder %s10, 1
    %p27 = por %p25, %p26
    %p28 = scmp.ne.s32.totalorder %s20, %s23
    %p29 = scmp.eq.s32.totalorder %s10, 0
    %p30 = por %p28, %p29
    %p31 = scmp.ne.s32.totalorder %s20, %s23
    %p32 = scmp.eq.s32.totalorder %s15, 1
    %p33 = por %p31, %p32
    %p34 = scmp.ne.s32.totalorder %s23, %s24
    %p35 = scmp.eq.s32.totalorder %s15, 0
    %p36 = por %p34, %p35
    %p37 = scmp.ne.s32.totalorder %s23, %s24
    %p38 = scmp.eq.s32.totalorder %s16, 1
    %p39 = por %p37, %p38
    %p41 = scmp.ne.s32.totalorder %s24, %s40
    %p42 = scmp.eq.s32.totalorder %s16, 0
    %p43 = por %p41, %p42
    %s45 = sadd.s32 %s44, 1
    %p48 = scmp.eq.s32.totalorder %s10, 1
    %p49 = scmp.ne.s32.totalorder %s44, %s46
    %p50 = scmp.eq.s32.totalorder %s10, 0
    %p51 = por %p49, %p50
    %p52 = scmp.ne.s32.totalorder %s44, %s46
    %p53 = scmp.eq.s32.totalorder %s15, 1
    %p54 = por %p52, %p53
    %p55 = scmp.ne.s32.totalorder %s46, %s47
    %p56 = scmp.eq.s32.totalorder %s15, 0
    %p57 = por %p55, %p56
    %p58 = scmp.ne.s32.totalorder %s46, %s47
    %p59 = scmp.eq.s32.totalorder %s16, 1
    %p60 = por %p58, %p59
    %p62 = scmp.ne.s32.totalorder %s47, %s61
    %p63 = scmp.eq.s32.totalorder %s16, 0
    %p64 = por %p62, %p63
    %s66 = sadd.s32 %s65, 1
    %p69 = scmp.eq.s32.totalorder %s10, 1
    %p70 = scmp.ne.s32.totalorder %s65, %s67
    %p71 = scmp.eq.s32.totalorder %s10, 0
    %p72 = por %p70, %p71
    %p73 = scmp.ne.s32.totalorder %s65, %s67
    %p74 = scmp.eq.s32.totalorder %s15, 1
    %p75 = por %p73, %p74
    %p76 = scmp.ne.s32.totalorder %s67, %s68
    %p77 = scmp.eq.s32.totalorder %s15, 0
    %p78 = por %p76, %p77
    %p79 = scmp.ne.s32.totalorder %s67, %s68
    %p80 = scmp.eq.s32.totalorder %s16, 1
    %p81 = por %p79, %p80
    %p83 = scmp.ne.s32.totalorder %s68, %s82
    %p84 = scmp.eq.s32.totalorder %s16, 0
    %p85 = por %p83, %p84
    %s87 = sadd.s32 %s86, 1
    %p90 = scmp.eq.s32.totalorder %s10, 1
    %p91 = scmp.ne.s32.totalorder %s86, %s88
    %p92 = scmp.eq.s32.totalorder %s10, 0
    %p93 = por %p91, %p92
    %p94 = scmp.ne.s32.totalorder %s86, %s88
    %p95 = scmp.eq.s32.totalorder %s15, 1
    %p96 = por %p94, %p95
    %p97 = scmp.ne.s32.totalorder %s88, %s89
    %p98 = scmp.eq.s32.totalorder %s15, 0
    %p99 = por %p97, %p98
    %p100 = scmp.ne.s32.totalorder %s88, %s89
    %p101 = scmp.eq.s32.totalorder %s16, 1
    %p102 = por %p100, %p101
    %p104 = scmp.ne.s32.totalorder %s89, %s103
    %p105 = scmp.eq.s32.totalorder %s16, 0
    %p106 = por %p104, %p105
    %s107 = ssub.s32 %s10, %s17
    %p108 = scmp.eq.s32.totalorder %s107, 0
    %s110 = sadd.s32 %s109, 1
    %s111 = scalar_select %p108, %s109, %s110
    %p114 = pneg %p108
    %p115 = scmp.eq.s32.totalorder %s10, 1
    %p116 = por %p114, %p115
    %p117 = scmp.ne.s32.totalorder %s109, %s112
    %p118 = scmp.eq.s32.totalorder %s10, 0
    %p119 = por %p117, %p118
    %p120 = scmp.ne.s32.totalorder %s109, %s112
    %p121 = scmp.eq.s32.totalorder %s15, 1
    %p122 = por %p120, %p121
    %p123 = scmp.ne.s32.totalorder %s112, %s113
    %p124 = scmp.eq.s32.totalorder %s15, 0
    %p125 = por %p123, %p124
    %p126 = scmp.ne.s32.totalorder %s112, %s113
    %p127 = scmp.eq.s32.totalorder %s16, 1
    %p128 = por %p126, %p127
    %p130 = scmp.ne.s32.totalorder %s113, %s129
    %p131 = scmp.eq.s32.totalorder %s16, 0
    %p132 = por %p130, %p131
    %p133 = scmp.le.s32.totalorder 1, %s10
    %p134 = scmp.lt.s32.totalorder %s10, 3
    %p135 = pnand %p133, %p134
    %p136 = pneg %p135
    // Predicated region
    $region9: #{basic_block_forward.5} parent=5 // pred_check
      _
    $region10: #{basic_block_forward.5} parent=5 // pred_check_branch
      %138 = sbr.rel (%p135) target = $region12
    $region11: #{basic_block_forward.5} parent=5 // pred_region
      %s139 = ssub.s32 %s10, 1
      // Predicated region
      $region13: #{basic_block_forward.5} parent=11 // pred_check
        %p140 = pneg %p57
      $region14: #{basic_block_forward.5} parent=11 // pred_check_branch
        %142 = sbr.rel (%p140) target = $region16
      $region15: #{basic_block_forward.5} parent=11 // pred_region
        _
      $region16: #{basic_block_forward.5} parent=11 // pred_fallthru
        _
      // Predicated region
      $region17: #{basic_block_forward.5} parent=11 // pred_check
        %p143 = pneg %p78
      $region18: #{basic_block_forward.5} parent=11 // pred_check_branch
        %145 = sbr.rel (%p143) target = $region20
      $region19: #{basic_block_forward.5} parent=11 // pred_region
        _
      $region20: #{basic_block_forward.5} parent=11 // pred_fallthru
        _
      // Predicated region
      $region21: #{basic_block_forward.5} parent=11 // pred_check
        %p146 = pneg %p99
      $region22: #{basic_block_forward.5} parent=11 // pred_check_branch
        %148 = sbr.rel (%p146) target = $region24
      $region23: #{basic_block_forward.5} parent=11 // pred_region
        _
      $region24: #{basic_block_forward.5} parent=11 // pred_fallthru
        _
    $region12: #{basic_block_forward.5} parent=5 // pred_fallthru
      _
    %p149 = scmp.lt.s32.totalorder %s10, 2
    // Predicated region
    $region25: #{basic_block_forward.5} parent=5 // pred_check
      %p150 = pneg %p149
    $region26: #{basic_block_forward.5} parent=5 // pred_check_branch
      %152 = sbr.rel (%p150) target = $region28
    $region27: #{basic_block_forward.5} parent=5 // pred_region
      // Predicated region
      $region29: #{basic_block_forward.5} parent=27 // pred_check
        %p153 = pneg %p30
      $region30: #{basic_block_forward.5} parent=27 // pred_check_branch
        %155 = sbr.rel (%p153) target = $region32
      $region31: #{basic_block_forward.5} parent=27 // pred_region
        %p156 = scmp.lt.s32.totalorder %s10, 1
        %s157 = scalar_select %p156, %s10, 1
        %s158 = smul.addr %s157, 54
        %s159 = smul.addr %s158, 8
        %s160 = scalar_lea.vmem %s0, %s159
      $region32: #{basic_block_forward.5} parent=27 // pred_fallthru
        _
    $region28: #{basic_block_forward.5} parent=5 // pred_fallthru
      _
    %p161 = scmp.le.s32.totalorder 1, %s10
    %p162 = scmp.lt.s32.totalorder %s10, 3
    %p163 = pnand %p161, %p162
    %p164 = pneg %p163
    // Predicated region
    $region33: #{basic_block_forward.5} parent=5 // pred_check
      _
    $region34: #{basic_block_forward.5} parent=5 // pred_check_branch
      %166 = sbr.rel (%p163) target = $region36
    $region35: #{basic_block_forward.5} parent=5 // pred_region
      %s167 = ssub.s32 %s10, 1
      %p168 = scmp.lt.s32.totalorder %s15, 1
      %s169 = scalar_select %p168, %s15, 1
      %s170 = smul.addr %s169, 54
      %s171 = smul.addr %s170, 8
      %s172 = scalar_lea.vmem %s0, %s171
      %p173 = pneg %p36
      %p174 = pneg %p33
      %p175 = pneg %p57
      %p176 = pneg %p54
      %p177 = pneg %p78
      %p178 = pneg %p75
      %p179 = pneg %p99
      %p180 = pneg %p96
      %p181 = pneg %p125
      %p182 = pneg %p122
      %p183 = scmp.lt.s32.totalorder %s15, 1
      %s184 = scalar_select %p183, %s15, 1
      %s185 = smul.addr %s184, 32
      %s186 = smul.addr %s185, 8
      %s187 = scalar_lea.vmem %s4, %s186
      %p188 = scmp.lt.s32.totalorder %s15, 1
      %s189 = scalar_select %p188, %s15, 1
      %s190 = smul.addr %s189, 54
      %s191 = smul.addr %s190, 8
      %s192 = scalar_lea.vmem %s0, %s191
      %p193 = scmp.lt.s32.totalorder %s15, 1
      %s194 = scalar_select %p193, %s15, 1
      %s195 = smul.addr %s194, 32
      %s196 = smul.addr %s195, 8
      %s197 = scalar_lea.vmem %s4, %s196
      %v199 = vld [vmem:[%s192] sm:$0xff]
      %v200 = vld [vmem:[%s192 + $0x8] sm:$0xff]
      %v201 = vld [vmem:[%s192 + $0x18] sm:$0xff]
      %v202 = vld [vmem:[%s192 + $0x20] sm:$0xff]
      %v203 = vld [vmem:[%s192 + $0x30] sm:$0xff]
      %v204 = vld [vmem:[%s192 + $0x38] sm:$0xff]
      %v205 = vld [vmem:[%s192 + $0x48] sm:$0xff]
      %v206 = vld [vmem:[%s192 + $0x50] sm:$0xff]
      %v207 = vld [vmem:[%s192 + $0x60] sm:$0xff]
      %v208 = vld [vmem:[%s192 + $0x68] sm:$0xff]
      %v209 = vld [vmem:[%s192 + $0x78] sm:$0xff]
      %v210 = vld [vmem:[%s192 + $0x80] sm:$0xff]
      %v211 = vld [vmem:[%s192 + $0x90] sm:$0xff]
      %v212 = vld [vmem:[%s192 + $0x98] sm:$0xff]
      %v213 = vld [vmem:[%s192 + $0xa8] sm:$0xff]
      %v214 = vld [vmem:[%s192 + $0xb0] sm:$0xff]
      %v215 = vld [vmem:[%s192 + $0xc0] sm:$0xff]
      %v216 = vld [vmem:[%s192 + $0xc8] sm:$0xff]
      %v217 = vld [vmem:[%s192 + $0xd8] sm:$0xff]
      %v218 = vld [vmem:[%s192 + $0xe0] sm:$0xff]
      %v219 = vld [vmem:[%s192 + $0xf0] sm:$0xff]
      %v220 = vld [vmem:[%s192 + $0xf8] sm:$0xff]
      %v221 = vld [vmem:[%s192 + $0x108] sm:$0xff]
      %v222 = vld [vmem:[%s192 + $0x110] sm:$0xff]
      %v223 = vld [vmem:[%s192 + $0x120] sm:$0xff]
      %v224 = vld [vmem:[%s192 + $0x128] sm:$0xff]
      %v225 = vld [vmem:[%s192 + $0x138] sm:$0xff]
      %v226 = vld [vmem:[%s192 + $0x140] sm:$0xff]
      %v227 = vld [vmem:[%s192 + $0x150] sm:$0xff]
      %v228 = vld [vmem:[%s192 + $0x158] sm:$0xff]
      %v229 = vld [vmem:[%s192 + $0x168] sm:$0xff]
      %v230 = vld [vmem:[%s192 + $0x170] sm:$0xff]
      %v231 = vpack.c.bf16 %v200, %v199
      %v232 = vpack.c.bf16 %v202, %v201
      %v233 = vpack.c.bf16 %v204, %v203
      %v234 = vpack.c.bf16 %v206, %v205
      %v235 = vpack.c.bf16 %v208, %v207
      %v236 = vpack.c.bf16 %v210, %v209
      %v237 = vpack.c.bf16 %v212, %v211
      %v238 = vpack.c.bf16 %v214, %v213
      %v239 = vpack.c.bf16 %v216, %v215
      %v240 = vpack.c.bf16 %v218, %v217
      %v241 = vpack.c.bf16 %v220, %v219
      %v242 = vpack.c.bf16 %v222, %v221
      %v243 = vpack.c.bf16 %v224, %v223
      %v244 = vpack.c.bf16 %v226, %v225
      %v245 = vpack.c.bf16 %v228, %v227
      %v246 = vpack.c.bf16 %v230, %v229
      %v247 = vld [vmem:[%s1] sm:$0xf]
      %v248 = vld [vmem:[%s1 + $0x4] sm:$0xf]
      %v249 = vld [vmem:[%s192 + $0x1] sm:$0xff]
      %v250 = vld [vmem:[%s192 + $0x9] sm:$0xff]
      %v251 = vld [vmem:[%s192 + $0x19] sm:$0xff]
      %v252 = vld [vmem:[%s192 + $0x21] sm:$0xff]
      %v253 = vld [vmem:[%s192 + $0x31] sm:$0xff]
      %v254 = vld [vmem:[%s192 + $0x39] sm:$0xff]
      %v255 = vld [vmem:[%s192 + $0x49] sm:$0xff]
      %v256 = vld [vmem:[%s192 + $0x51] sm:$0xff]
      %v257 = vld [vmem:[%s192 + $0x61] sm:$0xff]
      %v258 = vld [vmem:[%s192 + $0x69] sm:$0xff]
      %v259 = vld [vmem:[%s192 + $0x79] sm:$0xff]
      %v260 = vld [vmem:[%s192 + $0x81] sm:$0xff]
      %v261 = vld [vmem:[%s192 + $0x91] sm:$0xff]
      %v262 = vld [vmem:[%s192 + $0x99] sm:$0xff]
      %v263 = vld [vmem:[%s192 + $0xa9] sm:$0xff]
      %v264 = vld [vmem:[%s192 + $0xb1] sm:$0xff]
      %v265 = vld [vmem:[%s192 + $0xc1] sm:$0xff]
      %v266 = vld [vmem:[%s192 + $0xc9] sm:$0xff]
      %v267 = vld [vmem:[%s192 + $0xd9] sm:$0xff]
      %v268 = vld [vmem:[%s192 + $0xe1] sm:$0xff]
      %v269 = vld [vmem:[%s192 + $0xf1] sm:$0xff]
      %v270 = vld [vmem:[%s192 + $0xf9] sm:$0xff]
      %v271 = vld [vmem:[%s192 + $0x109] sm:$0xff]
      %v272 = vld [vmem:[%s192 + $0x111] sm:$0xff]
      %v273 = vld [vmem:[%s192 + $0x121] sm:$0xff]
      %v274 = vld [vmem:[%s192 + $0x129] sm:$0xff]
      %v275 = vld [vmem:[%s192 + $0x139] sm:$0xff]
      %v276 = vld [vmem:[%s192 + $0x141] sm:$0xff]
      %v277 = vld [vmem:[%s192 + $0x151] sm:$0xff]
      %v278 = vld [vmem:[%s192 + $0x159] sm:$0xff]
      %v279 = vld [vmem:[%s192 + $0x169] sm:$0xff]
      %v280 = vld [vmem:[%s192 + $0x171] sm:$0xff]
      %v281 = vpack.c.bf16 %v250, %v249
      %v282 = vpack.c.bf16 %v252, %v251
      %v283 = vpack.c.bf16 %v254, %v253
      %v284 = vpack.c.bf16 %v256, %v255
      %v285 = vpack.c.bf16 %v258, %v257
      %v286 = vpack.c.bf16 %v260, %v259
      %v287 = vpack.c.bf16 %v262, %v261
      %v288 = vpack.c.bf16 %v264, %v263
      %v289 = vpack.c.bf16 %v266, %v265
      %v290 = vpack.c.bf16 %v268, %v267
      %v291 = vpack.c.bf16 %v270, %v269
      %v292 = vpack.c.bf16 %v272, %v271
      %v293 = vpack.c.bf16 %v274, %v273
      %v294 = vpack.c.bf16 %v276, %v275
      %v295 = vpack.c.bf16 %v278, %v277
      %v296 = vpack.c.bf16 %v280, %v279
      %s297 = scalar_lea.vmem %s1, 8
      %v298 = vld [vmem:[%s297] sm:$0xf]
      %v299 = vld [vmem:[%s297 + $0x4] sm:$0xf]
      %v302 = vunpack.c.l.b16 %v298
      %v303 = vunpack.c.l.b16 %v299
      %v304 = vpack.c.b16 %v303, %v302
      %vm306 = vcmask 130048
      %v308 = vsel %vm306, %v281, 0
      %v311 = vsel %vm306, %v282, 0
      %v314 = vsel %vm306, %v283, 0
      %v317 = vsel %vm306, %v284, 0
      %v320 = vsel %vm306, %v285, 0
      %v323 = vsel %vm306, %v286, 0
      %v326 = vsel %vm306, %v287, 0
      %v329 = vsel %vm306, %v288, 0
      %v332 = vsel %vm306, %v289, 0
      %v335 = vsel %vm306, %v290, 0
      %v338 = vsel %vm306, %v291, 0
      %v341 = vsel %vm306, %v292, 0
      %v344 = vsel %vm306, %v293, 0
      %v347 = vsel %vm306, %v294, 0
      %v350 = vsel %vm306, %v295, 0
      %v353 = vsel %vm306, %v296, 0
      %355 = vmatpush.bf16.msra.mxu0 0
      %356 = vmatpush.bf16.msra.mxu0 0
      %357 = vmatpush.bf16.msra.mxu0 0
      %358 = vmatpush.bf16.msra.mxu0 0
      %359 = vmatpush.bf16.msra.mxu0 0
      %360 = vmatpush.bf16.msra.mxu0 0
      %361 = vmatpush.bf16.msra.mxu0 0
      %362 = vmatpush.bf16.msra.mxu0 %v304
      %363 = vmatmul.bf16.gmra.mxu0 %v308
      %v364 = vpop.f32.mrf.mxu0
      %v365 = vadd.f32 0.0, %v364
      %v366 = vpop.f32.mrf.mxu0
      %v367 = vadd.f32 0.0, %v366
      %368 = vmatmul.bf16.gmra.mxu0 %v311
      %v369 = vpop.f32.mrf.mxu0
      %v370 = vadd.f32 0.0, %v369
      %v371 = vpop.f32.mrf.mxu0
      %v372 = vadd.f32 0.0, %v371
      %373 = vmatmul.bf16.gmra.mxu0 %v314
      %v374 = vpop.f32.mrf.mxu0
      %v375 = vadd.f32 0.0, %v374
      %v376 = vpop.f32.mrf.mxu0
      %v377 = vadd.f32 0.0, %v376
      %378 = vmatmul.bf16.gmra.mxu0 %v317
      %v379 = vpop.f32.mrf.mxu0
      %v380 = vadd.f32 0.0, %v379
      %v381 = vpop.f32.mrf.mxu0
      %v382 = vadd.f32 0.0, %v381
      %383 = vmatmul.bf16.gmra.mxu0 %v320
      %v384 = vpop.f32.mrf.mxu0
      %v385 = vadd.f32 0.0, %v384
      %v386 = vpop.f32.mrf.mxu0
      %v387 = vadd.f32 0.0, %v386
      %388 = vmatmul.bf16.gmra.mxu0 %v323
      %v389 = vpop.f32.mrf.mxu0
      %v390 = vadd.f32 0.0, %v389
      %v391 = vpop.f32.mrf.mxu0
      %v392 = vadd.f32 0.0, %v391
      %393 = vmatmul.bf16.gmra.mxu0 %v326
      %v394 = vpop.f32.mrf.mxu0
      %v395 = vadd.f32 0.0, %v394
      %v396 = vpop.f32.mrf.mxu0
      %v397 = vadd.f32 0.0, %v396
      %398 = vmatmul.bf16.gmra.mxu0 %v329
      %v399 = vpop.f32.mrf.mxu0
      %v400 = vadd.f32 0.0, %v399
      %v401 = vpop.f32.mrf.mxu0
      %v402 = vadd.f32 0.0, %v401
      %403 = vmatmul.bf16.gmra.mxu0 %v332
      %v404 = vpop.f32.mrf.mxu0
      %v405 = vadd.f32 0.0, %v404
      %v406 = vpop.f32.mrf.mxu0
      %v407 = vadd.f32 0.0, %v406
      %408 = vmatmul.bf16.gmra.mxu0 %v335
      %v409 = vpop.f32.mrf.mxu0
      %v410 = vadd.f32 0.0, %v409
      %v411 = vpop.f32.mrf.mxu0
      %v412 = vadd.f32 0.0, %v411
      %413 = vmatmul.bf16.gmra.mxu0 %v338
      %v414 = vpop.f32.mrf.mxu0
      %v415 = vadd.f32 0.0, %v414
      %v416 = vpop.f32.mrf.mxu0
      %v417 = vadd.f32 0.0, %v416
      %418 = vmatmul.bf16.gmra.mxu0 %v341
      %v419 = vpop.f32.mrf.mxu0
      %v420 = vadd.f32 0.0, %v419
      %v421 = vpop.f32.mrf.mxu0
      %v422 = vadd.f32 0.0, %v421
      %423 = vmatmul.bf16.gmra.mxu0 %v344
      %v424 = vpop.f32.mrf.mxu0
      %v425 = vadd.f32 0.0, %v424
      %v426 = vpop.f32.mrf.mxu0
      %v427 = vadd.f32 0.0, %v426
      %428 = vmatmul.bf16.gmra.mxu0 %v347
      %v429 = vpop.f32.mrf.mxu0
      %v430 = vadd.f32 0.0, %v429
      %v431 = vpop.f32.mrf.mxu0
      %v432 = vadd.f32 0.0, %v431
      %433 = vmatmul.bf16.gmra.mxu0 %v350
      %v434 = vpop.f32.mrf.mxu0
      %v435 = vadd.f32 0.0, %v434
      %v436 = vpop.f32.mrf.mxu0
      %v437 = vadd.f32 0.0, %v436
      %438 = vmatmul.bf16.gmra.mxu0 %v353
      %v439 = vpop.f32.mrf.mxu0
      %v440 = vadd.f32 0.0, %v439
      %v441 = vpop.f32.mrf.mxu0
      %v442 = vadd.f32 0.0, %v441
      %443 = vdwg.mxu0
      %v446 = vunpack.c.l.b16 %v247
      %v447 = vunpack.c.l.b16 %v248
      %v448 = vpack.c.b16 %v447, %v446
      %v451 = vsel %vm306, %v231, 0
      %v454 = vsel %vm306, %v232, 0
      %v457 = vsel %vm306, %v233, 0
      %v460 = vsel %vm306, %v234, 0
      %v463 = vsel %vm306, %v235, 0
      %v466 = vsel %vm306, %v236, 0
      %v469 = vsel %vm306, %v237, 0
      %v472 = vsel %vm306, %v238, 0
      %v475 = vsel %vm306, %v239, 0
      %v478 = vsel %vm306, %v240, 0
      %v481 = vsel %vm306, %v241, 0
      %v484 = vsel %vm306, %v242, 0
      %v487 = vsel %vm306, %v243, 0
      %v490 = vsel %vm306, %v244, 0
      %v493 = vsel %vm306, %v245, 0
      %v496 = vsel %vm306, %v246, 0
      %498 = vmatpush.bf16.msra.mxu0 0
      %499 = vmatpush.bf16.msra.mxu0 0
      %500 = vmatpush.bf16.msra.mxu0 0
      %501 = vmatpush.bf16.msra.mxu0 0
      %502 = vmatpush.bf16.msra.mxu0 0
      %503 = vmatpush.bf16.msra.mxu0 0
      %504 = vmatpush.bf16.msra.mxu0 0
      %505 = vmatpush.bf16.msra.mxu0 %v448
      %506 = vmatmul.bf16.gmra.mxu0 %v451
      %v507 = vpop.f32.mrf.mxu0
      %v508 = vadd.f32 %v365, %v507
      %v509 = vpop.f32.mrf.mxu0
      %v510 = vadd.f32 %v367, %v509
      %511 = vmatmul.bf16.gmra.mxu0 %v454
      %v512 = vpop.f32.mrf.mxu0
      %v513 = vadd.f32 %v370, %v512
      %v514 = vpop.f32.mrf.mxu0
      %v515 = vadd.f32 %v372, %v514
      %516 = vmatmul.bf16.gmra.mxu0 %v457
      %v517 = vpop.f32.mrf.mxu0
      %v518 = vadd.f32 %v375, %v517
      %v519 = vpop.f32.mrf.mxu0
      %v520 = vadd.f32 %v377, %v519
      %521 = vmatmul.bf16.gmra.mxu0 %v460
      %v522 = vpop.f32.mrf.mxu0
      %v523 = vadd.f32 %v380, %v522
      %v524 = vpop.f32.mrf.mxu0
      %v525 = vadd.f32 %v382, %v524
      %526 = vmatmul.bf16.gmra.mxu0 %v463
      %v527 = vpop.f32.mrf.mxu0
      %v528 = vadd.f32 %v385, %v527
      %v529 = vpop.f32.mrf.mxu0
      %v530 = vadd.f32 %v387, %v529
      %531 = vmatmul.bf16.gmra.mxu0 %v466
      %v532 = vpop.f32.mrf.mxu0
      %v533 = vadd.f32 %v390, %v532
      %v534 = vpop.f32.mrf.mxu0
      %v535 = vadd.f32 %v392, %v534
      %536 = vmatmul.bf16.gmra.mxu0 %v469
      %v537 = vpop.f32.mrf.mxu0
      %v538 = vadd.f32 %v395, %v537
      %v539 = vpop.f32.mrf.mxu0
      %v540 = vadd.f32 %v397, %v539
      %541 = vmatmul.bf16.gmra.mxu0 %v472
      %v542 = vpop.f32.mrf.mxu0
      %v543 = vadd.f32 %v400, %v542
      %v544 = vpop.f32.mrf.mxu0
      %v545 = vadd.f32 %v402, %v544
      %546 = vmatmul.bf16.gmra.mxu0 %v475
      %v547 = vpop.f32.mrf.mxu0
      %v548 = vadd.f32 %v405, %v547
      %v549 = vpop.f32.mrf.mxu0
      %v550 = vadd.f32 %v407, %v549
      %551 = vmatmul.bf16.gmra.mxu0 %v478
      %v552 = vpop.f32.mrf.mxu0
      %v553 = vadd.f32 %v410, %v552
      %v554 = vpop.f32.mrf.mxu0
      %v555 = vadd.f32 %v412, %v554
      %556 = vmatmul.bf16.gmra.mxu0 %v481
      %v557 = vpop.f32.mrf.mxu0
      %v558 = vadd.f32 %v415, %v557
      %v559 = vpop.f32.mrf.mxu0
      %v560 = vadd.f32 %v417, %v559
      %561 = vmatmul.bf16.gmra.mxu0 %v484
      %v562 = vpop.f32.mrf.mxu0
      %v563 = vadd.f32 %v420, %v562
      %v564 = vpop.f32.mrf.mxu0
      %v565 = vadd.f32 %v422, %v564
      %566 = vmatmul.bf16.gmra.mxu0 %v487
      %v567 = vpop.f32.mrf.mxu0
      %v568 = vadd.f32 %v425, %v567
      %v569 = vpop.f32.mrf.mxu0
      %v570 = vadd.f32 %v427, %v569
      %571 = vmatmul.bf16.gmra.mxu0 %v490
      %v572 = vpop.f32.mrf.mxu0
      %v573 = vadd.f32 %v430, %v572
      %v574 = vpop.f32.mrf.mxu0
      %v575 = vadd.f32 %v432, %v574
      %576 = vmatmul.bf16.gmra.mxu0 %v493
      %v577 = vpop.f32.mrf.mxu0
      %v578 = vadd.f32 %v435, %v577
      %v579 = vpop.f32.mrf.mxu0
      %v580 = vadd.f32 %v437, %v579
      %581 = vmatmul.bf16.gmra.mxu0 %v496
      %v582 = vpop.f32.mrf.mxu0
      %v583 = vadd.f32 %v440, %v582
      %v584 = vpop.f32.mrf.mxu0
      %v585 = vadd.f32 %v442, %v584
      %586 = vdwg.mxu0
      %v587 = vld [vmem:[%s192 + $0x2] sm:$0xff]
      %v588 = vld [vmem:[%s192 + $0xa] sm:$0xff]
      %v589 = vld [vmem:[%s192 + $0x1a] sm:$0xff]
      %v590 = vld [vmem:[%s192 + $0x22] sm:$0xff]
      %v591 = vld [vmem:[%s192 + $0x32] sm:$0xff]
      %v592 = vld [vmem:[%s192 + $0x3a] sm:$0xff]
      %v593 = vld [vmem:[%s192 + $0x4a] sm:$0xff]
      %v594 = vld [vmem:[%s192 + $0x52] sm:$0xff]
      %v595 = vld [vmem:[%s192 + $0x62] sm:$0xff]
      %v596 = vld [vmem:[%s192 + $0x6a] sm:$0xff]
      %v597 = vld [vmem:[%s192 + $0x7a] sm:$0xff]
      %v598 = vld [vmem:[%s192 + $0x82] sm:$0xff]
      %v599 = vld [vmem:[%s192 + $0x92] sm:$0xff]
      %v600 = vld [vmem:[%s192 + $0x9a] sm:$0xff]
      %v601 = vld [vmem:[%s192 + $0xaa] sm:$0xff]
      %v602 = vld [vmem:[%s192 + $0xb2] sm:$0xff]
      %v603 = vld [vmem:[%s192 + $0xc2] sm:$0xff]
      %v604 = vld [vmem:[%s192 + $0xca] sm:$0xff]
      %v605 = vld [vmem:[%s192 + $0xda] sm:$0xff]
      %v606 = vld [vmem:[%s192 + $0xe2] sm:$0xff]
      %v607 = vld [vmem:[%s192 + $0xf2] sm:$0xff]
      %v608 = vld [vmem:[%s192 + $0xfa] sm:$0xff]
      %v609 = vld [vmem:[%s192 + $0x10a] sm:$0xff]
      %v610 = vld [vmem:[%s192 + $0x112] sm:$0xff]
      %v611 = vld [vmem:[%s192 + $0x122] sm:$0xff]
      %v612 = vld [vmem:[%s192 + $0x12a] sm:$0xff]
      %v613 = vld [vmem:[%s192 + $0x13a] sm:$0xff]
      %v614 = vld [vmem:[%s192 + $0x142] sm:$0xff]
      %v615 = vld [vmem:[%s192 + $0x152] sm:$0xff]
      %v616 = vld [vmem:[%s192 + $0x15a] sm:$0xff]
      %v617 = vld [vmem:[%s192 + $0x16a] sm:$0xff]
      %v618 = vld [vmem:[%s192 + $0x172] sm:$0xff]
      %v619 = vpack.c.bf16 %v588, %v587
      %v620 = vpack.c.bf16 %v590, %v589
      %v621 = vpack.c.bf16 %v592, %v591
      %v622 = vpack.c.bf16 %v594, %v593
      %v623 = vpack.c.bf16 %v596, %v595
      %v624 = vpack.c.bf16 %v598, %v597
      %v625 = vpack.c.bf16 %v600, %v599
      %v626 = vpack.c.bf16 %v602, %v601
      %v627 = vpack.c.bf16 %v604, %v603
      %v628 = vpack.c.bf16 %v606, %v605
      %v629 = vpack.c.bf16 %v608, %v607
      %v630 = vpack.c.bf16 %v610, %v609
      %v631 = vpack.c.bf16 %v612, %v611
      %v632 = vpack.c.bf16 %v614, %v613
      %v633 = vpack.c.bf16 %v616, %v615
      %v634 = vpack.c.bf16 %v618, %v617
      %s635 = scalar_lea.vmem %s1, 16
      %v636 = vld [vmem:[%s635] sm:$0xf]
      %v637 = vld [vmem:[%s635 + $0x4] sm:$0xf]
      %v640 = vunpack.c.l.b16 %v636
      %v641 = vunpack.c.l.b16 %v637
      %v642 = vpack.c.b16 %v641, %v640
      %v645 = vsel %vm306, %v619, 0
      %v648 = vsel %vm306, %v620, 0
      %v651 = vsel %vm306, %v621, 0
      %v654 = vsel %vm306, %v622, 0
      %v657 = vsel %vm306, %v623, 0
      %v660 = vsel %vm306, %v624, 0
      %v663 = vsel %vm306, %v625, 0
      %v666 = vsel %vm306, %v626, 0
      %v669 = vsel %vm306, %v627, 0
      %v672 = vsel %vm306, %v628, 0
      %v675 = vsel %vm306, %v629, 0
      %v678 = vsel %vm306, %v630, 0
      %v681 = vsel %vm306, %v631, 0
      %v684 = vsel %vm306, %v632, 0
      %v687 = vsel %vm306, %v633, 0
      %v690 = vsel %vm306, %v634, 0
      %692 = vmatpush.bf16.msra.mxu0 0
      %693 = vmatpush.bf16.msra.mxu0 0
      %694 = vmatpush.bf16.msra.mxu0 0
      %695 = vmatpush.bf16.msra.mxu0 0
      %696 = vmatpush.bf16.msra.mxu0 0
      %697 = vmatpush.bf16.msra.mxu0 0
      %698 = vmatpush.bf16.msra.mxu0 0
      %699 = vmatpush.bf16.msra.mxu0 %v642
      %700 = vmatmul.bf16.gmra.mxu0 %v645
      %v701 = vpop.f32.mrf.mxu0
      %v702 = vadd.f32 0.0, %v701
      %v703 = vpop.f32.mrf.mxu0
      %v704 = vadd.f32 0.0, %v703
      %705 = vmatmul.bf16.gmra.mxu0 %v648
      %v706 = vpop.f32.mrf.mxu0
      %v707 = vadd.f32 0.0, %v706
      %v708 = vpop.f32.mrf.mxu0
      %v709 = vadd.f32 0.0, %v708
      %710 = vmatmul.bf16.gmra.mxu0 %v651
      %v711 = vpop.f32.mrf.mxu0
      %v712 = vadd.f32 0.0, %v711
      %v713 = vpop.f32.mrf.mxu0
      %v714 = vadd.f32 0.0, %v713
      %715 = vmatmul.bf16.gmra.mxu0 %v654
      %v716 = vpop.f32.mrf.mxu0
      %v717 = vadd.f32 0.0, %v716
      %v718 = vpop.f32.mrf.mxu0
      %v719 = vadd.f32 0.0, %v718
      %720 = vmatmul.bf16.gmra.mxu0 %v657
      %v721 = vpop.f32.mrf.mxu0
      %v722 = vadd.f32 0.0, %v721
      %v723 = vpop.f32.mrf.mxu0
      %v724 = vadd.f32 0.0, %v723
      %725 = vmatmul.bf16.gmra.mxu0 %v660
      %v726 = vpop.f32.mrf.mxu0
      %v727 = vadd.f32 0.0, %v726
      %v728 = vpop.f32.mrf.mxu0
      %v729 = vadd.f32 0.0, %v728
      %730 = vmatmul.bf16.gmra.mxu0 %v663
      %v731 = vpop.f32.mrf.mxu0
      %v732 = vadd.f32 0.0, %v731
      %v733 = vpop.f32.mrf.mxu0
      %v734 = vadd.f32 0.0, %v733
      %735 = vmatmul.bf16.gmra.mxu0 %v666
      %v736 = vpop.f32.mrf.mxu0
      %v737 = vadd.f32 0.0, %v736
      %v738 = vpop.f32.mrf.mxu0
      %v739 = vadd.f32 0.0, %v738
      %740 = vmatmul.bf16.gmra.mxu0 %v669
      %v741 = vpop.f32.mrf.mxu0
      %v742 = vadd.f32 0.0, %v741
      %v743 = vpop.f32.mrf.mxu0
      %v744 = vadd.f32 0.0, %v743
      %745 = vmatmul.bf16.gmra.mxu0 %v672
      %v746 = vpop.f32.mrf.mxu0
      %v747 = vadd.f32 0.0, %v746
      %v748 = vpop.f32.mrf.mxu0
      %v749 = vadd.f32 0.0, %v748
      %750 = vmatmul.bf16.gmra.mxu0 %v675
      %v751 = vpop.f32.mrf.mxu0
      %v752 = vadd.f32 0.0, %v751
      %v753 = vpop.f32.mrf.mxu0
      %v754 = vadd.f32 0.0, %v753
      %755 = vmatmul.bf16.gmra.mxu0 %v678
      %v756 = vpop.f32.mrf.mxu0
      %v757 = vadd.f32 0.0, %v756
      %v758 = vpop.f32.mrf.mxu0
      %v759 = vadd.f32 0.0, %v758
      %760 = vmatmul.bf16.gmra.mxu0 %v681
      %v761 = vpop.f32.mrf.mxu0
      %v762 = vadd.f32 0.0, %v761
      %v763 = vpop.f32.mrf.mxu0
      %v764 = vadd.f32 0.0, %v763
      %765 = vmatmul.bf16.gmra.mxu0 %v684
      %v766 = vpop.f32.mrf.mxu0
      %v767 = vadd.f32 0.0, %v766
      %v768 = vpop.f32.mrf.mxu0
      %v769 = vadd.f32 0.0, %v768
      %770 = vmatmul.bf16.gmra.mxu0 %v687
      %v771 = vpop.f32.mrf.mxu0
      %v772 = vadd.f32 0.0, %v771
      %v773 = vpop.f32.mrf.mxu0
      %v774 = vadd.f32 0.0, %v773
      %775 = vmatmul.bf16.gmra.mxu0 %v690
      %v776 = vpop.f32.mrf.mxu0
      %v777 = vadd.f32 0.0, %v776
      %v778 = vpop.f32.mrf.mxu0
      %v779 = vadd.f32 0.0, %v778
      %780 = vdwg.mxu0
      %v781 = vadd.f32 %v508, %v702
      %v782 = vadd.f32 %v510, %v704
      %v783 = vadd.f32 %v513, %v707
      %v784 = vadd.f32 %v515, %v709
      %v785 = vadd.f32 %v518, %v712
      %v786 = vadd.f32 %v520, %v714
      %v787 = vadd.f32 %v523, %v717
      %v788 = vadd.f32 %v525, %v719
      %v789 = vadd.f32 %v528, %v722
      %v790 = vadd.f32 %v530, %v724
      %v791 = vadd.f32 %v533, %v727
      %v792 = vadd.f32 %v535, %v729
      %v793 = vadd.f32 %v538, %v732
      %v794 = vadd.f32 %v540, %v734
      %v795 = vadd.f32 %v543, %v737
      %v796 = vadd.f32 %v545, %v739
      %v797 = vadd.f32 %v548, %v742
      %v798 = vadd.f32 %v550, %v744
      %v799 = vadd.f32 %v553, %v747
      %v800 = vadd.f32 %v555, %v749
      %v801 = vadd.f32 %v558, %v752
      %v802 = vadd.f32 %v560, %v754
      %v803 = vadd.f32 %v563, %v757
      %v804 = vadd.f32 %v565, %v759
      %v805 = vadd.f32 %v568, %v762
      %v806 = vadd.f32 %v570, %v764
      %v807 = vadd.f32 %v573, %v767
      %v808 = vadd.f32 %v575, %v769
      %v809 = vadd.f32 %v578, %v772
      %v810 = vadd.f32 %v580, %v774
      %v811 = vadd.f32 %v583, %v777
      %v812 = vadd.f32 %v585, %v779
      %s813 = scalar_lea.vmem %s192, 24
      %v814 = vld [vmem:[%s813] sm:$0xff]
      %v815 = vld [vmem:[%s813 + $0x8] sm:$0xff]
      %v816 = vld [vmem:[%s813 + $0x18] sm:$0xff]
      %v817 = vld [vmem:[%s813 + $0x20] sm:$0xff]
      %v818 = vld [vmem:[%s813 + $0x30] sm:$0xff]
      %v819 = vld [vmem:[%s813 + $0x38] sm:$0xff]
      %v820 = vld [vmem:[%s813 + $0x48] sm:$0xff]
      %v821 = vld [vmem:[%s813 + $0x50] sm:$0xff]
      %v822 = vld [vmem:[%s813 + $0x60] sm:$0xff]
      %v823 = vld [vmem:[%s813 + $0x68] sm:$0xff]
      %v824 = vld [vmem:[%s813 + $0x78] sm:$0xff]
      %v825 = vld [vmem:[%s813 + $0x80] sm:$0xff]
      %v826 = vld [vmem:[%s813 + $0x90] sm:$0xff]
      %v827 = vld [vmem:[%s813 + $0x98] sm:$0xff]
      %v828 = vld [vmem:[%s813 + $0xa8] sm:$0xff]
      %v829 = vld [vmem:[%s813 + $0xb0] sm:$0xff]
      %v830 = vld [vmem:[%s813 + $0xc0] sm:$0xff]
      %v831 = vld [vmem:[%s813 + $0xc8] sm:$0xff]
      %v832 = vld [vmem:[%s813 + $0xd8] sm:$0xff]
      %v833 = vld [vmem:[%s813 + $0xe0] sm:$0xff]
      %v834 = vld [vmem:[%s813 + $0xf0] sm:$0xff]
      %v835 = vld [vmem:[%s813 + $0xf8] sm:$0xff]
      %v836 = vld [vmem:[%s813 + $0x108] sm:$0xff]
      %v837 = vld [vmem:[%s813 + $0x110] sm:$0xff]
      %v838 = vld [vmem:[%s813 + $0x120] sm:$0xff]
      %v839 = vld [vmem:[%s813 + $0x128] sm:$0xff]
      %v840 = vld [vmem:[%s813 + $0x138] sm:$0xff]
      %v841 = vld [vmem:[%s813 + $0x140] sm:$0xff]
      %v842 = vld [vmem:[%s813 + $0x150] sm:$0xff]
      %v843 = vld [vmem:[%s813 + $0x158] sm:$0xff]
      %v844 = vld [vmem:[%s813 + $0x168] sm:$0xff]
      %v845 = vld [vmem:[%s813 + $0x170] sm:$0xff]
      %v846 = vpack.c.bf16 %v815, %v814
      %v847 = vpack.c.bf16 %v817, %v816
      %v848 = vpack.c.bf16 %v819, %v818
      %v849 = vpack.c.bf16 %v821, %v820
      %v850 = vpack.c.bf16 %v823, %v822
      %v851 = vpack.c.bf16 %v825, %v824
      %v852 = vpack.c.bf16 %v827, %v826
      %v853 = vpack.c.bf16 %v829, %v828
      %v854 = vpack.c.bf16 %v831, %v830
      %v855 = vpack.c.bf16 %v833, %v832
      %v856 = vpack.c.bf16 %v835, %v834
      %v857 = vpack.c.bf16 %v837, %v836
      %v858 = vpack.c.bf16 %v839, %v838
      %v859 = vpack.c.bf16 %v841, %v840
      %v860 = vpack.c.bf16 %v843, %v842
      %v861 = vpack.c.bf16 %v845, %v844
      %s862 = scalar_lea.vmem %s1, 24
      %v863 = vld [vmem:[%s862] sm:$0xf]
      %v864 = vld [vmem:[%s862 + $0x4] sm:$0xf]
      %v867 = vunpack.c.l.b16 %v863
      %v868 = vunpack.c.l.b16 %v864
      %v869 = vpack.c.b16 %v868, %v867
      %v872 = vsel %vm306, %v846, 0
      %v875 = vsel %vm306, %v847, 0
      %v878 = vsel %vm306, %v848, 0
      %v881 = vsel %vm306, %v849, 0
      %v884 = vsel %vm306, %v850, 0
      %v887 = vsel %vm306, %v851, 0
      %v890 = vsel %vm306, %v852, 0
      %v893 = vsel %vm306, %v853, 0
      %v896 = vsel %vm306, %v854, 0
      %v899 = vsel %vm306, %v855, 0
      %v902 = vsel %vm306, %v856, 0
      %v905 = vsel %vm306, %v857, 0
      %v908 = vsel %vm306, %v858, 0
      %v911 = vsel %vm306, %v859, 0
      %v914 = vsel %vm306, %v860, 0
      %v917 = vsel %vm306, %v861, 0
      %919 = vmatpush.bf16.msra.mxu0 0
      %920 = vmatpush.bf16.msra.mxu0 0
      %921 = vmatpush.bf16.msra.mxu0 0
      %922 = vmatpush.bf16.msra.mxu0 0
      %923 = vmatpush.bf16.msra.mxu0 0
      %924 = vmatpush.bf16.msra.mxu0 0
      %925 = vmatpush.bf16.msra.mxu0 0
      %926 = vmatpush.bf16.msra.mxu0 %v869
      %927 = vmatmul.bf16.gmra.mxu0 %v872
      %v928 = vpop.f32.mrf.mxu0
      %v929 = vadd.f32 0.0, %v928
      %v930 = vpop.f32.mrf.mxu0
      %v931 = vadd.f32 0.0, %v930
      %932 = vmatmul.bf16.gmra.mxu0 %v875
      %v933 = vpop.f32.mrf.mxu0
      %v934 = vadd.f32 0.0, %v933
      %v935 = vpop.f32.mrf.mxu0
      %v936 = vadd.f32 0.0, %v935
      %937 = vmatmul.bf16.gmra.mxu0 %v878
      %v938 = vpop.f32.mrf.mxu0
      %v939 = vadd.f32 0.0, %v938
      %v940 = vpop.f32.mrf.mxu0
      %v941 = vadd.f32 0.0, %v940
      %942 = vmatmul.bf16.gmra.mxu0 %v881
      %v943 = vpop.f32.mrf.mxu0
      %v944 = vadd.f32 0.0, %v943
      %v945 = vpop.f32.mrf.mxu0
      %v946 = vadd.f32 0.0, %v945
      %947 = vmatmul.bf16.gmra.mxu0 %v884
      %v948 = vpop.f32.mrf.mxu0
      %v949 = vadd.f32 0.0, %v948
      %v950 = vpop.f32.mrf.mxu0
      %v951 = vadd.f32 0.0, %v950
      %952 = vmatmul.bf16.gmra.mxu0 %v887
      %v953 = vpop.f32.mrf.mxu0
      %v954 = vadd.f32 0.0, %v953
      %v955 = vpop.f32.mrf.mxu0
      %v956 = vadd.f32 0.0, %v955
      %957 = vmatmul.bf16.gmra.mxu0 %v890
      %v958 = vpop.f32.mrf.mxu0
      %v959 = vadd.f32 0.0, %v958
      %v960 = vpop.f32.mrf.mxu0
      %v961 = vadd.f32 0.0, %v960
      %962 = vmatmul.bf16.gmra.mxu0 %v893
      %v963 = vpop.f32.mrf.mxu0
      %v964 = vadd.f32 0.0, %v963
      %v965 = vpop.f32.mrf.mxu0
      %v966 = vadd.f32 0.0, %v965
      %967 = vmatmul.bf16.gmra.mxu0 %v896
      %v968 = vpop.f32.mrf.mxu0
      %v969 = vadd.f32 0.0, %v968
      %v970 = vpop.f32.mrf.mxu0
      %v971 = vadd.f32 0.0, %v970
      %972 = vmatmul.bf16.gmra.mxu0 %v899
      %v973 = vpop.f32.mrf.mxu0
      %v974 = vadd.f32 0.0, %v973
      %v975 = vpop.f32.mrf.mxu0
      %v976 = vadd.f32 0.0, %v975
      %977 = vmatmul.bf16.gmra.mxu0 %v902
      %v978 = vpop.f32.mrf.mxu0
      %v979 = vadd.f32 0.0, %v978
      %v980 = vpop.f32.mrf.mxu0
      %v981 = vadd.f32 0.0, %v980
      %982 = vmatmul.bf16.gmra.mxu0 %v905
      %v983 = vpop.f32.mrf.mxu0
      %v984 = vadd.f32 0.0, %v983
      %v985 = vpop.f32.mrf.mxu0
      %v986 = vadd.f32 0.0, %v985
      %987 = vmatmul.bf16.gmra.mxu0 %v908
      %v988 = vpop.f32.mrf.mxu0
      %v989 = vadd.f32 0.0, %v988
      %v990 = vpop.f32.mrf.mxu0
      %v991 = vadd.f32 0.0, %v990
      %992 = vmatmul.bf16.gmra.mxu0 %v911
      %v993 = vpop.f32.mrf.mxu0
      %v994 = vadd.f32 0.0, %v993
      %v995 = vpop.f32.mrf.mxu0
      %v996 = vadd.f32 0.0, %v995
      %997 = vmatmul.bf16.gmra.mxu0 %v914
      %v998 = vpop.f32.mrf.mxu0
      %v999 = vadd.f32 0.0, %v998
      %v1000 = vpop.f32.mrf.mxu0
      %v1001 = vadd.f32 0.0, %v1000
      %1002 = vmatmul.bf16.gmra.mxu0 %v917
      %v1003 = vpop.f32.mrf.mxu0
      %v1004 = vadd.f32 0.0, %v1003
      %v1005 = vpop.f32.mrf.mxu0
      %v1006 = vadd.f32 0.0, %v1005
      %1007 = vdwg.mxu0
      %v1008 = vadd.f32 %v781, %v929
      %v1009 = vadd.f32 %v782, %v931
      %v1010 = vadd.f32 %v783, %v934
      %v1011 = vadd.f32 %v784, %v936
      %v1012 = vadd.f32 %v785, %v939
      %v1013 = vadd.f32 %v786, %v941
      %v1014 = vadd.f32 %v787, %v944
      %v1015 = vadd.f32 %v788, %v946
      %v1016 = vadd.f32 %v789, %v949
      %v1017 = vadd.f32 %v790, %v951
      %v1018 = vadd.f32 %v791, %v954
      %v1019 = vadd.f32 %v792, %v956
      %v1020 = vadd.f32 %v793, %v959
      %v1021 = vadd.f32 %v794, %v961
      %v1022 = vadd.f32 %v795, %v964
      %v1023 = vadd.f32 %v796, %v966
      %v1024 = vadd.f32 %v797, %v969
      %v1025 = vadd.f32 %v798, %v971
      %v1026 = vadd.f32 %v799, %v974
      %v1027 = vadd.f32 %v800, %v976
      %v1028 = vadd.f32 %v801, %v979
      %v1029 = vadd.f32 %v802, %v981
      %v1030 = vadd.f32 %v803, %v984
      %v1031 = vadd.f32 %v804, %v986
      %v1032 = vadd.f32 %v805, %v989
      %v1033 = vadd.f32 %v806, %v991
      %v1034 = vadd.f32 %v807, %v994
      %v1035 = vadd.f32 %v808, %v996
      %v1036 = vadd.f32 %v809, %v999
      %v1037 = vadd.f32 %v810, %v1001
      %v1038 = vadd.f32 %v811, %v1004
      %v1039 = vadd.f32 %v812, %v1006
      %v1040 = vld [vmem:[%s813 + $0x1] sm:$0xff]
      %v1041 = vld [vmem:[%s813 + $0x9] sm:$0xff]
      %v1042 = vld [vmem:[%s813 + $0x19] sm:$0xff]
      %v1043 = vld [vmem:[%s813 + $0x21] sm:$0xff]
      %v1044 = vld [vmem:[%s813 + $0x31] sm:$0xff]
      %v1045 = vld [vmem:[%s813 + $0x39] sm:$0xff]
      %v1046 = vld [vmem:[%s813 + $0x49] sm:$0xff]
      %v1047 = vld [vmem:[%s813 + $0x51] sm:$0xff]
      %v1048 = vld [vmem:[%s813 + $0x61] sm:$0xff]
      %v1049 = vld [vmem:[%s813 + $0x69] sm:$0xff]
      %v1050 = vld [vmem:[%s813 + $0x79] sm:$0xff]
      %v1051 = vld [vmem:[%s813 + $0x81] sm:$0xff]
      %v1052 = vld [vmem:[%s813 + $0x91] sm:$0xff]
      %v1053 = vld [vmem:[%s813 + $0x99] sm:$0xff]
      %v1054 = vld [vmem:[%s813 + $0xa9] sm:$0xff]
      %v1055 = vld [vmem:[%s813 + $0xb1] sm:$0xff]
      %v1056 = vld [vmem:[%s813 + $0xc1] sm:$0xff]
      %v1057 = vld [vmem:[%s813 + $0xc9] sm:$0xff]
      %v1058 = vld [vmem:[%s813 + $0xd9] sm:$0xff]
      %v1059 = vld [vmem:[%s813 + $0xe1] sm:$0xff]
      %v1060 = vld [vmem:[%s813 + $0xf1] sm:$0xff]
      %v1061 = vld [vmem:[%s813 + $0xf9] sm:$0xff]
      %v1062 = vld [vmem:[%s813 + $0x109] sm:$0xff]
      %v1063 = vld [vmem:[%s813 + $0x111] sm:$0xff]
      %v1064 = vld [vmem:[%s813 + $0x121] sm:$0xff]
      %v1065 = vld [vmem:[%s813 + $0x129] sm:$0xff]
      %v1066 = vld [vmem:[%s813 + $0x139] sm:$0xff]
      %v1067 = vld [vmem:[%s813 + $0x141] sm:$0xff]
      %v1068 = vld [vmem:[%s813 + $0x151] sm:$0xff]
      %v1069 = vld [vmem:[%s813 + $0x159] sm:$0xff]
      %v1070 = vld [vmem:[%s813 + $0x169] sm:$0xff]
      %v1071 = vld [vmem:[%s813 + $0x171] sm:$0xff]
      %v1072 = vpack.c.bf16 %v1041, %v1040
      %v1073 = vpack.c.bf16 %v1043, %v1042
      %v1074 = vpack.c.bf16 %v1045, %v1044
      %v1075 = vpack.c.bf16 %v1047, %v1046
      %v1076 = vpack.c.bf16 %v1049, %v1048
      %v1077 = vpack.c.bf16 %v1051, %v1050
      %v1078 = vpack.c.bf16 %v1053, %v1052
      %v1079 = vpack.c.bf16 %v1055, %v1054
      %v1080 = vpack.c.bf16 %v1057, %v1056
      %v1081 = vpack.c.bf16 %v1059, %v1058
      %v1082 = vpack.c.bf16 %v1061, %v1060
      %v1083 = vpack.c.bf16 %v1063, %v1062
      %v1084 = vpack.c.bf16 %v1065, %v1064
      %v1085 = vpack.c.bf16 %v1067, %v1066
      %v1086 = vpack.c.bf16 %v1069, %v1068
      %v1087 = vpack.c.bf16 %v1071, %v1070
      %s1088 = scalar_lea.vmem %s1, 32
      %v1089 = vld [vmem:[%s1088] sm:$0xf]
      %v1090 = vld [vmem:[%s1088 + $0x4] sm:$0xf]
      %v1093 = vunpack.c.l.b16 %v1089
      %v1094 = vunpack.c.l.b16 %v1090
      %v1095 = vpack.c.b16 %v1094, %v1093
      %v1098 = vsel %vm306, %v1072, 0
      %v1101 = vsel %vm306, %v1073, 0
      %v1104 = vsel %vm306, %v1074, 0
      %v1107 = vsel %vm306, %v1075, 0
      %v1110 = vsel %vm306, %v1076, 0
      %v1113 = vsel %vm306, %v1077, 0
      %v1116 = vsel %vm306, %v1078, 0
      %v1119 = vsel %vm306, %v1079, 0
      %v1122 = vsel %vm306, %v1080, 0
      %v1125 = vsel %vm306, %v1081, 0
      %v1128 = vsel %vm306, %v1082, 0
      %v1131 = vsel %vm306, %v1083, 0
      %v1134 = vsel %vm306, %v1084, 0
      %v1137 = vsel %vm306, %v1085, 0
      %v1140 = vsel %vm306, %v1086, 0
      %v1143 = vsel %vm306, %v1087, 0
      %1145 = vmatpush.bf16.msra.mxu0 0
      %1146 = vmatpush.bf16.msra.mxu0 0
      %1147 = vmatpush.bf16.msra.mxu0 0
      %1148 = vmatpush.bf16.msra.mxu0 0
      %1149 = vmatpush.bf16.msra.mxu0 0
      %1150 = vmatpush.bf16.msra.mxu0 0
      %1151 = vmatpush.bf16.msra.mxu0 0
      %1152 = vmatpush.bf16.msra.mxu0 %v1095
      %1153 = vmatmul.bf16.gmra.mxu0 %v1098
      %v1154 = vpop.f32.mrf.mxu0
      %v1155 = vadd.f32 0.0, %v1154
      %v1156 = vpop.f32.mrf.mxu0
      %v1157 = vadd.f32 0.0, %v1156
      %1158 = vmatmul.bf16.gmra.mxu0 %v1101
      %v1159 = vpop.f32.mrf.mxu0
      %v1160 = vadd.f32 0.0, %v1159
      %v1161 = vpop.f32.mrf.mxu0
      %v1162 = vadd.f32 0.0, %v1161
      %1163 = vmatmul.bf16.gmra.mxu0 %v1104
      %v1164 = vpop.f32.mrf.mxu0
      %v1165 = vadd.f32 0.0, %v1164
      %v1166 = vpop.f32.mrf.mxu0
      %v1167 = vadd.f32 0.0, %v1166
      %1168 = vmatmul.bf16.gmra.mxu0 %v1107
      %v1169 = vpop.f32.mrf.mxu0
      %v1170 = vadd.f32 0.0, %v1169
      %v1171 = vpop.f32.mrf.mxu0
      %v1172 = vadd.f32 0.0, %v1171
      %1173 = vmatmul.bf16.gmra.mxu0 %v1110
      %v1174 = vpop.f32.mrf.mxu0
      %v1175 = vadd.f32 0.0, %v1174
      %v1176 = vpop.f32.mrf.mxu0
      %v1177 = vadd.f32 0.0, %v1176
      %1178 = vmatmul.bf16.gmra.mxu0 %v1113
      %v1179 = vpop.f32.mrf.mxu0
      %v1180 = vadd.f32 0.0, %v1179
      %v1181 = vpop.f32.mrf.mxu0
      %v1182 = vadd.f32 0.0, %v1181
      %1183 = vmatmul.bf16.gmra.mxu0 %v1116
      %v1184 = vpop.f32.mrf.mxu0
      %v1185 = vadd.f32 0.0, %v1184
      %v1186 = vpop.f32.mrf.mxu0
      %v1187 = vadd.f32 0.0, %v1186
      %1188 = vmatmul.bf16.gmra.mxu0 %v1119
      %v1189 = vpop.f32.mrf.mxu0
      %v1190 = vadd.f32 0.0, %v1189
      %v1191 = vpop.f32.mrf.mxu0
      %v1192 = vadd.f32 0.0, %v1191
      %1193 = vmatmul.bf16.gmra.mxu0 %v1122
      %v1194 = vpop.f32.mrf.mxu0
      %v1195 = vadd.f32 0.0, %v1194
      %v1196 = vpop.f32.mrf.mxu0
      %v1197 = vadd.f32 0.0, %v1196
      %1198 = vmatmul.bf16.gmra.mxu0 %v1125
      %v1199 = vpop.f32.mrf.mxu0
      %v1200 = vadd.f32 0.0, %v1199
      %v1201 = vpop.f32.mrf.mxu0
      %v1202 = vadd.f32 0.0, %v1201
      %1203 = vmatmul.bf16.gmra.mxu0 %v1128
      %v1204 = vpop.f32.mrf.mxu0
      %v1205 = vadd.f32 0.0, %v1204
      %v1206 = vpop.f32.mrf.mxu0
      %v1207 = vadd.f32 0.0, %v1206
      %1208 = vmatmul.bf16.gmra.mxu0 %v1131
      %v1209 = vpop.f32.mrf.mxu0
      %v1210 = vadd.f32 0.0, %v1209
      %v1211 = vpop.f32.mrf.mxu0
      %v1212 = vadd.f32 0.0, %v1211
      %1213 = vmatmul.bf16.gmra.mxu0 %v1134
      %v1214 = vpop.f32.mrf.mxu0
      %v1215 = vadd.f32 0.0, %v1214
      %v1216 = vpop.f32.mrf.mxu0
      %v1217 = vadd.f32 0.0, %v1216
      %1218 = vmatmul.bf16.gmra.mxu0 %v1137
      %v1219 = vpop.f32.mrf.mxu0
      %v1220 = vadd.f32 0.0, %v1219
      %v1221 = vpop.f32.mrf.mxu0
      %v1222 = vadd.f32 0.0, %v1221
      %1223 = vmatmul.bf16.gmra.mxu0 %v1140
      %v1224 = vpop.f32.mrf.mxu0
      %v1225 = vadd.f32 0.0, %v1224
      %v1226 = vpop.f32.mrf.mxu0
      %v1227 = vadd.f32 0.0, %v1226
      %1228 = vmatmul.bf16.gmra.mxu0 %v1143
      %v1229 = vpop.f32.mrf.mxu0
      %v1230 = vadd.f32 0.0, %v1229
      %v1231 = vpop.f32.mrf.mxu0
      %v1232 = vadd.f32 0.0, %v1231
      %1233 = vdwg.mxu0
      %v1234 = vadd.f32 %v1008, %v1155
      %v1235 = vadd.f32 %v1009, %v1157
      %v1236 = vadd.f32 %v1010, %v1160
      %v1237 = vadd.f32 %v1011, %v1162
      %v1238 = vadd.f32 %v1012, %v1165
      %v1239 = vadd.f32 %v1013, %v1167
      %v1240 = vadd.f32 %v1014, %v1170
      %v1241 = vadd.f32 %v1015, %v1172
      %v1242 = vadd.f32 %v1016, %v1175
      %v1243 = vadd.f32 %v1017, %v1177
      %v1244 = vadd.f32 %v1018, %v1180
      %v1245 = vadd.f32 %v1019, %v1182
      %v1246 = vadd.f32 %v1020, %v1185
      %v1247 = vadd.f32 %v1021, %v1187
      %v1248 = vadd.f32 %v1022, %v1190
      %v1249 = vadd.f32 %v1023, %v1192
      %v1250 = vadd.f32 %v1024, %v1195
      %v1251 = vadd.f32 %v1025, %v1197
      %v1252 = vadd.f32 %v1026, %v1200
      %v1253 = vadd.f32 %v1027, %v1202
      %v1254 = vadd.f32 %v1028, %v1205
      %v1255 = vadd.f32 %v1029, %v1207
      %v1256 = vadd.f32 %v1030, %v1210
      %v1257 = vadd.f32 %v1031, %v1212
      %v1258 = vadd.f32 %v1032, %v1215
      %v1259 = vadd.f32 %v1033, %v1217
      %v1260 = vadd.f32 %v1034, %v1220
      %v1261 = vadd.f32 %v1035, %v1222
      %v1262 = vadd.f32 %v1036, %v1225
      %v1263 = vadd.f32 %v1037, %v1227
      %v1264 = vadd.f32 %v1038, %v1230
      %v1265 = vadd.f32 %v1039, %v1232
      %v1266 = vld [vmem:[%s813 + $0x2] sm:$0xff]
      %v1267 = vld [vmem:[%s813 + $0xa] sm:$0xff]
      %v1268 = vld [vmem:[%s813 + $0x1a] sm:$0xff]
      %v1269 = vld [vmem:[%s813 + $0x22] sm:$0xff]
      %v1270 = vld [vmem:[%s813 + $0x32] sm:$0xff]
      %v1271 = vld [vmem:[%s813 + $0x3a] sm:$0xff]
      %v1272 = vld [vmem:[%s813 + $0x4a] sm:$0xff]
      %v1273 = vld [vmem:[%s813 + $0x52] sm:$0xff]
      %v1274 = vld [vmem:[%s813 + $0x62] sm:$0xff]
      %v1275 = vld [vmem:[%s813 + $0x6a] sm:$0xff]
      %v1276 = vld [vmem:[%s813 + $0x7a] sm:$0xff]
      %v1277 = vld [vmem:[%s813 + $0x82] sm:$0xff]
      %v1278 = vld [vmem:[%s813 + $0x92] sm:$0xff]
      %v1279 = vld [vmem:[%s813 + $0x9a] sm:$0xff]
      %v1280 = vld [vmem:[%s813 + $0xaa] sm:$0xff]
      %v1281 = vld [vmem:[%s813 + $0xb2] sm:$0xff]
      %v1282 = vld [vmem:[%s813 + $0xc2] sm:$0xff]
      %v1283 = vld [vmem:[%s813 + $0xca] sm:$0xff]
      %v1284 = vld [vmem:[%s813 + $0xda] sm:$0xff]
      %v1285 = vld [vmem:[%s813 + $0xe2] sm:$0xff]
      %v1286 = vld [vmem:[%s813 + $0xf2] sm:$0xff]
      %v1287 = vld [vmem:[%s813 + $0xfa] sm:$0xff]
      %v1288 = vld [vmem:[%s813 + $0x10a] sm:$0xff]
      %v1289 = vld [vmem:[%s813 + $0x112] sm:$0xff]
      %v1290 = vld [vmem:[%s813 + $0x122] sm:$0xff]
      %v1291 = vld [vmem:[%s813 + $0x12a] sm:$0xff]
      %v1292 = vld [vmem:[%s813 + $0x13a] sm:$0xff]
      %v1293 = vld [vmem:[%s813 + $0x142] sm:$0xff]
      %v1294 = vld [vmem:[%s813 + $0x152] sm:$0xff]
      %v1295 = vld [vmem:[%s813 + $0x15a] sm:$0xff]
      %v1296 = vld [vmem:[%s813 + $0x16a] sm:$0xff]
      %v1297 = vld [vmem:[%s813 + $0x172] sm:$0xff]
      %v1298 = vpack.c.bf16 %v1267, %v1266
      %v1299 = vpack.c.bf16 %v1269, %v1268
      %v1300 = vpack.c.bf16 %v1271, %v1270
      %v1301 = vpack.c.bf16 %v1273, %v1272
      %v1302 = vpack.c.bf16 %v1275, %v1274
      %v1303 = vpack.c.bf16 %v1277, %v1276
      %v1304 = vpack.c.bf16 %v1279, %v1278
      %v1305 = vpack.c.bf16 %v1281, %v1280
      %v1306 = vpack.c.bf16 %v1283, %v1282
      %v1307 = vpack.c.bf16 %v1285, %v1284
      %v1308 = vpack.c.bf16 %v1287, %v1286
      %v1309 = vpack.c.bf16 %v1289, %v1288
      %v1310 = vpack.c.bf16 %v1291, %v1290
      %v1311 = vpack.c.bf16 %v1293, %v1292
      %v1312 = vpack.c.bf16 %v1295, %v1294
      %v1313 = vpack.c.bf16 %v1297, %v1296
      %s1314 = scalar_lea.vmem %s1, 40
      %v1315 = vld [vmem:[%s1314] sm:$0xf]
      %v1316 = vld [vmem:[%s1314 + $0x4] sm:$0xf]
      %v1319 = vunpack.c.l.b16 %v1315
      %v1320 = vunpack.c.l.b16 %v1316
      %v1321 = vpack.c.b16 %v1320, %v1319
      %v1324 = vsel %vm306, %v1298, 0
      %v1327 = vsel %vm306, %v1299, 0
      %v1330 = vsel %vm306, %v1300, 0
      %v1333 = vsel %vm306, %v1301, 0
      %v1336 = vsel %vm306, %v1302, 0
      %v1339 = vsel %vm306, %v1303, 0
      %v1342 = vsel %vm306, %v1304, 0
      %v1345 = vsel %vm306, %v1305, 0
      %v1348 = vsel %vm306, %v1306, 0
      %v1351 = vsel %vm306, %v1307, 0
      %v1354 = vsel %vm306, %v1308, 0
      %v1357 = vsel %vm306, %v1309, 0
      %v1360 = vsel %vm306, %v1310, 0
      %v1363 = vsel %vm306, %v1311, 0
      %v1366 = vsel %vm306, %v1312, 0
      %v1369 = vsel %vm306, %v1313, 0
      %1371 = vmatpush.bf16.msra.mxu0 0
      %1372 = vmatpush.bf16.msra.mxu0 0
      %1373 = vmatpush.bf16.msra.mxu0 0
      %1374 = vmatpush.bf16.msra.mxu0 0
      %1375 = vmatpush.bf16.msra.mxu0 0
      %1376 = vmatpush.bf16.msra.mxu0 0
      %1377 = vmatpush.bf16.msra.mxu0 0
      %1378 = vmatpush.bf16.msra.mxu0 %v1321
      %1379 = vmatmul.bf16.gmra.mxu0 %v1324
      %v1380 = vpop.f32.mrf.mxu0
      %v1381 = vadd.f32 0.0, %v1380
      %v1382 = vpop.f32.mrf.mxu0
      %v1383 = vadd.f32 0.0, %v1382
      %1384 = vmatmul.bf16.gmra.mxu0 %v1327
      %v1385 = vpop.f32.mrf.mxu0
      %v1386 = vadd.f32 0.0, %v1385
      %v1387 = vpop.f32.mrf.mxu0
      %v1388 = vadd.f32 0.0, %v1387
      %1389 = vmatmul.bf16.gmra.mxu0 %v1330
      %v1390 = vpop.f32.mrf.mxu0
      %v1391 = vadd.f32 0.0, %v1390
      %v1392 = vpop.f32.mrf.mxu0
      %v1393 = vadd.f32 0.0, %v1392
      %1394 = vmatmul.bf16.gmra.mxu0 %v1333
      %v1395 = vpop.f32.mrf.mxu0
      %v1396 = vadd.f32 0.0, %v1395
      %v1397 = vpop.f32.mrf.mxu0
      %v1398 = vadd.f32 0.0, %v1397
      %1399 = vmatmul.bf16.gmra.mxu0 %v1336
      %v1400 = vpop.f32.mrf.mxu0
      %v1401 = vadd.f32 0.0, %v1400
      %v1402 = vpop.f32.mrf.mxu0
      %v1403 = vadd.f32 0.0, %v1402
      %1404 = vmatmul.bf16.gmra.mxu0 %v1339
      %v1405 = vpop.f32.mrf.mxu0
      %v1406 = vadd.f32 0.0, %v1405
      %v1407 = vpop.f32.mrf.mxu0
      %v1408 = vadd.f32 0.0, %v1407
      %1409 = vmatmul.bf16.gmra.mxu0 %v1342
      %v1410 = vpop.f32.mrf.mxu0
      %v1411 = vadd.f32 0.0, %v1410
      %v1412 = vpop.f32.mrf.mxu0
      %v1413 = vadd.f32 0.0, %v1412
      %1414 = vmatmul.bf16.gmra.mxu0 %v1345
      %v1415 = vpop.f32.mrf.mxu0
      %v1416 = vadd.f32 0.0, %v1415
      %v1417 = vpop.f32.mrf.mxu0
      %v1418 = vadd.f32 0.0, %v1417
      %1419 = vmatmul.bf16.gmra.mxu0 %v1348
      %v1420 = vpop.f32.mrf.mxu0
      %v1421 = vadd.f32 0.0, %v1420
      %v1422 = vpop.f32.mrf.mxu0
      %v1423 = vadd.f32 0.0, %v1422
      %1424 = vmatmul.bf16.gmra.mxu0 %v1351
      %v1425 = vpop.f32.mrf.mxu0
      %v1426 = vadd.f32 0.0, %v1425
      %v1427 = vpop.f32.mrf.mxu0
      %v1428 = vadd.f32 0.0, %v1427
      %1429 = vmatmul.bf16.gmra.mxu0 %v1354
      %v1430 = vpop.f32.mrf.mxu0
      %v1431 = vadd.f32 0.0, %v1430
      %v1432 = vpop.f32.mrf.mxu0
      %v1433 = vadd.f32 0.0, %v1432
      %1434 = vmatmul.bf16.gmra.mxu0 %v1357
      %v1435 = vpop.f32.mrf.mxu0
      %v1436 = vadd.f32 0.0, %v1435
      %v1437 = vpop.f32.mrf.mxu0
      %v1438 = vadd.f32 0.0, %v1437
      %1439 = vmatmul.bf16.gmra.mxu0 %v1360
      %v1440 = vpop.f32.mrf.mxu0
      %v1441 = vadd.f32 0.0, %v1440
      %v1442 = vpop.f32.mrf.mxu0
      %v1443 = vadd.f32 0.0, %v1442
      %1444 = vmatmul.bf16.gmra.mxu0 %v1363
      %v1445 = vpop.f32.mrf.mxu0
      %v1446 = vadd.f32 0.0, %v1445
      %v1447 = vpop.f32.mrf.mxu0
      %v1448 = vadd.f32 0.0, %v1447
      %1449 = vmatmul.bf16.gmra.mxu0 %v1366
      %v1450 = vpop.f32.mrf.mxu0
      %v1451 = vadd.f32 0.0, %v1450
      %v1452 = vpop.f32.mrf.mxu0
      %v1453 = vadd.f32 0.0, %v1452
      %1454 = vmatmul.bf16.gmra.mxu0 %v1369
      %v1455 = vpop.f32.mrf.mxu0
      %v1456 = vadd.f32 0.0, %v1455
      %v1457 = vpop.f32.mrf.mxu0
      %v1458 = vadd.f32 0.0, %v1457
      %1459 = vdwg.mxu0
      %v1460 = vadd.f32 %v1234, %v1381
      %v1461 = vadd.f32 %v1235, %v1383
      %v1462 = vadd.f32 %v1236, %v1386
      %v1463 = vadd.f32 %v1237, %v1388
      %v1464 = vadd.f32 %v1238, %v1391
      %v1465 = vadd.f32 %v1239, %v1393
      %v1466 = vadd.f32 %v1240, %v1396
      %v1467 = vadd.f32 %v1241, %v1398
      %v1468 = vadd.f32 %v1242, %v1401
      %v1469 = vadd.f32 %v1243, %v1403
      %v1470 = vadd.f32 %v1244, %v1406
      %v1471 = vadd.f32 %v1245, %v1408
      %v1472 = vadd.f32 %v1246, %v1411
      %v1473 = vadd.f32 %v1247, %v1413
      %v1474 = vadd.f32 %v1248, %v1416
      %v1475 = vadd.f32 %v1249, %v1418
      %v1476 = vadd.f32 %v1250, %v1421
      %v1477 = vadd.f32 %v1251, %v1423
      %v1478 = vadd.f32 %v1252, %v1426
      %v1479 = vadd.f32 %v1253, %v1428
      %v1480 = vadd.f32 %v1254, %v1431
      %v1481 = vadd.f32 %v1255, %v1433
      %v1482 = vadd.f32 %v1256, %v1436
      %v1483 = vadd.f32 %v1257, %v1438
      %v1484 = vadd.f32 %v1258, %v1441
      %v1485 = vadd.f32 %v1259, %v1443
      %v1486 = vadd.f32 %v1260, %v1446
      %v1487 = vadd.f32 %v1261, %v1448
      %v1488 = vadd.f32 %v1262, %v1451
      %v1489 = vadd.f32 %v1263, %v1453
      %v1490 = vadd.f32 %v1264, %v1456
      %v1491 = vadd.f32 %v1265, %v1458
      %s1492 = scalar_lea.vmem %s192, 48
      %v1493 = vld [vmem:[%s1492] sm:$0xff]
      %v1494 = vld [vmem:[%s1492 + $0x8] sm:$0xff]
      %v1495 = vld [vmem:[%s1492 + $0x18] sm:$0xff]
      %v1496 = vld [vmem:[%s1492 + $0x20] sm:$0xff]
      %v1497 = vld [vmem:[%s1492 + $0x30] sm:$0xff]
      %v1498 = vld [vmem:[%s1492 + $0x38] sm:$0xff]
      %v1499 = vld [vmem:[%s1492 + $0x48] sm:$0xff]
      %v1500 = vld [vmem:[%s1492 + $0x50] sm:$0xff]
      %v1501 = vld [vmem:[%s1492 + $0x60] sm:$0xff]
      %v1502 = vld [vmem:[%s1492 + $0x68] sm:$0xff]
      %v1503 = vld [vmem:[%s1492 + $0x78] sm:$0xff]
      %v1504 = vld [vmem:[%s1492 + $0x80] sm:$0xff]
      %v1505 = vld [vmem:[%s1492 + $0x90] sm:$0xff]
      %v1506 = vld [vmem:[%s1492 + $0x98] sm:$0xff]
      %v1507 = vld [vmem:[%s1492 + $0xa8] sm:$0xff]
      %v1508 = vld [vmem:[%s1492 + $0xb0] sm:$0xff]
      %v1509 = vld [vmem:[%s1492 + $0xc0] sm:$0xff]
      %v1510 = vld [vmem:[%s1492 + $0xc8] sm:$0xff]
      %v1511 = vld [vmem:[%s1492 + $0xd8] sm:$0xff]
      %v1512 = vld [vmem:[%s1492 + $0xe0] sm:$0xff]
      %v1513 = vld [vmem:[%s1492 + $0xf0] sm:$0xff]
      %v1514 = vld [vmem:[%s1492 + $0xf8] sm:$0xff]
      %v1515 = vld [vmem:[%s1492 + $0x108] sm:$0xff]
      %v1516 = vld [vmem:[%s1492 + $0x110] sm:$0xff]
      %v1517 = vld [vmem:[%s1492 + $0x120] sm:$0xff]
      %v1518 = vld [vmem:[%s1492 + $0x128] sm:$0xff]
      %v1519 = vld [vmem:[%s1492 + $0x138] sm:$0xff]
      %v1520 = vld [vmem:[%s1492 + $0x140] sm:$0xff]
      %v1521 = vld [vmem:[%s1492 + $0x150] sm:$0xff]
      %v1522 = vld [vmem:[%s1492 + $0x158] sm:$0xff]
      %v1523 = vld [vmem:[%s1492 + $0x168] sm:$0xff]
      %v1524 = vld [vmem:[%s1492 + $0x170] sm:$0xff]
      %v1525 = vpack.c.bf16 %v1494, %v1493
      %v1526 = vpack.c.bf16 %v1496, %v1495
      %v1527 = vpack.c.bf16 %v1498, %v1497
      %v1528 = vpack.c.bf16 %v1500, %v1499
      %v1529 = vpack.c.bf16 %v1502, %v1501
      %v1530 = vpack.c.bf16 %v1504, %v1503
      %v1531 = vpack.c.bf16 %v1506, %v1505
      %v1532 = vpack.c.bf16 %v1508, %v1507
      %v1533 = vpack.c.bf16 %v1510, %v1509
      %v1534 = vpack.c.bf16 %v1512, %v1511
      %v1535 = vpack.c.bf16 %v1514, %v1513
      %v1536 = vpack.c.bf16 %v1516, %v1515
      %v1537 = vpack.c.bf16 %v1518, %v1517
      %v1538 = vpack.c.bf16 %v1520, %v1519
      %v1539 = vpack.c.bf16 %v1522, %v1521
      %v1540 = vpack.c.bf16 %v1524, %v1523
      %s1541 = scalar_lea.vmem %s1, 48
      %v1542 = vld [vmem:[%s1541] sm:$0xf]
      %v1543 = vld [vmem:[%s1541 + $0x4] sm:$0xf]
      %v1546 = vunpack.c.l.b16 %v1542
      %v1547 = vunpack.c.l.b16 %v1543
      %v1548 = vpack.c.b16 %v1547, %v1546
      %v1551 = vsel %vm306, %v1525, 0
      %v1554 = vsel %vm306, %v1526, 0
      %v1557 = vsel %vm306, %v1527, 0
      %v1560 = vsel %vm306, %v1528, 0
      %v1563 = vsel %vm306, %v1529, 0
      %v1566 = vsel %vm306, %v1530, 0
      %v1569 = vsel %vm306, %v1531, 0
      %v1572 = vsel %vm306, %v1532, 0
      %v1575 = vsel %vm306, %v1533, 0
      %v1578 = vsel %vm306, %v1534, 0
      %v1581 = vsel %vm306, %v1535, 0
      %v1584 = vsel %vm306, %v1536, 0
      %v1587 = vsel %vm306, %v1537, 0
      %v1590 = vsel %vm306, %v1538, 0
      %v1593 = vsel %vm306, %v1539, 0
      %v1596 = vsel %vm306, %v1540, 0
      %1598 = vmatpush.bf16.msra.mxu0 0
      %1599 = vmatpush.bf16.msra.mxu0 0
      %1600 = vmatpush.bf16.msra.mxu0 0
      %1601 = vmatpush.bf16.msra.mxu0 0
      %1602 = vmatpush.bf16.msra.mxu0 0
      %1603 = vmatpush.bf16.msra.mxu0 0
      %1604 = vmatpush.bf16.msra.mxu0 0
      %1605 = vmatpush.bf16.msra.mxu0 %v1548
      %1606 = vmatmul.bf16.gmra.mxu0 %v1551
      %v1607 = vpop.f32.mrf.mxu0
      %v1608 = vadd.f32 0.0, %v1607
      %v1609 = vpop.f32.mrf.mxu0
      %v1610 = vadd.f32 0.0, %v1609
      %1611 = vmatmul.bf16.gmra.mxu0 %v1554
      %v1612 = vpop.f32.mrf.mxu0
      %v1613 = vadd.f32 0.0, %v1612
      %v1614 = vpop.f32.mrf.mxu0
      %v1615 = vadd.f32 0.0, %v1614
      %1616 = vmatmul.bf16.gmra.mxu0 %v1557
      %v1617 = vpop.f32.mrf.mxu0
      %v1618 = vadd.f32 0.0, %v1617
      %v1619 = vpop.f32.mrf.mxu0
      %v1620 = vadd.f32 0.0, %v1619
      %1621 = vmatmul.bf16.gmra.mxu0 %v1560
      %v1622 = vpop.f32.mrf.mxu0
      %v1623 = vadd.f32 0.0, %v1622
      %v1624 = vpop.f32.mrf.mxu0
      %v1625 = vadd.f32 0.0, %v1624
      %1626 = vmatmul.bf16.gmra.mxu0 %v1563
      %v1627 = vpop.f32.mrf.mxu0
      %v1628 = vadd.f32 0.0, %v1627
      %v1629 = vpop.f32.mrf.mxu0
      %v1630 = vadd.f32 0.0, %v1629
      %1631 = vmatmul.bf16.gmra.mxu0 %v1566
      %v1632 = vpop.f32.mrf.mxu0
      %v1633 = vadd.f32 0.0, %v1632
      %v1634 = vpop.f32.mrf.mxu0
      %v1635 = vadd.f32 0.0, %v1634
      %1636 = vmatmul.bf16.gmra.mxu0 %v1569
      %v1637 = vpop.f32.mrf.mxu0
      %v1638 = vadd.f32 0.0, %v1637
      %v1639 = vpop.f32.mrf.mxu0
      %v1640 = vadd.f32 0.0, %v1639
      %1641 = vmatmul.bf16.gmra.mxu0 %v1572
      %v1642 = vpop.f32.mrf.mxu0
      %v1643 = vadd.f32 0.0, %v1642
      %v1644 = vpop.f32.mrf.mxu0
      %v1645 = vadd.f32 0.0, %v1644
      %1646 = vmatmul.bf16.gmra.mxu0 %v1575
      %v1647 = vpop.f32.mrf.mxu0
      %v1648 = vadd.f32 0.0, %v1647
      %v1649 = vpop.f32.mrf.mxu0
      %v1650 = vadd.f32 0.0, %v1649
      %1651 = vmatmul.bf16.gmra.mxu0 %v1578
      %v1652 = vpop.f32.mrf.mxu0
      %v1653 = vadd.f32 0.0, %v1652
      %v1654 = vpop.f32.mrf.mxu0
      %v1655 = vadd.f32 0.0, %v1654
      %1656 = vmatmul.bf16.gmra.mxu0 %v1581
      %v1657 = vpop.f32.mrf.mxu0
      %v1658 = vadd.f32 0.0, %v1657
      %v1659 = vpop.f32.mrf.mxu0
      %v1660 = vadd.f32 0.0, %v1659
      %1661 = vmatmul.bf16.gmra.mxu0 %v1584
      %v1662 = vpop.f32.mrf.mxu0
      %v1663 = vadd.f32 0.0, %v1662
      %v1664 = vpop.f32.mrf.mxu0
      %v1665 = vadd.f32 0.0, %v1664
      %1666 = vmatmul.bf16.gmra.mxu0 %v1587
      %v1667 = vpop.f32.mrf.mxu0
      %v1668 = vadd.f32 0.0, %v1667
      %v1669 = vpop.f32.mrf.mxu0
      %v1670 = vadd.f32 0.0, %v1669
      %1671 = vmatmul.bf16.gmra.mxu0 %v1590
      %v1672 = vpop.f32.mrf.mxu0
      %v1673 = vadd.f32 0.0, %v1672
      %v1674 = vpop.f32.mrf.mxu0
      %v1675 = vadd.f32 0.0, %v1674
      %1676 = vmatmul.bf16.gmra.mxu0 %v1593
      %v1677 = vpop.f32.mrf.mxu0
      %v1678 = vadd.f32 0.0, %v1677
      %v1679 = vpop.f32.mrf.mxu0
      %v1680 = vadd.f32 0.0, %v1679
      %1681 = vmatmul.bf16.gmra.mxu0 %v1596
      %v1682 = vpop.f32.mrf.mxu0
      %v1683 = vadd.f32 0.0, %v1682
      %v1684 = vpop.f32.mrf.mxu0
      %v1685 = vadd.f32 0.0, %v1684
      %1686 = vdwg.mxu0
      %v1687 = vadd.f32 %v1460, %v1608
      %v1688 = vadd.f32 %v1461, %v1610
      %v1689 = vadd.f32 %v1462, %v1613
      %v1690 = vadd.f32 %v1463, %v1615
      %v1691 = vadd.f32 %v1464, %v1618
      %v1692 = vadd.f32 %v1465, %v1620
      %v1693 = vadd.f32 %v1466, %v1623
      %v1694 = vadd.f32 %v1467, %v1625
      %v1695 = vadd.f32 %v1468, %v1628
      %v1696 = vadd.f32 %v1469, %v1630
      %v1697 = vadd.f32 %v1470, %v1633
      %v1698 = vadd.f32 %v1471, %v1635
      %v1699 = vadd.f32 %v1472, %v1638
      %v1700 = vadd.f32 %v1473, %v1640
      %v1701 = vadd.f32 %v1474, %v1643
      %v1702 = vadd.f32 %v1475, %v1645
      %v1703 = vadd.f32 %v1476, %v1648
      %v1704 = vadd.f32 %v1477, %v1650
      %v1705 = vadd.f32 %v1478, %v1653
      %v1706 = vadd.f32 %v1479, %v1655
      %v1707 = vadd.f32 %v1480, %v1658
      %v1708 = vadd.f32 %v1481, %v1660
      %v1709 = vadd.f32 %v1482, %v1663
      %v1710 = vadd.f32 %v1483, %v1665
      %v1711 = vadd.f32 %v1484, %v1668
      %v1712 = vadd.f32 %v1485, %v1670
      %v1713 = vadd.f32 %v1486, %v1673
      %v1714 = vadd.f32 %v1487, %v1675
      %v1715 = vadd.f32 %v1488, %v1678
      %v1716 = vadd.f32 %v1489, %v1680
      %v1717 = vadd.f32 %v1490, %v1683
      %v1718 = vadd.f32 %v1491, %v1685
      %v1719 = vld [vmem:[%s1492 + $0x1] sm:$0xff]
      %v1720 = vld [vmem:[%s1492 + $0x9] sm:$0xff]
      %v1721 = vld [vmem:[%s1492 + $0x19] sm:$0xff]
      %v1722 = vld [vmem:[%s1492 + $0x21] sm:$0xff]
      %v1723 = vld [vmem:[%s1492 + $0x31] sm:$0xff]
      %v1724 = vld [vmem:[%s1492 + $0x39] sm:$0xff]
      %v1725 = vld [vmem:[%s1492 + $0x49] sm:$0xff]
      %v1726 = vld [vmem:[%s1492 + $0x51] sm:$0xff]
      %v1727 = vld [vmem:[%s1492 + $0x61] sm:$0xff]
      %v1728 = vld [vmem:[%s1492 + $0x69] sm:$0xff]
      %v1729 = vld [vmem:[%s1492 + $0x79] sm:$0xff]
      %v1730 = vld [vmem:[%s1492 + $0x81] sm:$0xff]
      %v1731 = vld [vmem:[%s1492 + $0x91] sm:$0xff]
      %v1732 = vld [vmem:[%s1492 + $0x99] sm:$0xff]
      %v1733 = vld [vmem:[%s1492 + $0xa9] sm:$0xff]
      %v1734 = vld [vmem:[%s1492 + $0xb1] sm:$0xff]
      %v1735 = vld [vmem:[%s1492 + $0xc1] sm:$0xff]
      %v1736 = vld [vmem:[%s1492 + $0xc9] sm:$0xff]
      %v1737 = vld [vmem:[%s1492 + $0xd9] sm:$0xff]
      %v1738 = vld [vmem:[%s1492 + $0xe1] sm:$0xff]
      %v1739 = vld [vmem:[%s1492 + $0xf1] sm:$0xff]
      %v1740 = vld [vmem:[%s1492 + $0xf9] sm:$0xff]
      %v1741 = vld [vmem:[%s1492 + $0x109] sm:$0xff]
      %v1742 = vld [vmem:[%s1492 + $0x111] sm:$0xff]
      %v1743 = vld [vmem:[%s1492 + $0x121] sm:$0xff]
      %v1744 = vld [vmem:[%s1492 + $0x129] sm:$0xff]
      %v1745 = vld [vmem:[%s1492 + $0x139] sm:$0xff]
      %v1746 = vld [vmem:[%s1492 + $0x141] sm:$0xff]
      %v1747 = vld [vmem:[%s1492 + $0x151] sm:$0xff]
      %v1748 = vld [vmem:[%s1492 + $0x159] sm:$0xff]
      %v1749 = vld [vmem:[%s1492 + $0x169] sm:$0xff]
      %v1750 = vld [vmem:[%s1492 + $0x171] sm:$0xff]
      %v1751 = vpack.c.bf16 %v1720, %v1719
      %v1752 = vpack.c.bf16 %v1722, %v1721
      %v1753 = vpack.c.bf16 %v1724, %v1723
      %v1754 = vpack.c.bf16 %v1726, %v1725
      %v1755 = vpack.c.bf16 %v1728, %v1727
      %v1756 = vpack.c.bf16 %v1730, %v1729
      %v1757 = vpack.c.bf16 %v1732, %v1731
      %v1758 = vpack.c.bf16 %v1734, %v1733
      %v1759 = vpack.c.bf16 %v1736, %v1735
      %v1760 = vpack.c.bf16 %v1738, %v1737
      %v1761 = vpack.c.bf16 %v1740, %v1739
      %v1762 = vpack.c.bf16 %v1742, %v1741
      %v1763 = vpack.c.bf16 %v1744, %v1743
      %v1764 = vpack.c.bf16 %v1746, %v1745
      %v1765 = vpack.c.bf16 %v1748, %v1747
      %v1766 = vpack.c.bf16 %v1750, %v1749
      %s1767 = scalar_lea.vmem %s1, 56
      %v1768 = vld [vmem:[%s1767] sm:$0xf]
      %v1769 = vld [vmem:[%s1767 + $0x4] sm:$0xf]
      %v1772 = vunpack.c.l.b16 %v1768
      %v1773 = vunpack.c.l.b16 %v1769
      %v1774 = vpack.c.b16 %v1773, %v1772
      %v1777 = vsel %vm306, %v1751, 0
      %v1780 = vsel %vm306, %v1752, 0
      %v1783 = vsel %vm306, %v1753, 0
      %v1786 = vsel %vm306, %v1754, 0
      %v1789 = vsel %vm306, %v1755, 0
      %v1792 = vsel %vm306, %v1756, 0
      %v1795 = vsel %vm306, %v1757, 0
      %v1798 = vsel %vm306, %v1758, 0
      %v1801 = vsel %vm306, %v1759, 0
      %v1804 = vsel %vm306, %v1760, 0
      %v1807 = vsel %vm306, %v1761, 0
      %v1810 = vsel %vm306, %v1762, 0
      %v1813 = vsel %vm306, %v1763, 0
      %v1816 = vsel %vm306, %v1764, 0
      %v1819 = vsel %vm306, %v1765, 0
      %v1822 = vsel %vm306, %v1766, 0
      %1824 = vmatpush.bf16.msra.mxu0 0
      %1825 = vmatpush.bf16.msra.mxu0 0
      %1826 = vmatpush.bf16.msra.mxu0 0
      %1827 = vmatpush.bf16.msra.mxu0 0
      %1828 = vmatpush.bf16.msra.mxu0 0
      %1829 = vmatpush.bf16.msra.mxu0 0
      %1830 = vmatpush.bf16.msra.mxu0 0
      %1831 = vmatpush.bf16.msra.mxu0 %v1774
      %1832 = vmatmul.bf16.gmra.mxu0 %v1777
      %v1833 = vpop.f32.mrf.mxu0
      %v1834 = vadd.f32 0.0, %v1833
      %v1835 = vpop.f32.mrf.mxu0
      %v1836 = vadd.f32 0.0, %v1835
      %1837 = vmatmul.bf16.gmra.mxu0 %v1780
      %v1838 = vpop.f32.mrf.mxu0
      %v1839 = vadd.f32 0.0, %v1838
      %v1840 = vpop.f32.mrf.mxu0
      %v1841 = vadd.f32 0.0, %v1840
      %1842 = vmatmul.bf16.gmra.mxu0 %v1783
      %v1843 = vpop.f32.mrf.mxu0
      %v1844 = vadd.f32 0.0, %v1843
      %v1845 = vpop.f32.mrf.mxu0
      %v1846 = vadd.f32 0.0, %v1845
      %1847 = vmatmul.bf16.gmra.mxu0 %v1786
      %v1848 = vpop.f32.mrf.mxu0
      %v1849 = vadd.f32 0.0, %v1848
      %v1850 = vpop.f32.mrf.mxu0
      %v1851 = vadd.f32 0.0, %v1850
      %1852 = vmatmul.bf16.gmra.mxu0 %v1789
      %v1853 = vpop.f32.mrf.mxu0
      %v1854 = vadd.f32 0.0, %v1853
      %v1855 = vpop.f32.mrf.mxu0
      %v1856 = vadd.f32 0.0, %v1855
      %1857 = vmatmul.bf16.gmra.mxu0 %v1792
      %v1858 = vpop.f32.mrf.mxu0
      %v1859 = vadd.f32 0.0, %v1858
      %v1860 = vpop.f32.mrf.mxu0
      %v1861 = vadd.f32 0.0, %v1860
      %1862 = vmatmul.bf16.gmra.mxu0 %v1795
      %v1863 = vpop.f32.mrf.mxu0
      %v1864 = vadd.f32 0.0, %v1863
      %v1865 = vpop.f32.mrf.mxu0
      %v1866 = vadd.f32 0.0, %v1865
      %1867 = vmatmul.bf16.gmra.mxu0 %v1798
      %v1868 = vpop.f32.mrf.mxu0
      %v1869 = vadd.f32 0.0, %v1868
      %v1870 = vpop.f32.mrf.mxu0
      %v1871 = vadd.f32 0.0, %v1870
      %1872 = vmatmul.bf16.gmra.mxu0 %v1801
      %v1873 = vpop.f32.mrf.mxu0
      %v1874 = vadd.f32 0.0, %v1873
      %v1875 = vpop.f32.mrf.mxu0
      %v1876 = vadd.f32 0.0, %v1875
      %1877 = vmatmul.bf16.gmra.mxu0 %v1804
      %v1878 = vpop.f32.mrf.mxu0
      %v1879 = vadd.f32 0.0, %v1878
      %v1880 = vpop.f32.mrf.mxu0
      %v1881 = vadd.f32 0.0, %v1880
      %1882 = vmatmul.bf16.gmra.mxu0 %v1807
      %v1883 = vpop.f32.mrf.mxu0
      %v1884 = vadd.f32 0.0, %v1883
      %v1885 = vpop.f32.mrf.mxu0
      %v1886 = vadd.f32 0.0, %v1885
      %1887 = vmatmul.bf16.gmra.mxu0 %v1810
      %v1888 = vpop.f32.mrf.mxu0
      %v1889 = vadd.f32 0.0, %v1888
      %v1890 = vpop.f32.mrf.mxu0
      %v1891 = vadd.f32 0.0, %v1890
      %1892 = vmatmul.bf16.gmra.mxu0 %v1813
      %v1893 = vpop.f32.mrf.mxu0
      %v1894 = vadd.f32 0.0, %v1893
      %v1895 = vpop.f32.mrf.mxu0
      %v1896 = vadd.f32 0.0, %v1895
      %1897 = vmatmul.bf16.gmra.mxu0 %v1816
      %v1898 = vpop.f32.mrf.mxu0
      %v1899 = vadd.f32 0.0, %v1898
      %v1900 = vpop.f32.mrf.mxu0
      %v1901 = vadd.f32 0.0, %v1900
      %1902 = vmatmul.bf16.gmra.mxu0 %v1819
      %v1903 = vpop.f32.mrf.mxu0
      %v1904 = vadd.f32 0.0, %v1903
      %v1905 = vpop.f32.mrf.mxu0
      %v1906 = vadd.f32 0.0, %v1905
      %1907 = vmatmul.bf16.gmra.mxu0 %v1822
      %v1908 = vpop.f32.mrf.mxu0
      %v1909 = vadd.f32 0.0, %v1908
      %v1910 = vpop.f32.mrf.mxu0
      %v1911 = vadd.f32 0.0, %v1910
      %1912 = vdwg.mxu0
      %v1913 = vadd.f32 %v1687, %v1834
      %v1914 = vadd.f32 %v1688, %v1836
      %v1915 = vadd.f32 %v1689, %v1839
      %v1916 = vadd.f32 %v1690, %v1841
      %v1917 = vadd.f32 %v1691, %v1844
      %v1918 = vadd.f32 %v1692, %v1846
      %v1919 = vadd.f32 %v1693, %v1849
      %v1920 = vadd.f32 %v1694, %v1851
      %v1921 = vadd.f32 %v1695, %v1854
      %v1922 = vadd.f32 %v1696, %v1856
      %v1923 = vadd.f32 %v1697, %v1859
      %v1924 = vadd.f32 %v1698, %v1861
      %v1925 = vadd.f32 %v1699, %v1864
      %v1926 = vadd.f32 %v1700, %v1866
      %v1927 = vadd.f32 %v1701, %v1869
      %v1928 = vadd.f32 %v1702, %v1871
      %v1929 = vadd.f32 %v1703, %v1874
      %v1930 = vadd.f32 %v1704, %v1876
      %v1931 = vadd.f32 %v1705, %v1879
      %v1932 = vadd.f32 %v1706, %v1881
      %v1933 = vadd.f32 %v1707, %v1884
      %v1934 = vadd.f32 %v1708, %v1886
      %v1935 = vadd.f32 %v1709, %v1889
      %v1936 = vadd.f32 %v1710, %v1891
      %v1937 = vadd.f32 %v1711, %v1894
      %v1938 = vadd.f32 %v1712, %v1896
      %v1939 = vadd.f32 %v1713, %v1899
      %v1940 = vadd.f32 %v1714, %v1901
      %v1941 = vadd.f32 %v1715, %v1904
      %v1942 = vadd.f32 %v1716, %v1906
      %v1943 = vadd.f32 %v1717, %v1909
      %v1944 = vadd.f32 %v1718, %v1911
      %v1945 = vld [vmem:[%s1492 + $0x2] sm:$0xff]
      %v1946 = vld [vmem:[%s1492 + $0xa] sm:$0xff]
      %v1947 = vld [vmem:[%s1492 + $0x1a] sm:$0xff]
      %v1948 = vld [vmem:[%s1492 + $0x22] sm:$0xff]
      %v1949 = vld [vmem:[%s1492 + $0x32] sm:$0xff]
      %v1950 = vld [vmem:[%s1492 + $0x3a] sm:$0xff]
      %v1951 = vld [vmem:[%s1492 + $0x4a] sm:$0xff]
      %v1952 = vld [vmem:[%s1492 + $0x52] sm:$0xff]
      %v1953 = vld [vmem:[%s1492 + $0x62] sm:$0xff]
      %v1954 = vld [vmem:[%s1492 + $0x6a] sm:$0xff]
      %v1955 = vld [vmem:[%s1492 + $0x7a] sm:$0xff]
      %v1956 = vld [vmem:[%s1492 + $0x82] sm:$0xff]
      %v1957 = vld [vmem:[%s1492 + $0x92] sm:$0xff]
      %v1958 = vld [vmem:[%s1492 + $0x9a] sm:$0xff]
      %v1959 = vld [vmem:[%s1492 + $0xaa] sm:$0xff]
      %v1960 = vld [vmem:[%s1492 + $0xb2] sm:$0xff]
      %v1961 = vld [vmem:[%s1492 + $0xc2] sm:$0xff]
      %v1962 = vld [vmem:[%s1492 + $0xca] sm:$0xff]
      %v1963 = vld [vmem:[%s1492 + $0xda] sm:$0xff]
      %v1964 = vld [vmem:[%s1492 + $0xe2] sm:$0xff]
      %v1965 = vld [vmem:[%s1492 + $0xf2] sm:$0xff]
      %v1966 = vld [vmem:[%s1492 + $0xfa] sm:$0xff]
      %v1967 = vld [vmem:[%s1492 + $0x10a] sm:$0xff]
      %v1968 = vld [vmem:[%s1492 + $0x112] sm:$0xff]
      %v1969 = vld [vmem:[%s1492 + $0x122] sm:$0xff]
      %v1970 = vld [vmem:[%s1492 + $0x12a] sm:$0xff]
      %v1971 = vld [vmem:[%s1492 + $0x13a] sm:$0xff]
      %v1972 = vld [vmem:[%s1492 + $0x142] sm:$0xff]
      %v1973 = vld [vmem:[%s1492 + $0x152] sm:$0xff]
      %v1974 = vld [vmem:[%s1492 + $0x15a] sm:$0xff]
      %v1975 = vld [vmem:[%s1492 + $0x16a] sm:$0xff]
      %v1976 = vld [vmem:[%s1492 + $0x172] sm:$0xff]
      %v1977 = vpack.c.bf16 %v1946, %v1945
      %v1978 = vpack.c.bf16 %v1948, %v1947
      %v1979 = vpack.c.bf16 %v1950, %v1949
      %v1980 = vpack.c.bf16 %v1952, %v1951
      %v1981 = vpack.c.bf16 %v1954, %v1953
      %v1982 = vpack.c.bf16 %v1956, %v1955
      %v1983 = vpack.c.bf16 %v1958, %v1957
      %v1984 = vpack.c.bf16 %v1960, %v1959
      %v1985 = vpack.c.bf16 %v1962, %v1961
      %v1986 = vpack.c.bf16 %v1964, %v1963
      %v1987 = vpack.c.bf16 %v1966, %v1965
      %v1988 = vpack.c.bf16 %v1968, %v1967
      %v1989 = vpack.c.bf16 %v1970, %v1969
      %v1990 = vpack.c.bf16 %v1972, %v1971
      %v1991 = vpack.c.bf16 %v1974, %v1973
      %v1992 = vpack.c.bf16 %v1976, %v1975
      %s1993 = scalar_lea.vmem %s1, 64
      %v1994 = vld [vmem:[%s1993] sm:$0xf]
      %v1995 = vld [vmem:[%s1993 + $0x4] sm:$0xf]
      %v1998 = vunpack.c.l.b16 %v1994
      %v1999 = vunpack.c.l.b16 %v1995
      %v2000 = vpack.c.b16 %v1999, %v1998
      %v2003 = vsel %vm306, %v1977, 0
      %v2006 = vsel %vm306, %v1978, 0
      %v2009 = vsel %vm306, %v1979, 0
      %v2012 = vsel %vm306, %v1980, 0
      %v2015 = vsel %vm306, %v1981, 0
      %v2018 = vsel %vm306, %v1982, 0
      %v2021 = vsel %vm306, %v1983, 0
      %v2024 = vsel %vm306, %v1984, 0
      %v2027 = vsel %vm306, %v1985, 0
      %v2030 = vsel %vm306, %v1986, 0
      %v2033 = vsel %vm306, %v1987, 0
      %v2036 = vsel %vm306, %v1988, 0
      %v2039 = vsel %vm306, %v1989, 0
      %v2042 = vsel %vm306, %v1990, 0
      %v2045 = vsel %vm306, %v1991, 0
      %v2048 = vsel %vm306, %v1992, 0
      %2050 = vmatpush.bf16.msra.mxu0 0
      %2051 = vmatpush.bf16.msra.mxu0 0
      %2052 = vmatpush.bf16.msra.mxu0 0
      %2053 = vmatpush.bf16.msra.mxu0 0
      %2054 = vmatpush.bf16.msra.mxu0 0
      %2055 = vmatpush.bf16.msra.mxu0 0
      %2056 = vmatpush.bf16.msra.mxu0 0
      %2057 = vmatpush.bf16.msra.mxu0 %v2000
      %2058 = vmatmul.bf16.gmra.mxu0 %v2003
      %v2059 = vpop.f32.mrf.mxu0
      %v2060 = vadd.f32 0.0, %v2059
      %v2061 = vpop.f32.mrf.mxu0
      %v2062 = vadd.f32 0.0, %v2061
      %2063 = vmatmul.bf16.gmra.mxu0 %v2006
      %v2064 = vpop.f32.mrf.mxu0
      %v2065 = vadd.f32 0.0, %v2064
      %v2066 = vpop.f32.mrf.mxu0
      %v2067 = vadd.f32 0.0, %v2066
      %2068 = vmatmul.bf16.gmra.mxu0 %v2009
      %v2069 = vpop.f32.mrf.mxu0
      %v2070 = vadd.f32 0.0, %v2069
      %v2071 = vpop.f32.mrf.mxu0
      %v2072 = vadd.f32 0.0, %v2071
      %2073 = vmatmul.bf16.gmra.mxu0 %v2012
      %v2074 = vpop.f32.mrf.mxu0
      %v2075 = vadd.f32 0.0, %v2074
      %v2076 = vpop.f32.mrf.mxu0
      %v2077 = vadd.f32 0.0, %v2076
      %2078 = vmatmul.bf16.gmra.mxu0 %v2015
      %v2079 = vpop.f32.mrf.mxu0
      %v2080 = vadd.f32 0.0, %v2079
      %v2081 = vpop.f32.mrf.mxu0
      %v2082 = vadd.f32 0.0, %v2081
      %2083 = vmatmul.bf16.gmra.mxu0 %v2018
      %v2084 = vpop.f32.mrf.mxu0
      %v2085 = vadd.f32 0.0, %v2084
      %v2086 = vpop.f32.mrf.mxu0
      %v2087 = vadd.f32 0.0, %v2086
      %2088 = vmatmul.bf16.gmra.mxu0 %v2021
      %v2089 = vpop.f32.mrf.mxu0
      %v2090 = vadd.f32 0.0, %v2089
      %v2091 = vpop.f32.mrf.mxu0
      %v2092 = vadd.f32 0.0, %v2091
      %2093 = vmatmul.bf16.gmra.mxu0 %v2024
      %v2094 = vpop.f32.mrf.mxu0
      %v2095 = vadd.f32 0.0, %v2094
      %v2096 = vpop.f32.mrf.mxu0
      %v2097 = vadd.f32 0.0, %v2096
      %2098 = vmatmul.bf16.gmra.mxu0 %v2027
      %v2099 = vpop.f32.mrf.mxu0
      %v2100 = vadd.f32 0.0, %v2099
      %v2101 = vpop.f32.mrf.mxu0
      %v2102 = vadd.f32 0.0, %v2101
      %2103 = vmatmul.bf16.gmra.mxu0 %v2030
      %v2104 = vpop.f32.mrf.mxu0
      %v2105 = vadd.f32 0.0, %v2104
      %v2106 = vpop.f32.mrf.mxu0
      %v2107 = vadd.f32 0.0, %v2106
      %2108 = vmatmul.bf16.gmra.mxu0 %v2033
      %v2109 = vpop.f32.mrf.mxu0
      %v2110 = vadd.f32 0.0, %v2109
      %v2111 = vpop.f32.mrf.mxu0
      %v2112 = vadd.f32 0.0, %v2111
      %2113 = vmatmul.bf16.gmra.mxu0 %v2036
      %v2114 = vpop.f32.mrf.mxu0
      %v2115 = vadd.f32 0.0, %v2114
      %v2116 = vpop.f32.mrf.mxu0
      %v2117 = vadd.f32 0.0, %v2116
      %2118 = vmatmul.bf16.gmra.mxu0 %v2039
      %v2119 = vpop.f32.mrf.mxu0
      %v2120 = vadd.f32 0.0, %v2119
      %v2121 = vpop.f32.mrf.mxu0
      %v2122 = vadd.f32 0.0, %v2121
      %2123 = vmatmul.bf16.gmra.mxu0 %v2042
      %v2124 = vpop.f32.mrf.mxu0
      %v2125 = vadd.f32 0.0, %v2124
      %v2126 = vpop.f32.mrf.mxu0
      %v2127 = vadd.f32 0.0, %v2126
      %2128 = vmatmul.bf16.gmra.mxu0 %v2045
      %v2129 = vpop.f32.mrf.mxu0
      %v2130 = vadd.f32 0.0, %v2129
      %v2131 = vpop.f32.mrf.mxu0
      %v2132 = vadd.f32 0.0, %v2131
      %2133 = vmatmul.bf16.gmra.mxu0 %v2048
      %v2134 = vpop.f32.mrf.mxu0
      %v2135 = vadd.f32 0.0, %v2134
      %v2136 = vpop.f32.mrf.mxu0
      %v2137 = vadd.f32 0.0, %v2136
      %2138 = vdwg.mxu0
      %v2139 = vadd.f32 %v1913, %v2060
      %v2140 = vadd.f32 %v1914, %v2062
      %v2141 = vadd.f32 %v1915, %v2065
      %v2142 = vadd.f32 %v1916, %v2067
      %v2143 = vadd.f32 %v1917, %v2070
      %v2144 = vadd.f32 %v1918, %v2072
      %v2145 = vadd.f32 %v1919, %v2075
      %v2146 = vadd.f32 %v1920, %v2077
      %v2147 = vadd.f32 %v1921, %v2080
      %v2148 = vadd.f32 %v1922, %v2082
      %v2149 = vadd.f32 %v1923, %v2085
      %v2150 = vadd.f32 %v1924, %v2087
      %v2151 = vadd.f32 %v1925, %v2090
      %v2152 = vadd.f32 %v1926, %v2092
      %v2153 = vadd.f32 %v1927, %v2095
      %v2154 = vadd.f32 %v1928, %v2097
      %v2155 = vadd.f32 %v1929, %v2100
      %v2156 = vadd.f32 %v1930, %v2102
      %v2157 = vadd.f32 %v1931, %v2105
      %v2158 = vadd.f32 %v1932, %v2107
      %v2159 = vadd.f32 %v1933, %v2110
      %v2160 = vadd.f32 %v1934, %v2112
      %v2161 = vadd.f32 %v1935, %v2115
      %v2162 = vadd.f32 %v1936, %v2117
      %v2163 = vadd.f32 %v1937, %v2120
      %v2164 = vadd.f32 %v1938, %v2122
      %v2165 = vadd.f32 %v1939, %v2125
      %v2166 = vadd.f32 %v1940, %v2127
      %v2167 = vadd.f32 %v1941, %v2130
      %v2168 = vadd.f32 %v1942, %v2132
      %v2169 = vadd.f32 %v1943, %v2135
      %v2170 = vadd.f32 %v1944, %v2137
      %v2171 = vld [vmem:[%s2] sm:$0x1]
      %v2173 = vperm.slane %v2171, 0
      %v2175 = vmul.f32 %v2139, %v2173
      %v2176 = vmul.f32 %v2140, %v2173
      %v2177 = vmul.f32 %v2141, %v2173
      %v2178 = vmul.f32 %v2142, %v2173
      %v2179 = vmul.f32 %v2143, %v2173
      %v2180 = vmul.f32 %v2144, %v2173
      %v2181 = vmul.f32 %v2145, %v2173
      %v2182 = vmul.f32 %v2146, %v2173
      %v2183 = vmul.f32 %v2147, %v2173
      %v2184 = vmul.f32 %v2148, %v2173
      %v2185 = vmul.f32 %v2149, %v2173
      %v2186 = vmul.f32 %v2150, %v2173
      %v2187 = vmul.f32 %v2151, %v2173
      %v2188 = vmul.f32 %v2152, %v2173
      %v2189 = vmul.f32 %v2153, %v2173
      %v2190 = vmul.f32 %v2154, %v2173
      %v2191 = vmul.f32 %v2155, %v2173
      %v2192 = vmul.f32 %v2156, %v2173
      %v2193 = vmul.f32 %v2157, %v2173
      %v2194 = vmul.f32 %v2158, %v2173
      %v2195 = vmul.f32 %v2159, %v2173
      %v2196 = vmul.f32 %v2160, %v2173
      %v2197 = vmul.f32 %v2161, %v2173
      %v2198 = vmul.f32 %v2162, %v2173
      %v2199 = vmul.f32 %v2163, %v2173
      %v2200 = vmul.f32 %v2164, %v2173
      %v2201 = vmul.f32 %v2165, %v2173
      %v2202 = vmul.f32 %v2166, %v2173
      %v2203 = vmul.f32 %v2167, %v2173
      %v2204 = vmul.f32 %v2168, %v2173
      %v2205 = vmul.f32 %v2169, %v2173
      %v2206 = vmul.f32 %v2170, %v2173
      %v2207 = vld [vmem:[%s3] sm:$0x1]
      %v2209 = vperm.slane %v2207, 0
      %v2211 = vadd.f32 %v2175, %v2209
      %v2212 = vadd.f32 %v2176, %v2209
      %v2213 = vadd.f32 %v2177, %v2209
      %v2214 = vadd.f32 %v2178, %v2209
      %v2215 = vadd.f32 %v2179, %v2209
      %v2216 = vadd.f32 %v2180, %v2209
      %v2217 = vadd.f32 %v2181, %v2209
      %v2218 = vadd.f32 %v2182, %v2209
      %v2219 = vadd.f32 %v2183, %v2209
      %v2220 = vadd.f32 %v2184, %v2209
      %v2221 = vadd.f32 %v2185, %v2209
      %v2222 = vadd.f32 %v2186, %v2209
      %v2223 = vadd.f32 %v2187, %v2209
      %v2224 = vadd.f32 %v2188, %v2209
      %v2225 = vadd.f32 %v2189, %v2209
      %v2226 = vadd.f32 %v2190, %v2209
      %v2227 = vadd.f32 %v2191, %v2209
      %v2228 = vadd.f32 %v2192, %v2209
      %v2229 = vadd.f32 %v2193, %v2209
      %v2230 = vadd.f32 %v2194, %v2209
      %v2231 = vadd.f32 %v2195, %v2209
      %v2232 = vadd.f32 %v2196, %v2209
      %v2233 = vadd.f32 %v2197, %v2209
      %v2234 = vadd.f32 %v2198, %v2209
      %v2235 = vadd.f32 %v2199, %v2209
      %v2236 = vadd.f32 %v2200, %v2209
      %v2237 = vadd.f32 %v2201, %v2209
      %v2238 = vadd.f32 %v2202, %v2209
      %v2239 = vadd.f32 %v2203, %v2209
      %v2240 = vadd.f32 %v2204, %v2209
      %v2241 = vadd.f32 %v2205, %v2209
      %v2242 = vadd.f32 %v2206, %v2209
      %v2243 = vmax.f32 %v2211, 0.0
      %v2244 = vmax.f32 %v2212, 0.0
      %v2245 = vmax.f32 %v2213, 0.0
      %v2246 = vmax.f32 %v2214, 0.0
      %v2247 = vmax.f32 %v2215, 0.0
      %v2248 = vmax.f32 %v2216, 0.0
      %v2249 = vmax.f32 %v2217, 0.0
      %v2250 = vmax.f32 %v2218, 0.0
      %v2251 = vmax.f32 %v2219, 0.0
      %v2252 = vmax.f32 %v2220, 0.0
      %v2253 = vmax.f32 %v2221, 0.0
      %v2254 = vmax.f32 %v2222, 0.0
      %v2255 = vmax.f32 %v2223, 0.0
      %v2256 = vmax.f32 %v2224, 0.0
      %v2257 = vmax.f32 %v2225, 0.0
      %v2258 = vmax.f32 %v2226, 0.0
      %v2259 = vmax.f32 %v2227, 0.0
      %v2260 = vmax.f32 %v2228, 0.0
      %v2261 = vmax.f32 %v2229, 0.0
      %v2262 = vmax.f32 %v2230, 0.0
      %v2263 = vmax.f32 %v2231, 0.0
      %v2264 = vmax.f32 %v2232, 0.0
      %v2265 = vmax.f32 %v2233, 0.0
      %v2266 = vmax.f32 %v2234, 0.0
      %v2267 = vmax.f32 %v2235, 0.0
      %v2268 = vmax.f32 %v2236, 0.0
      %v2269 = vmax.f32 %v2237, 0.0
      %v2270 = vmax.f32 %v2238, 0.0
      %v2271 = vmax.f32 %v2239, 0.0
      %v2272 = vmax.f32 %v2240, 0.0
      %v2273 = vmax.f32 %v2241, 0.0
      %v2274 = vmax.f32 %v2242, 0.0
      %2275 = vst [vmem:[%s197] sm:$0xff] %v2243
      %2276 = vst [vmem:[%s197 + $0x8] sm:$0xff] %v2244
      %2277 = vst [vmem:[%s197 + $0x10] sm:$0xff] %v2245
      %2278 = vst [vmem:[%s197 + $0x18] sm:$0xff] %v2246
      %2279 = vst [vmem:[%s197 + $0x20] sm:$0xff] %v2247
      %2280 = vst [vmem:[%s197 + $0x28] sm:$0xff] %v2248
      %2281 = vst [vmem:[%s197 + $0x30] sm:$0xff] %v2249
      %2282 = vst [vmem:[%s197 + $0x38] sm:$0xff] %v2250
      %2283 = vst [vmem:[%s197 + $0x40] sm:$0xff] %v2251
      %2284 = vst [vmem:[%s197 + $0x48] sm:$0xff] %v2252
      %2285 = vst [vmem:[%s197 + $0x50] sm:$0xff] %v2253
      %2286 = vst [vmem:[%s197 + $0x58] sm:$0xff] %v2254
      %2287 = vst [vmem:[%s197 + $0x60] sm:$0xff] %v2255
      %2288 = vst [vmem:[%s197 + $0x68] sm:$0xff] %v2256
      %2289 = vst [vmem:[%s197 + $0x70] sm:$0xff] %v2257
      %2290 = vst [vmem:[%s197 + $0x78] sm:$0xff] %v2258
      %2291 = vst [vmem:[%s197 + $0x80] sm:$0xff] %v2259
      %2292 = vst [vmem:[%s197 + $0x88] sm:$0xff] %v2260
      %2293 = vst [vmem:[%s197 + $0x90] sm:$0xff] %v2261
      %2294 = vst [vmem:[%s197 + $0x98] sm:$0xff] %v2262
      %2295 = vst [vmem:[%s197 + $0xa0] sm:$0xff] %v2263
      %2296 = vst [vmem:[%s197 + $0xa8] sm:$0xff] %v2264
      %2297 = vst [vmem:[%s197 + $0xb0] sm:$0xff] %v2265
      %2298 = vst [vmem:[%s197 + $0xb8] sm:$0xff] %v2266
      %2299 = vst [vmem:[%s197 + $0xc0] sm:$0xff] %v2267
      %2300 = vst [vmem:[%s197 + $0xc8] sm:$0xff] %v2268
      %2301 = vst [vmem:[%s197 + $0xd0] sm:$0xff] %v2269
      %2302 = vst [vmem:[%s197 + $0xd8] sm:$0xff] %v2270
      %2303 = vst [vmem:[%s197 + $0xe0] sm:$0xff] %v2271
      %2304 = vst [vmem:[%s197 + $0xe8] sm:$0xff] %v2272
      %2305 = vst [vmem:[%s197 + $0xf0] sm:$0xff] %v2273
      %2306 = vst [vmem:[%s197 + $0xf8] sm:$0xff] %v2274
      %p2307 = scmp.lt.s32.totalorder %s15, 1
      %s2308 = scalar_select %p2307, %s15, 1
      %s2309 = smul.addr %s2308, 32
      %s2310 = smul.addr %s2309, 8
      %s2311 = scalar_lea.vmem %s4, %s2310
      // Predicated region
      $region37: #{basic_block_forward.5} parent=35 // pred_check
        %p2312 = pneg %p122
      $region38: #{basic_block_forward.5} parent=35 // pred_check_branch
        %2314 = sbr.rel (%p2312) target = $region40
      $region39: #{basic_block_forward.5} parent=35 // pred_region
        _
      $region40: #{basic_block_forward.5} parent=35 // pred_fallthru
        _
    $region36: #{basic_block_forward.5} parent=5 // pred_fallthru
      _
    %p2315 = scmp.le.s32.totalorder 2, %s10
    // Predicated region
    $region41: #{basic_block_forward.5} parent=5 // pred_check
      %p2316 = pneg %p2315
    $region42: #{basic_block_forward.5} parent=5 // pred_check_branch
      %2318 = sbr.rel (%p2316) target = $region44
    $region43: #{basic_block_forward.5} parent=5 // pred_region
      %s2319 = ssub.s32 %s10, 2
      // Predicated region
      $region45: #{basic_block_forward.5} parent=43 // pred_check
        %p2320 = pneg %p128
      $region46: #{basic_block_forward.5} parent=43 // pred_check_branch
        %2322 = sbr.rel (%p2320) target = $region48
      $region47: #{basic_block_forward.5} parent=43 // pred_region
        %p2323 = scmp.lt.s32.totalorder %s16, 1
        %s2324 = scalar_select %p2323, %s16, 1
        %s2325 = smul.addr %s2324, 32
        %s2326 = smul.addr %s2325, 8
        %s2327 = scalar_lea.vmem %s4, %s2326
      $region48: #{basic_block_forward.5} parent=43 // pred_fallthru
        _
    $region44: #{basic_block_forward.5} parent=5 // pred_fallthru
      _
  $region6: #{basic_block_forward.5} parent=0 // loop_footer
    %s14 = sadd.s32 1, %s10
  $region7: #{basic_block_forward.5} parent=0 // loop_footer_branch
    %9 = sbr.rel target = $region3
  $region8: #{basic_block_forward.5} parent=0 // loop_exit
    _

// kernel: basic_block_forward.6
$region0: #{basic_block_forward.6}
  #allocation0 [shape = 'u32[]', space=smem, size = 0x4, offset = 0x4, fixed_abs, tag = 'smem constant byte address 0x4 - core index']
  #allocation1 [shape = 'u32[72,128]{1,0:T(1,128)}', space=vmem, size = 0x9000, scoped, tag = 'internal scratch']
  %s0 = inlined_call_operand.vmem [shape: f32[2,4,9,9,128], index: 0, kind: input, shape index: {}]
  %s1 = inlined_call_operand.vmem [shape: bf16[9,128,128], index: 1, kind: input, shape index: {}]
  %s2 = inlined_call_operand.vmem [shape: f32[1,128], index: 2, kind: input, shape index: {}]
  %s3 = inlined_call_operand.vmem [shape: f32[1,128], index: 3, kind: input, shape index: {}]
  %s4 = inlined_call_operand.vmem [shape: f32[2,64,128], index: 4, kind: output, shape index: {}]
  %s5 = sld [smem:[#allocation0]]
  $region49: #{basic_block_forward.6} parent=0
    _
  %s7 = ssub.s32 1, %s5
  %s8 = scalar_select 0, %s7, %s5
  loop: start=0, step=1, limit=4
  $region2: #{basic_block_forward.6} parent=0 // loop_pre_header
    _
  $region3: #{basic_block_forward.6} parent=0 // loop_header
    %s10 = sphi 0, %s14
    %p11 = scmp.ge.s32.totalorder %s10, 4
    %s20 = sphi 0, %s22
    %s23 = sphi 0, %s20
    %s24 = sphi 0, %s23
    %s40 = sphi 0, %s24
    %s44 = sphi 0, %s44
    %s46 = sphi 0, %s44
    %s47 = sphi 0, %s46
    %s61 = sphi 0, %s47
    %s65 = sphi 0, %s65
    %s67 = sphi 0, %s65
    %s68 = sphi 0, %s67
    %s82 = sphi 0, %s68
    %s86 = sphi 0, %s86
    %s88 = sphi 0, %s86
    %s89 = sphi 0, %s88
    %s103 = sphi 0, %s89
    %s109 = sphi 0, %s111
    %s112 = sphi 0, %s109
    %s113 = sphi 0, %s112
    %s129 = sphi 0, %s113
  $region4: #{basic_block_forward.6} parent=0 // loop_header_branch
    %13 = sbr.rel (%p11) target = $region8
  $region5: #{basic_block_forward.6} parent=0 // loop_body
    %s15 = ssub.s32 %s10, 1
    %s16 = ssub.s32 %s10, 2
    %s17 = sadd.s32 %s10, 1
    %s18 = ssub.s32 %s10, %s17
    %p19 = scmp.eq.s32.totalorder %s18, 0
    %s21 = sadd.s32 %s20, 1
    %s22 = scalar_select %p19, %s20, %s21
    %p25 = pneg %p19
    %p26 = scmp.eq.s32.totalorder %s10, 1
    %p27 = por %p25, %p26
    %p28 = scmp.ne.s32.totalorder %s20, %s23
    %p29 = scmp.eq.s32.totalorder %s10, 0
    %p30 = por %p28, %p29
    %p31 = scmp.ne.s32.totalorder %s20, %s23
    %p32 = scmp.eq.s32.totalorder %s15, 1
    %p33 = por %p31, %p32
    %p34 = scmp.ne.s32.totalorder %s23, %s24
    %p35 = scmp.eq.s32.totalorder %s15, 0
    %p36 = por %p34, %p35
    %p37 = scmp.ne.s32.totalorder %s23, %s24
    %p38 = scmp.eq.s32.totalorder %s16, 1
    %p39 = por %p37, %p38
    %p41 = scmp.ne.s32.totalorder %s24, %s40
    %p42 = scmp.eq.s32.totalorder %s16, 0
    %p43 = por %p41, %p42
    %s45 = sadd.s32 %s44, 1
    %p48 = scmp.eq.s32.totalorder %s10, 1
    %p49 = scmp.ne.s32.totalorder %s44, %s46
    %p50 = scmp.eq.s32.totalorder %s10, 0
    %p51 = por %p49, %p50
    %p52 = scmp.ne.s32.totalorder %s44, %s46
    %p53 = scmp.eq.s32.totalorder %s15, 1
    %p54 = por %p52, %p53
    %p55 = scmp.ne.s32.totalorder %s46, %s47
    %p56 = scmp.eq.s32.totalorder %s15, 0
    %p57 = por %p55, %p56
    %p58 = scmp.ne.s32.totalorder %s46, %s47
    %p59 = scmp.eq.s32.totalorder %s16, 1
    %p60 = por %p58, %p59
    %p62 = scmp.ne.s32.totalorder %s47, %s61
    %p63 = scmp.eq.s32.totalorder %s16, 0
    %p64 = por %p62, %p63
    %s66 = sadd.s32 %s65, 1
    %p69 = scmp.eq.s32.totalorder %s10, 1
    %p70 = scmp.ne.s32.totalorder %s65, %s67
    %p71 = scmp.eq.s32.totalorder %s10, 0
    %p72 = por %p70, %p71
    %p73 = scmp.ne.s32.totalorder %s65, %s67
    %p74 = scmp.eq.s32.totalorder %s15, 1
    %p75 = por %p73, %p74
    %p76 = scmp.ne.s32.totalorder %s67, %s68
    %p77 = scmp.eq.s32.totalorder %s15, 0
    %p78 = por %p76, %p77
    %p79 = scmp.ne.s32.totalorder %s67, %s68
    %p80 = scmp.eq.s32.totalorder %s16, 1
    %p81 = por %p79, %p80
    %p83 = scmp.ne.s32.totalorder %s68, %s82
    %p84 = scmp.eq.s32.totalorder %s16, 0
    %p85 = por %p83, %p84
    %s87 = sadd.s32 %s86, 1
    %p90 = scmp.eq.s32.totalorder %s10, 1
    %p91 = scmp.ne.s32.totalorder %s86, %s88
    %p92 = scmp.eq.s32.totalorder %s10, 0
    %p93 = por %p91, %p92
    %p94 = scmp.ne.s32.totalorder %s86, %s88
    %p95 = scmp.eq.s32.totalorder %s15, 1
    %p96 = por %p94, %p95
    %p97 = scmp.ne.s32.totalorder %s88, %s89
    %p98 = scmp.eq.s32.totalorder %s15, 0
    %p99 = por %p97, %p98
    %p100 = scmp.ne.s32.totalorder %s88, %s89
    %p101 = scmp.eq.s32.totalorder %s16, 1
    %p102 = por %p100, %p101
    %p104 = scmp.ne.s32.totalorder %s89, %s103
    %p105 = scmp.eq.s32.totalorder %s16, 0
    %p106 = por %p104, %p105
    %s107 = ssub.s32 %s10, %s17
    %p108 = scmp.eq.s32.totalorder %s107, 0
    %s110 = sadd.s32 %s109, 1
    %s111 = scalar_select %p108, %s109, %s110
    %p114 = pneg %p108
    %p115 = scmp.eq.s32.totalorder %s10, 1
    %p116 = por %p114, %p115
    %p117 = scmp.ne.s32.totalorder %s109, %s112
    %p118 = scmp.eq.s32.totalorder %s10, 0
    %p119 = por %p117, %p118
    %p120 = scmp.ne.s32.totalorder %s109, %s112
    %p121 = scmp.eq.s32.totalorder %s15, 1
    %p122 = por %p120, %p121
    %p123 = scmp.ne.s32.totalorder %s112, %s113
    %p124 = scmp.eq.s32.totalorder %s15, 0
    %p125 = por %p123, %p124
    %p126 = scmp.ne.s32.totalorder %s112, %s113
    %p127 = scmp.eq.s32.totalorder %s16, 1
    %p128 = por %p126, %p127
    %p130 = scmp.ne.s32.totalorder %s113, %s129
    %p131 = scmp.eq.s32.totalorder %s16, 0
    %p132 = por %p130, %p131
    %p133 = scmp.le.s32.totalorder 1, %s10
    %p134 = scmp.lt.s32.totalorder %s10, 3
    %p135 = pnand %p133, %p134
    %p136 = pneg %p135
    // Predicated region
    $region9: #{basic_block_forward.6} parent=5 // pred_check
      _
    $region10: #{basic_block_forward.6} parent=5 // pred_check_branch
      %138 = sbr.rel (%p135) target = $region12
    $region11: #{basic_block_forward.6} parent=5 // pred_region
      %s139 = ssub.s32 %s10, 1
      // Predicated region
      $region13: #{basic_block_forward.6} parent=11 // pred_check
        %p140 = pneg %p57
      $region14: #{basic_block_forward.6} parent=11 // pred_check_branch
        %142 = sbr.rel (%p140) target = $region16
      $region15: #{basic_block_forward.6} parent=11 // pred_region
        _
      $region16: #{basic_block_forward.6} parent=11 // pred_fallthru
        _
      // Predicated region
      $region17: #{basic_block_forward.6} parent=11 // pred_check
        %p143 = pneg %p78
      $region18: #{basic_block_forward.6} parent=11 // pred_check_branch
        %145 = sbr.rel (%p143) target = $region20
      $region19: #{basic_block_forward.6} parent=11 // pred_region
        _
      $region20: #{basic_block_forward.6} parent=11 // pred_fallthru
        _
      // Predicated region
      $region21: #{basic_block_forward.6} parent=11 // pred_check
        %p146 = pneg %p99
      $region22: #{basic_block_forward.6} parent=11 // pred_check_branch
        %148 = sbr.rel (%p146) target = $region24
      $region23: #{basic_block_forward.6} parent=11 // pred_region
        _
      $region24: #{basic_block_forward.6} parent=11 // pred_fallthru
        _
    $region12: #{basic_block_forward.6} parent=5 // pred_fallthru
      _
    %p149 = scmp.lt.s32.totalorder %s10, 2
    // Predicated region
    $region25: #{basic_block_forward.6} parent=5 // pred_check
      %p150 = pneg %p149
    $region26: #{basic_block_forward.6} parent=5 // pred_check_branch
      %152 = sbr.rel (%p150) target = $region28
    $region27: #{basic_block_forward.6} parent=5 // pred_region
      // Predicated region
      $region29: #{basic_block_forward.6} parent=27 // pred_check
        %p153 = pneg %p30
      $region30: #{basic_block_forward.6} parent=27 // pred_check_branch
        %155 = sbr.rel (%p153) target = $region32
      $region31: #{basic_block_forward.6} parent=27 // pred_region
        %p156 = scmp.lt.s32.totalorder %s10, 1
        %s157 = scalar_select %p156, %s10, 1
        %s158 = smul.addr %s157, 72
        %s159 = smul.addr %s158, 8
        %s160 = scalar_lea.vmem %s0, %s159
      $region32: #{basic_block_forward.6} parent=27 // pred_fallthru
        _
    $region28: #{basic_block_forward.6} parent=5 // pred_fallthru
      _
    %p161 = scmp.le.s32.totalorder 1, %s10
    %p162 = scmp.lt.s32.totalorder %s10, 3
    %p163 = pnand %p161, %p162
    %p164 = pneg %p163
    // Predicated region
    $region33: #{basic_block_forward.6} parent=5 // pred_check
      _
    $region34: #{basic_block_forward.6} parent=5 // pred_check_branch
      %166 = sbr.rel (%p163) target = $region36
    $region35: #{basic_block_forward.6} parent=5 // pred_region
      %s167 = ssub.s32 %s10, 1
      %p168 = scmp.lt.s32.totalorder %s15, 1
      %s169 = scalar_select %p168, %s15, 1
      %s170 = smul.addr %s169, 72
      %s171 = smul.addr %s170, 8
      %s172 = scalar_lea.vmem %s0, %s171
      %p173 = pneg %p36
      %p174 = pneg %p33
      %p175 = pneg %p57
      %p176 = pneg %p54
      %p177 = pneg %p78
      %p178 = pneg %p75
      %p179 = pneg %p99
      %p180 = pneg %p96
      %p181 = pneg %p125
      %p182 = pneg %p122
      %p183 = scmp.lt.s32.totalorder %s15, 1
      %s184 = scalar_select %p183, %s15, 1
      %s185 = smul.addr %s184, 8
      %s186 = smul.addr %s185, 8
      %s187 = scalar_lea.vmem %s4, %s186
      %p188 = scmp.lt.s32.totalorder %s15, 1
      %s189 = scalar_select %p188, %s15, 1
      %s190 = smul.addr %s189, 72
      %s191 = smul.addr %s190, 8
      %s192 = scalar_lea.vmem %s0, %s191
      %p193 = scmp.lt.s32.totalorder %s15, 1
      %s194 = scalar_select %p193, %s15, 1
      %s195 = smul.addr %s194, 8
      %s196 = smul.addr %s195, 8
      %s197 = scalar_lea.vmem %s4, %s196
      %v198 = vld [vmem:[%s192] sm:$0xff]
      %v199 = vld [vmem:[%s192 + $0x10] sm:$0xff]
      %v200 = vld [vmem:[%s192 + $0x20] sm:$0xff]
      %v201 = vld [vmem:[%s192 + $0x30] sm:$0xff]
      %v202 = vld [vmem:[%s192 + $0x40] sm:$0xff]
      %v203 = vld [vmem:[%s192 + $0x50] sm:$0xff]
      %v204 = vld [vmem:[%s192 + $0x60] sm:$0xff]
      %v205 = vld [vmem:[%s192 + $0x70] sm:$0xff]
      %v206 = vpack.c.bf16 %v199, %v198
      %v207 = vpack.c.bf16 %v201, %v200
      %v208 = vpack.c.bf16 %v203, %v202
      %v209 = vpack.c.bf16 %v205, %v204
      %v210 = vld [vmem:[%s1] sm:$0xf]
      %v211 = vld [vmem:[%s1 + $0x4] sm:$0xf]
      %v212 = vld [vmem:[%s1 + $0x8] sm:$0xf]
      %v213 = vld [vmem:[%s1 + $0xc] sm:$0xf]
      %v214 = vld [vmem:[%s1 + $0x10] sm:$0xf]
      %v215 = vld [vmem:[%s1 + $0x14] sm:$0xf]
      %v216 = vld [vmem:[%s1 + $0x18] sm:$0xf]
      %v217 = vld [vmem:[%s1 + $0x1c] sm:$0xf]
      %v218 = vld [vmem:[%s1 + $0x20] sm:$0xf]
      %v219 = vld [vmem:[%s1 + $0x24] sm:$0xf]
      %v220 = vld [vmem:[%s1 + $0x28] sm:$0xf]
      %v221 = vld [vmem:[%s1 + $0x2c] sm:$0xf]
      %v222 = vld [vmem:[%s1 + $0x30] sm:$0xf]
      %v223 = vld [vmem:[%s1 + $0x34] sm:$0xf]
      %v224 = vld [vmem:[%s1 + $0x38] sm:$0xf]
      %v225 = vld [vmem:[%s1 + $0x3c] sm:$0xf]
      %s226 = scalar_lea.vmem %s192, 144
      %v227 = vld [vmem:[%s226] sm:$0xff]
      %v228 = vld [vmem:[%s226 + $0x10] sm:$0xff]
      %v229 = vld [vmem:[%s226 + $0x20] sm:$0xff]
      %v230 = vld [vmem:[%s226 + $0x30] sm:$0xff]
      %v231 = vld [vmem:[%s226 + $0x40] sm:$0xff]
      %v232 = vld [vmem:[%s226 + $0x50] sm:$0xff]
      %v233 = vld [vmem:[%s226 + $0x60] sm:$0xff]
      %v234 = vld [vmem:[%s226 + $0x70] sm:$0xff]
      %v235 = vpack.c.bf16 %v228, %v227
      %v236 = vpack.c.bf16 %v230, %v229
      %v237 = vpack.c.bf16 %v232, %v231
      %v238 = vpack.c.bf16 %v234, %v233
      %s239 = scalar_lea.vmem %s1, 64
      %v240 = vld [vmem:[%s239] sm:$0xf]
      %v241 = vld [vmem:[%s239 + $0x4] sm:$0xf]
      %v242 = vld [vmem:[%s239 + $0x8] sm:$0xf]
      %v243 = vld [vmem:[%s239 + $0xc] sm:$0xf]
      %v244 = vld [vmem:[%s239 + $0x10] sm:$0xf]
      %v245 = vld [vmem:[%s239 + $0x14] sm:$0xf]
      %v246 = vld [vmem:[%s239 + $0x18] sm:$0xf]
      %v247 = vld [vmem:[%s239 + $0x1c] sm:$0xf]
      %v248 = vld [vmem:[%s239 + $0x20] sm:$0xf]
      %v249 = vld [vmem:[%s239 + $0x24] sm:$0xf]
      %v250 = vld [vmem:[%s239 + $0x28] sm:$0xf]
      %v251 = vld [vmem:[%s239 + $0x2c] sm:$0xf]
      %v252 = vld [vmem:[%s239 + $0x30] sm:$0xf]
      %v253 = vld [vmem:[%s239 + $0x34] sm:$0xf]
      %v254 = vld [vmem:[%s239 + $0x38] sm:$0xf]
      %v255 = vld [vmem:[%s239 + $0x3c] sm:$0xf]
      %v272 = vunpack.c.l.b16 %v240
      %v273 = vunpack.c.l.b16 %v241
      %v274 = vunpack.c.l.b16 %v242
      %v275 = vunpack.c.l.b16 %v243
      %v276 = vunpack.c.l.b16 %v244
      %v277 = vunpack.c.l.b16 %v245
      %v278 = vunpack.c.l.b16 %v246
      %v279 = vunpack.c.l.b16 %v247
      %v280 = vunpack.c.l.b16 %v248
      %v281 = vunpack.c.l.b16 %v249
      %v282 = vunpack.c.l.b16 %v250
      %v283 = vunpack.c.l.b16 %v251
      %v284 = vunpack.c.l.b16 %v252
      %v285 = vunpack.c.l.b16 %v253
      %v286 = vunpack.c.l.b16 %v254
      %v287 = vunpack.c.l.b16 %v255
      %v288 = vpack.c.b16 %v273, %v272
      %v289 = vpack.c.b16 %v275, %v274
      %v290 = vpack.c.b16 %v277, %v276
      %v291 = vpack.c.b16 %v279, %v278
      %v292 = vpack.c.b16 %v281, %v280
      %v293 = vpack.c.b16 %v283, %v282
      %v294 = vpack.c.b16 %v285, %v284
      %v295 = vpack.c.b16 %v287, %v286
      %304 = vmatpush.bf16.msra.mxu0 %v295
      %305 = vmatpush.bf16.msra.mxu0 %v294
      %306 = vmatpush.bf16.msra.mxu0 %v293
      %307 = vmatpush.bf16.msra.mxu0 %v292
      %308 = vmatpush.bf16.msra.mxu0 %v291
      %309 = vmatpush.bf16.msra.mxu0 %v290
      %310 = vmatpush.bf16.msra.mxu0 %v289
      %311 = vmatpush.bf16.msra.mxu0 %v288
      %312 = vmatmul.bf16.gmra.mxu0 %v235
      %v313 = vpop.f32.mrf.mxu0
      %v314 = vadd.f32 0.0, %v313
      %v315 = vpop.f32.mrf.mxu0
      %v316 = vadd.f32 0.0, %v315
      %317 = vmatmul.bf16.gmra.mxu0 %v236
      %v318 = vpop.f32.mrf.mxu0
      %v319 = vadd.f32 0.0, %v318
      %v320 = vpop.f32.mrf.mxu0
      %v321 = vadd.f32 0.0, %v320
      %322 = vmatmul.bf16.gmra.mxu0 %v237
      %v323 = vpop.f32.mrf.mxu0
      %v324 = vadd.f32 0.0, %v323
      %v325 = vpop.f32.mrf.mxu0
      %v326 = vadd.f32 0.0, %v325
      %327 = vmatmul.bf16.gmra.mxu0 %v238
      %v328 = vpop.f32.mrf.mxu0
      %v329 = vadd.f32 0.0, %v328
      %v330 = vpop.f32.mrf.mxu0
      %v331 = vadd.f32 0.0, %v330
      %332 = vdwg.mxu0
      %v349 = vunpack.c.l.b16 %v210
      %v350 = vunpack.c.l.b16 %v211
      %v351 = vunpack.c.l.b16 %v212
      %v352 = vunpack.c.l.b16 %v213
      %v353 = vunpack.c.l.b16 %v214
      %v354 = vunpack.c.l.b16 %v215
      %v355 = vunpack.c.l.b16 %v216
      %v356 = vunpack.c.l.b16 %v217
      %v357 = vunpack.c.l.b16 %v218
      %v358 = vunpack.c.l.b16 %v219
      %v359 = vunpack.c.l.b16 %v220
      %v360 = vunpack.c.l.b16 %v221
      %v361 = vunpack.c.l.b16 %v222
      %v362 = vunpack.c.l.b16 %v223
      %v363 = vunpack.c.l.b16 %v224
      %v364 = vunpack.c.l.b16 %v225
      %v365 = vpack.c.b16 %v350, %v349
      %v366 = vpack.c.b16 %v352, %v351
      %v367 = vpack.c.b16 %v354, %v353
      %v368 = vpack.c.b16 %v356, %v355
      %v369 = vpack.c.b16 %v358, %v357
      %v370 = vpack.c.b16 %v360, %v359
      %v371 = vpack.c.b16 %v362, %v361
      %v372 = vpack.c.b16 %v364, %v363
      %381 = vmatpush.bf16.msra.mxu0 %v372
      %382 = vmatpush.bf16.msra.mxu0 %v371
      %383 = vmatpush.bf16.msra.mxu0 %v370
      %384 = vmatpush.bf16.msra.mxu0 %v369
      %385 = vmatpush.bf16.msra.mxu0 %v368
      %386 = vmatpush.bf16.msra.mxu0 %v367
      %387 = vmatpush.bf16.msra.mxu0 %v366
      %388 = vmatpush.bf16.msra.mxu0 %v365
      %389 = vmatmul.bf16.gmra.mxu0 %v206
      %v390 = vpop.f32.mrf.mxu0
      %v391 = vadd.f32 %v314, %v390
      %v392 = vpop.f32.mrf.mxu0
      %v393 = vadd.f32 %v316, %v392
      %394 = vmatmul.bf16.gmra.mxu0 %v207
      %v395 = vpop.f32.mrf.mxu0
      %v396 = vadd.f32 %v319, %v395
      %v397 = vpop.f32.mrf.mxu0
      %v398 = vadd.f32 %v321, %v397
      %399 = vmatmul.bf16.gmra.mxu0 %v208
      %v400 = vpop.f32.mrf.mxu0
      %v401 = vadd.f32 %v324, %v400
      %v402 = vpop.f32.mrf.mxu0
      %v403 = vadd.f32 %v326, %v402
      %404 = vmatmul.bf16.gmra.mxu0 %v209
      %v405 = vpop.f32.mrf.mxu0
      %v406 = vadd.f32 %v329, %v405
      %v407 = vpop.f32.mrf.mxu0
      %v408 = vadd.f32 %v331, %v407
      %409 = vdwg.mxu0
      %v410 = vld [vmem:[%s192 + $0x1] sm:$0xff]
      %v411 = vld [vmem:[%s192 + $0x11] sm:$0xff]
      %v412 = vld [vmem:[%s192 + $0x21] sm:$0xff]
      %v413 = vld [vmem:[%s192 + $0x31] sm:$0xff]
      %v414 = vld [vmem:[%s192 + $0x41] sm:$0xff]
      %v415 = vld [vmem:[%s192 + $0x51] sm:$0xff]
      %v416 = vld [vmem:[%s192 + $0x61] sm:$0xff]
      %v417 = vld [vmem:[%s192 + $0x71] sm:$0xff]
      %v418 = vpack.c.bf16 %v411, %v410
      %v419 = vpack.c.bf16 %v413, %v412
      %v420 = vpack.c.bf16 %v415, %v414
      %v421 = vpack.c.bf16 %v417, %v416
      %s422 = scalar_lea.vmem %s1, 128
      %v423 = vld [vmem:[%s422] sm:$0xf]
      %v424 = vld [vmem:[%s422 + $0x4] sm:$0xf]
      %v425 = vld [vmem:[%s422 + $0x8] sm:$0xf]
      %v426 = vld [vmem:[%s422 + $0xc] sm:$0xf]
      %v427 = vld [vmem:[%s422 + $0x10] sm:$0xf]
      %v428 = vld [vmem:[%s422 + $0x14] sm:$0xf]
      %v429 = vld [vmem:[%s422 + $0x18] sm:$0xf]
      %v430 = vld [vmem:[%s422 + $0x1c] sm:$0xf]
      %v431 = vld [vmem:[%s422 + $0x20] sm:$0xf]
      %v432 = vld [vmem:[%s422 + $0x24] sm:$0xf]
      %v433 = vld [vmem:[%s422 + $0x28] sm:$0xf]
      %v434 = vld [vmem:[%s422 + $0x2c] sm:$0xf]
      %v435 = vld [vmem:[%s422 + $0x30] sm:$0xf]
      %v436 = vld [vmem:[%s422 + $0x34] sm:$0xf]
      %v437 = vld [vmem:[%s422 + $0x38] sm:$0xf]
      %v438 = vld [vmem:[%s422 + $0x3c] sm:$0xf]
      %v455 = vunpack.c.l.b16 %v423
      %v456 = vunpack.c.l.b16 %v424
      %v457 = vunpack.c.l.b16 %v425
      %v458 = vunpack.c.l.b16 %v426
      %v459 = vunpack.c.l.b16 %v427
      %v460 = vunpack.c.l.b16 %v428
      %v461 = vunpack.c.l.b16 %v429
      %v462 = vunpack.c.l.b16 %v430
      %v463 = vunpack.c.l.b16 %v431
      %v464 = vunpack.c.l.b16 %v432
      %v465 = vunpack.c.l.b16 %v433
      %v466 = vunpack.c.l.b16 %v434
      %v467 = vunpack.c.l.b16 %v435
      %v468 = vunpack.c.l.b16 %v436
      %v469 = vunpack.c.l.b16 %v437
      %v470 = vunpack.c.l.b16 %v438
      %v471 = vpack.c.b16 %v456, %v455
      %v472 = vpack.c.b16 %v458, %v457
      %v473 = vpack.c.b16 %v460, %v459
      %v474 = vpack.c.b16 %v462, %v461
      %v475 = vpack.c.b16 %v464, %v463
      %v476 = vpack.c.b16 %v466, %v465
      %v477 = vpack.c.b16 %v468, %v467
      %v478 = vpack.c.b16 %v470, %v469
      %487 = vmatpush.bf16.msra.mxu0 %v478
      %488 = vmatpush.bf16.msra.mxu0 %v477
      %489 = vmatpush.bf16.msra.mxu0 %v476
      %490 = vmatpush.bf16.msra.mxu0 %v475
      %491 = vmatpush.bf16.msra.mxu0 %v474
      %492 = vmatpush.bf16.msra.mxu0 %v473
      %493 = vmatpush.bf16.msra.mxu0 %v472
      %494 = vmatpush.bf16.msra.mxu0 %v471
      %495 = vmatmul.bf16.gmra.mxu0 %v418
      %v496 = vpop.f32.mrf.mxu0
      %v497 = vadd.f32 0.0, %v496
      %v498 = vpop.f32.mrf.mxu0
      %v499 = vadd.f32 0.0, %v498
      %500 = vmatmul.bf16.gmra.mxu0 %v419
      %v501 = vpop.f32.mrf.mxu0
      %v502 = vadd.f32 0.0, %v501
      %v503 = vpop.f32.mrf.mxu0
      %v504 = vadd.f32 0.0, %v503
      %505 = vmatmul.bf16.gmra.mxu0 %v420
      %v506 = vpop.f32.mrf.mxu0
      %v507 = vadd.f32 0.0, %v506
      %v508 = vpop.f32.mrf.mxu0
      %v509 = vadd.f32 0.0, %v508
      %510 = vmatmul.bf16.gmra.mxu0 %v421
      %v511 = vpop.f32.mrf.mxu0
      %v512 = vadd.f32 0.0, %v511
      %v513 = vpop.f32.mrf.mxu0
      %v514 = vadd.f32 0.0, %v513
      %515 = vdwg.mxu0
      %v516 = vadd.f32 %v391, %v497
      %v517 = vadd.f32 %v393, %v499
      %v518 = vadd.f32 %v396, %v502
      %v519 = vadd.f32 %v398, %v504
      %v520 = vadd.f32 %v401, %v507
      %v521 = vadd.f32 %v403, %v509
      %v522 = vadd.f32 %v406, %v512
      %v523 = vadd.f32 %v408, %v514
      %s524 = scalar_lea.vmem %s192, 288
      %v525 = vld [vmem:[%s524] sm:$0xff]
      %v526 = vld [vmem:[%s524 + $0x10] sm:$0xff]
      %v527 = vld [vmem:[%s524 + $0x20] sm:$0xff]
      %v528 = vld [vmem:[%s524 + $0x30] sm:$0xff]
      %v529 = vld [vmem:[%s524 + $0x40] sm:$0xff]
      %v530 = vld [vmem:[%s524 + $0x50] sm:$0xff]
      %v531 = vld [vmem:[%s524 + $0x60] sm:$0xff]
      %v532 = vld [vmem:[%s524 + $0x70] sm:$0xff]
      %v533 = vpack.c.bf16 %v526, %v525
      %v534 = vpack.c.bf16 %v528, %v527
      %v535 = vpack.c.bf16 %v530, %v529
      %v536 = vpack.c.bf16 %v532, %v531
      %s537 = scalar_lea.vmem %s1, 192
      %v538 = vld [vmem:[%s537] sm:$0xf]
      %v539 = vld [vmem:[%s537 + $0x4] sm:$0xf]
      %v540 = vld [vmem:[%s537 + $0x8] sm:$0xf]
      %v541 = vld [vmem:[%s537 + $0xc] sm:$0xf]
      %v542 = vld [vmem:[%s537 + $0x10] sm:$0xf]
      %v543 = vld [vmem:[%s537 + $0x14] sm:$0xf]
      %v544 = vld [vmem:[%s537 + $0x18] sm:$0xf]
      %v545 = vld [vmem:[%s537 + $0x1c] sm:$0xf]
      %v546 = vld [vmem:[%s537 + $0x20] sm:$0xf]
      %v547 = vld [vmem:[%s537 + $0x24] sm:$0xf]
      %v548 = vld [vmem:[%s537 + $0x28] sm:$0xf]
      %v549 = vld [vmem:[%s537 + $0x2c] sm:$0xf]
      %v550 = vld [vmem:[%s537 + $0x30] sm:$0xf]
      %v551 = vld [vmem:[%s537 + $0x34] sm:$0xf]
      %v552 = vld [vmem:[%s537 + $0x38] sm:$0xf]
      %v553 = vld [vmem:[%s537 + $0x3c] sm:$0xf]
      %v570 = vunpack.c.l.b16 %v538
      %v571 = vunpack.c.l.b16 %v539
      %v572 = vunpack.c.l.b16 %v540
      %v573 = vunpack.c.l.b16 %v541
      %v574 = vunpack.c.l.b16 %v542
      %v575 = vunpack.c.l.b16 %v543
      %v576 = vunpack.c.l.b16 %v544
      %v577 = vunpack.c.l.b16 %v545
      %v578 = vunpack.c.l.b16 %v546
      %v579 = vunpack.c.l.b16 %v547
      %v580 = vunpack.c.l.b16 %v548
      %v581 = vunpack.c.l.b16 %v549
      %v582 = vunpack.c.l.b16 %v550
      %v583 = vunpack.c.l.b16 %v551
      %v584 = vunpack.c.l.b16 %v552
      %v585 = vunpack.c.l.b16 %v553
      %v586 = vpack.c.b16 %v571, %v570
      %v587 = vpack.c.b16 %v573, %v572
      %v588 = vpack.c.b16 %v575, %v574
      %v589 = vpack.c.b16 %v577, %v576
      %v590 = vpack.c.b16 %v579, %v578
      %v591 = vpack.c.b16 %v581, %v580
      %v592 = vpack.c.b16 %v583, %v582
      %v593 = vpack.c.b16 %v585, %v584
      %602 = vmatpush.bf16.msra.mxu0 %v593
      %603 = vmatpush.bf16.msra.mxu0 %v592
      %604 = vmatpush.bf16.msra.mxu0 %v591
      %605 = vmatpush.bf16.msra.mxu0 %v590
      %606 = vmatpush.bf16.msra.mxu0 %v589
      %607 = vmatpush.bf16.msra.mxu0 %v588
      %608 = vmatpush.bf16.msra.mxu0 %v587
      %609 = vmatpush.bf16.msra.mxu0 %v586
      %610 = vmatmul.bf16.gmra.mxu0 %v533
      %v611 = vpop.f32.mrf.mxu0
      %v612 = vadd.f32 0.0, %v611
      %v613 = vpop.f32.mrf.mxu0
      %v614 = vadd.f32 0.0, %v613
      %615 = vmatmul.bf16.gmra.mxu0 %v534
      %v616 = vpop.f32.mrf.mxu0
      %v617 = vadd.f32 0.0, %v616
      %v618 = vpop.f32.mrf.mxu0
      %v619 = vadd.f32 0.0, %v618
      %620 = vmatmul.bf16.gmra.mxu0 %v535
      %v621 = vpop.f32.mrf.mxu0
      %v622 = vadd.f32 0.0, %v621
      %v623 = vpop.f32.mrf.mxu0
      %v624 = vadd.f32 0.0, %v623
      %625 = vmatmul.bf16.gmra.mxu0 %v536
      %v626 = vpop.f32.mrf.mxu0
      %v627 = vadd.f32 0.0, %v626
      %v628 = vpop.f32.mrf.mxu0
      %v629 = vadd.f32 0.0, %v628
      %630 = vdwg.mxu0
      %v631 = vadd.f32 %v516, %v612
      %v632 = vadd.f32 %v517, %v614
      %v633 = vadd.f32 %v518, %v617
      %v634 = vadd.f32 %v519, %v619
      %v635 = vadd.f32 %v520, %v622
      %v636 = vadd.f32 %v521, %v624
      %v637 = vadd.f32 %v522, %v627
      %v638 = vadd.f32 %v523, %v629
      %s639 = scalar_lea.vmem %s192, 432
      %v640 = vld [vmem:[%s639] sm:$0xff]
      %v641 = vld [vmem:[%s639 + $0x10] sm:$0xff]
      %v642 = vld [vmem:[%s639 + $0x20] sm:$0xff]
      %v643 = vld [vmem:[%s639 + $0x30] sm:$0xff]
      %v644 = vld [vmem:[%s639 + $0x40] sm:$0xff]
      %v645 = vld [vmem:[%s639 + $0x50] sm:$0xff]
      %v646 = vld [vmem:[%s639 + $0x60] sm:$0xff]
      %v647 = vld [vmem:[%s639 + $0x70] sm:$0xff]
      %v648 = vpack.c.bf16 %v641, %v640
      %v649 = vpack.c.bf16 %v643, %v642
      %v650 = vpack.c.bf16 %v645, %v644
      %v651 = vpack.c.bf16 %v647, %v646
      %s652 = scalar_lea.vmem %s1, 256
      %v653 = vld [vmem:[%s652] sm:$0xf]
      %v654 = vld [vmem:[%s652 + $0x4] sm:$0xf]
      %v655 = vld [vmem:[%s652 + $0x8] sm:$0xf]
      %v656 = vld [vmem:[%s652 + $0xc] sm:$0xf]
      %v657 = vld [vmem:[%s652 + $0x10] sm:$0xf]
      %v658 = vld [vmem:[%s652 + $0x14] sm:$0xf]
      %v659 = vld [vmem:[%s652 + $0x18] sm:$0xf]
      %v660 = vld [vmem:[%s652 + $0x1c] sm:$0xf]
      %v661 = vld [vmem:[%s652 + $0x20] sm:$0xf]
      %v662 = vld [vmem:[%s652 + $0x24] sm:$0xf]
      %v663 = vld [vmem:[%s652 + $0x28] sm:$0xf]
      %v664 = vld [vmem:[%s652 + $0x2c] sm:$0xf]
      %v665 = vld [vmem:[%s652 + $0x30] sm:$0xf]
      %v666 = vld [vmem:[%s652 + $0x34] sm:$0xf]
      %v667 = vld [vmem:[%s652 + $0x38] sm:$0xf]
      %v668 = vld [vmem:[%s652 + $0x3c] sm:$0xf]
      %v685 = vunpack.c.l.b16 %v653
      %v686 = vunpack.c.l.b16 %v654
      %v687 = vunpack.c.l.b16 %v655
      %v688 = vunpack.c.l.b16 %v656
      %v689 = vunpack.c.l.b16 %v657
      %v690 = vunpack.c.l.b16 %v658
      %v691 = vunpack.c.l.b16 %v659
      %v692 = vunpack.c.l.b16 %v660
      %v693 = vunpack.c.l.b16 %v661
      %v694 = vunpack.c.l.b16 %v662
      %v695 = vunpack.c.l.b16 %v663
      %v696 = vunpack.c.l.b16 %v664
      %v697 = vunpack.c.l.b16 %v665
      %v698 = vunpack.c.l.b16 %v666
      %v699 = vunpack.c.l.b16 %v667
      %v700 = vunpack.c.l.b16 %v668
      %v701 = vpack.c.b16 %v686, %v685
      %v702 = vpack.c.b16 %v688, %v687
      %v703 = vpack.c.b16 %v690, %v689
      %v704 = vpack.c.b16 %v692, %v691
      %v705 = vpack.c.b16 %v694, %v693
      %v706 = vpack.c.b16 %v696, %v695
      %v707 = vpack.c.b16 %v698, %v697
      %v708 = vpack.c.b16 %v700, %v699
      %717 = vmatpush.bf16.msra.mxu0 %v708
      %718 = vmatpush.bf16.msra.mxu0 %v707
      %719 = vmatpush.bf16.msra.mxu0 %v706
      %720 = vmatpush.bf16.msra.mxu0 %v705
      %721 = vmatpush.bf16.msra.mxu0 %v704
      %722 = vmatpush.bf16.msra.mxu0 %v703
      %723 = vmatpush.bf16.msra.mxu0 %v702
      %724 = vmatpush.bf16.msra.mxu0 %v701
      %725 = vmatmul.bf16.gmra.mxu0 %v648
      %v726 = vpop.f32.mrf.mxu0
      %v727 = vadd.f32 0.0, %v726
      %v728 = vpop.f32.mrf.mxu0
      %v729 = vadd.f32 0.0, %v728
      %730 = vmatmul.bf16.gmra.mxu0 %v649
      %v731 = vpop.f32.mrf.mxu0
      %v732 = vadd.f32 0.0, %v731
      %v733 = vpop.f32.mrf.mxu0
      %v734 = vadd.f32 0.0, %v733
      %735 = vmatmul.bf16.gmra.mxu0 %v650
      %v736 = vpop.f32.mrf.mxu0
      %v737 = vadd.f32 0.0, %v736
      %v738 = vpop.f32.mrf.mxu0
      %v739 = vadd.f32 0.0, %v738
      %740 = vmatmul.bf16.gmra.mxu0 %v651
      %v741 = vpop.f32.mrf.mxu0
      %v742 = vadd.f32 0.0, %v741
      %v743 = vpop.f32.mrf.mxu0
      %v744 = vadd.f32 0.0, %v743
      %745 = vdwg.mxu0
      %v746 = vadd.f32 %v631, %v727
      %v747 = vadd.f32 %v632, %v729
      %v748 = vadd.f32 %v633, %v732
      %v749 = vadd.f32 %v634, %v734
      %v750 = vadd.f32 %v635, %v737
      %v751 = vadd.f32 %v636, %v739
      %v752 = vadd.f32 %v637, %v742
      %v753 = vadd.f32 %v638, %v744
      %v754 = vld [vmem:[%s524 + $0x1] sm:$0xff]
      %v755 = vld [vmem:[%s524 + $0x11] sm:$0xff]
      %v756 = vld [vmem:[%s524 + $0x21] sm:$0xff]
      %v757 = vld [vmem:[%s524 + $0x31] sm:$0xff]
      %v758 = vld [vmem:[%s524 + $0x41] sm:$0xff]
      %v759 = vld [vmem:[%s524 + $0x51] sm:$0xff]
      %v760 = vld [vmem:[%s524 + $0x61] sm:$0xff]
      %v761 = vld [vmem:[%s524 + $0x71] sm:$0xff]
      %v762 = vpack.c.bf16 %v755, %v754
      %v763 = vpack.c.bf16 %v757, %v756
      %v764 = vpack.c.bf16 %v759, %v758
      %v765 = vpack.c.bf16 %v761, %v760
      %s766 = scalar_lea.vmem %s1, 320
      %v767 = vld [vmem:[%s766] sm:$0xf]
      %v768 = vld [vmem:[%s766 + $0x4] sm:$0xf]
      %v769 = vld [vmem:[%s766 + $0x8] sm:$0xf]
      %v770 = vld [vmem:[%s766 + $0xc] sm:$0xf]
      %v771 = vld [vmem:[%s766 + $0x10] sm:$0xf]
      %v772 = vld [vmem:[%s766 + $0x14] sm:$0xf]
      %v773 = vld [vmem:[%s766 + $0x18] sm:$0xf]
      %v774 = vld [vmem:[%s766 + $0x1c] sm:$0xf]
      %v775 = vld [vmem:[%s766 + $0x20] sm:$0xf]
      %v776 = vld [vmem:[%s766 + $0x24] sm:$0xf]
      %v777 = vld [vmem:[%s766 + $0x28] sm:$0xf]
      %v778 = vld [vmem:[%s766 + $0x2c] sm:$0xf]
      %v779 = vld [vmem:[%s766 + $0x30] sm:$0xf]
      %v780 = vld [vmem:[%s766 + $0x34] sm:$0xf]
      %v781 = vld [vmem:[%s766 + $0x38] sm:$0xf]
      %v782 = vld [vmem:[%s766 + $0x3c] sm:$0xf]
      %v799 = vunpack.c.l.b16 %v767
      %v800 = vunpack.c.l.b16 %v768
      %v801 = vunpack.c.l.b16 %v769
      %v802 = vunpack.c.l.b16 %v770
      %v803 = vunpack.c.l.b16 %v771
      %v804 = vunpack.c.l.b16 %v772
      %v805 = vunpack.c.l.b16 %v773
      %v806 = vunpack.c.l.b16 %v774
      %v807 = vunpack.c.l.b16 %v775
      %v808 = vunpack.c.l.b16 %v776
      %v809 = vunpack.c.l.b16 %v777
      %v810 = vunpack.c.l.b16 %v778
      %v811 = vunpack.c.l.b16 %v779
      %v812 = vunpack.c.l.b16 %v780
      %v813 = vunpack.c.l.b16 %v781
      %v814 = vunpack.c.l.b16 %v782
      %v815 = vpack.c.b16 %v800, %v799
      %v816 = vpack.c.b16 %v802, %v801
      %v817 = vpack.c.b16 %v804, %v803
      %v818 = vpack.c.b16 %v806, %v805
      %v819 = vpack.c.b16 %v808, %v807
      %v820 = vpack.c.b16 %v810, %v809
      %v821 = vpack.c.b16 %v812, %v811
      %v822 = vpack.c.b16 %v814, %v813
      %831 = vmatpush.bf16.msra.mxu0 %v822
      %832 = vmatpush.bf16.msra.mxu0 %v821
      %833 = vmatpush.bf16.msra.mxu0 %v820
      %834 = vmatpush.bf16.msra.mxu0 %v819
      %835 = vmatpush.bf16.msra.mxu0 %v818
      %836 = vmatpush.bf16.msra.mxu0 %v817
      %837 = vmatpush.bf16.msra.mxu0 %v816
      %838 = vmatpush.bf16.msra.mxu0 %v815
      %839 = vmatmul.bf16.gmra.mxu0 %v762
      %v840 = vpop.f32.mrf.mxu0
      %v841 = vadd.f32 0.0, %v840
      %v842 = vpop.f32.mrf.mxu0
      %v843 = vadd.f32 0.0, %v842
      %844 = vmatmul.bf16.gmra.mxu0 %v763
      %v845 = vpop.f32.mrf.mxu0
      %v846 = vadd.f32 0.0, %v845
      %v847 = vpop.f32.mrf.mxu0
      %v848 = vadd.f32 0.0, %v847
      %849 = vmatmul.bf16.gmra.mxu0 %v764
      %v850 = vpop.f32.mrf.mxu0
      %v851 = vadd.f32 0.0, %v850
      %v852 = vpop.f32.mrf.mxu0
      %v853 = vadd.f32 0.0, %v852
      %854 = vmatmul.bf16.gmra.mxu0 %v765
      %v855 = vpop.f32.mrf.mxu0
      %v856 = vadd.f32 0.0, %v855
      %v857 = vpop.f32.mrf.mxu0
      %v858 = vadd.f32 0.0, %v857
      %859 = vdwg.mxu0
      %v860 = vadd.f32 %v746, %v841
      %v861 = vadd.f32 %v747, %v843
      %v862 = vadd.f32 %v748, %v846
      %v863 = vadd.f32 %v749, %v848
      %v864 = vadd.f32 %v750, %v851
      %v865 = vadd.f32 %v751, %v853
      %v866 = vadd.f32 %v752, %v856
      %v867 = vadd.f32 %v753, %v858
      %s868 = scalar_lea.vmem %s192, 16
      %v869 = vld [vmem:[%s868] sm:$0xff]
      %v870 = vld [vmem:[%s868 + $0x10] sm:$0xff]
      %v871 = vld [vmem:[%s868 + $0x20] sm:$0xff]
      %v872 = vld [vmem:[%s868 + $0x30] sm:$0xff]
      %v873 = vld [vmem:[%s868 + $0x40] sm:$0xff]
      %v874 = vld [vmem:[%s868 + $0x50] sm:$0xff]
      %v875 = vld [vmem:[%s868 + $0x60] sm:$0xff]
      %v876 = vld [vmem:[%s868 + $0x70] sm:$0xff]
      %v877 = vpack.c.bf16 %v870, %v869
      %v878 = vpack.c.bf16 %v872, %v871
      %v879 = vpack.c.bf16 %v874, %v873
      %v880 = vpack.c.bf16 %v876, %v875
      %s881 = scalar_lea.vmem %s1, 384
      %v882 = vld [vmem:[%s881] sm:$0xf]
      %v883 = vld [vmem:[%s881 + $0x4] sm:$0xf]
      %v884 = vld [vmem:[%s881 + $0x8] sm:$0xf]
      %v885 = vld [vmem:[%s881 + $0xc] sm:$0xf]
      %v886 = vld [vmem:[%s881 + $0x10] sm:$0xf]
      %v887 = vld [vmem:[%s881 + $0x14] sm:$0xf]
      %v888 = vld [vmem:[%s881 + $0x18] sm:$0xf]
      %v889 = vld [vmem:[%s881 + $0x1c] sm:$0xf]
      %v890 = vld [vmem:[%s881 + $0x20] sm:$0xf]
      %v891 = vld [vmem:[%s881 + $0x24] sm:$0xf]
      %v892 = vld [vmem:[%s881 + $0x28] sm:$0xf]
      %v893 = vld [vmem:[%s881 + $0x2c] sm:$0xf]
      %v894 = vld [vmem:[%s881 + $0x30] sm:$0xf]
      %v895 = vld [vmem:[%s881 + $0x34] sm:$0xf]
      %v896 = vld [vmem:[%s881 + $0x38] sm:$0xf]
      %v897 = vld [vmem:[%s881 + $0x3c] sm:$0xf]
      %v914 = vunpack.c.l.b16 %v882
      %v915 = vunpack.c.l.b16 %v883
      %v916 = vunpack.c.l.b16 %v884
      %v917 = vunpack.c.l.b16 %v885
      %v918 = vunpack.c.l.b16 %v886
      %v919 = vunpack.c.l.b16 %v887
      %v920 = vunpack.c.l.b16 %v888
      %v921 = vunpack.c.l.b16 %v889
      %v922 = vunpack.c.l.b16 %v890
      %v923 = vunpack.c.l.b16 %v891
      %v924 = vunpack.c.l.b16 %v892
      %v925 = vunpack.c.l.b16 %v893
      %v926 = vunpack.c.l.b16 %v894
      %v927 = vunpack.c.l.b16 %v895
      %v928 = vunpack.c.l.b16 %v896
      %v929 = vunpack.c.l.b16 %v897
      %v930 = vpack.c.b16 %v915, %v914
      %v931 = vpack.c.b16 %v917, %v916
      %v932 = vpack.c.b16 %v919, %v918
      %v933 = vpack.c.b16 %v921, %v920
      %v934 = vpack.c.b16 %v923, %v922
      %v935 = vpack.c.b16 %v925, %v924
      %v936 = vpack.c.b16 %v927, %v926
      %v937 = vpack.c.b16 %v929, %v928
      %946 = vmatpush.bf16.msra.mxu0 %v937
      %947 = vmatpush.bf16.msra.mxu0 %v936
      %948 = vmatpush.bf16.msra.mxu0 %v935
      %949 = vmatpush.bf16.msra.mxu0 %v934
      %950 = vmatpush.bf16.msra.mxu0 %v933
      %951 = vmatpush.bf16.msra.mxu0 %v932
      %952 = vmatpush.bf16.msra.mxu0 %v931
      %953 = vmatpush.bf16.msra.mxu0 %v930
      %954 = vmatmul.bf16.gmra.mxu0 %v877
      %v955 = vpop.f32.mrf.mxu0
      %v956 = vadd.f32 0.0, %v955
      %v957 = vpop.f32.mrf.mxu0
      %v958 = vadd.f32 0.0, %v957
      %959 = vmatmul.bf16.gmra.mxu0 %v878
      %v960 = vpop.f32.mrf.mxu0
      %v961 = vadd.f32 0.0, %v960
      %v962 = vpop.f32.mrf.mxu0
      %v963 = vadd.f32 0.0, %v962
      %964 = vmatmul.bf16.gmra.mxu0 %v879
      %v965 = vpop.f32.mrf.mxu0
      %v966 = vadd.f32 0.0, %v965
      %v967 = vpop.f32.mrf.mxu0
      %v968 = vadd.f32 0.0, %v967
      %969 = vmatmul.bf16.gmra.mxu0 %v880
      %v970 = vpop.f32.mrf.mxu0
      %v971 = vadd.f32 0.0, %v970
      %v972 = vpop.f32.mrf.mxu0
      %v973 = vadd.f32 0.0, %v972
      %974 = vdwg.mxu0
      %v975 = vadd.f32 %v860, %v956
      %v976 = vadd.f32 %v861, %v958
      %v977 = vadd.f32 %v862, %v961
      %v978 = vadd.f32 %v863, %v963
      %v979 = vadd.f32 %v864, %v966
      %v980 = vadd.f32 %v865, %v968
      %v981 = vadd.f32 %v866, %v971
      %v982 = vadd.f32 %v867, %v973
      %s983 = scalar_lea.vmem %s192, 160
      %v984 = vld [vmem:[%s983] sm:$0xff]
      %v985 = vld [vmem:[%s983 + $0x10] sm:$0xff]
      %v986 = vld [vmem:[%s983 + $0x20] sm:$0xff]
      %v987 = vld [vmem:[%s983 + $0x30] sm:$0xff]
      %v988 = vld [vmem:[%s983 + $0x40] sm:$0xff]
      %v989 = vld [vmem:[%s983 + $0x50] sm:$0xff]
      %v990 = vld [vmem:[%s983 + $0x60] sm:$0xff]
      %v991 = vld [vmem:[%s983 + $0x70] sm:$0xff]
      %v992 = vpack.c.bf16 %v985, %v984
      %v993 = vpack.c.bf16 %v987, %v986
      %v994 = vpack.c.bf16 %v989, %v988
      %v995 = vpack.c.bf16 %v991, %v990
      %s996 = scalar_lea.vmem %s1, 448
      %v997 = vld [vmem:[%s996] sm:$0xf]
      %v998 = vld [vmem:[%s996 + $0x4] sm:$0xf]
      %v999 = vld [vmem:[%s996 + $0x8] sm:$0xf]
      %v1000 = vld [vmem:[%s996 + $0xc] sm:$0xf]
      %v1001 = vld [vmem:[%s996 + $0x10] sm:$0xf]
      %v1002 = vld [vmem:[%s996 + $0x14] sm:$0xf]
      %v1003 = vld [vmem:[%s996 + $0x18] sm:$0xf]
      %v1004 = vld [vmem:[%s996 + $0x1c] sm:$0xf]
      %v1005 = vld [vmem:[%s996 + $0x20] sm:$0xf]
      %v1006 = vld [vmem:[%s996 + $0x24] sm:$0xf]
      %v1007 = vld [vmem:[%s996 + $0x28] sm:$0xf]
      %v1008 = vld [vmem:[%s996 + $0x2c] sm:$0xf]
      %v1009 = vld [vmem:[%s996 + $0x30] sm:$0xf]
      %v1010 = vld [vmem:[%s996 + $0x34] sm:$0xf]
      %v1011 = vld [vmem:[%s996 + $0x38] sm:$0xf]
      %v1012 = vld [vmem:[%s996 + $0x3c] sm:$0xf]
      %v1029 = vunpack.c.l.b16 %v997
      %v1030 = vunpack.c.l.b16 %v998
      %v1031 = vunpack.c.l.b16 %v999
      %v1032 = vunpack.c.l.b16 %v1000
      %v1033 = vunpack.c.l.b16 %v1001
      %v1034 = vunpack.c.l.b16 %v1002
      %v1035 = vunpack.c.l.b16 %v1003
      %v1036 = vunpack.c.l.b16 %v1004
      %v1037 = vunpack.c.l.b16 %v1005
      %v1038 = vunpack.c.l.b16 %v1006
      %v1039 = vunpack.c.l.b16 %v1007
      %v1040 = vunpack.c.l.b16 %v1008
      %v1041 = vunpack.c.l.b16 %v1009
      %v1042 = vunpack.c.l.b16 %v1010
      %v1043 = vunpack.c.l.b16 %v1011
      %v1044 = vunpack.c.l.b16 %v1012
      %v1045 = vpack.c.b16 %v1030, %v1029
      %v1046 = vpack.c.b16 %v1032, %v1031
      %v1047 = vpack.c.b16 %v1034, %v1033
      %v1048 = vpack.c.b16 %v1036, %v1035
      %v1049 = vpack.c.b16 %v1038, %v1037
      %v1050 = vpack.c.b16 %v1040, %v1039
      %v1051 = vpack.c.b16 %v1042, %v1041
      %v1052 = vpack.c.b16 %v1044, %v1043
      %1061 = vmatpush.bf16.msra.mxu0 %v1052
      %1062 = vmatpush.bf16.msra.mxu0 %v1051
      %1063 = vmatpush.bf16.msra.mxu0 %v1050
      %1064 = vmatpush.bf16.msra.mxu0 %v1049
      %1065 = vmatpush.bf16.msra.mxu0 %v1048
      %1066 = vmatpush.bf16.msra.mxu0 %v1047
      %1067 = vmatpush.bf16.msra.mxu0 %v1046
      %1068 = vmatpush.bf16.msra.mxu0 %v1045
      %1069 = vmatmul.bf16.gmra.mxu0 %v992
      %v1070 = vpop.f32.mrf.mxu0
      %v1071 = vadd.f32 0.0, %v1070
      %v1072 = vpop.f32.mrf.mxu0
      %v1073 = vadd.f32 0.0, %v1072
      %1074 = vmatmul.bf16.gmra.mxu0 %v993
      %v1075 = vpop.f32.mrf.mxu0
      %v1076 = vadd.f32 0.0, %v1075
      %v1077 = vpop.f32.mrf.mxu0
      %v1078 = vadd.f32 0.0, %v1077
      %1079 = vmatmul.bf16.gmra.mxu0 %v994
      %v1080 = vpop.f32.mrf.mxu0
      %v1081 = vadd.f32 0.0, %v1080
      %v1082 = vpop.f32.mrf.mxu0
      %v1083 = vadd.f32 0.0, %v1082
      %1084 = vmatmul.bf16.gmra.mxu0 %v995
      %v1085 = vpop.f32.mrf.mxu0
      %v1086 = vadd.f32 0.0, %v1085
      %v1087 = vpop.f32.mrf.mxu0
      %v1088 = vadd.f32 0.0, %v1087
      %1089 = vdwg.mxu0
      %v1090 = vadd.f32 %v975, %v1071
      %v1091 = vadd.f32 %v976, %v1073
      %v1092 = vadd.f32 %v977, %v1076
      %v1093 = vadd.f32 %v978, %v1078
      %v1094 = vadd.f32 %v979, %v1081
      %v1095 = vadd.f32 %v980, %v1083
      %v1096 = vadd.f32 %v981, %v1086
      %v1097 = vadd.f32 %v982, %v1088
      %v1098 = vld [vmem:[%s868 + $0x1] sm:$0xff]
      %v1099 = vld [vmem:[%s868 + $0x11] sm:$0xff]
      %v1100 = vld [vmem:[%s868 + $0x21] sm:$0xff]
      %v1101 = vld [vmem:[%s868 + $0x31] sm:$0xff]
      %v1102 = vld [vmem:[%s868 + $0x41] sm:$0xff]
      %v1103 = vld [vmem:[%s868 + $0x51] sm:$0xff]
      %v1104 = vld [vmem:[%s868 + $0x61] sm:$0xff]
      %v1105 = vld [vmem:[%s868 + $0x71] sm:$0xff]
      %v1106 = vpack.c.bf16 %v1099, %v1098
      %v1107 = vpack.c.bf16 %v1101, %v1100
      %v1108 = vpack.c.bf16 %v1103, %v1102
      %v1109 = vpack.c.bf16 %v1105, %v1104
      %s1110 = scalar_lea.vmem %s1, 512
      %v1111 = vld [vmem:[%s1110] sm:$0xf]
      %v1112 = vld [vmem:[%s1110 + $0x4] sm:$0xf]
      %v1113 = vld [vmem:[%s1110 + $0x8] sm:$0xf]
      %v1114 = vld [vmem:[%s1110 + $0xc] sm:$0xf]
      %v1115 = vld [vmem:[%s1110 + $0x10] sm:$0xf]
      %v1116 = vld [vmem:[%s1110 + $0x14] sm:$0xf]
      %v1117 = vld [vmem:[%s1110 + $0x18] sm:$0xf]
      %v1118 = vld [vmem:[%s1110 + $0x1c] sm:$0xf]
      %v1119 = vld [vmem:[%s1110 + $0x20] sm:$0xf]
      %v1120 = vld [vmem:[%s1110 + $0x24] sm:$0xf]
      %v1121 = vld [vmem:[%s1110 + $0x28] sm:$0xf]
      %v1122 = vld [vmem:[%s1110 + $0x2c] sm:$0xf]
      %v1123 = vld [vmem:[%s1110 + $0x30] sm:$0xf]
      %v1124 = vld [vmem:[%s1110 + $0x34] sm:$0xf]
      %v1125 = vld [vmem:[%s1110 + $0x38] sm:$0xf]
      %v1126 = vld [vmem:[%s1110 + $0x3c] sm:$0xf]
      %v1143 = vunpack.c.l.b16 %v1111
      %v1144 = vunpack.c.l.b16 %v1112
      %v1145 = vunpack.c.l.b16 %v1113
      %v1146 = vunpack.c.l.b16 %v1114
      %v1147 = vunpack.c.l.b16 %v1115
      %v1148 = vunpack.c.l.b16 %v1116
      %v1149 = vunpack.c.l.b16 %v1117
      %v1150 = vunpack.c.l.b16 %v1118
      %v1151 = vunpack.c.l.b16 %v1119
      %v1152 = vunpack.c.l.b16 %v1120
      %v1153 = vunpack.c.l.b16 %v1121
      %v1154 = vunpack.c.l.b16 %v1122
      %v1155 = vunpack.c.l.b16 %v1123
      %v1156 = vunpack.c.l.b16 %v1124
      %v1157 = vunpack.c.l.b16 %v1125
      %v1158 = vunpack.c.l.b16 %v1126
      %v1159 = vpack.c.b16 %v1144, %v1143
      %v1160 = vpack.c.b16 %v1146, %v1145
      %v1161 = vpack.c.b16 %v1148, %v1147
      %v1162 = vpack.c.b16 %v1150, %v1149
      %v1163 = vpack.c.b16 %v1152, %v1151
      %v1164 = vpack.c.b16 %v1154, %v1153
      %v1165 = vpack.c.b16 %v1156, %v1155
      %v1166 = vpack.c.b16 %v1158, %v1157
      %1175 = vmatpush.bf16.msra.mxu0 %v1166
      %1176 = vmatpush.bf16.msra.mxu0 %v1165
      %1177 = vmatpush.bf16.msra.mxu0 %v1164
      %1178 = vmatpush.bf16.msra.mxu0 %v1163
      %1179 = vmatpush.bf16.msra.mxu0 %v1162
      %1180 = vmatpush.bf16.msra.mxu0 %v1161
      %1181 = vmatpush.bf16.msra.mxu0 %v1160
      %1182 = vmatpush.bf16.msra.mxu0 %v1159
      %1183 = vmatmul.bf16.gmra.mxu0 %v1106
      %v1184 = vpop.f32.mrf.mxu0
      %v1185 = vadd.f32 0.0, %v1184
      %v1186 = vpop.f32.mrf.mxu0
      %v1187 = vadd.f32 0.0, %v1186
      %1188 = vmatmul.bf16.gmra.mxu0 %v1107
      %v1189 = vpop.f32.mrf.mxu0
      %v1190 = vadd.f32 0.0, %v1189
      %v1191 = vpop.f32.mrf.mxu0
      %v1192 = vadd.f32 0.0, %v1191
      %1193 = vmatmul.bf16.gmra.mxu0 %v1108
      %v1194 = vpop.f32.mrf.mxu0
      %v1195 = vadd.f32 0.0, %v1194
      %v1196 = vpop.f32.mrf.mxu0
      %v1197 = vadd.f32 0.0, %v1196
      %1198 = vmatmul.bf16.gmra.mxu0 %v1109
      %v1199 = vpop.f32.mrf.mxu0
      %v1200 = vadd.f32 0.0, %v1199
      %v1201 = vpop.f32.mrf.mxu0
      %v1202 = vadd.f32 0.0, %v1201
      %1203 = vdwg.mxu0
      %v1204 = vadd.f32 %v1090, %v1185
      %v1205 = vadd.f32 %v1091, %v1187
      %v1206 = vadd.f32 %v1092, %v1190
      %v1207 = vadd.f32 %v1093, %v1192
      %v1208 = vadd.f32 %v1094, %v1195
      %v1209 = vadd.f32 %v1095, %v1197
      %v1210 = vadd.f32 %v1096, %v1200
      %v1211 = vadd.f32 %v1097, %v1202
      %v1212 = vld [vmem:[%s2] sm:$0x1]
      %v1214 = vperm.slane %v1212, 0
      %v1216 = vmul.f32 %v1204, %v1214
      %v1217 = vmul.f32 %v1205, %v1214
      %v1218 = vmul.f32 %v1206, %v1214
      %v1219 = vmul.f32 %v1207, %v1214
      %v1220 = vmul.f32 %v1208, %v1214
      %v1221 = vmul.f32 %v1209, %v1214
      %v1222 = vmul.f32 %v1210, %v1214
      %v1223 = vmul.f32 %v1211, %v1214
      %v1224 = vld [vmem:[%s3] sm:$0x1]
      %v1226 = vperm.slane %v1224, 0
      %v1228 = vadd.f32 %v1216, %v1226
      %v1229 = vadd.f32 %v1217, %v1226
      %v1230 = vadd.f32 %v1218, %v1226
      %v1231 = vadd.f32 %v1219, %v1226
      %v1232 = vadd.f32 %v1220, %v1226
      %v1233 = vadd.f32 %v1221, %v1226
      %v1234 = vadd.f32 %v1222, %v1226
      %v1235 = vadd.f32 %v1223, %v1226
      %1236 = vst [vmem:[%s197] sm:$0xff] %v1228
      %1237 = vst [vmem:[%s197 + $0x8] sm:$0xff] %v1229
      %1238 = vst [vmem:[%s197 + $0x10] sm:$0xff] %v1230
      %1239 = vst [vmem:[%s197 + $0x18] sm:$0xff] %v1231
      %1240 = vst [vmem:[%s197 + $0x20] sm:$0xff] %v1232
      %1241 = vst [vmem:[%s197 + $0x28] sm:$0xff] %v1233
      %1242 = vst [vmem:[%s197 + $0x30] sm:$0xff] %v1234
      %1243 = vst [vmem:[%s197 + $0x38] sm:$0xff] %v1235
      %p1244 = scmp.lt.s32.totalorder %s15, 1
      %s1245 = scalar_select %p1244, %s15, 1
      %s1246 = smul.addr %s1245, 8
      %s1247 = smul.addr %s1246, 8
      %s1248 = scalar_lea.vmem %s4, %s1247
      // Predicated region
      $region37: #{basic_block_forward.6} parent=35 // pred_check
        %p1249 = pneg %p122
      $region38: #{basic_block_forward.6} parent=35 // pred_check_branch
        %1251 = sbr.rel (%p1249) target = $region40
      $region39: #{basic_block_forward.6} parent=35 // pred_region
        _
      $region40: #{basic_block_forward.6} parent=35 // pred_fallthru
        _
    $region36: #{basic_block_forward.6} parent=5 // pred_fallthru
      _
    %p1252 = scmp.le.s32.totalorder 2, %s10
    // Predicated region
    $region41: #{basic_block_forward.6} parent=5 // pred_check
      %p1253 = pneg %p1252
    $region42: #{basic_block_forward.6} parent=5 // pred_check_branch
      %1255 = sbr.rel (%p1253) target = $region44
    $region43: #{basic_block_forward.6} parent=5 // pred_region
      %s1256 = ssub.s32 %s10, 2
      // Predicated region
      $region45: #{basic_block_forward.6} parent=43 // pred_check
        %p1257 = pneg %p128
      $region46: #{basic_block_forward.6} parent=43 // pred_check_branch
        %1259 = sbr.rel (%p1257) target = $region48
      $region47: #{basic_block_forward.6} parent=43 // pred_region
        %p1260 = scmp.lt.s32.totalorder %s16, 1
        %s1261 = scalar_select %p1260, %s16, 1
        %s1262 = smul.addr %s1261, 8
        %s1263 = smul.addr %s1262, 8
        %s1264 = scalar_lea.vmem %s4, %s1263
      $region48: #{basic_block_forward.6} parent=43 // pred_fallthru
        _
    $region44: #{basic_block_forward.6} parent=5 // pred_fallthru
      _
  $region6: #{basic_block_forward.6} parent=0 // loop_footer
    %s14 = sadd.s32 1, %s10
  $region7: #{basic_block_forward.6} parent=0 // loop_footer_branch
    %9 = sbr.rel target = $region3
  $region8: #{basic_block_forward.6} parent=0 // loop_exit
    _

// kernel: basic_block_forward.9
$region0: #{basic_block_forward.9}
  #allocation0 [shape = 'u32[]', space=smem, size = 0x4, offset = 0x4, fixed_abs, tag = 'smem constant byte address 0x4 - core index']
  #allocation1 [shape = 'u32[72,128]{1,0:T(1,128)}', space=vmem, size = 0x9000, scoped, tag = 'internal scratch']
  %s0 = inlined_call_operand.vmem [shape: f32[2,8,8,128], index: 0, kind: input, shape index: {}]
  %s1 = inlined_call_operand.vmem [shape: f32[2,1,128], index: 1, kind: input, shape index: {}]
  %s2 = inlined_call_operand.vmem [shape: f32[2,2,14,14], index: 2, kind: input, shape index: {}]
  %s3 = inlined_call_operand.vmem [shape: f32[98], index: 3, kind: input, shape index: {}]
  %s4 = inlined_call_operand.vmem [shape: f32[2], index: 4, kind: input, shape index: {}]
  %s5 = inlined_call_operand.vmem [shape: f32[2,64,16], index: 5, kind: input, shape index: {}]
  %s6 = inlined_call_operand.vmem [shape: bf16[16,128], index: 6, kind: input, shape index: {}]
  %s7 = inlined_call_operand.vmem [shape: f32[1,128], index: 7, kind: input, shape index: {}]
  %s8 = inlined_call_operand.vmem [shape: f32[1,128], index: 8, kind: input, shape index: {}]
  %s9 = inlined_call_operand.vmem [shape: f32[2,8,8,128], index: 9, kind: output, shape index: {}]
  %s10 = sld [smem:[#allocation0]]
  $region77: #{basic_block_forward.9} parent=0
    _
  %s12 = ssub.s32 1, %s10
  %s13 = scalar_select 0, %s12, %s10
  $region1: #{basic_block_forward.9} parent=0
    #allocation2 [shape = 'u8[512]{0}', space=smem, size = 0x200, scoped, tag = 'input window, operand 3, single buffered']
    #allocation3 [shape = 's32[2]{0}', space=sflag, size = 0x8, scoped, tag = 'scoped memory for basic_block_forward.9']
    #allocation4 [shape = 'u8[512]{0}', space=smem, size = 0x200, scoped, tag = 'input window, operand 4, single buffered']
    #allocation5 [shape = 's32[1]{0}', space=sflag, size = 0x4, scoped, tag = 'scoped memory for basic_block_forward.9']
    %14 = vsyncpa [#allocation3], 0
    %15 = vsyncpa [#allocation5], 0
    loop: start=0, step=1, limit=4
    $region2: #{basic_block_forward.9} parent=1 // loop_pre_header
      _
    $region3: #{basic_block_forward.9} parent=1 // loop_header
      %s17 = sphi 0, %s21
      %p18 = scmp.ge.s32.totalorder %s17, 4
      %s27 = sphi 0, %s29
      %s30 = sphi 0, %s27
      %s31 = sphi 0, %s30
      %s47 = sphi 0, %s31
      %s53 = sphi 0, %s55
      %s56 = sphi 0, %s53
      %s57 = sphi 0, %s56
      %s73 = sphi 0, %s57
      %s79 = sphi 0, %s81
      %s82 = sphi 0, %s79
      %s83 = sphi 0, %s82
      %s99 = sphi 0, %s83
      %s103 = sphi 0, %s103
      %s105 = sphi 0, %s103
      %s106 = sphi 0, %s105
      %s120 = sphi 0, %s106
      %s124 = sphi 0, %s124
      %s126 = sphi 0, %s124
      %s127 = sphi 0, %s126
      %s141 = sphi 0, %s127
      %s147 = sphi 0, %s149
      %s150 = sphi 0, %s147
      %s151 = sphi 0, %s150
      %s167 = sphi 0, %s151
      %s171 = sphi 0, %s171
      %s173 = sphi 0, %s171
      %s174 = sphi 0, %s173
      %s188 = sphi 0, %s174
      %s192 = sphi 0, %s192
      %s194 = sphi 0, %s192
      %s195 = sphi 0, %s194
      %s209 = sphi 0, %s195
      %s213 = sphi 0, %s213
      %s215 = sphi 0, %s213
      %s216 = sphi 0, %s215
      %s230 = sphi 0, %s216
      %s236 = sphi 0, %s238
      %s239 = sphi 0, %s236
      %s240 = sphi 0, %s239
      %s256 = sphi 0, %s240
    $region4: #{basic_block_forward.9} parent=1 // loop_header_branch
      %20 = sbr.rel (%p18) target = $region8
    $region5: #{basic_block_forward.9} parent=1 // loop_body
      %s22 = ssub.s32 %s17, 1
      %s23 = ssub.s32 %s17, 2
      %s24 = sadd.s32 %s17, 1
      %s25 = ssub.s32 %s17, %s24
      %p26 = scmp.eq.s32.totalorder %s25, 0
      %s28 = sadd.s32 %s27, 1
      %s29 = scalar_select %p26, %s27, %s28
      %p32 = pneg %p26
      %p33 = scmp.eq.s32.totalorder %s17, 1
      %p34 = por %p32, %p33
      %p35 = scmp.ne.s32.totalorder %s27, %s30
      %p36 = scmp.eq.s32.totalorder %s17, 0
      %p37 = por %p35, %p36
      %p38 = scmp.ne.s32.totalorder %s27, %s30
      %p39 = scmp.eq.s32.totalorder %s22, 1
      %p40 = por %p38, %p39
      %p41 = scmp.ne.s32.totalorder %s30, %s31
      %p42 = scmp.eq.s32.totalorder %s22, 0
      %p43 = por %p41, %p42
      %p44 = scmp.ne.s32.totalorder %s30, %s31
      %p45 = scmp.eq.s32.totalorder %s23, 1
      %p46 = por %p44, %p45
      %p48 = scmp.ne.s32.totalorder %s31, %s47
      %p49 = scmp.eq.s32.totalorder %s23, 0
      %p50 = por %p48, %p49
      %s51 = ssub.s32 %s17, %s24
      %p52 = scmp.eq.s32.totalorder %s51, 0
      %s54 = sadd.s32 %s53, 1
      %s55 = scalar_select %p52, %s53, %s54
      %p58 = pneg %p52
      %p59 = scmp.eq.s32.totalorder %s17, 1
      %p60 = por %p58, %p59
      %p61 = scmp.ne.s32.totalorder %s53, %s56
      %p62 = scmp.eq.s32.totalorder %s17, 0
      %p63 = por %p61, %p62
      %p64 = scmp.ne.s32.totalorder %s53, %s56
      %p65 = scmp.eq.s32.totalorder %s22, 1
      %p66 = por %p64, %p65
      %p67 = scmp.ne.s32.totalorder %s56, %s57
      %p68 = scmp.eq.s32.totalorder %s22, 0
      %p69 = por %p67, %p68
      %p70 = scmp.ne.s32.totalorder %s56, %s57
      %p71 = scmp.eq.s32.totalorder %s23, 1
      %p72 = por %p70, %p71
      %p74 = scmp.ne.s32.totalorder %s57, %s73
      %p75 = scmp.eq.s32.totalorder %s23, 0
      %p76 = por %p74, %p75
      %s77 = ssub.s32 %s17, %s24
      %p78 = scmp.eq.s32.totalorder %s77, 0
      %s80 = sadd.s32 %s79, 1
      %s81 = scalar_select %p78, %s79, %s80
      %p84 = pneg %p78
      %p85 = scmp.eq.s32.totalorder %s17, 1
      %p86 = por %p84, %p85
      %p87 = scmp.ne.s32.totalorder %s79, %s82
      %p88 = scmp.eq.s32.totalorder %s17, 0
      %p89 = por %p87, %p88
      %p90 = scmp.ne.s32.totalorder %s79, %s82
      %p91 = scmp.eq.s32.totalorder %s22, 1
      %p92 = por %p90, %p91
      %p93 = scmp.ne.s32.totalorder %s82, %s83
      %p94 = scmp.eq.s32.totalorder %s22, 0
      %p95 = por %p93, %p94
      %p96 = scmp.ne.s32.totalorder %s82, %s83
      %p97 = scmp.eq.s32.totalorder %s23, 1
      %p98 = por %p96, %p97
      %p100 = scmp.ne.s32.totalorder %s83, %s99
      %p101 = scmp.eq.s32.totalorder %s23, 0
      %p102 = por %p100, %p101
      %s104 = sadd.s32 %s103, 1
      %p107 = scmp.eq.s32.totalorder %s17, 1
      %p108 = scmp.ne.s32.totalorder %s103, %s105
      %p109 = scmp.eq.s32.totalorder %s17, 0
      %p110 = por %p108, %p109
      %p111 = scmp.ne.s32.totalorder %s103, %s105
      %p112 = scmp.eq.s32.totalorder %s22, 1
      %p113 = por %p111, %p112
      %p114 = scmp.ne.s32.totalorder %s105, %s106
      %p115 = scmp.eq.s32.totalorder %s22, 0
      %p116 = por %p114, %p115
      %p117 = scmp.ne.s32.totalorder %s105, %s106
      %p118 = scmp.eq.s32.totalorder %s23, 1
      %p119 = por %p117, %p118
      %p121 = scmp.ne.s32.totalorder %s106, %s120
      %p122 = scmp.eq.s32.totalorder %s23, 0
      %p123 = por %p121, %p122
      %s125 = sadd.s32 %s124, 1
      %p128 = scmp.eq.s32.totalorder %s17, 1
      %p129 = scmp.ne.s32.totalorder %s124, %s126
      %p130 = scmp.eq.s32.totalorder %s17, 0
      %p131 = por %p129, %p130
      %p132 = scmp.ne.s32.totalorder %s124, %s126
      %p133 = scmp.eq.s32.totalorder %s22, 1
      %p134 = por %p132, %p133
      %p135 = scmp.ne.s32.totalorder %s126, %s127
      %p136 = scmp.eq.s32.totalorder %s22, 0
      %p137 = por %p135, %p136
      %p138 = scmp.ne.s32.totalorder %s126, %s127
      %p139 = scmp.eq.s32.totalorder %s23, 1
      %p140 = por %p138, %p139
      %p142 = scmp.ne.s32.totalorder %s127, %s141
      %p143 = scmp.eq.s32.totalorder %s23, 0
      %p144 = por %p142, %p143
      %s145 = ssub.s32 %s17, %s24
      %p146 = scmp.eq.s32.totalorder %s145, 0
      %s148 = sadd.s32 %s147, 1
      %s149 = scalar_select %p146, %s147, %s148
      %p152 = pneg %p146
      %p153 = scmp.eq.s32.totalorder %s17, 1
      %p154 = por %p152, %p153
      %p155 = scmp.ne.s32.totalorder %s147, %s150
      %p156 = scmp.eq.s32.totalorder %s17, 0
      %p157 = por %p155, %p156
      %p158 = scmp.ne.s32.totalorder %s147, %s150
      %p159 = scmp.eq.s32.totalorder %s22, 1
      %p160 = por %p158, %p159
      %p161 = scmp.ne.s32.totalorder %s150, %s151
      %p162 = scmp.eq.s32.totalorder %s22, 0
      %p163 = por %p161, %p162
      %p164 = scmp.ne.s32.totalorder %s150, %s151
      %p165 = scmp.eq.s32.totalorder %s23, 1
      %p166 = por %p164, %p165
      %p168 = scmp.ne.s32.totalorder %s151, %s167
      %p169 = scmp.eq.s32.totalorder %s23, 0
      %p170 = por %p168, %p169
      %s172 = sadd.s32 %s171, 1
      %p175 = scmp.eq.s32.totalorder %s17, 1
      %p176 = scmp.ne.s32.totalorder %s171, %s173
      %p177 = scmp.eq.s32.totalorder %s17, 0
      %p178 = por %p176, %p177
      %p179 = scmp.ne.s32.totalorder %s171, %s173
      %p180 = scmp.eq.s32.totalorder %s22, 1
      %p181 = por %p179, %p180
      %p182 = scmp.ne.s32.totalorder %s173, %s174
      %p183 = scmp.eq.s32.totalorder %s22, 0
      %p184 = por %p182, %p183
      %p185 = scmp.ne.s32.totalorder %s173, %s174
      %p186 = scmp.eq.s32.totalorder %s23, 1
      %p187 = por %p185, %p186
      %p189 = scmp.ne.s32.totalorder %s174, %s188
      %p190 = scmp.eq.s32.totalorder %s23, 0
      %p191 = por %p189, %p190
      %s193 = sadd.s32 %s192, 1
      %p196 = scmp.eq.s32.totalorder %s17, 1
      %p197 = scmp.ne.s32.totalorder %s192, %s194
      %p198 = scmp.eq.s32.totalorder %s17, 0
      %p199 = por %p197, %p198
      %p200 = scmp.ne.s32.totalorder %s192, %s194
      %p201 = scmp.eq.s32.totalorder %s22, 1
      %p202 = por %p200, %p201
      %p203 = scmp.ne.s32.totalorder %s194, %s195
      %p204 = scmp.eq.s32.totalorder %s22, 0
      %p205 = por %p203, %p204
      %p206 = scmp.ne.s32.totalorder %s194, %s195
      %p207 = scmp.eq.s32.totalorder %s23, 1
      %p208 = por %p206, %p207
      %p210 = scmp.ne.s32.totalorder %s195, %s209
      %p211 = scmp.eq.s32.totalorder %s23, 0
      %p212 = por %p210, %p211
      %s214 = sadd.s32 %s213, 1
      %p217 = scmp.eq.s32.totalorder %s17, 1
      %p218 = scmp.ne.s32.totalorder %s213, %s215
      %p219 = scmp.eq.s32.totalorder %s17, 0
      %p220 = por %p218, %p219
      %p221 = scmp.ne.s32.totalorder %s213, %s215
      %p222 = scmp.eq.s32.totalorder %s22, 1
      %p223 = por %p221, %p222
      %p224 = scmp.ne.s32.totalorder %s215, %s216
      %p225 = scmp.eq.s32.totalorder %s22, 0
      %p226 = por %p224, %p225
      %p227 = scmp.ne.s32.totalorder %s215, %s216
      %p228 = scmp.eq.s32.totalorder %s23, 1
      %p229 = por %p227, %p228
      %p231 = scmp.ne.s32.totalorder %s216, %s230
      %p232 = scmp.eq.s32.totalorder %s23, 0
      %p233 = por %p231, %p232
      %s234 = ssub.s32 %s17, %s24
      %p235 = scmp.eq.s32.totalorder %s234, 0
      %s237 = sadd.s32 %s236, 1
      %s238 = scalar_select %p235, %s236, %s237
      %p241 = pneg %p235
      %p242 = scmp.eq.s32.totalorder %s17, 1
      %p243 = por %p241, %p242
      %p244 = scmp.ne.s32.totalorder %s236, %s239
      %p245 = scmp.eq.s32.totalorder %s17, 0
      %p246 = por %p244, %p245
      %p247 = scmp.ne.s32.totalorder %s236, %s239
      %p248 = scmp.eq.s32.totalorder %s22, 1
      %p249 = por %p247, %p248
      %p250 = scmp.ne.s32.totalorder %s239, %s240
      %p251 = scmp.eq.s32.totalorder %s22, 0
      %p252 = por %p250, %p251
      %p253 = scmp.ne.s32.totalorder %s239, %s240
      %p254 = scmp.eq.s32.totalorder %s23, 1
      %p255 = por %p253, %p254
      %p257 = scmp.ne.s32.totalorder %s240, %s256
      %p258 = scmp.eq.s32.totalorder %s23, 0
      %p259 = por %p257, %p258
      %p260 = scmp.le.s32.totalorder 1, %s17
      %p261 = scmp.lt.s32.totalorder %s17, 3
      %p262 = pnand %p260, %p261
      %p263 = pneg %p262
      // Predicated region
      $region9: #{basic_block_forward.9} parent=5 // pred_check
        _
      $region10: #{basic_block_forward.9} parent=5 // pred_check_branch
        %265 = sbr.rel (%p262) target = $region12
      $region11: #{basic_block_forward.9} parent=5 // pred_region
        %s266 = ssub.s32 %s17, 1
        // Predicated region
        $region13: #{basic_block_forward.9} parent=11 // pred_check
          %p267 = pneg %p116
        $region14: #{basic_block_forward.9} parent=11 // pred_check_branch
          %269 = sbr.rel (%p267) target = $region16
        $region15: #{basic_block_forward.9} parent=11 // pred_region
          %271 = vsyncadd [#allocation3], 0
          %s273 = sshll.u32 %s3, 4
          %s274 = int_to_ptr.vmem [resolvable:$true] %s273
          %276 = dma.vmem_to_smem %s274, 16, [#allocation2], [#allocation3]
        $region16: #{basic_block_forward.9} parent=11 // pred_fallthru
          _
        // Predicated region
        $region17: #{basic_block_forward.9} parent=11 // pred_check
          %p277 = pneg %p137
        $region18: #{basic_block_forward.9} parent=11 // pred_check_branch
          %279 = sbr.rel (%p277) target = $region20
        $region19: #{basic_block_forward.9} parent=11 // pred_region
          %281 = vsyncadd [#allocation5], 0
          %s283 = sshll.u32 %s4, 4
          %s284 = int_to_ptr.vmem [resolvable:$true] %s283
          %286 = dma.vmem_to_smem %s284, 16, [#allocation4], [#allocation5]
        $region20: #{basic_block_forward.9} parent=11 // pred_fallthru
          _
        // Predicated region
        $region21: #{basic_block_forward.9} parent=11 // pred_check
          %p287 = pneg %p184
        $region22: #{basic_block_forward.9} parent=11 // pred_check_branch
          %289 = sbr.rel (%p287) target = $region24
        $region23: #{basic_block_forward.9} parent=11 // pred_region
          _
        $region24: #{basic_block_forward.9} parent=11 // pred_fallthru
          _
        // Predicated region
        $region25: #{basic_block_forward.9} parent=11 // pred_check
          %p290 = pneg %p205
        $region26: #{basic_block_forward.9} parent=11 // pred_check_branch
          %292 = sbr.rel (%p290) target = $region28
        $region27: #{basic_block_forward.9} parent=11 // pred_region
          _
        $region28: #{basic_block_forward.9} parent=11 // pred_fallthru
          _
        // Predicated region
        $region29: #{basic_block_forward.9} parent=11 // pred_check
          %p293 = pneg %p226
        $region30: #{basic_block_forward.9} parent=11 // pred_check_branch
          %295 = sbr.rel (%p293) target = $region32
        $region31: #{basic_block_forward.9} parent=11 // pred_region
          _
        $region32: #{basic_block_forward.9} parent=11 // pred_fallthru
          _
      $region12: #{basic_block_forward.9} parent=5 // pred_fallthru
        _
      %p296 = scmp.lt.s32.totalorder %s17, 2
      // Predicated region
      $region33: #{basic_block_forward.9} parent=5 // pred_check
        %p297 = pneg %p296
      $region34: #{basic_block_forward.9} parent=5 // pred_check_branch
        %299 = sbr.rel (%p297) target = $region36
      $region35: #{basic_block_forward.9} parent=5 // pred_region
        // Predicated region
        $region37: #{basic_block_forward.9} parent=35 // pred_check
          %p300 = pneg %p37
        $region38: #{basic_block_forward.9} parent=35 // pred_check_branch
          %302 = sbr.rel (%p300) target = $region40
        $region39: #{basic_block_forward.9} parent=35 // pred_region
          %p303 = scmp.lt.s32.totalorder %s17, 1
          %s304 = scalar_select %p303, %s17, 1
          %s305 = smul.addr %s304, 8
          %s306 = smul.addr %s305, 8
          %s307 = scalar_lea.vmem %s0, %s306
        $region40: #{basic_block_forward.9} parent=35 // pred_fallthru
          _
        // Predicated region
        $region41: #{basic_block_forward.9} parent=35 // pred_check
          %p308 = pneg %p63
        $region42: #{basic_block_forward.9} parent=35 // pred_check_branch
          %310 = sbr.rel (%p308) target = $region44
        $region43: #{basic_block_forward.9} parent=35 // pred_region
          %p311 = scmp.lt.s32.totalorder %s17, 1
          %s312 = scalar_select %p311, %s17, 1
          %s313 = scalar_lea.vmem %s1, %s312
        $region44: #{basic_block_forward.9} parent=35 // pred_fallthru
          _
        // Predicated region
        $region45: #{basic_block_forward.9} parent=35 // pred_check
          %p314 = pneg %p89
        $region46: #{basic_block_forward.9} parent=35 // pred_check_branch
          %316 = sbr.rel (%p314) target = $region48
        $region47: #{basic_block_forward.9} parent=35 // pred_region
          %p317 = scmp.lt.s32.totalorder %s17, 1
          %s318 = scalar_select %p317, %s17, 1
          %s319 = smul.addr %s318, 4
          %s320 = smul.addr %s319, 8
          %s321 = scalar_lea.vmem %s2, %s320
        $region48: #{basic_block_forward.9} parent=35 // pred_fallthru
          _
        // Predicated region
        $region49: #{basic_block_forward.9} parent=35 // pred_check
          %p322 = pneg %p157
        $region50: #{basic_block_forward.9} parent=35 // pred_check_branch
          %324 = sbr.rel (%p322) target = $region52
        $region51: #{basic_block_forward.9} parent=35 // pred_region
          %p325 = scmp.lt.s32.totalorder %s17, 1
          %s326 = scalar_select %p325, %s17, 1
          %s327 = smul.addr %s326, 8
          %s328 = smul.addr %s327, 8
          %s329 = scalar_lea.vmem %s5, %s328
        $region52: #{basic_block_forward.9} parent=35 // pred_fallthru
          _
      $region36: #{basic_block_forward.9} parent=5 // pred_fallthru
        _
      %p330 = scmp.le.s32.totalorder 1, %s17
      %p331 = scmp.lt.s32.totalorder %s17, 3
      %p332 = pnand %p330, %p331
      %p333 = pneg %p332
      // Predicated region
      $region53: #{basic_block_forward.9} parent=5 // pred_check
        _
      $region54: #{basic_block_forward.9} parent=5 // pred_check_branch
        %335 = sbr.rel (%p332) target = $region56
      $region55: #{basic_block_forward.9} parent=5 // pred_region
        %s336 = ssub.s32 %s17, 1
        // Predicated region
        $region57: #{basic_block_forward.9} parent=55 // pred_check
          %p337 = pneg %p116
        $region58: #{basic_block_forward.9} parent=55 // pred_check_branch
          %339 = sbr.rel (%p337) target = $region60
        $region59: #{basic_block_forward.9} parent=55 // pred_region
          %341 = dma.done [#allocation3], 16
        $region60: #{basic_block_forward.9} parent=55 // pred_fallthru
          _
        // Predicated region
        $region61: #{basic_block_forward.9} parent=55 // pred_check
          %p342 = pneg %p137
        $region62: #{basic_block_forward.9} parent=55 // pred_check_branch
          %344 = sbr.rel (%p342) target = $region64
        $region63: #{basic_block_forward.9} parent=55 // pred_region
          %346 = dma.done [#allocation5], 16
        $region64: #{basic_block_forward.9} parent=55 // pred_fallthru
          _
        %347 = sfence
        %p348 = scmp.lt.s32.totalorder %s22, 1
        %s349 = scalar_select %p348, %s22, 1
        %s350 = smul.addr %s349, 8
        %s351 = smul.addr %s350, 8
        %s352 = scalar_lea.vmem %s0, %s351
        %p353 = pneg %p43
        %p354 = pneg %p40
        %p355 = scmp.lt.s32.totalorder %s22, 1
        %s356 = scalar_select %p355, %s22, 1
        %s357 = scalar_lea.vmem %s1, %s356
        %p358 = pneg %p69
        %p359 = pneg %p66
        %p360 = scmp.lt.s32.totalorder %s22, 1
        %s361 = scalar_select %p360, %s22, 1
        %s362 = smul.addr %s361, 4
        %s363 = smul.addr %s362, 8
        %s364 = scalar_lea.vmem %s2, %s363
        %p365 = pneg %p95
        %p366 = pneg %p92
        %p367 = pneg %p116
        %p368 = pneg %p113
        %p369 = pneg %p137
        %p370 = pneg %p134
        %p371 = scmp.lt.s32.totalorder %s22, 1
        %s372 = scalar_select %p371, %s22, 1
        %s373 = smul.addr %s372, 8
        %s374 = smul.addr %s373, 8
        %s375 = scalar_lea.vmem %s5, %s374
        %p376 = pneg %p163
        %p377 = pneg %p160
        %p378 = pneg %p184
        %p379 = pneg %p181
        %p380 = pneg %p205
        %p381 = pneg %p202
        %p382 = pneg %p226
        %p383 = pneg %p223
        %p384 = pneg %p252
        %p385 = pneg %p249
        %p386 = scmp.lt.s32.totalorder %s22, 1
        %s387 = scalar_select %p386, %s22, 1
        %s388 = smul.addr %s387, 8
        %s389 = smul.addr %s388, 8
        %s390 = scalar_lea.vmem %s9, %s389
        %p391 = scmp.lt.s32.totalorder %s22, 1
        %s392 = scalar_select %p391, %s22, 1
        %s393 = smul.addr %s392, 8
        %s394 = smul.addr %s393, 8
        %s395 = scalar_lea.vmem %s0, %s394
        %p396 = scmp.lt.s32.totalorder %s22, 1
        %s397 = scalar_select %p396, %s22, 1
        %s398 = scalar_lea.vmem %s1, %s397
        %p399 = scmp.lt.s32.totalorder %s22, 1
        %s400 = scalar_select %p399, %s22, 1
        %s401 = smul.addr %s400, 4
        %s402 = smul.addr %s401, 8
        %s403 = scalar_lea.vmem %s2, %s402
        %p404 = scmp.lt.s32.totalorder %s22, 1
        %s405 = scalar_select %p404, %s22, 1
        %s406 = smul.addr %s405, 8
        %s407 = smul.addr %s406, 8
        %s408 = scalar_lea.vmem %s5, %s407
        %p409 = scmp.lt.s32.totalorder %s22, 1
        %s410 = scalar_select %p409, %s22, 1
        %s411 = smul.addr %s410, 8
        %s412 = smul.addr %s411, 8
        %s413 = scalar_lea.vmem %s9, %s412
        %v415 = vld [vmem:[%s403] sm:$0xff]
        %v416 = vld [vmem:[%s403 + $0x8] sm:$0x3f]
        %s417 = sld [smem:[#allocation2]]
        %v418 = vstv %s417
        %v419 = vmul.f32 %v418, %v415
        %v420 = vadd.f32 %v419, 0.0
        %s421 = sld [smem:[#allocation2 + $0x1]]
        %v422 = vstv %s421
        %v423 = vmul.f32 %v422, %v415
        %425 = vrot.lane.b32.xlu0 %v423, 127
        %v426 = vpop.permute.xlu0 %425
        %v428 = vadd.f32 %v420, %v426
        %s429 = sld [smem:[#allocation2 + $0x2]]
        %v430 = vstv %s429
        %v431 = vmul.f32 %v430, %v415
        %433 = vrot.lane.b32.xlu0 %v431, 126
        %v434 = vpop.permute.xlu0 %433
        %v436 = vadd.f32 %v428, %v434
        %s437 = sld [smem:[#allocation2 + $0x3]]
        %v438 = vstv %s437
        %v439 = vmul.f32 %v438, %v415
        %441 = vrot.lane.b32.xlu0 %v439, 125
        %v442 = vpop.permute.xlu0 %441
        %v444 = vadd.f32 %v436, %v442
        %s445 = sld [smem:[#allocation2 + $0x4]]
        %v446 = vstv %s445
        %v447 = vmul.f32 %v446, %v415
        %449 = vrot.lane.b32.xlu0 %v447, 124
        %v450 = vpop.permute.xlu0 %449
        %v452 = vadd.f32 %v444, %v450
        %s453 = sld [smem:[#allocation2 + $0x5]]
        %v454 = vstv %s453
        %v455 = vmul.f32 %v454, %v415
        %457 = vrot.lane.b32.xlu0 %v455, 123
        %v458 = vpop.permute.xlu0 %457
        %v460 = vadd.f32 %v452, %v458
        %s461 = sld [smem:[#allocation2 + $0x6]]
        %v462 = vstv %s461
        %v463 = vmul.f32 %v462, %v415
        %465 = vrot.lane.b32.xlu0 %v463, 122
        %v466 = vpop.permute.xlu0 %465
        %v468 = vadd.f32 %v460, %v466
        %s469 = sld [smem:[#allocation2 + $0x7]]
        %v470 = vstv %s469
        %v471 = vmul.f32 %v470, %v415
        %v472 = vmul.f32 %v470, %v416
        %vm475 = vcmask 1046528
        %v476 = vrot.slane %v471, 1
        %v477 = vrot.slane %v472, 1
        %v478 = vsel %vm475, %v476, %v477
        %v480 = vadd.f32 %v468, %v478
        %s481 = sld [smem:[#allocation2 + $0x8]]
        %v482 = vstv %s481
        %v483 = vmul.f32 %v482, %v415
        %v484 = vmul.f32 %v482, %v416
        %v487 = vrot.slane %v483, 1
        %v488 = vrot.slane %v484, 1
        %v489 = vsel %vm475, %v487, %v488
        %490 = vrot.lane.b32.xlu0 %v489, 127
        %v491 = vpop.permute.xlu0 %490
        %v493 = vadd.f32 %v480, %v491
        %s494 = sld [smem:[#allocation2 + $0x9]]
        %v495 = vstv %s494
        %v496 = vmul.f32 %v495, %v415
        %v497 = vmul.f32 %v495, %v416
        %v500 = vrot.slane %v496, 1
        %v501 = vrot.slane %v497, 1
        %v502 = vsel %vm475, %v500, %v501
        %503 = vrot.lane.b32.xlu0 %v502, 126
        %v504 = vpop.permute.xlu0 %503
        %v506 = vadd.f32 %v493, %v504
        %s507 = sld [smem:[#allocation2 + $0xa]]
        %v508 = vstv %s507
        %v509 = vmul.f32 %v508, %v415
        %v510 = vmul.f32 %v508, %v416
        %v513 = vrot.slane %v509, 1
        %v514 = vrot.slane %v510, 1
        %v515 = vsel %vm475, %v513, %v514
        %516 = vrot.lane.b32.xlu0 %v515, 125
        %v517 = vpop.permute.xlu0 %516
        %v519 = vadd.f32 %v506, %v517
        %s520 = sld [smem:[#allocation2 + $0xb]]
        %v521 = vstv %s520
        %v522 = vmul.f32 %v521, %v415
        %v523 = vmul.f32 %v521, %v416
        %v526 = vrot.slane %v522, 1
        %v527 = vrot.slane %v523, 1
        %v528 = vsel %vm475, %v526, %v527
        %529 = vrot.lane.b32.xlu0 %v528, 124
        %v530 = vpop.permute.xlu0 %529
        %v532 = vadd.f32 %v519, %v530
        %s533 = sld [smem:[#allocation2 + $0xc]]
        %v534 = vstv %s533
        %v535 = vmul.f32 %v534, %v415
        %v536 = vmul.f32 %v534, %v416
        %v539 = vrot.slane %v535, 1
        %v540 = vrot.slane %v536, 1
        %v541 = vsel %vm475, %v539, %v540
        %542 = vrot.lane.b32.xlu0 %v541, 123
        %v543 = vpop.permute.xlu0 %542
        %v545 = vadd.f32 %v532, %v543
        %s546 = sld [smem:[#allocation2 + $0xd]]
        %v547 = vstv %s546
        %v548 = vmul.f32 %v547, %v415
        %v549 = vmul.f32 %v547, %v416
        %v552 = vrot.slane %v548, 1
        %v553 = vrot.slane %v549, 1
        %v554 = vsel %vm475, %v552, %v553
        %555 = vrot.lane.b32.xlu0 %v554, 122
        %v556 = vpop.permute.xlu0 %555
        %v558 = vadd.f32 %v545, %v556
        %s559 = sld [smem:[#allocation2 + $0xe]]
        %v560 = vstv %s559
        %v561 = vmul.f32 %v560, %v415
        %v562 = vmul.f32 %v560, %v416
        %vm565 = vcmask 1045504
        %v566 = vrot.slane %v561, 2
        %v567 = vrot.slane %v562, 2
        %v568 = vsel %vm565, %v566, %v567
        %v570 = vadd.f32 %v558, %v568
        %s571 = sld [smem:[#allocation2 + $0xf]]
        %v572 = vstv %s571
        %v573 = vmul.f32 %v572, %v415
        %v574 = vmul.f32 %v572, %v416
        %v577 = vrot.slane %v573, 2
        %v578 = vrot.slane %v574, 2
        %v579 = vsel %vm565, %v577, %v578
        %580 = vrot.lane.b32.xlu0 %v579, 127
        %v581 = vpop.permute.xlu0 %580
        %v583 = vadd.f32 %v570, %v581
        %s584 = sld [smem:[#allocation2 + $0x10]]
        %v585 = vstv %s584
        %v586 = vmul.f32 %v585, %v415
        %v587 = vmul.f32 %v585, %v416
        %v590 = vrot.slane %v586, 2
        %v591 = vrot.slane %v587, 2
        %v592 = vsel %vm565, %v590, %v591
        %593 = vrot.lane.b32.xlu0 %v592, 126
        %v594 = vpop.permute.xlu0 %593
        %v596 = vadd.f32 %v583, %v594
        %s597 = sld [smem:[#allocation2 + $0x11]]
        %v598 = vstv %s597
        %v599 = vmul.f32 %v598, %v415
        %v600 = vmul.f32 %v598, %v416
        %v603 = vrot.slane %v599, 2
        %v604 = vrot.slane %v600, 2
        %v605 = vsel %vm565, %v603, %v604
        %606 = vrot.lane.b32.xlu0 %v605, 125
        %v607 = vpop.permute.xlu0 %606
        %v609 = vadd.f32 %v596, %v607
        %s610 = sld [smem:[#allocation2 + $0x12]]
        %v611 = vstv %s610
        %v612 = vmul.f32 %v611, %v415
        %v613 = vmul.f32 %v611, %v416
        %v616 = vrot.slane %v612, 2
        %v617 = vrot.slane %v613, 2
        %v618 = vsel %vm565, %v616, %v617
        %619 = vrot.lane.b32.xlu0 %v618, 124
        %v620 = vpop.permute.xlu0 %619
        %v622 = vadd.f32 %v609, %v620
        %s623 = sld [smem:[#allocation2 + $0x13]]
        %v624 = vstv %s623
        %v625 = vmul.f32 %v624, %v415
        %v626 = vmul.f32 %v624, %v416
        %v629 = vrot.slane %v625, 2
        %v630 = vrot.slane %v626, 2
        %v631 = vsel %vm565, %v629, %v630
        %632 = vrot.lane.b32.xlu0 %v631, 123
        %v633 = vpop.permute.xlu0 %632
        %v635 = vadd.f32 %v622, %v633
        %s636 = sld [smem:[#allocation2 + $0x14]]
        %v637 = vstv %s636
        %v638 = vmul.f32 %v637, %v415
        %v639 = vmul.f32 %v637, %v416
        %v642 = vrot.slane %v638, 2
        %v643 = vrot.slane %v639, 2
        %v644 = vsel %vm565, %v642, %v643
        %645 = vrot.lane.b32.xlu0 %v644, 122
        %v646 = vpop.permute.xlu0 %645
        %v648 = vadd.f32 %v635, %v646
        %s649 = sld [smem:[#allocation2 + $0x15]]
        %v650 = vstv %s649
        %v651 = vmul.f32 %v650, %v415
        %v652 = vmul.f32 %v650, %v416
        %vm655 = vcmask 1044480
        %v656 = vrot.slane %v651, 3
        %v657 = vrot.slane %v652, 3
        %v658 = vsel %vm655, %v656, %v657
        %v660 = vadd.f32 %v648, %v658
        %s661 = sld [smem:[#allocation2 + $0x16]]
        %v662 = vstv %s661
        %v663 = vmul.f32 %v662, %v415
        %v664 = vmul.f32 %v662, %v416
        %v667 = vrot.slane %v663, 3
        %v668 = vrot.slane %v664, 3
        %v669 = vsel %vm655, %v667, %v668
        %670 = vrot.lane.b32.xlu0 %v669, 127
        %v671 = vpop.permute.xlu0 %670
        %v673 = vadd.f32 %v660, %v671
        %s674 = sld [smem:[#allocation2 + $0x17]]
        %v675 = vstv %s674
        %v676 = vmul.f32 %v675, %v415
        %v677 = vmul.f32 %v675, %v416
        %v680 = vrot.slane %v676, 3
        %v681 = vrot.slane %v677, 3
        %v682 = vsel %vm655, %v680, %v681
        %683 = vrot.lane.b32.xlu0 %v682, 126
        %v684 = vpop.permute.xlu0 %683
        %v686 = vadd.f32 %v673, %v684
        %s687 = sld [smem:[#allocation2 + $0x18]]
        %v688 = vstv %s687
        %v689 = vmul.f32 %v688, %v415
        %v690 = vmul.f32 %v688, %v416
        %v693 = vrot.slane %v689, 3
        %v694 = vrot.slane %v690, 3
        %v695 = vsel %vm655, %v693, %v694
        %696 = vrot.lane.b32.xlu0 %v695, 125
        %v697 = vpop.permute.xlu0 %696
        %v699 = vadd.f32 %v686, %v697
        %s700 = sld [smem:[#allocation2 + $0x19]]
        %v701 = vstv %s700
        %v702 = vmul.f32 %v701, %v415
        %v703 = vmul.f32 %v701, %v416
        %v706 = vrot.slane %v702, 3
        %v707 = vrot.slane %v703, 3
        %v708 = vsel %vm655, %v706, %v707
        %709 = vrot.lane.b32.xlu0 %v708, 124
        %v710 = vpop.permute.xlu0 %709
        %v712 = vadd.f32 %v699, %v710
        %s713 = sld [smem:[#allocation2 + $0x1a]]
        %v714 = vstv %s713
        %v715 = vmul.f32 %v714, %v415
        %v716 = vmul.f32 %v714, %v416
        %v719 = vrot.slane %v715, 3
        %v720 = vrot.slane %v716, 3
        %v721 = vsel %vm655, %v719, %v720
        %722 = vrot.lane.b32.xlu0 %v721, 123
        %v723 = vpop.permute.xlu0 %722
        %v725 = vadd.f32 %v712, %v723
        %s726 = sld [smem:[#allocation2 + $0x1b]]
        %v727 = vstv %s726
        %v728 = vmul.f32 %v727, %v415
        %v729 = vmul.f32 %v727, %v416
        %v732 = vrot.slane %v728, 3
        %v733 = vrot.slane %v729, 3
        %v734 = vsel %vm655, %v732, %v733
        %735 = vrot.lane.b32.xlu0 %v734, 122
        %v736 = vpop.permute.xlu0 %735
        %v738 = vadd.f32 %v725, %v736
        %s739 = sld [smem:[#allocation2 + $0x1c]]
        %v740 = vstv %s739
        %v741 = vmul.f32 %v740, %v415
        %v742 = vmul.f32 %v740, %v416
        %vm745 = vcmask 1043456
        %v746 = vrot.slane %v741, 4
        %v747 = vrot.slane %v742, 4
        %v748 = vsel %vm745, %v746, %v747
        %v750 = vadd.f32 %v738, %v748
        %s751 = sld [smem:[#allocation2 + $0x1d]]
        %v752 = vstv %s751
        %v753 = vmul.f32 %v752, %v415
        %v754 = vmul.f32 %v752, %v416
        %v757 = vrot.slane %v753, 4
        %v758 = vrot.slane %v754, 4
        %v759 = vsel %vm745, %v757, %v758
        %760 = vrot.lane.b32.xlu0 %v759, 127
        %v761 = vpop.permute.xlu0 %760
        %v763 = vadd.f32 %v750, %v761
        %s764 = sld [smem:[#allocation2 + $0x1e]]
        %v765 = vstv %s764
        %v766 = vmul.f32 %v765, %v415
        %v767 = vmul.f32 %v765, %v416
        %v770 = vrot.slane %v766, 4
        %v771 = vrot.slane %v767, 4
        %v772 = vsel %vm745, %v770, %v771
        %773 = vrot.lane.b32.xlu0 %v772, 126
        %v774 = vpop.permute.xlu0 %773
        %v776 = vadd.f32 %v763, %v774
        %s777 = sld [smem:[#allocation2 + $0x1f]]
        %v778 = vstv %s777
        %v779 = vmul.f32 %v778, %v415
        %v780 = vmul.f32 %v778, %v416
        %v783 = vrot.slane %v779, 4
        %v784 = vrot.slane %v780, 4
        %v785 = vsel %vm745, %v783, %v784
        %786 = vrot.lane.b32.xlu0 %v785, 125
        %v787 = vpop.permute.xlu0 %786
        %v789 = vadd.f32 %v776, %v787
        %s790 = sld [smem:[#allocation2 + $0x20]]
        %v791 = vstv %s790
        %v792 = vmul.f32 %v791, %v415
        %v793 = vmul.f32 %v791, %v416
        %v796 = vrot.slane %v792, 4
        %v797 = vrot.slane %v793, 4
        %v798 = vsel %vm745, %v796, %v797
        %799 = vrot.lane.b32.xlu0 %v798, 124
        %v800 = vpop.permute.xlu0 %799
        %v802 = vadd.f32 %v789, %v800
        %s803 = sld [smem:[#allocation2 + $0x21]]
        %v804 = vstv %s803
        %v805 = vmul.f32 %v804, %v415
        %v806 = vmul.f32 %v804, %v416
        %v809 = vrot.slane %v805, 4
        %v810 = vrot.slane %v806, 4
        %v811 = vsel %vm745, %v809, %v810
        %812 = vrot.lane.b32.xlu0 %v811, 123
        %v813 = vpop.permute.xlu0 %812
        %v815 = vadd.f32 %v802, %v813
        %s816 = sld [smem:[#allocation2 + $0x22]]
        %v817 = vstv %s816
        %v818 = vmul.f32 %v817, %v415
        %v819 = vmul.f32 %v817, %v416
        %v822 = vrot.slane %v818, 4
        %v823 = vrot.slane %v819, 4
        %v824 = vsel %vm745, %v822, %v823
        %825 = vrot.lane.b32.xlu0 %v824, 122
        %v826 = vpop.permute.xlu0 %825
        %v828 = vadd.f32 %v815, %v826
        %s829 = sld [smem:[#allocation2 + $0x23]]
        %v830 = vstv %s829
        %v831 = vmul.f32 %v830, %v415
        %v832 = vmul.f32 %v830, %v416
        %vm835 = vcmask 1042432
        %v836 = vrot.slane %v831, 5
        %v837 = vrot.slane %v832, 5
        %v838 = vsel %vm835, %v836, %v837
        %v840 = vadd.f32 %v828, %v838
        %s841 = sld [smem:[#allocation2 + $0x24]]
        %v842 = vstv %s841
        %v843 = vmul.f32 %v842, %v415
        %v844 = vmul.f32 %v842, %v416
        %v847 = vrot.slane %v843, 5
        %v848 = vrot.slane %v844, 5
        %v849 = vsel %vm835, %v847, %v848
        %850 = vrot.lane.b32.xlu0 %v849, 127
        %v851 = vpop.permute.xlu0 %850
        %v853 = vadd.f32 %v840, %v851
        %s854 = sld [smem:[#allocation2 + $0x25]]
        %v855 = vstv %s854
        %v856 = vmul.f32 %v855, %v415
        %v857 = vmul.f32 %v855, %v416
        %v860 = vrot.slane %v856, 5
        %v861 = vrot.slane %v857, 5
        %v862 = vsel %vm835, %v860, %v861
        %863 = vrot.lane.b32.xlu0 %v862, 126
        %v864 = vpop.permute.xlu0 %863
        %v866 = vadd.f32 %v853, %v864
        %s867 = sld [smem:[#allocation2 + $0x26]]
        %v868 = vstv %s867
        %v869 = vmul.f32 %v868, %v415
        %v870 = vmul.f32 %v868, %v416
        %v873 = vrot.slane %v869, 5
        %v874 = vrot.slane %v870, 5
        %v875 = vsel %vm835, %v873, %v874
        %876 = vrot.lane.b32.xlu0 %v875, 125
        %v877 = vpop.permute.xlu0 %876
        %v879 = vadd.f32 %v866, %v877
        %s880 = sld [smem:[#allocation2 + $0x27]]
        %v881 = vstv %s880
        %v882 = vmul.f32 %v881, %v415
        %v883 = vmul.f32 %v881, %v416
        %v886 = vrot.slane %v882, 5
        %v887 = vrot.slane %v883, 5
        %v888 = vsel %vm835, %v886, %v887
        %889 = vrot.lane.b32.xlu0 %v888, 124
        %v890 = vpop.permute.xlu0 %889
        %v892 = vadd.f32 %v879, %v890
        %s893 = sld [smem:[#allocation2 + $0x28]]
        %v894 = vstv %s893
        %v895 = vmul.f32 %v894, %v415
        %v896 = vmul.f32 %v894, %v416
        %v899 = vrot.slane %v895, 5
        %v900 = vrot.slane %v896, 5
        %v901 = vsel %vm835, %v899, %v900
        %902 = vrot.lane.b32.xlu0 %v901, 123
        %v903 = vpop.permute.xlu0 %902
        %v905 = vadd.f32 %v892, %v903
        %s906 = sld [smem:[#allocation2 + $0x29]]
        %v907 = vstv %s906
        %v908 = vmul.f32 %v907, %v415
        %v909 = vmul.f32 %v907, %v416
        %v912 = vrot.slane %v908, 5
        %v913 = vrot.slane %v909, 5
        %v914 = vsel %vm835, %v912, %v913
        %915 = vrot.lane.b32.xlu0 %v914, 122
        %v916 = vpop.permute.xlu0 %915
        %v918 = vadd.f32 %v905, %v916
        %s919 = sld [smem:[#allocation2 + $0x2a]]
        %v920 = vstv %s919
        %v921 = vmul.f32 %v920, %v415
        %v922 = vmul.f32 %v920, %v416
        %vm925 = vcmask 1041408
        %v926 = vrot.slane %v921, 6
        %v927 = vrot.slane %v922, 6
        %v928 = vsel %vm925, %v926, %v927
        %v930 = vadd.f32 %v918, %v928
        %s931 = sld [smem:[#allocation2 + $0x2b]]
        %v932 = vstv %s931
        %v933 = vmul.f32 %v932, %v415
        %v934 = vmul.f32 %v932, %v416
        %v937 = vrot.slane %v933, 6
        %v938 = vrot.slane %v934, 6
        %v939 = vsel %vm925, %v937, %v938
        %940 = vrot.lane.b32.xlu0 %v939, 127
        %v941 = vpop.permute.xlu0 %940
        %v943 = vadd.f32 %v930, %v941
        %s944 = sld [smem:[#allocation2 + $0x2c]]
        %v945 = vstv %s944
        %v946 = vmul.f32 %v945, %v415
        %v947 = vmul.f32 %v945, %v416
        %v950 = vrot.slane %v946, 6
        %v951 = vrot.slane %v947, 6
        %v952 = vsel %vm925, %v950, %v951
        %953 = vrot.lane.b32.xlu0 %v952, 126
        %v954 = vpop.permute.xlu0 %953
        %v956 = vadd.f32 %v943, %v954
        %s957 = sld [smem:[#allocation2 + $0x2d]]
        %v958 = vstv %s957
        %v959 = vmul.f32 %v958, %v415
        %v960 = vmul.f32 %v958, %v416
        %v963 = vrot.slane %v959, 6
        %v964 = vrot.slane %v960, 6
        %v965 = vsel %vm925, %v963, %v964
        %966 = vrot.lane.b32.xlu0 %v965, 125
        %v967 = vpop.permute.xlu0 %966
        %v969 = vadd.f32 %v956, %v967
        %s970 = sld [smem:[#allocation2 + $0x2e]]
        %v971 = vstv %s970
        %v972 = vmul.f32 %v971, %v415
        %v973 = vmul.f32 %v971, %v416
        %v976 = vrot.slane %v972, 6
        %v977 = vrot.slane %v973, 6
        %v978 = vsel %vm925, %v976, %v977
        %979 = vrot.lane.b32.xlu0 %v978, 124
        %v980 = vpop.permute.xlu0 %979
        %v982 = vadd.f32 %v969, %v980
        %s983 = sld [smem:[#allocation2 + $0x2f]]
        %v984 = vstv %s983
        %v985 = vmul.f32 %v984, %v415
        %v986 = vmul.f32 %v984, %v416
        %v989 = vrot.slane %v985, 6
        %v990 = vrot.slane %v986, 6
        %v991 = vsel %vm925, %v989, %v990
        %992 = vrot.lane.b32.xlu0 %v991, 123
        %v993 = vpop.permute.xlu0 %992
        %v995 = vadd.f32 %v982, %v993
        %s996 = sld [smem:[#allocation2 + $0x30]]
        %v997 = vstv %s996
        %v998 = vmul.f32 %v997, %v415
        %v999 = vmul.f32 %v997, %v416
        %v1002 = vrot.slane %v998, 6
        %v1003 = vrot.slane %v999, 6
        %v1004 = vsel %vm925, %v1002, %v1003
        %1005 = vrot.lane.b32.xlu0 %v1004, 122
        %v1006 = vpop.permute.xlu0 %1005
        %v1008 = vadd.f32 %v995, %v1006
        %s1009 = scalar_lea.vmem %s403, 16
        %v1010 = vld [vmem:[%s1009] sm:$0xff]
        %v1011 = vld [vmem:[%s1009 + $0x8] sm:$0x3f]
        %s1012 = sld [smem:[#allocation2 + $0x31]]
        %v1013 = vstv %s1012
        %v1014 = vmul.f32 %v1013, %v1010
        %v1015 = vadd.f32 %v1008, %v1014
        %s1016 = sld [smem:[#allocation2 + $0x32]]
        %v1017 = vstv %s1016
        %v1018 = vmul.f32 %v1017, %v1010
        %1020 = vrot.lane.b32.xlu0 %v1018, 127
        %v1021 = vpop.permute.xlu0 %1020
        %v1023 = vadd.f32 %v1015, %v1021
        %s1024 = sld [smem:[#allocation2 + $0x33]]
        %v1025 = vstv %s1024
        %v1026 = vmul.f32 %v1025, %v1010
        %1028 = vrot.lane.b32.xlu0 %v1026, 126
        %v1029 = vpop.permute.xlu0 %1028
        %v1031 = vadd.f32 %v1023, %v1029
        %s1032 = sld [smem:[#allocation2 + $0x34]]
        %v1033 = vstv %s1032
        %v1034 = vmul.f32 %v1033, %v1010
        %1036 = vrot.lane.b32.xlu0 %v1034, 125
        %v1037 = vpop.permute.xlu0 %1036
        %v1039 = vadd.f32 %v1031, %v1037
        %s1040 = sld [smem:[#allocation2 + $0x35]]
        %v1041 = vstv %s1040
        %v1042 = vmul.f32 %v1041, %v1010
        %1044 = vrot.lane.b32.xlu0 %v1042, 124
        %v1045 = vpop.permute.xlu0 %1044
        %v1047 = vadd.f32 %v1039, %v1045
        %s1048 = sld [smem:[#allocation2 + $0x36]]
        %v1049 = vstv %s1048
        %v1050 = vmul.f32 %v1049, %v1010
        %1052 = vrot.lane.b32.xlu0 %v1050, 123
        %v1053 = vpop.permute.xlu0 %1052
        %v1055 = vadd.f32 %v1047, %v1053
        %s1056 = sld [smem:[#allocation2 + $0x37]]
        %v1057 = vstv %s1056
        %v1058 = vmul.f32 %v1057, %v1010
        %1060 = vrot.lane.b32.xlu0 %v1058, 122
        %v1061 = vpop.permute.xlu0 %1060
        %v1063 = vadd.f32 %v1055, %v1061
        %s1064 = sld [smem:[#allocation2 + $0x38]]
        %v1065 = vstv %s1064
        %v1066 = vmul.f32 %v1065, %v1010
        %v1067 = vmul.f32 %v1065, %v1011
        %v1070 = vrot.slane %v1066, 1
        %v1071 = vrot.slane %v1067, 1
        %v1072 = vsel %vm475, %v1070, %v1071
        %v1074 = vadd.f32 %v1063, %v1072
        %s1075 = sld [smem:[#allocation2 + $0x39]]
        %v1076 = vstv %s1075
        %v1077 = vmul.f32 %v1076, %v1010
        %v1078 = vmul.f32 %v1076, %v1011
        %v1081 = vrot.slane %v1077, 1
        %v1082 = vrot.slane %v1078, 1
        %v1083 = vsel %vm475, %v1081, %v1082
        %1084 = vrot.lane.b32.xlu0 %v1083, 127
        %v1085 = vpop.permute.xlu0 %1084
        %v1087 = vadd.f32 %v1074, %v1085
        %s1088 = sld [smem:[#allocation2 + $0x3a]]
        %v1089 = vstv %s1088
        %v1090 = vmul.f32 %v1089, %v1010
        %v1091 = vmul.f32 %v1089, %v1011
        %v1094 = vrot.slane %v1090, 1
        %v1095 = vrot.slane %v1091, 1
        %v1096 = vsel %vm475, %v1094, %v1095
        %1097 = vrot.lane.b32.xlu0 %v1096, 126
        %v1098 = vpop.permute.xlu0 %1097
        %v1100 = vadd.f32 %v1087, %v1098
        %s1101 = sld [smem:[#allocation2 + $0x3b]]
        %v1102 = vstv %s1101
        %v1103 = vmul.f32 %v1102, %v1010
        %v1104 = vmul.f32 %v1102, %v1011
        %v1107 = vrot.slane %v1103, 1
        %v1108 = vrot.slane %v1104, 1
        %v1109 = vsel %vm475, %v1107, %v1108
        %1110 = vrot.lane.b32.xlu0 %v1109, 125
        %v1111 = vpop.permute.xlu0 %1110
        %v1113 = vadd.f32 %v1100, %v1111
        %s1114 = sld [smem:[#allocation2 + $0x3c]]
        %v1115 = vstv %s1114
        %v1116 = vmul.f32 %v1115, %v1010
        %v1117 = vmul.f32 %v1115, %v1011
        %v1120 = vrot.slane %v1116, 1
        %v1121 = vrot.slane %v1117, 1
        %v1122 = vsel %vm475, %v1120, %v1121
        %1123 = vrot.lane.b32.xlu0 %v1122, 124
        %v1124 = vpop.permute.xlu0 %1123
        %v1126 = vadd.f32 %v1113, %v1124
        %s1127 = sld [smem:[#allocation2 + $0x3d]]
        %v1128 = vstv %s1127
        %v1129 = vmul.f32 %v1128, %v1010
        %v1130 = vmul.f32 %v1128, %v1011
        %v1133 = vrot.slane %v1129, 1
        %v1134 = vrot.slane %v1130, 1
        %v1135 = vsel %vm475, %v1133, %v1134
        %1136 = vrot.lane.b32.xlu0 %v1135, 123
        %v1137 = vpop.permute.xlu0 %1136
        %v1139 = vadd.f32 %v1126, %v1137
        %s1140 = sld [smem:[#allocation2 + $0x3e]]
        %v1141 = vstv %s1140
        %v1142 = vmul.f32 %v1141, %v1010
        %v1143 = vmul.f32 %v1141, %v1011
        %v1146 = vrot.slane %v1142, 1
        %v1147 = vrot.slane %v1143, 1
        %v1148 = vsel %vm475, %v1146, %v1147
        %1149 = vrot.lane.b32.xlu0 %v1148, 122
        %v1150 = vpop.permute.xlu0 %1149
        %v1152 = vadd.f32 %v1139, %v1150
        %s1153 = sld [smem:[#allocation2 + $0x3f]]
        %v1154 = vstv %s1153
        %v1155 = vmul.f32 %v1154, %v1010
        %v1156 = vmul.f32 %v1154, %v1011
        %v1159 = vrot.slane %v1155, 2
        %v1160 = vrot.slane %v1156, 2
        %v1161 = vsel %vm565, %v1159, %v1160
        %v1163 = vadd.f32 %v1152, %v1161
        %s1164 = sld [smem:[#allocation2 + $0x40]]
        %v1165 = vstv %s1164
        %v1166 = vmul.f32 %v1165, %v1010
        %v1167 = vmul.f32 %v1165, %v1011
        %v1170 = vrot.slane %v1166, 2
        %v1171 = vrot.slane %v1167, 2
        %v1172 = vsel %vm565, %v1170, %v1171
        %1173 = vrot.lane.b32.xlu0 %v1172, 127
        %v1174 = vpop.permute.xlu0 %1173
        %v1176 = vadd.f32 %v1163, %v1174
        %s1177 = sld [smem:[#allocation2 + $0x41]]
        %v1178 = vstv %s1177
        %v1179 = vmul.f32 %v1178, %v1010
        %v1180 = vmul.f32 %v1178, %v1011
        %v1183 = vrot.slane %v1179, 2
        %v1184 = vrot.slane %v1180, 2
        %v1185 = vsel %vm565, %v1183, %v1184
        %1186 = vrot.lane.b32.xlu0 %v1185, 126
        %v1187 = vpop.permute.xlu0 %1186
        %v1189 = vadd.f32 %v1176, %v1187
        %s1190 = sld [smem:[#allocation2 + $0x42]]
        %v1191 = vstv %s1190
        %v1192 = vmul.f32 %v1191, %v1010
        %v1193 = vmul.f32 %v1191, %v1011
        %v1196 = vrot.slane %v1192, 2
        %v1197 = vrot.slane %v1193, 2
        %v1198 = vsel %vm565, %v1196, %v1197
        %1199 = vrot.lane.b32.xlu0 %v1198, 125
        %v1200 = vpop.permute.xlu0 %1199
        %v1202 = vadd.f32 %v1189, %v1200
        %s1203 = sld [smem:[#allocation2 + $0x43]]
        %v1204 = vstv %s1203
        %v1205 = vmul.f32 %v1204, %v1010
        %v1206 = vmul.f32 %v1204, %v1011
        %v1209 = vrot.slane %v1205, 2
        %v1210 = vrot.slane %v1206, 2
        %v1211 = vsel %vm565, %v1209, %v1210
        %1212 = vrot.lane.b32.xlu0 %v1211, 124
        %v1213 = vpop.permute.xlu0 %1212
        %v1215 = vadd.f32 %v1202, %v1213
        %s1216 = sld [smem:[#allocation2 + $0x44]]
        %v1217 = vstv %s1216
        %v1218 = vmul.f32 %v1217, %v1010
        %v1219 = vmul.f32 %v1217, %v1011
        %v1222 = vrot.slane %v1218, 2
        %v1223 = vrot.slane %v1219, 2
        %v1224 = vsel %vm565, %v1222, %v1223
        %1225 = vrot.lane.b32.xlu0 %v1224, 123
        %v1226 = vpop.permute.xlu0 %1225
        %v1228 = vadd.f32 %v1215, %v1226
        %s1229 = sld [smem:[#allocation2 + $0x45]]
        %v1230 = vstv %s1229
        %v1231 = vmul.f32 %v1230, %v1010
        %v1232 = vmul.f32 %v1230, %v1011
        %v1235 = vrot.slane %v1231, 2
        %v1236 = vrot.slane %v1232, 2
        %v1237 = vsel %vm565, %v1235, %v1236
        %1238 = vrot.lane.b32.xlu0 %v1237, 122
        %v1239 = vpop.permute.xlu0 %1238
        %v1241 = vadd.f32 %v1228, %v1239
        %s1242 = sld [smem:[#allocation2 + $0x46]]
        %v1243 = vstv %s1242
        %v1244 = vmul.f32 %v1243, %v1010
        %v1245 = vmul.f32 %v1243, %v1011
        %v1248 = vrot.slane %v1244, 3
        %v1249 = vrot.slane %v1245, 3
        %v1250 = vsel %vm655, %v1248, %v1249
        %v1252 = vadd.f32 %v1241, %v1250
        %s1253 = sld [smem:[#allocation2 + $0x47]]
        %v1254 = vstv %s1253
        %v1255 = vmul.f32 %v1254, %v1010
        %v1256 = vmul.f32 %v1254, %v1011
        %v1259 = vrot.slane %v1255, 3
        %v1260 = vrot.slane %v1256, 3
        %v1261 = vsel %vm655, %v1259, %v1260
        %1262 = vrot.lane.b32.xlu0 %v1261, 127
        %v1263 = vpop.permute.xlu0 %1262
        %v1265 = vadd.f32 %v1252, %v1263
        %s1266 = sld [smem:[#allocation2 + $0x48]]
        %v1267 = vstv %s1266
        %v1268 = vmul.f32 %v1267, %v1010
        %v1269 = vmul.f32 %v1267, %v1011
        %v1272 = vrot.slane %v1268, 3
        %v1273 = vrot.slane %v1269, 3
        %v1274 = vsel %vm655, %v1272, %v1273
        %1275 = vrot.lane.b32.xlu0 %v1274, 126
        %v1276 = vpop.permute.xlu0 %1275
        %v1278 = vadd.f32 %v1265, %v1276
        %s1279 = sld [smem:[#allocation2 + $0x49]]
        %v1280 = vstv %s1279
        %v1281 = vmul.f32 %v1280, %v1010
        %v1282 = vmul.f32 %v1280, %v1011
        %v1285 = vrot.slane %v1281, 3
        %v1286 = vrot.slane %v1282, 3
        %v1287 = vsel %vm655, %v1285, %v1286
        %1288 = vrot.lane.b32.xlu0 %v1287, 125
        %v1289 = vpop.permute.xlu0 %1288
        %v1291 = vadd.f32 %v1278, %v1289
        %s1292 = sld [smem:[#allocation2 + $0x4a]]
        %v1293 = vstv %s1292
        %v1294 = vmul.f32 %v1293, %v1010
        %v1295 = vmul.f32 %v1293, %v1011
        %v1298 = vrot.slane %v1294, 3
        %v1299 = vrot.slane %v1295, 3
        %v1300 = vsel %vm655, %v1298, %v1299
        %1301 = vrot.lane.b32.xlu0 %v1300, 124
        %v1302 = vpop.permute.xlu0 %1301
        %v1304 = vadd.f32 %v1291, %v1302
        %s1305 = sld [smem:[#allocation2 + $0x4b]]
        %v1306 = vstv %s1305
        %v1307 = vmul.f32 %v1306, %v1010
        %v1308 = vmul.f32 %v1306, %v1011
        %v1311 = vrot.slane %v1307, 3
        %v1312 = vrot.slane %v1308, 3
        %v1313 = vsel %vm655, %v1311, %v1312
        %1314 = vrot.lane.b32.xlu0 %v1313, 123
        %v1315 = vpop.permute.xlu0 %1314
        %v1317 = vadd.f32 %v1304, %v1315
        %s1318 = sld [smem:[#allocation2 + $0x4c]]
        %v1319 = vstv %s1318
        %v1320 = vmul.f32 %v1319, %v1010
        %v1321 = vmul.f32 %v1319, %v1011
        %v1324 = vrot.slane %v1320, 3
        %v1325 = vrot.slane %v1321, 3
        %v1326 = vsel %vm655, %v1324, %v1325
        %1327 = vrot.lane.b32.xlu0 %v1326, 122
        %v1328 = vpop.permute.xlu0 %1327
        %v1330 = vadd.f32 %v1317, %v1328
        %s1331 = sld [smem:[#allocation2 + $0x4d]]
        %v1332 = vstv %s1331
        %v1333 = vmul.f32 %v1332, %v1010
        %v1334 = vmul.f32 %v1332, %v1011
        %v1337 = vrot.slane %v1333, 4
        %v1338 = vrot.slane %v1334, 4
        %v1339 = vsel %vm745, %v1337, %v1338
        %v1341 = vadd.f32 %v1330, %v1339
        %s1342 = sld [smem:[#allocation2 + $0x4e]]
        %v1343 = vstv %s1342
        %v1344 = vmul.f32 %v1343, %v1010
        %v1345 = vmul.f32 %v1343, %v1011
        %v1348 = vrot.slane %v1344, 4
        %v1349 = vrot.slane %v1345, 4
        %v1350 = vsel %vm745, %v1348, %v1349
        %1351 = vrot.lane.b32.xlu0 %v1350, 127
        %v1352 = vpop.permute.xlu0 %1351
        %v1354 = vadd.f32 %v1341, %v1352
        %s1355 = sld [smem:[#allocation2 + $0x4f]]
        %v1356 = vstv %s1355
        %v1357 = vmul.f32 %v1356, %v1010
        %v1358 = vmul.f32 %v1356, %v1011
        %v1361 = vrot.slane %v1357, 4
        %v1362 = vrot.slane %v1358, 4
        %v1363 = vsel %vm745, %v1361, %v1362
        %1364 = vrot.lane.b32.xlu0 %v1363, 126
        %v1365 = vpop.permute.xlu0 %1364
        %v1367 = vadd.f32 %v1354, %v1365
        %s1368 = sld [smem:[#allocation2 + $0x50]]
        %v1369 = vstv %s1368
        %v1370 = vmul.f32 %v1369, %v1010
        %v1371 = vmul.f32 %v1369, %v1011
        %v1374 = vrot.slane %v1370, 4
        %v1375 = vrot.slane %v1371, 4
        %v1376 = vsel %vm745, %v1374, %v1375
        %1377 = vrot.lane.b32.xlu0 %v1376, 125
        %v1378 = vpop.permute.xlu0 %1377
        %v1380 = vadd.f32 %v1367, %v1378
        %s1381 = sld [smem:[#allocation2 + $0x51]]
        %v1382 = vstv %s1381
        %v1383 = vmul.f32 %v1382, %v1010
        %v1384 = vmul.f32 %v1382, %v1011
        %v1387 = vrot.slane %v1383, 4
        %v1388 = vrot.slane %v1384, 4
        %v1389 = vsel %vm745, %v1387, %v1388
        %1390 = vrot.lane.b32.xlu0 %v1389, 124
        %v1391 = vpop.permute.xlu0 %1390
        %v1393 = vadd.f32 %v1380, %v1391
        %s1394 = sld [smem:[#allocation2 + $0x52]]
        %v1395 = vstv %s1394
        %v1396 = vmul.f32 %v1395, %v1010
        %v1397 = vmul.f32 %v1395, %v1011
        %v1400 = vrot.slane %v1396, 4
        %v1401 = vrot.slane %v1397, 4
        %v1402 = vsel %vm745, %v1400, %v1401
        %1403 = vrot.lane.b32.xlu0 %v1402, 123
        %v1404 = vpop.permute.xlu0 %1403
        %v1406 = vadd.f32 %v1393, %v1404
        %s1407 = sld [smem:[#allocation2 + $0x53]]
        %v1408 = vstv %s1407
        %v1409 = vmul.f32 %v1408, %v1010
        %v1410 = vmul.f32 %v1408, %v1011
        %v1413 = vrot.slane %v1409, 4
        %v1414 = vrot.slane %v1410, 4
        %v1415 = vsel %vm745, %v1413, %v1414
        %1416 = vrot.lane.b32.xlu0 %v1415, 122
        %v1417 = vpop.permute.xlu0 %1416
        %v1419 = vadd.f32 %v1406, %v1417
        %s1420 = sld [smem:[#allocation2 + $0x54]]
        %v1421 = vstv %s1420
        %v1422 = vmul.f32 %v1421, %v1010
        %v1423 = vmul.f32 %v1421, %v1011
        %v1426 = vrot.slane %v1422, 5
        %v1427 = vrot.slane %v1423, 5
        %v1428 = vsel %vm835, %v1426, %v1427
        %v1430 = vadd.f32 %v1419, %v1428
        %s1431 = sld [smem:[#allocation2 + $0x55]]
        %v1432 = vstv %s1431
        %v1433 = vmul.f32 %v1432, %v1010
        %v1434 = vmul.f32 %v1432, %v1011
        %v1437 = vrot.slane %v1433, 5
        %v1438 = vrot.slane %v1434, 5
        %v1439 = vsel %vm835, %v1437, %v1438
        %1440 = vrot.lane.b32.xlu0 %v1439, 127
        %v1441 = vpop.permute.xlu0 %1440
        %v1443 = vadd.f32 %v1430, %v1441
        %s1444 = sld [smem:[#allocation2 + $0x56]]
        %v1445 = vstv %s1444
        %v1446 = vmul.f32 %v1445, %v1010
        %v1447 = vmul.f32 %v1445, %v1011
        %v1450 = vrot.slane %v1446, 5
        %v1451 = vrot.slane %v1447, 5
        %v1452 = vsel %vm835, %v1450, %v1451
        %1453 = vrot.lane.b32.xlu0 %v1452, 126
        %v1454 = vpop.permute.xlu0 %1453
        %v1456 = vadd.f32 %v1443, %v1454
        %s1457 = sld [smem:[#allocation2 + $0x57]]
        %v1458 = vstv %s1457
        %v1459 = vmul.f32 %v1458, %v1010
        %v1460 = vmul.f32 %v1458, %v1011
        %v1463 = vrot.slane %v1459, 5
        %v1464 = vrot.slane %v1460, 5
        %v1465 = vsel %vm835, %v1463, %v1464
        %1466 = vrot.lane.b32.xlu0 %v1465, 125
        %v1467 = vpop.permute.xlu0 %1466
        %v1469 = vadd.f32 %v1456, %v1467
        %s1470 = sld [smem:[#allocation2 + $0x58]]
        %v1471 = vstv %s1470
        %v1472 = vmul.f32 %v1471, %v1010
        %v1473 = vmul.f32 %v1471, %v1011
        %v1476 = vrot.slane %v1472, 5
        %v1477 = vrot.slane %v1473, 5
        %v1478 = vsel %vm835, %v1476, %v1477
        %1479 = vrot.lane.b32.xlu0 %v1478, 124
        %v1480 = vpop.permute.xlu0 %1479
        %v1482 = vadd.f32 %v1469, %v1480
        %s1483 = sld [smem:[#allocation2 + $0x59]]
        %v1484 = vstv %s1483
        %v1485 = vmul.f32 %v1484, %v1010
        %v1486 = vmul.f32 %v1484, %v1011
        %v1489 = vrot.slane %v1485, 5
        %v1490 = vrot.slane %v1486, 5
        %v1491 = vsel %vm835, %v1489, %v1490
        %1492 = vrot.lane.b32.xlu0 %v1491, 123
        %v1493 = vpop.permute.xlu0 %1492
        %v1495 = vadd.f32 %v1482, %v1493
        %s1496 = sld [smem:[#allocation2 + $0x5a]]
        %v1497 = vstv %s1496
        %v1498 = vmul.f32 %v1497, %v1010
        %v1499 = vmul.f32 %v1497, %v1011
        %v1502 = vrot.slane %v1498, 5
        %v1503 = vrot.slane %v1499, 5
        %v1504 = vsel %vm835, %v1502, %v1503
        %1505 = vrot.lane.b32.xlu0 %v1504, 122
        %v1506 = vpop.permute.xlu0 %1505
        %v1508 = vadd.f32 %v1495, %v1506
        %s1509 = sld [smem:[#allocation2 + $0x5b]]
        %v1510 = vstv %s1509
        %v1511 = vmul.f32 %v1510, %v1010
        %v1512 = vmul.f32 %v1510, %v1011
        %v1515 = vrot.slane %v1511, 6
        %v1516 = vrot.slane %v1512, 6
        %v1517 = vsel %vm925, %v1515, %v1516
        %v1519 = vadd.f32 %v1508, %v1517
        %s1520 = sld [smem:[#allocation2 + $0x5c]]
        %v1521 = vstv %s1520
        %v1522 = vmul.f32 %v1521, %v1010
        %v1523 = vmul.f32 %v1521, %v1011
        %v1526 = vrot.slane %v1522, 6
        %v1527 = vrot.slane %v1523, 6
        %v1528 = vsel %vm925, %v1526, %v1527
        %1529 = vrot.lane.b32.xlu0 %v1528, 127
        %v1530 = vpop.permute.xlu0 %1529
        %v1532 = vadd.f32 %v1519, %v1530
        %s1533 = sld [smem:[#allocation2 + $0x5d]]
        %v1534 = vstv %s1533
        %v1535 = vmul.f32 %v1534, %v1010
        %v1536 = vmul.f32 %v1534, %v1011
        %v1539 = vrot.slane %v1535, 6
        %v1540 = vrot.slane %v1536, 6
        %v1541 = vsel %vm925, %v1539, %v1540
        %1542 = vrot.lane.b32.xlu0 %v1541, 126
        %v1543 = vpop.permute.xlu0 %1542
        %v1545 = vadd.f32 %v1532, %v1543
        %s1546 = sld [smem:[#allocation2 + $0x5e]]
        %v1547 = vstv %s1546
        %v1548 = vmul.f32 %v1547, %v1010
        %v1549 = vmul.f32 %v1547, %v1011
        %v1552 = vrot.slane %v1548, 6
        %v1553 = vrot.slane %v1549, 6
        %v1554 = vsel %vm925, %v1552, %v1553
        %1555 = vrot.lane.b32.xlu0 %v1554, 125
        %v1556 = vpop.permute.xlu0 %1555
        %v1558 = vadd.f32 %v1545, %v1556
        %s1559 = sld [smem:[#allocation2 + $0x5f]]
        %v1560 = vstv %s1559
        %v1561 = vmul.f32 %v1560, %v1010
        %v1562 = vmul.f32 %v1560, %v1011
        %v1565 = vrot.slane %v1561, 6
        %v1566 = vrot.slane %v1562, 6
        %v1567 = vsel %vm925, %v1565, %v1566
        %1568 = vrot.lane.b32.xlu0 %v1567, 124
        %v1569 = vpop.permute.xlu0 %1568
        %v1571 = vadd.f32 %v1558, %v1569
        %s1572 = sld [smem:[#allocation2 + $0x60]]
        %v1573 = vstv %s1572
        %v1574 = vmul.f32 %v1573, %v1010
        %v1575 = vmul.f32 %v1573, %v1011
        %v1578 = vrot.slane %v1574, 6
        %v1579 = vrot.slane %v1575, 6
        %v1580 = vsel %vm925, %v1578, %v1579
        %1581 = vrot.lane.b32.xlu0 %v1580, 123
        %v1582 = vpop.permute.xlu0 %1581
        %v1584 = vadd.f32 %v1571, %v1582
        %s1585 = sld [smem:[#allocation2 + $0x61]]
        %v1586 = vstv %s1585
        %v1587 = vmul.f32 %v1586, %v1010
        %v1588 = vmul.f32 %v1586, %v1011
        %v1591 = vrot.slane %v1587, 6
        %v1592 = vrot.slane %v1588, 6
        %v1593 = vsel %vm925, %v1591, %v1592
        %1594 = vrot.lane.b32.xlu0 %v1593, 122
        %v1595 = vpop.permute.xlu0 %1594
        %v1597 = vadd.f32 %v1584, %v1595
        %s1598 = sld [smem:[#allocation4]]
        %v1599 = vstv %s1598
        %v1600 = vmul.f32 %v1597, %v1599
        %s1601 = sld [smem:[#allocation4 + $0x1]]
        %v1602 = vstv %s1601
        %v1603 = vadd.f32 %v1600, %v1602
        %v1604 = vxor.u32 %v1603, 2147483648
        %v1605 = vmul.f32 %v1604, 1.442695
        %v1606 = vpow.pop %v1605
        %v1607 = vadd.f32 %v1606, 1.0
        %v1608 = vrcp.pop %v1607
        %v1609 = vmul.f32 %v1607, %v1608
        %v1610 = vsub.f32 1.0, %v1609
        %v1611 = vmul.f32 %v1608, %v1610
        %v1612 = vadd.f32 %v1608, %v1611
        %vm1613 = vweird.f32 %v1607
        %vm1614 = vweird.f32 %v1608
        %vm1615 = vmor %vm1613, %vm1614
        %v1616 = vsel %vm1615, %v1608, %v1612
        %v1617 = vand.u32 2147483647, %v1607
        %vm1618 = vcmp.eq.f32.partialorder %v1617, 8.507059e+37
        %v1619 = vand.u32 %v1607, 2147483648
        %v1620 = vor.u32 1.1754944e-38, %v1619
        %v1621 = vsel %vm1618, %v1620, %v1616
        %v1622 = vmul.f32 1.0, %v1621
        %v1623 = vld [vmem:[%s395] sm:$0xff]
        %v1624 = vld [vmem:[%s395 + $0x8] sm:$0xff]
        %v1625 = vld [vmem:[%s395 + $0x10] sm:$0xff]
        %v1626 = vld [vmem:[%s395 + $0x18] sm:$0xff]
        %v1627 = vld [vmem:[%s395 + $0x20] sm:$0xff]
        %v1628 = vld [vmem:[%s395 + $0x28] sm:$0xff]
        %v1629 = vld [vmem:[%s395 + $0x30] sm:$0xff]
        %v1630 = vld [vmem:[%s395 + $0x38] sm:$0xff]
        %v1631 = vld [vmem:[%s398] sm:$0x1]
        %v1633 = vperm.slane %v1631, 0
        %v1635 = vmul.f32 %v1623, %v1633
        %v1636 = vmul.f32 %v1624, %v1633
        %v1637 = vmul.f32 %v1625, %v1633
        %v1638 = vmul.f32 %v1626, %v1633
        %v1639 = vmul.f32 %v1627, %v1633
        %v1640 = vmul.f32 %v1628, %v1633
        %v1641 = vmul.f32 %v1629, %v1633
        %v1642 = vmul.f32 %v1630, %v1633
        %v1643 = vld [vmem:[%s408] sm:$0xff]
        %v1644 = vld [vmem:[%s408 + $0x8] sm:$0xff]
        %v1645 = vld [vmem:[%s408 + $0x10] sm:$0xff]
        %v1646 = vld [vmem:[%s408 + $0x18] sm:$0xff]
        %v1647 = vld [vmem:[%s408 + $0x20] sm:$0xff]
        %v1648 = vld [vmem:[%s408 + $0x28] sm:$0xff]
        %v1649 = vld [vmem:[%s408 + $0x30] sm:$0xff]
        %v1650 = vld [vmem:[%s408 + $0x38] sm:$0xff]
        %v1651 = vpack.c.bf16 %v1644, %v1643
        %v1652 = vpack.c.bf16 %v1646, %v1645
        %v1653 = vpack.c.bf16 %v1648, %v1647
        %v1654 = vpack.c.bf16 %v1650, %v1649
        %v1655 = vld [vmem:[%s6] sm:$0xf]
        %v1656 = vld [vmem:[%s6 + $0x4] sm:$0xf]
        %v1659 = vunpack.c.l.b16 %v1655
        %v1660 = vunpack.c.l.b16 %v1656
        %v1661 = vpack.c.b16 %v1660, %v1659
        %vm1663 = vcmask 130048
        %v1665 = vsel %vm1663, %v1651, 0
        %v1668 = vsel %vm1663, %v1652, 0
        %v1671 = vsel %vm1663, %v1653, 0
        %v1674 = vsel %vm1663, %v1654, 0
        %1676 = vmatpush.bf16.msra.mxu0 0
        %1677 = vmatpush.bf16.msra.mxu0 0
        %1678 = vmatpush.bf16.msra.mxu0 0
        %1679 = vmatpush.bf16.msra.mxu0 0
        %1680 = vmatpush.bf16.msra.mxu0 0
        %1681 = vmatpush.bf16.msra.mxu0 0
        %1682 = vmatpush.bf16.msra.mxu0 0
        %1683 = vmatpush.bf16.msra.mxu0 %v1661
        %1684 = vmatmul.bf16.gmra.mxu0 %v1665
        %v1685 = vpop.f32.mrf.mxu0
        %v1686 = vadd.f32 0.0, %v1685
        %v1687 = vpop.f32.mrf.mxu0
        %v1688 = vadd.f32 0.0, %v1687
        %1689 = vmatmul.bf16.gmra.mxu0 %v1668
        %v1690 = vpop.f32.mrf.mxu0
        %v1691 = vadd.f32 0.0, %v1690
        %v1692 = vpop.f32.mrf.mxu0
        %v1693 = vadd.f32 0.0, %v1692
        %1694 = vmatmul.bf16.gmra.mxu0 %v1671
        %v1695 = vpop.f32.mrf.mxu0
        %v1696 = vadd.f32 0.0, %v1695
        %v1697 = vpop.f32.mrf.mxu0
        %v1698 = vadd.f32 0.0, %v1697
        %1699 = vmatmul.bf16.gmra.mxu0 %v1674
        %v1700 = vpop.f32.mrf.mxu0
        %v1701 = vadd.f32 0.0, %v1700
        %v1702 = vpop.f32.mrf.mxu0
        %v1703 = vadd.f32 0.0, %v1702
        %1704 = vdwg.mxu0
        %v1705 = vld [vmem:[%s7] sm:$0x1]
        %v1707 = vperm.slane %v1705, 0
        %v1709 = vmul.f32 %v1686, %v1707
        %v1710 = vmul.f32 %v1688, %v1707
        %v1711 = vmul.f32 %v1691, %v1707
        %v1712 = vmul.f32 %v1693, %v1707
        %v1713 = vmul.f32 %v1696, %v1707
        %v1714 = vmul.f32 %v1698, %v1707
        %v1715 = vmul.f32 %v1701, %v1707
        %v1716 = vmul.f32 %v1703, %v1707
        %v1717 = vld [vmem:[%s8] sm:$0x1]
        %v1719 = vperm.slane %v1717, 0
        %v1721 = vadd.f32 %v1709, %v1719
        %v1722 = vadd.f32 %v1710, %v1719
        %v1723 = vadd.f32 %v1711, %v1719
        %v1724 = vadd.f32 %v1712, %v1719
        %v1725 = vadd.f32 %v1713, %v1719
        %v1726 = vadd.f32 %v1714, %v1719
        %v1727 = vadd.f32 %v1715, %v1719
        %v1728 = vadd.f32 %v1716, %v1719
        %v1729 = vperm.slane %v1622, 0
        %v1730 = vlaneseq
        %v1731 = vshrl.u32 %v1730, 7
        %1733 = vset.pattern.permute.xlu0 %v1731
        %1734 = vperm.xlu0 %1733, %v1729
        %v1735 = vpop.permute.xlu0 %1734
        %v1736 = vperm.slane %v1622, 1
        %v1737 = vlaneseq
        %v1738 = vshrl.u32 %v1737, 7
        %1740 = vset.pattern.permute.xlu0 %v1738
        %1741 = vperm.xlu0 %1740, %v1736
        %v1742 = vpop.permute.xlu0 %1741
        %v1743 = vperm.slane %v1622, 2
        %v1744 = vlaneseq
        %v1745 = vshrl.u32 %v1744, 7
        %1747 = vset.pattern.permute.xlu0 %v1745
        %1748 = vperm.xlu0 %1747, %v1743
        %v1749 = vpop.permute.xlu0 %1748
        %v1750 = vperm.slane %v1622, 3
        %v1751 = vlaneseq
        %v1752 = vshrl.u32 %v1751, 7
        %1754 = vset.pattern.permute.xlu0 %v1752
        %1755 = vperm.xlu0 %1754, %v1750
        %v1756 = vpop.permute.xlu0 %1755
        %v1757 = vperm.slane %v1622, 4
        %v1758 = vlaneseq
        %v1759 = vshrl.u32 %v1758, 7
        %1761 = vset.pattern.permute.xlu0 %v1759
        %1762 = vperm.xlu0 %1761, %v1757
        %v1763 = vpop.permute.xlu0 %1762
        %v1764 = vperm.slane %v1622, 5
        %v1765 = vlaneseq
        %v1766 = vshrl.u32 %v1765, 7
        %1768 = vset.pattern.permute.xlu0 %v1766
        %1769 = vperm.xlu0 %1768, %v1764
        %v1770 = vpop.permute.xlu0 %1769
        %v1771 = vperm.slane %v1622, 6
        %v1772 = vlaneseq
        %v1773 = vshrl.u32 %v1772, 7
        %1775 = vset.pattern.permute.xlu0 %v1773
        %1776 = vperm.xlu0 %1775, %v1771
        %v1777 = vpop.permute.xlu0 %1776
        %v1778 = vperm.slane %v1622, 7
        %v1779 = vlaneseq
        %v1780 = vshrl.u32 %v1779, 7
        %1782 = vset.pattern.permute.xlu0 %v1780
        %1783 = vperm.xlu0 %1782, %v1778
        %v1784 = vpop.permute.xlu0 %1783
        %v1785 = vmul.f32 %v1635, %v1735
        %v1786 = vmul.f32 %v1636, %v1742
        %v1787 = vmul.f32 %v1637, %v1749
        %v1788 = vmul.f32 %v1638, %v1756
        %v1789 = vmul.f32 %v1639, %v1763
        %v1790 = vmul.f32 %v1640, %v1770
        %v1791 = vmul.f32 %v1641, %v1777
        %v1792 = vmul.f32 %v1642, %v1784
        %v1793 = vadd.f32 %v1785, %v1721
        %v1794 = vadd.f32 %v1786, %v1722
        %v1795 = vadd.f32 %v1787, %v1723
        %v1796 = vadd.f32 %v1788, %v1724
        %v1797 = vadd.f32 %v1789, %v1725
        %v1798 = vadd.f32 %v1790, %v1726
        %v1799 = vadd.f32 %v1791, %v1727
        %v1800 = vadd.f32 %v1792, %v1728
        %v1801 = vmax.f32 %v1793, 0.0
        %v1802 = vmax.f32 %v1794, 0.0
        %v1803 = vmax.f32 %v1795, 0.0
        %v1804 = vmax.f32 %v1796, 0.0
        %v1805 = vmax.f32 %v1797, 0.0
        %v1806 = vmax.f32 %v1798, 0.0
        %v1807 = vmax.f32 %v1799, 0.0
        %v1808 = vmax.f32 %v1800, 0.0
        %1809 = vst [vmem:[%s413] sm:$0xff] %v1801
        %1810 = vst [vmem:[%s413 + $0x8] sm:$0xff] %v1802
        %1811 = vst [vmem:[%s413 + $0x10] sm:$0xff] %v1803
        %1812 = vst [vmem:[%s413 + $0x18] sm:$0xff] %v1804
        %1813 = vst [vmem:[%s413 + $0x20] sm:$0xff] %v1805
        %1814 = vst [vmem:[%s413 + $0x28] sm:$0xff] %v1806
        %1815 = vst [vmem:[%s413 + $0x30] sm:$0xff] %v1807
        %1816 = vst [vmem:[%s413 + $0x38] sm:$0xff] %v1808
        %p1817 = scmp.lt.s32.totalorder %s22, 1
        %s1818 = scalar_select %p1817, %s22, 1
        %s1819 = smul.addr %s1818, 8
        %s1820 = smul.addr %s1819, 8
        %s1821 = scalar_lea.vmem %s9, %s1820
        // Predicated region
        $region65: #{basic_block_forward.9} parent=55 // pred_check
          %p1822 = pneg %p249
        $region66: #{basic_block_forward.9} parent=55 // pred_check_branch
          %1824 = sbr.rel (%p1822) target = $region68
        $region67: #{basic_block_forward.9} parent=55 // pred_region
          _
        $region68: #{basic_block_forward.9} parent=55 // pred_fallthru
          _
      $region56: #{basic_block_forward.9} parent=5 // pred_fallthru
        _
      %p1825 = scmp.le.s32.totalorder 2, %s17
      // Predicated region
      $region69: #{basic_block_forward.9} parent=5 // pred_check
        %p1826 = pneg %p1825
      $region70: #{basic_block_forward.9} parent=5 // pred_check_branch
        %1828 = sbr.rel (%p1826) target = $region72
      $region71: #{basic_block_forward.9} parent=5 // pred_region
        %s1829 = ssub.s32 %s17, 2
        // Predicated region
        $region73: #{basic_block_forward.9} parent=71 // pred_check
          %p1830 = pneg %p255
        $region74: #{basic_block_forward.9} parent=71 // pred_check_branch
          %1832 = sbr.rel (%p1830) target = $region76
        $region75: #{basic_block_forward.9} parent=71 // pred_region
          %p1833 = scmp.lt.s32.totalorder %s23, 1
          %s1834 = scalar_select %p1833, %s23, 1
          %s1835 = smul.addr %s1834, 8
          %s1836 = smul.addr %s1835, 8
          %s1837 = scalar_lea.vmem %s9, %s1836
        $region76: #{basic_block_forward.9} parent=71 // pred_fallthru
          _
      $region72: #{basic_block_forward.9} parent=5 // pred_fallthru
        _
    $region6: #{basic_block_forward.9} parent=1 // loop_footer
      %s21 = sadd.s32 1, %s17
    $region7: #{basic_block_forward.9} parent=1 // loop_footer_branch
      %16 = sbr.rel target = $region3
    $region8: #{basic_block_forward.9} parent=1 // loop_exit
      _
    %1838 = vsyncpa [#allocation3], 1
    %s1839 = scalar_lea.sflag [#allocation3], 1
    %1840 = vsyncpa %s1839, 1
    %1841 = vsyncpa [#allocation5], 1

</llo_original>
